<compile_context>
chip_gen: v7x
topology: tpu7x:2x2x1
jax: 0.10.0
libtpu: 0.0.40
codegen_flags: <defaults>
</compile_context>

<pallas_src>
import math
import functools

import jax
import jax.numpy as jnp
from jax.experimental import pallas as pl
from jax.experimental.pallas import tpu as pltpu


# ----------------------------------------------------------------------------
# Fused kernel: one grid step == one block of Bt batch elements.
# ----------------------------------------------------------------------------
def dnn_kernel(x_ref, hr_ref, hi_ref, hbr_ref, hbi_ref,
               w1_ref, b1_ref, w2_ref, b2_ref, w3_ref, b3_ref, w4_ref, b4_ref,
               wb1r_ref, wb1i_ref, bb1_ref, wb2_ref, bb2_ref, wb3_ref, bb3_ref,
               wp1r_ref, wp1i_ref, bp1_ref, wp2_ref, bp2_ref,
               out_ref,
               *, M, N, L, K, P, Bt, n_w, out_lanes, sqrt_pt, use_bf16):
    f32 = jnp.float32
    mmt = jnp.bfloat16 if use_bf16 else jnp.float32
    R = Bt * L                                   # rows of the fc stage, ordered (l, b)

    def mm(a, b):
        return jnp.dot(a.astype(mmt), b.astype(mmt), preferred_element_type=f32)

    # ---- PhaseNet 1x1 convs: channel matmuls over all (p, l, b) rows at once ----
    x = x_ref[...]                                                   # (P*R, 2K)
    y = jnp.maximum(mm(x, w1_ref[...]) + b1_ref[...], 0.0)           # (P*R, 64)
    y = jnp.maximum(mm(y, w2_ref[...]) + b2_ref[...], 0.0)           # (P*R, 64)

    # ---- fc3: P accumulating (R,64)@(64,4N) matmuls on contiguous 8-aligned slabs ----
    acc = jnp.zeros((R, 4 * N), dtype=f32)
    for p in range(P):                                               # static unroll
        acc = acc + mm(y[p * R:(p + 1) * R, :], w3_ref[p * 64:(p + 1) * 64, :])
    h = jnp.maximum(acc + b3_ref[...], 0.0)                          # (R, 4N)
    r = mm(h, w4_ref[...]) + b4_ref[...]                             # (R, 2N)

    # ---- F.normalize(A, dim=2): per-(l, n) complex normalization (rsqrt on EUP) ----
    re = r[:, :N]
    im = r[:, N:]
    inv = jax.lax.rsqrt(jnp.maximum(re * re + im * im, 1e-24))       # 1/max(|z|,1e-12)
    t_re = re * inv                                                  # (R, N), rows (l, b)
    t_im = im * inv

    # ---- concat_H: tiny LN->KM contraction done on the VPU (broadcast-MAC) ----
    re_acc = hbr_ref[...]                                            # (Bt, KM)
    im_acc = hbi_ref[...]
    for l in range(L):
        tr_l = t_re[l * Bt:(l + 1) * Bt, :]                          # (Bt, N)
        ti_l = t_im[l * Bt:(l + 1) * Bt, :]
        for n in range(N):
            q = l * N + n
            hr = hr_ref[q]                                           # (Bt, KM)
            hi = hi_ref[q]
            trc = tr_l[:, n:n + 1]                                   # (Bt, 1) lane-bcast
            tic = ti_l[:, n:n + 1]
            re_acc = re_acc + trc * hr + tic * hi
            im_acc = im_acc + tic * hr - trc * hi

    # ---- BeamNet: re/im-split first layer (no (k, re|im) interleave, no concat) ----
    h1 = jnp.maximum(mm(re_acc, wb1r_ref[...]) + mm(im_acc, wb1i_ref[...])
                     + bb1_ref[...], 0.0)                            # (Bt, 128)
    h2 = jnp.maximum(mm(h1, wb2_ref[...]) + bb2_ref[...], 0.0)       # (Bt, 128)
    w_raw = mm(h2, wb3_ref[...]) + bb3_ref[...]                      # (Bt, 2M(K+1))

    # ---- powerNet + softmax over the 2 logits ----
    p1 = jnp.maximum(mm(re_acc, wp1r_ref[...]) + mm(im_acc, wp1i_ref[...])
                     + bp1_ref[...], 0.0)                            # (Bt, 128)
    logits = mm(p1, wp2_ref[...]) + bp2_ref[...]                     # (Bt, 2)
    mx = jnp.max(logits, axis=1, keepdims=True)
    e = jnp.exp(logits - mx)
    mu = e / jnp.sum(e, axis=1, keepdims=True)                       # (Bt, 2)

    # ---- W = F.normalize(W, dim=1) * sqrt(Pt) * sqrt(mu[:, 0]) ----
    inv_w = jax.lax.rsqrt(jnp.maximum(jnp.sum(w_raw * w_raw, axis=1, keepdims=True),
                                      1e-24))
    w_fin = w_raw * (inv_w * sqrt_pt * jnp.sqrt(mu[:, 0:1]))         # (Bt, n_w)

    # ---- single lane-dense packed output row per batch element ----
    pieces = []
    for l in range(L):
        pieces.append(t_re[l * Bt:(l + 1) * Bt, :])                  # (Bt, N)
        pieces.append(t_im[l * Bt:(l + 1) * Bt, :])                  # (Bt, N)
    pieces.append(w_fin)                                             # (Bt, n_w)
    pieces.append(mu)                                                # (Bt, 2)
    used = 2 * L * N + n_w + 2
    if out_lanes > used:
        pieces.append(jnp.zeros((Bt, out_lanes - used), dtype=f32))
    out_ref[...] = jnp.concatenate(pieces, axis=1)                   # (Bt, out_lanes)


# ----------------------------------------------------------------------------
# Deterministic torch-style parameter init + conversion to kernel layout
# ----------------------------------------------------------------------------
def init_torch_params(key, M, N, L, K):
    """PyTorch-default-style uniform(+/-1/sqrt(fan_in)) init, torch (out, in) layout."""
    P = M * (N + 1)
    ch = 128
    dims = [("conv1", 2 * K, 64), ("conv2", 64, 64),
            ("fc3", 64 * P, 4 * N), ("fc4", 4 * N, 2 * N),
            ("beam1", 2 * K * M, ch), ("beam2", ch, ch),
            ("beam3", ch, 2 * M * (K + 1)),
            ("pow1", 2 * K * M, ch), ("pow2", ch, 2)]
    keys = jax.random.split(key, 2 * len(dims))
    tp = {}
    for i, (name, fin, fout) in enumerate(dims):
        bound = 1.0 / math.sqrt(fin)
        tp[name + "_w"] = jax.random.uniform(keys[2 * i], (fout, fin),
                                             jnp.float32, -bound, bound)
        tp[name + "_b"] = jax.random.uniform(keys[2 * i + 1], (fout,),
                                             jnp.float32, -bound, bound)
    return tp


def to_kernel_params(tp, M, N, L, K):
    P = M * (N + 1)
    KM = K * M
    p = {}
    p["w1"] = tp["conv1_w"].T
    p["b1"] = tp["conv1_b"].reshape(1, -1)
    p["w2"] = tp["conv2_w"].T
    p["b2"] = tp["conv2_b"].reshape(1, -1)
    # fc3: torch Flatten order (c, m, n) -> kernel row order (p=(m,n), c)
    w3 = tp["fc3_w"].reshape(4 * N, 64, M, N + 1)
    p["w3"] = jnp.transpose(w3, (2, 3, 1, 0)).reshape(P * 64, 4 * N)
    p["b3"] = tp["fc3_b"].reshape(1, -1)
    p["w4"] = tp["fc4_w"].T
    p["b4"] = tp["fc4_b"].reshape(1, -1)

    def split_reim(w):
        # torch input index j = k*2M + part*M + m  (concat_H flatten);
        # kernel row index of each half = k*M + m.
        out_dim = w.shape[0]
        w4d = w.reshape(out_dim, K, 2, M)
        w_re = w4d[:, :, 0, :].reshape(out_dim, KM).T
        w_im = w4d[:, :, 1, :].reshape(out_dim, KM).T
        return w_re, w_im

    p["wb1_re"], p["wb1_im"] = split_reim(tp["beam1_w"])
    p["bb1"] = tp["beam1_b"].reshape(1, -1)
    p["wb2"] = tp["beam2_w"].T
    p["bb2"] = tp["beam2_b"].reshape(1, -1)
    p["wb3"] = tp["beam3_w"].T
    p["bb3"] = tp["beam3_b"].reshape(1, -1)
    p["wp1_re"], p["wp1_im"] = split_reim(tp["pow1_w"])
    p["bp1"] = tp["pow1_b"].reshape(1, -1)
    p["wp2"] = tp["pow2_w"].T
    p["bp2"] = tp["pow2_b"].reshape(1, -1)
    return p


# ----------------------------------------------------------------------------
# Forward pass (single fused pallas_call, gridded over batch blocks)
# ----------------------------------------------------------------------------
def _pick_bt(B):
    for cand in (128, 64, 32, 16, 8):          # prefer >=2 grid steps (v7x megacore)
        if B % cand == 0 and B // cand >= 2:
            return cand
    for cand in (128, 64, 32, 16, 8):
        if B % cand == 0:
            return cand
    return B


def dnn_forward(params, x, H, channel_bs_user, *, M, N, L, K, Pt,
                bt=None, use_bf16_matmul=False):
    """
    x:               (B, L, 2K, M, N+1) float32
    H:               (B, M, N, L, K)    complex64
    channel_bs_user: (B, K, M)          complex64
    returns (W (B, K+1, 2M), Theta (B, L, N, 2), mu (B, 2))
    """
    B = x.shape[0]
    Np1 = N + 1
    P = M * Np1
    LN = L * N
    KM = K * M
    n_w = 2 * M * (K + 1)
    packed_width = 2 * LN + n_w + 2
    out_lanes = ((packed_width + 127) // 128) * 128

    if bt is None:
        bt = _pick_bt(B)
    assert B % bt == 0, f"batch {B} must be divisible by batch block {bt}"
    nb = B // bt

    # ---- host-side layout plumbing (one-time XLA transposes; no kernel relayouts) ----
    # conv/fc rows ordered (p, l, b) inside each block so fc3 slabs are contiguous and
    # the theta stage comes out with rows ordered (l, b).
    x_blk = x.astype(jnp.float32).reshape(nb, bt, L, 2 * K, M, Np1)
    x_rows = jnp.transpose(x_blk, (0, 4, 5, 2, 1, 3)).reshape(nb, P * L * bt, 2 * K)

    Hr = jnp.real(H).astype(jnp.float32).reshape(nb, bt, M, N, L, K)
    Hi = jnp.imag(H).astype(jnp.float32).reshape(nb, bt, M, N, L, K)
    hr = jnp.transpose(Hr, (0, 4, 3, 1, 5, 2)).reshape(nb, LN, bt, KM)
    hi = jnp.transpose(Hi, (0, 4, 3, 1, 5, 2)).reshape(nb, LN, bt, KM)

    hbr = jnp.real(channel_bs_user).astype(jnp.float32).reshape(nb, bt, KM)
    hbi = jnp.imag(channel_bs_user).astype(jnp.float32).reshape(nb, bt, KM)

    def blk(shape):
        nd = len(shape)
        return pl.BlockSpec((None,) + tuple(shape),
                            lambda i, _nd=nd: (i,) + (0,) * _nd)

    def full(arr):
        z = (0,) * arr.ndim
        return pl.BlockSpec(arr.shape, lambda i, _z=z: _z)

    weight_keys = ("w1", "b1", "w2", "b2", "w3", "b3", "w4", "b4",
                   "wb1_re", "wb1_im", "bb1", "wb2", "bb2", "wb3", "bb3",
                   "wp1_re", "wp1_im", "bp1", "wp2", "bp2")
    weights = [params[k] for k in weight_keys]

    in_specs = ([blk((P * L * bt, 2 * K)),
                 blk((LN, bt, KM)),
                 blk((LN, bt, KM)),
                 blk((bt, KM)),
                 blk((bt, KM))]
                + [full(w) for w in weights])

    kernel = functools.partial(
        dnn_kernel, M=M, N=N, L=L, K=K, P=P, Bt=bt, n_w=n_w,
        out_lanes=out_lanes, sqrt_pt=float(math.sqrt(Pt)),
        use_bf16=use_bf16_matmul)

    packed = pl.pallas_call(
        kernel,
        grid=(nb,),
        in_specs=in_specs,
        out_specs=blk((bt, out_lanes)),
        out_shape=jax.ShapeDtypeStruct((nb, bt, out_lanes), jnp.float32),
        compiler_params=pltpu.CompilerParams(
            dimension_semantics=("parallel",)),
    )(x_rows, hr, hi, hbr, hbi, *weights)

    # ---- cheap XLA-side unpacking of the lane-dense output ----
    packed = packed.reshape(B, out_lanes)
    theta = packed[:, :2 * LN].reshape(B, L, 2, N)
    Theta = jnp.transpose(theta, (0, 1, 3, 2))                       # (B, L, N, 2)
    W = packed[:, 2 * LN:2 * LN + n_w].reshape(B, K + 1, 2 * M)
    mu = packed[:, 2 * LN + n_w:2 * LN + n_w + 2]
    return W, Theta, mu


# ----------------------------------------------------------------------------
# Pure-JAX reference (mirrors the PyTorch forward) for a numerical check
# ----------------------------------------------------------------------------
def dnn_reference(tp, x, H, cbu, *, M, N, L, K, Pt):
    hp = jax.lax.Precision.HIGHEST
    B = x.shape[0]

    def phasenet(xl):                                                # (B, 2K, M, N+1)
        y = jnp.einsum("bcmn,oc->bomn", xl, tp["conv1_w"], precision=hp)
        y = jnp.maximum(y + tp["conv1_b"][None, :, None, None], 0.0)
        y = jnp.einsum("bcmn,oc->bomn", y, tp["conv2_w"], precision=hp)
        y = jnp.maximum(y + tp["conv2_b"][None, :, None, None], 0.0)
        flat = y.reshape(B, -1)                                      # torch Flatten (c,m,n)
        h = jnp.maximum(jnp.dot(flat, tp["fc3_w"].T, precision=hp) + tp["fc3_b"], 0.0)
        return jnp.dot(h, tp["fc4_w"].T, precision=hp) + tp["fc4_b"]

    thetas = []
    for l in range(L):
        Rl = phasenet(x[:, l])
        re, im = Rl[:, :N], Rl[:, N:]
        nrm = jnp.maximum(jnp.sqrt(re * re + im * im), 1e-12)
        thetas.append(jnp.stack([re / nrm, im / nrm], axis=-1))
    Theta = jnp.stack(thetas, axis=1)                                # (B, L, N, 2)

    Hr, Hi = jnp.real(H), jnp.imag(H)                                # (B, M, N, L, K)
    t_re, t_im = Theta[..., 0], Theta[..., 1]                        # (B, L, N)
    re_p = (jnp.einsum("bmnlk,bln->bkm", Hr, t_re, precision=hp)
            + jnp.einsum("bmnlk,bln->bkm", Hi, t_im, precision=hp) + jnp.real(cbu))
    im_p = (jnp.einsum("bmnlk,bln->bkm", Hr, t_im, precision=hp)
            - jnp.einsum("bmnlk,bln->bkm", Hi, t_re, precision=hp) + jnp.imag(cbu))
    concat_H = jnp.concatenate([re_p, im_p], axis=-1).reshape(B, -1)  # (B, 2KM)

    h1 = jnp.maximum(jnp.dot(concat_H, tp["beam1_w"].T, precision=hp) + tp["beam1_b"], 0.0)
    h2 = jnp.maximum(jnp.dot(h1, tp["beam2_w"].T, precision=hp) + tp["beam2_b"], 0.0)
    Wr = jnp.dot(h2, tp["beam3_w"].T, precision=hp) + tp["beam3_b"]
    p1 = jnp.maximum(jnp.dot(concat_H, tp["pow1_w"].T, precision=hp) + tp["pow1_b"], 0.0)
    mu = jax.nn.softmax(jnp.dot(p1, tp["pow2_w"].T, precision=hp) + tp["pow2_b"], axis=1)
    nw = jnp.maximum(jnp.sqrt(jnp.sum(Wr * Wr, axis=1, keepdims=True)), 1e-12)
    W = Wr / nw * math.sqrt(Pt) * jnp.sqrt(mu[:, 0:1])
    return W.reshape(B, K + 1, 2 * M), Theta, mu


# ----------------------------------------------------------------------------
if __name__ == "__main__":
    M, N, L, K = 4, 8, 2, 4
    Pt = 10.0
    B = 16                                  # -> Bt = 8, grid = (2,)

    key = jax.random.PRNGKey(0)
    kp, kx, khr, khi, kcr, kci = jax.random.split(key, 6)

    torch_params = init_torch_params(kp, M, N, L, K)
    params = to_kernel_params(torch_params, M, N, L, K)

    x = jax.random.normal(kx, (B, L, 2 * K, M, N + 1), jnp.float32)
    H = (jax.random.normal(khr, (B, M, N, L, K), jnp.float32)
         + 1j * jax.random.normal(khi, (B, M, N, L, K), jnp.float32)).astype(jnp.complex64)
    channel_bs_user = (jax.random.normal(kcr, (B, K, M), jnp.float32)
                       + 1j * jax.random.normal(kci, (B, K, M), jnp.float32)
                       ).astype(jnp.complex64)

    fwd = jax.jit(functools.partial(dnn_forward, M=M, N=N, L=L, K=K, Pt=Pt))
    W, Theta, mu = fwd(params, x, H, channel_bs_user)
    jax.block_until_ready((W, Theta, mu))

    assert W.shape == (B, K + 1, 2 * M)
    assert Theta.shape == (B, L, N, 2)
    assert mu.shape == (B, 2)

    # numerical check against the pure-JAX reference of the PyTorch forward
    ref = jax.jit(functools.partial(dnn_reference, M=M, N=N, L=L, K=K, Pt=Pt))
    W_r, Theta_r, mu_r = ref(torch_params, x, H, channel_bs_user)
    err = max(float(jnp.max(jnp.abs(W - W_r))),
              float(jnp.max(jnp.abs(Theta - Theta_r))),
              float(jnp.max(jnp.abs(mu - mu_r))))
    assert err < 3e-2, f"kernel/reference mismatch: max abs err = {err}"

    print("KERNEL_OK")
</pallas_src>

<mosaic_0001>
module attributes {stable_mosaic.version = 11 : i64} {
  func.func @dnn_kernel(%arg0: i32, %arg1: memref<1x576x8xf32, #tpu.memory_space<vmem>>, %arg2: memref<1x16x8x16xf32, #tpu.memory_space<vmem>>, %arg3: memref<1x16x8x16xf32, #tpu.memory_space<vmem>>, %arg4: memref<1x8x16xf32, #tpu.memory_space<vmem>>, %arg5: memref<1x8x16xf32, #tpu.memory_space<vmem>>, %arg6: memref<8x64xf32, #tpu.memory_space<vmem>>, %arg7: memref<1x64xf32, #tpu.memory_space<vmem>>, %arg8: memref<64x64xf32, #tpu.memory_space<vmem>>, %arg9: memref<1x64xf32, #tpu.memory_space<vmem>>, %arg10: memref<2304x32xf32, #tpu.memory_space<vmem>>, %arg11: memref<1x32xf32, #tpu.memory_space<vmem>>, %arg12: memref<32x16xf32, #tpu.memory_space<vmem>>, %arg13: memref<1x16xf32, #tpu.memory_space<vmem>>, %arg14: memref<16x128xf32, #tpu.memory_space<vmem>>, %arg15: memref<16x128xf32, #tpu.memory_space<vmem>>, %arg16: memref<1x128xf32, #tpu.memory_space<vmem>>, %arg17: memref<128x128xf32, #tpu.memory_space<vmem>>, %arg18: memref<1x128xf32, #tpu.memory_space<vmem>>, %arg19: memref<128x40xf32, #tpu.memory_space<vmem>>, %arg20: memref<1x40xf32, #tpu.memory_space<vmem>>, %arg21: memref<16x128xf32, #tpu.memory_space<vmem>>, %arg22: memref<16x128xf32, #tpu.memory_space<vmem>>, %arg23: memref<1x128xf32, #tpu.memory_space<vmem>>, %arg24: memref<128x2xf32, #tpu.memory_space<vmem>>, %arg25: memref<1x2xf32, #tpu.memory_space<vmem>>, %arg26: memref<1x8x128xf32, #tpu.memory_space<vmem>>) attributes {dimension_semantics = [#tpu.dimension_semantics<parallel>], iteration_bounds = array<i64: 2>, scalar_prefetch = 0 : i64, scratch_operands = 0 : i64, tpu.core_type = #tpu.core_type<tc>, window_params = [{transform_indices = @transform_0, window_bounds = array<i64: 1, 576, 8>}, {transform_indices = @transform_1, window_bounds = array<i64: 1, 16, 8, 16>}, {transform_indices = @transform_2, window_bounds = array<i64: 1, 16, 8, 16>}, {transform_indices = @transform_3, window_bounds = array<i64: 1, 8, 16>}, {transform_indices = @transform_4, window_bounds = array<i64: 1, 8, 16>}, {pipeline_mode = #tpu.pipeline_mode<synchronous>, transform_indices = @transform_5, window_bounds = array<i64: 8, 64>}, {pipeline_mode = #tpu.pipeline_mode<synchronous>, transform_indices = @transform_6, window_bounds = array<i64: 1, 64>}, {pipeline_mode = #tpu.pipeline_mode<synchronous>, transform_indices = @transform_7, window_bounds = array<i64: 64, 64>}, {pipeline_mode = #tpu.pipeline_mode<synchronous>, transform_indices = @transform_8, window_bounds = array<i64: 1, 64>}, {pipeline_mode = #tpu.pipeline_mode<synchronous>, transform_indices = @transform_9, window_bounds = array<i64: 2304, 32>}, {pipeline_mode = #tpu.pipeline_mode<synchronous>, transform_indices = @transform_10, window_bounds = array<i64: 1, 32>}, {pipeline_mode = #tpu.pipeline_mode<synchronous>, transform_indices = @transform_11, window_bounds = array<i64: 32, 16>}, {pipeline_mode = #tpu.pipeline_mode<synchronous>, transform_indices = @transform_12, window_bounds = array<i64: 1, 16>}, {pipeline_mode = #tpu.pipeline_mode<synchronous>, transform_indices = @transform_13, window_bounds = array<i64: 16, 128>}, {pipeline_mode = #tpu.pipeline_mode<synchronous>, transform_indices = @transform_14, window_bounds = array<i64: 16, 128>}, {pipeline_mode = #tpu.pipeline_mode<synchronous>, transform_indices = @transform_15, window_bounds = array<i64: 1, 128>}, {pipeline_mode = #tpu.pipeline_mode<synchronous>, transform_indices = @transform_16, window_bounds = array<i64: 128, 128>}, {pipeline_mode = #tpu.pipeline_mode<synchronous>, transform_indices = @transform_17, window_bounds = array<i64: 1, 128>}, {pipeline_mode = #tpu.pipeline_mode<synchronous>, transform_indices = @transform_18, window_bounds = array<i64: 128, 40>}, {pipeline_mode = #tpu.pipeline_mode<synchronous>, transform_indices = @transform_19, window_bounds = array<i64: 1, 40>}, {pipeline_mode = #tpu.pipeline_mode<synchronous>, transform_indices = @transform_20, window_bounds = array<i64: 16, 128>}, {pipeline_mode = #tpu.pipeline_mode<synchronous>, transform_indices = @transform_21, window_bounds = array<i64: 16, 128>}, {pipeline_mode = #tpu.pipeline_mode<synchronous>, transform_indices = @transform_22, window_bounds = array<i64: 1, 128>}, {pipeline_mode = #tpu.pipeline_mode<synchronous>, transform_indices = @transform_23, window_bounds = array<i64: 128, 2>}, {pipeline_mode = #tpu.pipeline_mode<synchronous>, transform_indices = @transform_24, window_bounds = array<i64: 1, 2>}, {transform_indices = @transform_25, window_bounds = array<i64: 1, 8, 128>}]} {
    %c0 = arith.constant 0 : index
    %c0_0 = arith.constant 0 : index
    %c0_1 = arith.constant 0 : index
    %0 = vector.load %arg1[%c0, %c0_0, %c0_1] : memref<1x576x8xf32, #tpu.memory_space<vmem>>, vector<1x576x8xf32>
    %1 = vector.shape_cast %0 : vector<1x576x8xf32> to vector<576x8xf32>
    %c0_2 = arith.constant 0 : index
    %c0_3 = arith.constant 0 : index
    %2 = vector.load %arg6[%c0_2, %c0_3] : memref<8x64xf32, #tpu.memory_space<vmem>>, vector<8x64xf32>
    %cst = arith.constant dense<0.000000e+00> : vector<576x64xf32>
    %3 = tpu.matmul %1, %2, %cst {dimension_numbers = #tpu.dot_dimension_numbers<[1], [0], [0], [1], [0, 0, 1, 1], [], []>} : vector<576x8xf32>, vector<8x64xf32>, vector<576x64xf32> -> vector<576x64xf32>
    %c0_4 = arith.constant 0 : index
    %c0_5 = arith.constant 0 : index
    %4 = vector.load %arg7[%c0_4, %c0_5] : memref<1x64xf32, #tpu.memory_space<vmem>>, vector<1x64xf32>
    %5 = vector.broadcast %4 : vector<1x64xf32> to vector<576x64xf32>
    %6 = arith.addf %3, %5 : vector<576x64xf32>
    %cst_6 = arith.constant 0.000000e+00 : f32
    %7 = vector.broadcast %cst_6 : f32 to vector<576x64xf32>
    %8 = arith.maximumf %6, %7 : vector<576x64xf32>
    %c0_7 = arith.constant 0 : index
    %c0_8 = arith.constant 0 : index
    %9 = vector.load %arg8[%c0_7, %c0_8] : memref<64x64xf32, #tpu.memory_space<vmem>>, vector<64x64xf32>
    %cst_9 = arith.constant dense<0.000000e+00> : vector<576x64xf32>
    %10 = tpu.matmul %8, %9, %cst_9 {dimension_numbers = #tpu.dot_dimension_numbers<[1], [0], [0], [1], [0, 0, 1, 1], [], []>} : vector<576x64xf32>, vector<64x64xf32>, vector<576x64xf32> -> vector<576x64xf32>
    %c0_10 = arith.constant 0 : index
    %c0_11 = arith.constant 0 : index
    %11 = vector.load %arg9[%c0_10, %c0_11] : memref<1x64xf32, #tpu.memory_space<vmem>>, vector<1x64xf32>
    %12 = vector.broadcast %11 : vector<1x64xf32> to vector<576x64xf32>
    %13 = arith.addf %10, %12 : vector<576x64xf32>
    %cst_12 = arith.constant 0.000000e+00 : f32
    %14 = vector.broadcast %cst_12 : f32 to vector<576x64xf32>
    %15 = arith.maximumf %13, %14 : vector<576x64xf32>
    %cst_13 = arith.constant 0.000000e+00 : f32
    %16 = vector.broadcast %cst_13 : f32 to vector<16x32xf32>
    %17 = vector.extract_strided_slice %15 {offsets = [0, 0], sizes = [16, 64], strides = [1, 1]} : vector<576x64xf32> to vector<16x64xf32>
    %c0_14 = arith.constant 0 : index
    %c0_15 = arith.constant 0 : index
    %18 = vector.load %arg10[%c0_14, %c0_15] : memref<2304x32xf32, #tpu.memory_space<vmem>>, vector<64x32xf32>
    %cst_16 = arith.constant dense<0.000000e+00> : vector<16x32xf32>
    %19 = tpu.matmul %17, %18, %cst_16 {dimension_numbers = #tpu.dot_dimension_numbers<[1], [0], [0], [1], [0, 0, 1, 1], [], []>} : vector<16x64xf32>, vector<64x32xf32>, vector<16x32xf32> -> vector<16x32xf32>
    %20 = arith.addf %16, %19 : vector<16x32xf32>
    %21 = vector.extract_strided_slice %15 {offsets = [16, 0], sizes = [16, 64], strides = [1, 1]} : vector<576x64xf32> to vector<16x64xf32>
    %c64 = arith.constant 64 : index
    %c0_17 = arith.constant 0 : index
    %22 = vector.load %arg10[%c64, %c0_17] : memref<2304x32xf32, #tpu.memory_space<vmem>>, vector<64x32xf32>
    %cst_18 = arith.constant dense<0.000000e+00> : vector<16x32xf32>
    %23 = tpu.matmul %21, %22, %cst_18 {dimension_numbers = #tpu.dot_dimension_numbers<[1], [0], [0], [1], [0, 0, 1, 1], [], []>} : vector<16x64xf32>, vector<64x32xf32>, vector<16x32xf32> -> vector<16x32xf32>
    %24 = arith.addf %20, %23 : vector<16x32xf32>
    %25 = vector.extract_strided_slice %15 {offsets = [32, 0], sizes = [16, 64], strides = [1, 1]} : vector<576x64xf32> to vector<16x64xf32>
    %c128 = arith.constant 128 : index
    %c0_19 = arith.constant 0 : index
    %26 = vector.load %arg10[%c128, %c0_19] : memref<2304x32xf32, #tpu.memory_space<vmem>>, vector<64x32xf32>
    %cst_20 = arith.constant dense<0.000000e+00> : vector<16x32xf32>
    %27 = tpu.matmul %25, %26, %cst_20 {dimension_numbers = #tpu.dot_dimension_numbers<[1], [0], [0], [1], [0, 0, 1, 1], [], []>} : vector<16x64xf32>, vector<64x32xf32>, vector<16x32xf32> -> vector<16x32xf32>
    %28 = arith.addf %24, %27 : vector<16x32xf32>
    %29 = vector.extract_strided_slice %15 {offsets = [48, 0], sizes = [16, 64], strides = [1, 1]} : vector<576x64xf32> to vector<16x64xf32>
    %c192 = arith.constant 192 : index
    %c0_21 = arith.constant 0 : index
    %30 = vector.load %arg10[%c192, %c0_21] : memref<2304x32xf32, #tpu.memory_space<vmem>>, vector<64x32xf32>
    %cst_22 = arith.constant dense<0.000000e+00> : vector<16x32xf32>
    %31 = tpu.matmul %29, %30, %cst_22 {dimension_numbers = #tpu.dot_dimension_numbers<[1], [0], [0], [1], [0, 0, 1, 1], [], []>} : vector<16x64xf32>, vector<64x32xf32>, vector<16x32xf32> -> vector<16x32xf32>
    %32 = arith.addf %28, %31 : vector<16x32xf32>
    %33 = vector.extract_strided_slice %15 {offsets = [64, 0], sizes = [16, 64], strides = [1, 1]} : vector<576x64xf32> to vector<16x64xf32>
    %c256 = arith.constant 256 : index
    %c0_23 = arith.constant 0 : index
    %34 = vector.load %arg10[%c256, %c0_23] : memref<2304x32xf32, #tpu.memory_space<vmem>>, vector<64x32xf32>
    %cst_24 = arith.constant dense<0.000000e+00> : vector<16x32xf32>
    %35 = tpu.matmul %33, %34, %cst_24 {dimension_numbers = #tpu.dot_dimension_numbers<[1], [0], [0], [1], [0, 0, 1, 1], [], []>} : vector<16x64xf32>, vector<64x32xf32>, vector<16x32xf32> -> vector<16x32xf32>
    %36 = arith.addf %32, %35 : vector<16x32xf32>
    %37 = vector.extract_strided_slice %15 {offsets = [80, 0], sizes = [16, 64], strides = [1, 1]} : vector<576x64xf32> to vector<16x64xf32>
    %c320 = arith.constant 320 : index
    %c0_25 = arith.constant 0 : index
    %38 = vector.load %arg10[%c320, %c0_25] : memref<2304x32xf32, #tpu.memory_space<vmem>>, vector<64x32xf32>
    %cst_26 = arith.constant dense<0.000000e+00> : vector<16x32xf32>
    %39 = tpu.matmul %37, %38, %cst_26 {dimension_numbers = #tpu.dot_dimension_numbers<[1], [0], [0], [1], [0, 0, 1, 1], [], []>} : vector<16x64xf32>, vector<64x32xf32>, vector<16x32xf32> -> vector<16x32xf32>
    %40 = arith.addf %36, %39 : vector<16x32xf32>
    %41 = vector.extract_strided_slice %15 {offsets = [96, 0], sizes = [16, 64], strides = [1, 1]} : vector<576x64xf32> to vector<16x64xf32>
    %c384 = arith.constant 384 : index
    %c0_27 = arith.constant 0 : index
    %42 = vector.load %arg10[%c384, %c0_27] : memref<2304x32xf32, #tpu.memory_space<vmem>>, vector<64x32xf32>
    %cst_28 = arith.constant dense<0.000000e+00> : vector<16x32xf32>
    %43 = tpu.matmul %41, %42, %cst_28 {dimension_numbers = #tpu.dot_dimension_numbers<[1], [0], [0], [1], [0, 0, 1, 1], [], []>} : vector<16x64xf32>, vector<64x32xf32>, vector<16x32xf32> -> vector<16x32xf32>
    %44 = arith.addf %40, %43 : vector<16x32xf32>
    %45 = vector.extract_strided_slice %15 {offsets = [112, 0], sizes = [16, 64], strides = [1, 1]} : vector<576x64xf32> to vector<16x64xf32>
    %c448 = arith.constant 448 : index
    %c0_29 = arith.constant 0 : index
    %46 = vector.load %arg10[%c448, %c0_29] : memref<2304x32xf32, #tpu.memory_space<vmem>>, vector<64x32xf32>
    %cst_30 = arith.constant dense<0.000000e+00> : vector<16x32xf32>
    %47 = tpu.matmul %45, %46, %cst_30 {dimension_numbers = #tpu.dot_dimension_numbers<[1], [0], [0], [1], [0, 0, 1, 1], [], []>} : vector<16x64xf32>, vector<64x32xf32>, vector<16x32xf32> -> vector<16x32xf32>
    %48 = arith.addf %44, %47 : vector<16x32xf32>
    %49 = vector.extract_strided_slice %15 {offsets = [128, 0], sizes = [16, 64], strides = [1, 1]} : vector<576x64xf32> to vector<16x64xf32>
    %c512 = arith.constant 512 : index
    %c0_31 = arith.constant 0 : index
    %50 = vector.load %arg10[%c512, %c0_31] : memref<2304x32xf32, #tpu.memory_space<vmem>>, vector<64x32xf32>
    %cst_32 = arith.constant dense<0.000000e+00> : vector<16x32xf32>
    %51 = tpu.matmul %49, %50, %cst_32 {dimension_numbers = #tpu.dot_dimension_numbers<[1], [0], [0], [1], [0, 0, 1, 1], [], []>} : vector<16x64xf32>, vector<64x32xf32>, vector<16x32xf32> -> vector<16x32xf32>
    %52 = arith.addf %48, %51 : vector<16x32xf32>
    %53 = vector.extract_strided_slice %15 {offsets = [144, 0], sizes = [16, 64], strides = [1, 1]} : vector<576x64xf32> to vector<16x64xf32>
    %c576 = arith.constant 576 : index
    %c0_33 = arith.constant 0 : index
    %54 = vector.load %arg10[%c576, %c0_33] : memref<2304x32xf32, #tpu.memory_space<vmem>>, vector<64x32xf32>
    %cst_34 = arith.constant dense<0.000000e+00> : vector<16x32xf32>
    %55 = tpu.matmul %53, %54, %cst_34 {dimension_numbers = #tpu.dot_dimension_numbers<[1], [0], [0], [1], [0, 0, 1, 1], [], []>} : vector<16x64xf32>, vector<64x32xf32>, vector<16x32xf32> -> vector<16x32xf32>
    %56 = arith.addf %52, %55 : vector<16x32xf32>
    %57 = vector.extract_strided_slice %15 {offsets = [160, 0], sizes = [16, 64], strides = [1, 1]} : vector<576x64xf32> to vector<16x64xf32>
    %c640 = arith.constant 640 : index
    %c0_35 = arith.constant 0 : index
    %58 = vector.load %arg10[%c640, %c0_35] : memref<2304x32xf32, #tpu.memory_space<vmem>>, vector<64x32xf32>
    %cst_36 = arith.constant dense<0.000000e+00> : vector<16x32xf32>
    %59 = tpu.matmul %57, %58, %cst_36 {dimension_numbers = #tpu.dot_dimension_numbers<[1], [0], [0], [1], [0, 0, 1, 1], [], []>} : vector<16x64xf32>, vector<64x32xf32>, vector<16x32xf32> -> vector<16x32xf32>
    %60 = arith.addf %56, %59 : vector<16x32xf32>
    %61 = vector.extract_strided_slice %15 {offsets = [176, 0], sizes = [16, 64], strides = [1, 1]} : vector<576x64xf32> to vector<16x64xf32>
    %c704 = arith.constant 704 : index
    %c0_37 = arith.constant 0 : index
    %62 = vector.load %arg10[%c704, %c0_37] : memref<2304x32xf32, #tpu.memory_space<vmem>>, vector<64x32xf32>
    %cst_38 = arith.constant dense<0.000000e+00> : vector<16x32xf32>
    %63 = tpu.matmul %61, %62, %cst_38 {dimension_numbers = #tpu.dot_dimension_numbers<[1], [0], [0], [1], [0, 0, 1, 1], [], []>} : vector<16x64xf32>, vector<64x32xf32>, vector<16x32xf32> -> vector<16x32xf32>
    %64 = arith.addf %60, %63 : vector<16x32xf32>
    %65 = vector.extract_strided_slice %15 {offsets = [192, 0], sizes = [16, 64], strides = [1, 1]} : vector<576x64xf32> to vector<16x64xf32>
    %c768 = arith.constant 768 : index
    %c0_39 = arith.constant 0 : index
    %66 = vector.load %arg10[%c768, %c0_39] : memref<2304x32xf32, #tpu.memory_space<vmem>>, vector<64x32xf32>
    %cst_40 = arith.constant dense<0.000000e+00> : vector<16x32xf32>
    %67 = tpu.matmul %65, %66, %cst_40 {dimension_numbers = #tpu.dot_dimension_numbers<[1], [0], [0], [1], [0, 0, 1, 1], [], []>} : vector<16x64xf32>, vector<64x32xf32>, vector<16x32xf32> -> vector<16x32xf32>
    %68 = arith.addf %64, %67 : vector<16x32xf32>
    %69 = vector.extract_strided_slice %15 {offsets = [208, 0], sizes = [16, 64], strides = [1, 1]} : vector<576x64xf32> to vector<16x64xf32>
    %c832 = arith.constant 832 : index
    %c0_41 = arith.constant 0 : index
    %70 = vector.load %arg10[%c832, %c0_41] : memref<2304x32xf32, #tpu.memory_space<vmem>>, vector<64x32xf32>
    %cst_42 = arith.constant dense<0.000000e+00> : vector<16x32xf32>
    %71 = tpu.matmul %69, %70, %cst_42 {dimension_numbers = #tpu.dot_dimension_numbers<[1], [0], [0], [1], [0, 0, 1, 1], [], []>} : vector<16x64xf32>, vector<64x32xf32>, vector<16x32xf32> -> vector<16x32xf32>
    %72 = arith.addf %68, %71 : vector<16x32xf32>
    %73 = vector.extract_strided_slice %15 {offsets = [224, 0], sizes = [16, 64], strides = [1, 1]} : vector<576x64xf32> to vector<16x64xf32>
    %c896 = arith.constant 896 : index
    %c0_43 = arith.constant 0 : index
    %74 = vector.load %arg10[%c896, %c0_43] : memref<2304x32xf32, #tpu.memory_space<vmem>>, vector<64x32xf32>
    %cst_44 = arith.constant dense<0.000000e+00> : vector<16x32xf32>
    %75 = tpu.matmul %73, %74, %cst_44 {dimension_numbers = #tpu.dot_dimension_numbers<[1], [0], [0], [1], [0, 0, 1, 1], [], []>} : vector<16x64xf32>, vector<64x32xf32>, vector<16x32xf32> -> vector<16x32xf32>
    %76 = arith.addf %72, %75 : vector<16x32xf32>
    %77 = vector.extract_strided_slice %15 {offsets = [240, 0], sizes = [16, 64], strides = [1, 1]} : vector<576x64xf32> to vector<16x64xf32>
    %c960 = arith.constant 960 : index
    %c0_45 = arith.constant 0 : index
    %78 = vector.load %arg10[%c960, %c0_45] : memref<2304x32xf32, #tpu.memory_space<vmem>>, vector<64x32xf32>
    %cst_46 = arith.constant dense<0.000000e+00> : vector<16x32xf32>
    %79 = tpu.matmul %77, %78, %cst_46 {dimension_numbers = #tpu.dot_dimension_numbers<[1], [0], [0], [1], [0, 0, 1, 1], [], []>} : vector<16x64xf32>, vector<64x32xf32>, vector<16x32xf32> -> vector<16x32xf32>
    %80 = arith.addf %76, %79 : vector<16x32xf32>
    %81 = vector.extract_strided_slice %15 {offsets = [256, 0], sizes = [16, 64], strides = [1, 1]} : vector<576x64xf32> to vector<16x64xf32>
    %c1024 = arith.constant 1024 : index
    %c0_47 = arith.constant 0 : index
    %82 = vector.load %arg10[%c1024, %c0_47] : memref<2304x32xf32, #tpu.memory_space<vmem>>, vector<64x32xf32>
    %cst_48 = arith.constant dense<0.000000e+00> : vector<16x32xf32>
    %83 = tpu.matmul %81, %82, %cst_48 {dimension_numbers = #tpu.dot_dimension_numbers<[1], [0], [0], [1], [0, 0, 1, 1], [], []>} : vector<16x64xf32>, vector<64x32xf32>, vector<16x32xf32> -> vector<16x32xf32>
    %84 = arith.addf %80, %83 : vector<16x32xf32>
    %85 = vector.extract_strided_slice %15 {offsets = [272, 0], sizes = [16, 64], strides = [1, 1]} : vector<576x64xf32> to vector<16x64xf32>
    %c1088 = arith.constant 1088 : index
    %c0_49 = arith.constant 0 : index
    %86 = vector.load %arg10[%c1088, %c0_49] : memref<2304x32xf32, #tpu.memory_space<vmem>>, vector<64x32xf32>
    %cst_50 = arith.constant dense<0.000000e+00> : vector<16x32xf32>
    %87 = tpu.matmul %85, %86, %cst_50 {dimension_numbers = #tpu.dot_dimension_numbers<[1], [0], [0], [1], [0, 0, 1, 1], [], []>} : vector<16x64xf32>, vector<64x32xf32>, vector<16x32xf32> -> vector<16x32xf32>
    %88 = arith.addf %84, %87 : vector<16x32xf32>
    %89 = vector.extract_strided_slice %15 {offsets = [288, 0], sizes = [16, 64], strides = [1, 1]} : vector<576x64xf32> to vector<16x64xf32>
    %c1152 = arith.constant 1152 : index
    %c0_51 = arith.constant 0 : index
    %90 = vector.load %arg10[%c1152, %c0_51] : memref<2304x32xf32, #tpu.memory_space<vmem>>, vector<64x32xf32>
    %cst_52 = arith.constant dense<0.000000e+00> : vector<16x32xf32>
    %91 = tpu.matmul %89, %90, %cst_52 {dimension_numbers = #tpu.dot_dimension_numbers<[1], [0], [0], [1], [0, 0, 1, 1], [], []>} : vector<16x64xf32>, vector<64x32xf32>, vector<16x32xf32> -> vector<16x32xf32>
    %92 = arith.addf %88, %91 : vector<16x32xf32>
    %93 = vector.extract_strided_slice %15 {offsets = [304, 0], sizes = [16, 64], strides = [1, 1]} : vector<576x64xf32> to vector<16x64xf32>
    %c1216 = arith.constant 1216 : index
    %c0_53 = arith.constant 0 : index
    %94 = vector.load %arg10[%c1216, %c0_53] : memref<2304x32xf32, #tpu.memory_space<vmem>>, vector<64x32xf32>
    %cst_54 = arith.constant dense<0.000000e+00> : vector<16x32xf32>
    %95 = tpu.matmul %93, %94, %cst_54 {dimension_numbers = #tpu.dot_dimension_numbers<[1], [0], [0], [1], [0, 0, 1, 1], [], []>} : vector<16x64xf32>, vector<64x32xf32>, vector<16x32xf32> -> vector<16x32xf32>
    %96 = arith.addf %92, %95 : vector<16x32xf32>
    %97 = vector.extract_strided_slice %15 {offsets = [320, 0], sizes = [16, 64], strides = [1, 1]} : vector<576x64xf32> to vector<16x64xf32>
    %c1280 = arith.constant 1280 : index
    %c0_55 = arith.constant 0 : index
    %98 = vector.load %arg10[%c1280, %c0_55] : memref<2304x32xf32, #tpu.memory_space<vmem>>, vector<64x32xf32>
    %cst_56 = arith.constant dense<0.000000e+00> : vector<16x32xf32>
    %99 = tpu.matmul %97, %98, %cst_56 {dimension_numbers = #tpu.dot_dimension_numbers<[1], [0], [0], [1], [0, 0, 1, 1], [], []>} : vector<16x64xf32>, vector<64x32xf32>, vector<16x32xf32> -> vector<16x32xf32>
    %100 = arith.addf %96, %99 : vector<16x32xf32>
    %101 = vector.extract_strided_slice %15 {offsets = [336, 0], sizes = [16, 64], strides = [1, 1]} : vector<576x64xf32> to vector<16x64xf32>
    %c1344 = arith.constant 1344 : index
    %c0_57 = arith.constant 0 : index
    %102 = vector.load %arg10[%c1344, %c0_57] : memref<2304x32xf32, #tpu.memory_space<vmem>>, vector<64x32xf32>
    %cst_58 = arith.constant dense<0.000000e+00> : vector<16x32xf32>
    %103 = tpu.matmul %101, %102, %cst_58 {dimension_numbers = #tpu.dot_dimension_numbers<[1], [0], [0], [1], [0, 0, 1, 1], [], []>} : vector<16x64xf32>, vector<64x32xf32>, vector<16x32xf32> -> vector<16x32xf32>
    %104 = arith.addf %100, %103 : vector<16x32xf32>
    %105 = vector.extract_strided_slice %15 {offsets = [352, 0], sizes = [16, 64], strides = [1, 1]} : vector<576x64xf32> to vector<16x64xf32>
    %c1408 = arith.constant 1408 : index
    %c0_59 = arith.constant 0 : index
    %106 = vector.load %arg10[%c1408, %c0_59] : memref<2304x32xf32, #tpu.memory_space<vmem>>, vector<64x32xf32>
    %cst_60 = arith.constant dense<0.000000e+00> : vector<16x32xf32>
    %107 = tpu.matmul %105, %106, %cst_60 {dimension_numbers = #tpu.dot_dimension_numbers<[1], [0], [0], [1], [0, 0, 1, 1], [], []>} : vector<16x64xf32>, vector<64x32xf32>, vector<16x32xf32> -> vector<16x32xf32>
    %108 = arith.addf %104, %107 : vector<16x32xf32>
    %109 = vector.extract_strided_slice %15 {offsets = [368, 0], sizes = [16, 64], strides = [1, 1]} : vector<576x64xf32> to vector<16x64xf32>
    %c1472 = arith.constant 1472 : index
    %c0_61 = arith.constant 0 : index
    %110 = vector.load %arg10[%c1472, %c0_61] : memref<2304x32xf32, #tpu.memory_space<vmem>>, vector<64x32xf32>
    %cst_62 = arith.constant dense<0.000000e+00> : vector<16x32xf32>
    %111 = tpu.matmul %109, %110, %cst_62 {dimension_numbers = #tpu.dot_dimension_numbers<[1], [0], [0], [1], [0, 0, 1, 1], [], []>} : vector<16x64xf32>, vector<64x32xf32>, vector<16x32xf32> -> vector<16x32xf32>
    %112 = arith.addf %108, %111 : vector<16x32xf32>
    %113 = vector.extract_strided_slice %15 {offsets = [384, 0], sizes = [16, 64], strides = [1, 1]} : vector<576x64xf32> to vector<16x64xf32>
    %c1536 = arith.constant 1536 : index
    %c0_63 = arith.constant 0 : index
    %114 = vector.load %arg10[%c1536, %c0_63] : memref<2304x32xf32, #tpu.memory_space<vmem>>, vector<64x32xf32>
    %cst_64 = arith.constant dense<0.000000e+00> : vector<16x32xf32>
    %115 = tpu.matmul %113, %114, %cst_64 {dimension_numbers = #tpu.dot_dimension_numbers<[1], [0], [0], [1], [0, 0, 1, 1], [], []>} : vector<16x64xf32>, vector<64x32xf32>, vector<16x32xf32> -> vector<16x32xf32>
    %116 = arith.addf %112, %115 : vector<16x32xf32>
    %117 = vector.extract_strided_slice %15 {offsets = [400, 0], sizes = [16, 64], strides = [1, 1]} : vector<576x64xf32> to vector<16x64xf32>
    %c1600 = arith.constant 1600 : index
    %c0_65 = arith.constant 0 : index
    %118 = vector.load %arg10[%c1600, %c0_65] : memref<2304x32xf32, #tpu.memory_space<vmem>>, vector<64x32xf32>
    %cst_66 = arith.constant dense<0.000000e+00> : vector<16x32xf32>
    %119 = tpu.matmul %117, %118, %cst_66 {dimension_numbers = #tpu.dot_dimension_numbers<[1], [0], [0], [1], [0, 0, 1, 1], [], []>} : vector<16x64xf32>, vector<64x32xf32>, vector<16x32xf32> -> vector<16x32xf32>
    %120 = arith.addf %116, %119 : vector<16x32xf32>
    %121 = vector.extract_strided_slice %15 {offsets = [416, 0], sizes = [16, 64], strides = [1, 1]} : vector<576x64xf32> to vector<16x64xf32>
    %c1664 = arith.constant 1664 : index
    %c0_67 = arith.constant 0 : index
    %122 = vector.load %arg10[%c1664, %c0_67] : memref<2304x32xf32, #tpu.memory_space<vmem>>, vector<64x32xf32>
    %cst_68 = arith.constant dense<0.000000e+00> : vector<16x32xf32>
    %123 = tpu.matmul %121, %122, %cst_68 {dimension_numbers = #tpu.dot_dimension_numbers<[1], [0], [0], [1], [0, 0, 1, 1], [], []>} : vector<16x64xf32>, vector<64x32xf32>, vector<16x32xf32> -> vector<16x32xf32>
    %124 = arith.addf %120, %123 : vector<16x32xf32>
    %125 = vector.extract_strided_slice %15 {offsets = [432, 0], sizes = [16, 64], strides = [1, 1]} : vector<576x64xf32> to vector<16x64xf32>
    %c1728 = arith.constant 1728 : index
    %c0_69 = arith.constant 0 : index
    %126 = vector.load %arg10[%c1728, %c0_69] : memref<2304x32xf32, #tpu.memory_space<vmem>>, vector<64x32xf32>
    %cst_70 = arith.constant dense<0.000000e+00> : vector<16x32xf32>
    %127 = tpu.matmul %125, %126, %cst_70 {dimension_numbers = #tpu.dot_dimension_numbers<[1], [0], [0], [1], [0, 0, 1, 1], [], []>} : vector<16x64xf32>, vector<64x32xf32>, vector<16x32xf32> -> vector<16x32xf32>
    %128 = arith.addf %124, %127 : vector<16x32xf32>
    %129 = vector.extract_strided_slice %15 {offsets = [448, 0], sizes = [16, 64], strides = [1, 1]} : vector<576x64xf32> to vector<16x64xf32>
    %c1792 = arith.constant 1792 : index
    %c0_71 = arith.constant 0 : index
    %130 = vector.load %arg10[%c1792, %c0_71] : memref<2304x32xf32, #tpu.memory_space<vmem>>, vector<64x32xf32>
    %cst_72 = arith.constant dense<0.000000e+00> : vector<16x32xf32>
    %131 = tpu.matmul %129, %130, %cst_72 {dimension_numbers = #tpu.dot_dimension_numbers<[1], [0], [0], [1], [0, 0, 1, 1], [], []>} : vector<16x64xf32>, vector<64x32xf32>, vector<16x32xf32> -> vector<16x32xf32>
    %132 = arith.addf %128, %131 : vector<16x32xf32>
    %133 = vector.extract_strided_slice %15 {offsets = [464, 0], sizes = [16, 64], strides = [1, 1]} : vector<576x64xf32> to vector<16x64xf32>
    %c1856 = arith.constant 1856 : index
    %c0_73 = arith.constant 0 : index
    %134 = vector.load %arg10[%c1856, %c0_73] : memref<2304x32xf32, #tpu.memory_space<vmem>>, vector<64x32xf32>
    %cst_74 = arith.constant dense<0.000000e+00> : vector<16x32xf32>
    %135 = tpu.matmul %133, %134, %cst_74 {dimension_numbers = #tpu.dot_dimension_numbers<[1], [0], [0], [1], [0, 0, 1, 1], [], []>} : vector<16x64xf32>, vector<64x32xf32>, vector<16x32xf32> -> vector<16x32xf32>
    %136 = arith.addf %132, %135 : vector<16x32xf32>
    %137 = vector.extract_strided_slice %15 {offsets = [480, 0], sizes = [16, 64], strides = [1, 1]} : vector<576x64xf32> to vector<16x64xf32>
    %c1920 = arith.constant 1920 : index
    %c0_75 = arith.constant 0 : index
    %138 = vector.load %arg10[%c1920, %c0_75] : memref<2304x32xf32, #tpu.memory_space<vmem>>, vector<64x32xf32>
    %cst_76 = arith.constant dense<0.000000e+00> : vector<16x32xf32>
    %139 = tpu.matmul %137, %138, %cst_76 {dimension_numbers = #tpu.dot_dimension_numbers<[1], [0], [0], [1], [0, 0, 1, 1], [], []>} : vector<16x64xf32>, vector<64x32xf32>, vector<16x32xf32> -> vector<16x32xf32>
    %140 = arith.addf %136, %139 : vector<16x32xf32>
    %141 = vector.extract_strided_slice %15 {offsets = [496, 0], sizes = [16, 64], strides = [1, 1]} : vector<576x64xf32> to vector<16x64xf32>
    %c1984 = arith.constant 1984 : index
    %c0_77 = arith.constant 0 : index
    %142 = vector.load %arg10[%c1984, %c0_77] : memref<2304x32xf32, #tpu.memory_space<vmem>>, vector<64x32xf32>
    %cst_78 = arith.constant dense<0.000000e+00> : vector<16x32xf32>
    %143 = tpu.matmul %141, %142, %cst_78 {dimension_numbers = #tpu.dot_dimension_numbers<[1], [0], [0], [1], [0, 0, 1, 1], [], []>} : vector<16x64xf32>, vector<64x32xf32>, vector<16x32xf32> -> vector<16x32xf32>
    %144 = arith.addf %140, %143 : vector<16x32xf32>
    %145 = vector.extract_strided_slice %15 {offsets = [512, 0], sizes = [16, 64], strides = [1, 1]} : vector<576x64xf32> to vector<16x64xf32>
    %c2048 = arith.constant 2048 : index
    %c0_79 = arith.constant 0 : index
    %146 = vector.load %arg10[%c2048, %c0_79] : memref<2304x32xf32, #tpu.memory_space<vmem>>, vector<64x32xf32>
    %cst_80 = arith.constant dense<0.000000e+00> : vector<16x32xf32>
    %147 = tpu.matmul %145, %146, %cst_80 {dimension_numbers = #tpu.dot_dimension_numbers<[1], [0], [0], [1], [0, 0, 1, 1], [], []>} : vector<16x64xf32>, vector<64x32xf32>, vector<16x32xf32> -> vector<16x32xf32>
    %148 = arith.addf %144, %147 : vector<16x32xf32>
    %149 = vector.extract_strided_slice %15 {offsets = [528, 0], sizes = [16, 64], strides = [1, 1]} : vector<576x64xf32> to vector<16x64xf32>
    %c2112 = arith.constant 2112 : index
    %c0_81 = arith.constant 0 : index
    %150 = vector.load %arg10[%c2112, %c0_81] : memref<2304x32xf32, #tpu.memory_space<vmem>>, vector<64x32xf32>
    %cst_82 = arith.constant dense<0.000000e+00> : vector<16x32xf32>
    %151 = tpu.matmul %149, %150, %cst_82 {dimension_numbers = #tpu.dot_dimension_numbers<[1], [0], [0], [1], [0, 0, 1, 1], [], []>} : vector<16x64xf32>, vector<64x32xf32>, vector<16x32xf32> -> vector<16x32xf32>
    %152 = arith.addf %148, %151 : vector<16x32xf32>
    %153 = vector.extract_strided_slice %15 {offsets = [544, 0], sizes = [16, 64], strides = [1, 1]} : vector<576x64xf32> to vector<16x64xf32>
    %c2176 = arith.constant 2176 : index
    %c0_83 = arith.constant 0 : index
    %154 = vector.load %arg10[%c2176, %c0_83] : memref<2304x32xf32, #tpu.memory_space<vmem>>, vector<64x32xf32>
    %cst_84 = arith.constant dense<0.000000e+00> : vector<16x32xf32>
    %155 = tpu.matmul %153, %154, %cst_84 {dimension_numbers = #tpu.dot_dimension_numbers<[1], [0], [0], [1], [0, 0, 1, 1], [], []>} : vector<16x64xf32>, vector<64x32xf32>, vector<16x32xf32> -> vector<16x32xf32>
    %156 = arith.addf %152, %155 : vector<16x32xf32>
    %157 = vector.extract_strided_slice %15 {offsets = [560, 0], sizes = [16, 64], strides = [1, 1]} : vector<576x64xf32> to vector<16x64xf32>
    %c2240 = arith.constant 2240 : index
    %c0_85 = arith.constant 0 : index
    %158 = vector.load %arg10[%c2240, %c0_85] : memref<2304x32xf32, #tpu.memory_space<vmem>>, vector<64x32xf32>
    %cst_86 = arith.constant dense<0.000000e+00> : vector<16x32xf32>
    %159 = tpu.matmul %157, %158, %cst_86 {dimension_numbers = #tpu.dot_dimension_numbers<[1], [0], [0], [1], [0, 0, 1, 1], [], []>} : vector<16x64xf32>, vector<64x32xf32>, vector<16x32xf32> -> vector<16x32xf32>
    %160 = arith.addf %156, %159 : vector<16x32xf32>
    %c0_87 = arith.constant 0 : index
    %c0_88 = arith.constant 0 : index
    %161 = vector.load %arg11[%c0_87, %c0_88] : memref<1x32xf32, #tpu.memory_space<vmem>>, vector<1x32xf32>
    %162 = vector.broadcast %161 : vector<1x32xf32> to vector<16x32xf32>
    %163 = arith.addf %160, %162 : vector<16x32xf32>
    %cst_89 = arith.constant 0.000000e+00 : f32
    %164 = vector.broadcast %cst_89 : f32 to vector<16x32xf32>
    %165 = arith.maximumf %163, %164 : vector<16x32xf32>
    %c0_90 = arith.constant 0 : index
    %c0_91 = arith.constant 0 : index
    %166 = vector.load %arg12[%c0_90, %c0_91] : memref<32x16xf32, #tpu.memory_space<vmem>>, vector<32x16xf32>
    %cst_92 = arith.constant dense<0.000000e+00> : vector<16x16xf32>
    %167 = tpu.matmul %165, %166, %cst_92 {dimension_numbers = #tpu.dot_dimension_numbers<[1], [0], [0], [1], [0, 0, 1, 1], [], []>} : vector<16x32xf32>, vector<32x16xf32>, vector<16x16xf32> -> vector<16x16xf32>
    %c0_93 = arith.constant 0 : index
    %c0_94 = arith.constant 0 : index
    %168 = vector.load %arg13[%c0_93, %c0_94] : memref<1x16xf32, #tpu.memory_space<vmem>>, vector<1x16xf32>
    %169 = vector.broadcast %168 : vector<1x16xf32> to vector<16x16xf32>
    %170 = arith.addf %167, %169 : vector<16x16xf32>
    %171 = vector.extract_strided_slice %170 {offsets = [0, 0], sizes = [16, 8], strides = [1, 1]} : vector<16x16xf32> to vector<16x8xf32>
    %172 = vector.extract_strided_slice %170 {offsets = [0, 8], sizes = [16, 8], strides = [1, 1]} : vector<16x16xf32> to vector<16x8xf32>
    %173 = arith.mulf %171, %171 : vector<16x8xf32>
    %174 = arith.mulf %172, %172 : vector<16x8xf32>
    %175 = arith.addf %173, %174 : vector<16x8xf32>
    %cst_95 = arith.constant 1.000000e-24 : f32
    %176 = vector.broadcast %cst_95 : f32 to vector<16x8xf32>
    %177 = arith.maximumf %175, %176 : vector<16x8xf32>
    %178 = math.rsqrt %177 : vector<16x8xf32>
    %179 = arith.mulf %171, %178 : vector<16x8xf32>
    %180 = arith.mulf %172, %178 : vector<16x8xf32>
    %c0_96 = arith.constant 0 : index
    %c0_97 = arith.constant 0 : index
    %c0_98 = arith.constant 0 : index
    %181 = vector.load %arg4[%c0_96, %c0_97, %c0_98] : memref<1x8x16xf32, #tpu.memory_space<vmem>>, vector<1x8x16xf32>
    %182 = vector.shape_cast %181 : vector<1x8x16xf32> to vector<8x16xf32>
    %c0_99 = arith.constant 0 : index
    %c0_100 = arith.constant 0 : index
    %c0_101 = arith.constant 0 : index
    %183 = vector.load %arg5[%c0_99, %c0_100, %c0_101] : memref<1x8x16xf32, #tpu.memory_space<vmem>>, vector<1x8x16xf32>
    %184 = vector.shape_cast %183 : vector<1x8x16xf32> to vector<8x16xf32>
    %185 = vector.extract_strided_slice %179 {offsets = [0, 0], sizes = [8, 8], strides = [1, 1]} : vector<16x8xf32> to vector<8x8xf32>
    %186 = vector.extract_strided_slice %180 {offsets = [0, 0], sizes = [8, 8], strides = [1, 1]} : vector<16x8xf32> to vector<8x8xf32>
    %c0_102 = arith.constant 0 : index
    %c0_103 = arith.constant 0 : index
    %c0_104 = arith.constant 0 : index
    %c0_105 = arith.constant 0 : index
    %187 = vector.load %arg2[%c0_102, %c0_103, %c0_104, %c0_105] : memref<1x16x8x16xf32, #tpu.memory_space<vmem>>, vector<1x1x8x16xf32>
    %188 = vector.shape_cast %187 : vector<1x1x8x16xf32> to vector<8x16xf32>
    %c0_106 = arith.constant 0 : index
    %c0_107 = arith.constant 0 : index
    %c0_108 = arith.constant 0 : index
    %c0_109 = arith.constant 0 : index
    %189 = vector.load %arg3[%c0_106, %c0_107, %c0_108, %c0_109] : memref<1x16x8x16xf32, #tpu.memory_space<vmem>>, vector<1x1x8x16xf32>
    %190 = vector.shape_cast %189 : vector<1x1x8x16xf32> to vector<8x16xf32>
    %191 = vector.extract_strided_slice %185 {offsets = [0, 0], sizes = [8, 1], strides = [1, 1]} : vector<8x8xf32> to vector<8x1xf32>
    %192 = vector.extract_strided_slice %186 {offsets = [0, 0], sizes = [8, 1], strides = [1, 1]} : vector<8x8xf32> to vector<8x1xf32>
    %193 = vector.broadcast %191 : vector<8x1xf32> to vector<8x16xf32>
    %194 = arith.mulf %193, %188 : vector<8x16xf32>
    %195 = arith.addf %182, %194 : vector<8x16xf32>
    %196 = vector.broadcast %192 : vector<8x1xf32> to vector<8x16xf32>
    %197 = arith.mulf %196, %190 : vector<8x16xf32>
    %198 = arith.addf %195, %197 : vector<8x16xf32>
    %199 = vector.broadcast %192 : vector<8x1xf32> to vector<8x16xf32>
    %200 = arith.mulf %199, %188 : vector<8x16xf32>
    %201 = arith.addf %184, %200 : vector<8x16xf32>
    %202 = vector.broadcast %191 : vector<8x1xf32> to vector<8x16xf32>
    %203 = arith.mulf %202, %190 : vector<8x16xf32>
    %204 = arith.subf %201, %203 : vector<8x16xf32>
    %c0_110 = arith.constant 0 : index
    %c1 = arith.constant 1 : index
    %c0_111 = arith.constant 0 : index
    %c0_112 = arith.constant 0 : index
    %205 = vector.load %arg2[%c0_110, %c1, %c0_111, %c0_112] : memref<1x16x8x16xf32, #tpu.memory_space<vmem>>, vector<1x1x8x16xf32>
    %206 = vector.shape_cast %205 : vector<1x1x8x16xf32> to vector<8x16xf32>
    %c0_113 = arith.constant 0 : index
    %c1_114 = arith.constant 1 : index
    %c0_115 = arith.constant 0 : index
    %c0_116 = arith.constant 0 : index
    %207 = vector.load %arg3[%c0_113, %c1_114, %c0_115, %c0_116] : memref<1x16x8x16xf32, #tpu.memory_space<vmem>>, vector<1x1x8x16xf32>
    %208 = vector.shape_cast %207 : vector<1x1x8x16xf32> to vector<8x16xf32>
    %209 = vector.extract_strided_slice %185 {offsets = [0, 1], sizes = [8, 1], strides = [1, 1]} : vector<8x8xf32> to vector<8x1xf32>
    %210 = vector.extract_strided_slice %186 {offsets = [0, 1], sizes = [8, 1], strides = [1, 1]} : vector<8x8xf32> to vector<8x1xf32>
    %211 = vector.broadcast %209 : vector<8x1xf32> to vector<8x16xf32>
    %212 = arith.mulf %211, %206 : vector<8x16xf32>
    %213 = arith.addf %198, %212 : vector<8x16xf32>
    %214 = vector.broadcast %210 : vector<8x1xf32> to vector<8x16xf32>
    %215 = arith.mulf %214, %208 : vector<8x16xf32>
    %216 = arith.addf %213, %215 : vector<8x16xf32>
    %217 = vector.broadcast %210 : vector<8x1xf32> to vector<8x16xf32>
    %218 = arith.mulf %217, %206 : vector<8x16xf32>
    %219 = arith.addf %204, %218 : vector<8x16xf32>
    %220 = vector.broadcast %209 : vector<8x1xf32> to vector<8x16xf32>
    %221 = arith.mulf %220, %208 : vector<8x16xf32>
    %222 = arith.subf %219, %221 : vector<8x16xf32>
    %c0_117 = arith.constant 0 : index
    %c2 = arith.constant 2 : index
    %c0_118 = arith.constant 0 : index
    %c0_119 = arith.constant 0 : index
    %223 = vector.load %arg2[%c0_117, %c2, %c0_118, %c0_119] : memref<1x16x8x16xf32, #tpu.memory_space<vmem>>, vector<1x1x8x16xf32>
    %224 = vector.shape_cast %223 : vector<1x1x8x16xf32> to vector<8x16xf32>
    %c0_120 = arith.constant 0 : index
    %c2_121 = arith.constant 2 : index
    %c0_122 = arith.constant 0 : index
    %c0_123 = arith.constant 0 : index
    %225 = vector.load %arg3[%c0_120, %c2_121, %c0_122, %c0_123] : memref<1x16x8x16xf32, #tpu.memory_space<vmem>>, vector<1x1x8x16xf32>
    %226 = vector.shape_cast %225 : vector<1x1x8x16xf32> to vector<8x16xf32>
    %227 = vector.extract_strided_slice %185 {offsets = [0, 2], sizes = [8, 1], strides = [1, 1]} : vector<8x8xf32> to vector<8x1xf32>
    %228 = vector.extract_strided_slice %186 {offsets = [0, 2], sizes = [8, 1], strides = [1, 1]} : vector<8x8xf32> to vector<8x1xf32>
    %229 = vector.broadcast %227 : vector<8x1xf32> to vector<8x16xf32>
    %230 = arith.mulf %229, %224 : vector<8x16xf32>
    %231 = arith.addf %216, %230 : vector<8x16xf32>
    %232 = vector.broadcast %228 : vector<8x1xf32> to vector<8x16xf32>
    %233 = arith.mulf %232, %226 : vector<8x16xf32>
    %234 = arith.addf %231, %233 : vector<8x16xf32>
    %235 = vector.broadcast %228 : vector<8x1xf32> to vector<8x16xf32>
    %236 = arith.mulf %235, %224 : vector<8x16xf32>
    %237 = arith.addf %222, %236 : vector<8x16xf32>
    %238 = vector.broadcast %227 : vector<8x1xf32> to vector<8x16xf32>
    %239 = arith.mulf %238, %226 : vector<8x16xf32>
    %240 = arith.subf %237, %239 : vector<8x16xf32>
    %c0_124 = arith.constant 0 : index
    %c3 = arith.constant 3 : index
    %c0_125 = arith.constant 0 : index
    %c0_126 = arith.constant 0 : index
    %241 = vector.load %arg2[%c0_124, %c3, %c0_125, %c0_126] : memref<1x16x8x16xf32, #tpu.memory_space<vmem>>, vector<1x1x8x16xf32>
    %242 = vector.shape_cast %241 : vector<1x1x8x16xf32> to vector<8x16xf32>
    %c0_127 = arith.constant 0 : index
    %c3_128 = arith.constant 3 : index
    %c0_129 = arith.constant 0 : index
    %c0_130 = arith.constant 0 : index
    %243 = vector.load %arg3[%c0_127, %c3_128, %c0_129, %c0_130] : memref<1x16x8x16xf32, #tpu.memory_space<vmem>>, vector<1x1x8x16xf32>
    %244 = vector.shape_cast %243 : vector<1x1x8x16xf32> to vector<8x16xf32>
    %245 = vector.extract_strided_slice %185 {offsets = [0, 3], sizes = [8, 1], strides = [1, 1]} : vector<8x8xf32> to vector<8x1xf32>
    %246 = vector.extract_strided_slice %186 {offsets = [0, 3], sizes = [8, 1], strides = [1, 1]} : vector<8x8xf32> to vector<8x1xf32>
    %247 = vector.broadcast %245 : vector<8x1xf32> to vector<8x16xf32>
    %248 = arith.mulf %247, %242 : vector<8x16xf32>
    %249 = arith.addf %234, %248 : vector<8x16xf32>
    %250 = vector.broadcast %246 : vector<8x1xf32> to vector<8x16xf32>
    %251 = arith.mulf %250, %244 : vector<8x16xf32>
    %252 = arith.addf %249, %251 : vector<8x16xf32>
    %253 = vector.broadcast %246 : vector<8x1xf32> to vector<8x16xf32>
    %254 = arith.mulf %253, %242 : vector<8x16xf32>
    %255 = arith.addf %240, %254 : vector<8x16xf32>
    %256 = vector.broadcast %245 : vector<8x1xf32> to vector<8x16xf32>
    %257 = arith.mulf %256, %244 : vector<8x16xf32>
    %258 = arith.subf %255, %257 : vector<8x16xf32>
    %c0_131 = arith.constant 0 : index
    %c4 = arith.constant 4 : index
    %c0_132 = arith.constant 0 : index
    %c0_133 = arith.constant 0 : index
    %259 = vector.load %arg2[%c0_131, %c4, %c0_132, %c0_133] : memref<1x16x8x16xf32, #tpu.memory_space<vmem>>, vector<1x1x8x16xf32>
    %260 = vector.shape_cast %259 : vector<1x1x8x16xf32> to vector<8x16xf32>
    %c0_134 = arith.constant 0 : index
    %c4_135 = arith.constant 4 : index
    %c0_136 = arith.constant 0 : index
    %c0_137 = arith.constant 0 : index
    %261 = vector.load %arg3[%c0_134, %c4_135, %c0_136, %c0_137] : memref<1x16x8x16xf32, #tpu.memory_space<vmem>>, vector<1x1x8x16xf32>
    %262 = vector.shape_cast %261 : vector<1x1x8x16xf32> to vector<8x16xf32>
    %263 = vector.extract_strided_slice %185 {offsets = [0, 4], sizes = [8, 1], strides = [1, 1]} : vector<8x8xf32> to vector<8x1xf32>
    %264 = vector.extract_strided_slice %186 {offsets = [0, 4], sizes = [8, 1], strides = [1, 1]} : vector<8x8xf32> to vector<8x1xf32>
    %265 = vector.broadcast %263 : vector<8x1xf32> to vector<8x16xf32>
    %266 = arith.mulf %265, %260 : vector<8x16xf32>
    %267 = arith.addf %252, %266 : vector<8x16xf32>
    %268 = vector.broadcast %264 : vector<8x1xf32> to vector<8x16xf32>
    %269 = arith.mulf %268, %262 : vector<8x16xf32>
    %270 = arith.addf %267, %269 : vector<8x16xf32>
    %271 = vector.broadcast %264 : vector<8x1xf32> to vector<8x16xf32>
    %272 = arith.mulf %271, %260 : vector<8x16xf32>
    %273 = arith.addf %258, %272 : vector<8x16xf32>
    %274 = vector.broadcast %263 : vector<8x1xf32> to vector<8x16xf32>
    %275 = arith.mulf %274, %262 : vector<8x16xf32>
    %276 = arith.subf %273, %275 : vector<8x16xf32>
    %c0_138 = arith.constant 0 : index
    %c5 = arith.constant 5 : index
    %c0_139 = arith.constant 0 : index
    %c0_140 = arith.constant 0 : index
    %277 = vector.load %arg2[%c0_138, %c5, %c0_139, %c0_140] : memref<1x16x8x16xf32, #tpu.memory_space<vmem>>, vector<1x1x8x16xf32>
    %278 = vector.shape_cast %277 : vector<1x1x8x16xf32> to vector<8x16xf32>
    %c0_141 = arith.constant 0 : index
    %c5_142 = arith.constant 5 : index
    %c0_143 = arith.constant 0 : index
    %c0_144 = arith.constant 0 : index
    %279 = vector.load %arg3[%c0_141, %c5_142, %c0_143, %c0_144] : memref<1x16x8x16xf32, #tpu.memory_space<vmem>>, vector<1x1x8x16xf32>
    %280 = vector.shape_cast %279 : vector<1x1x8x16xf32> to vector<8x16xf32>
    %281 = vector.extract_strided_slice %185 {offsets = [0, 5], sizes = [8, 1], strides = [1, 1]} : vector<8x8xf32> to vector<8x1xf32>
    %282 = vector.extract_strided_slice %186 {offsets = [0, 5], sizes = [8, 1], strides = [1, 1]} : vector<8x8xf32> to vector<8x1xf32>
    %283 = vector.broadcast %281 : vector<8x1xf32> to vector<8x16xf32>
    %284 = arith.mulf %283, %278 : vector<8x16xf32>
    %285 = arith.addf %270, %284 : vector<8x16xf32>
    %286 = vector.broadcast %282 : vector<8x1xf32> to vector<8x16xf32>
    %287 = arith.mulf %286, %280 : vector<8x16xf32>
    %288 = arith.addf %285, %287 : vector<8x16xf32>
    %289 = vector.broadcast %282 : vector<8x1xf32> to vector<8x16xf32>
    %290 = arith.mulf %289, %278 : vector<8x16xf32>
    %291 = arith.addf %276, %290 : vector<8x16xf32>
    %292 = vector.broadcast %281 : vector<8x1xf32> to vector<8x16xf32>
    %293 = arith.mulf %292, %280 : vector<8x16xf32>
    %294 = arith.subf %291, %293 : vector<8x16xf32>
    %c0_145 = arith.constant 0 : index
    %c6 = arith.constant 6 : index
    %c0_146 = arith.constant 0 : index
    %c0_147 = arith.constant 0 : index
    %295 = vector.load %arg2[%c0_145, %c6, %c0_146, %c0_147] : memref<1x16x8x16xf32, #tpu.memory_space<vmem>>, vector<1x1x8x16xf32>
    %296 = vector.shape_cast %295 : vector<1x1x8x16xf32> to vector<8x16xf32>
    %c0_148 = arith.constant 0 : index
    %c6_149 = arith.constant 6 : index
    %c0_150 = arith.constant 0 : index
    %c0_151 = arith.constant 0 : index
    %297 = vector.load %arg3[%c0_148, %c6_149, %c0_150, %c0_151] : memref<1x16x8x16xf32, #tpu.memory_space<vmem>>, vector<1x1x8x16xf32>
    %298 = vector.shape_cast %297 : vector<1x1x8x16xf32> to vector<8x16xf32>
    %299 = vector.extract_strided_slice %185 {offsets = [0, 6], sizes = [8, 1], strides = [1, 1]} : vector<8x8xf32> to vector<8x1xf32>
    %300 = vector.extract_strided_slice %186 {offsets = [0, 6], sizes = [8, 1], strides = [1, 1]} : vector<8x8xf32> to vector<8x1xf32>
    %301 = vector.broadcast %299 : vector<8x1xf32> to vector<8x16xf32>
    %302 = arith.mulf %301, %296 : vector<8x16xf32>
    %303 = arith.addf %288, %302 : vector<8x16xf32>
    %304 = vector.broadcast %300 : vector<8x1xf32> to vector<8x16xf32>
    %305 = arith.mulf %304, %298 : vector<8x16xf32>
    %306 = arith.addf %303, %305 : vector<8x16xf32>
    %307 = vector.broadcast %300 : vector<8x1xf32> to vector<8x16xf32>
    %308 = arith.mulf %307, %296 : vector<8x16xf32>
    %309 = arith.addf %294, %308 : vector<8x16xf32>
    %310 = vector.broadcast %299 : vector<8x1xf32> to vector<8x16xf32>
    %311 = arith.mulf %310, %298 : vector<8x16xf32>
    %312 = arith.subf %309, %311 : vector<8x16xf32>
    %c0_152 = arith.constant 0 : index
    %c7 = arith.constant 7 : index
    %c0_153 = arith.constant 0 : index
    %c0_154 = arith.constant 0 : index
    %313 = vector.load %arg2[%c0_152, %c7, %c0_153, %c0_154] : memref<1x16x8x16xf32, #tpu.memory_space<vmem>>, vector<1x1x8x16xf32>
    %314 = vector.shape_cast %313 : vector<1x1x8x16xf32> to vector<8x16xf32>
    %c0_155 = arith.constant 0 : index
    %c7_156 = arith.constant 7 : index
    %c0_157 = arith.constant 0 : index
    %c0_158 = arith.constant 0 : index
    %315 = vector.load %arg3[%c0_155, %c7_156, %c0_157, %c0_158] : memref<1x16x8x16xf32, #tpu.memory_space<vmem>>, vector<1x1x8x16xf32>
    %316 = vector.shape_cast %315 : vector<1x1x8x16xf32> to vector<8x16xf32>
    %317 = vector.extract_strided_slice %185 {offsets = [0, 7], sizes = [8, 1], strides = [1, 1]} : vector<8x8xf32> to vector<8x1xf32>
    %318 = vector.extract_strided_slice %186 {offsets = [0, 7], sizes = [8, 1], strides = [1, 1]} : vector<8x8xf32> to vector<8x1xf32>
    %319 = vector.broadcast %317 : vector<8x1xf32> to vector<8x16xf32>
    %320 = arith.mulf %319, %314 : vector<8x16xf32>
    %321 = arith.addf %306, %320 : vector<8x16xf32>
    %322 = vector.broadcast %318 : vector<8x1xf32> to vector<8x16xf32>
    %323 = arith.mulf %322, %316 : vector<8x16xf32>
    %324 = arith.addf %321, %323 : vector<8x16xf32>
    %325 = vector.broadcast %318 : vector<8x1xf32> to vector<8x16xf32>
    %326 = arith.mulf %325, %314 : vector<8x16xf32>
    %327 = arith.addf %312, %326 : vector<8x16xf32>
    %328 = vector.broadcast %317 : vector<8x1xf32> to vector<8x16xf32>
    %329 = arith.mulf %328, %316 : vector<8x16xf32>
    %330 = arith.subf %327, %329 : vector<8x16xf32>
    %331 = vector.extract_strided_slice %179 {offsets = [8, 0], sizes = [8, 8], strides = [1, 1]} : vector<16x8xf32> to vector<8x8xf32>
    %332 = vector.extract_strided_slice %180 {offsets = [8, 0], sizes = [8, 8], strides = [1, 1]} : vector<16x8xf32> to vector<8x8xf32>
    %c0_159 = arith.constant 0 : index
    %c8 = arith.constant 8 : index
    %c0_160 = arith.constant 0 : index
    %c0_161 = arith.constant 0 : index
    %333 = vector.load %arg2[%c0_159, %c8, %c0_160, %c0_161] : memref<1x16x8x16xf32, #tpu.memory_space<vmem>>, vector<1x1x8x16xf32>
    %334 = vector.shape_cast %333 : vector<1x1x8x16xf32> to vector<8x16xf32>
    %c0_162 = arith.constant 0 : index
    %c8_163 = arith.constant 8 : index
    %c0_164 = arith.constant 0 : index
    %c0_165 = arith.constant 0 : index
    %335 = vector.load %arg3[%c0_162, %c8_163, %c0_164, %c0_165] : memref<1x16x8x16xf32, #tpu.memory_space<vmem>>, vector<1x1x8x16xf32>
    %336 = vector.shape_cast %335 : vector<1x1x8x16xf32> to vector<8x16xf32>
    %337 = vector.extract_strided_slice %331 {offsets = [0, 0], sizes = [8, 1], strides = [1, 1]} : vector<8x8xf32> to vector<8x1xf32>
    %338 = vector.extract_strided_slice %332 {offsets = [0, 0], sizes = [8, 1], strides = [1, 1]} : vector<8x8xf32> to vector<8x1xf32>
    %339 = vector.broadcast %337 : vector<8x1xf32> to vector<8x16xf32>
    %340 = arith.mulf %339, %334 : vector<8x16xf32>
    %341 = arith.addf %324, %340 : vector<8x16xf32>
    %342 = vector.broadcast %338 : vector<8x1xf32> to vector<8x16xf32>
    %343 = arith.mulf %342, %336 : vector<8x16xf32>
    %344 = arith.addf %341, %343 : vector<8x16xf32>
    %345 = vector.broadcast %338 : vector<8x1xf32> to vector<8x16xf32>
    %346 = arith.mulf %345, %334 : vector<8x16xf32>
    %347 = arith.addf %330, %346 : vector<8x16xf32>
    %348 = vector.broadcast %337 : vector<8x1xf32> to vector<8x16xf32>
    %349 = arith.mulf %348, %336 : vector<8x16xf32>
    %350 = arith.subf %347, %349 : vector<8x16xf32>
    %c0_166 = arith.constant 0 : index
    %c9 = arith.constant 9 : index
    %c0_167 = arith.constant 0 : index
    %c0_168 = arith.constant 0 : index
    %351 = vector.load %arg2[%c0_166, %c9, %c0_167, %c0_168] : memref<1x16x8x16xf32, #tpu.memory_space<vmem>>, vector<1x1x8x16xf32>
    %352 = vector.shape_cast %351 : vector<1x1x8x16xf32> to vector<8x16xf32>
    %c0_169 = arith.constant 0 : index
    %c9_170 = arith.constant 9 : index
    %c0_171 = arith.constant 0 : index
    %c0_172 = arith.constant 0 : index
    %353 = vector.load %arg3[%c0_169, %c9_170, %c0_171, %c0_172] : memref<1x16x8x16xf32, #tpu.memory_space<vmem>>, vector<1x1x8x16xf32>
    %354 = vector.shape_cast %353 : vector<1x1x8x16xf32> to vector<8x16xf32>
    %355 = vector.extract_strided_slice %331 {offsets = [0, 1], sizes = [8, 1], strides = [1, 1]} : vector<8x8xf32> to vector<8x1xf32>
    %356 = vector.extract_strided_slice %332 {offsets = [0, 1], sizes = [8, 1], strides = [1, 1]} : vector<8x8xf32> to vector<8x1xf32>
    %357 = vector.broadcast %355 : vector<8x1xf32> to vector<8x16xf32>
    %358 = arith.mulf %357, %352 : vector<8x16xf32>
    %359 = arith.addf %344, %358 : vector<8x16xf32>
    %360 = vector.broadcast %356 : vector<8x1xf32> to vector<8x16xf32>
    %361 = arith.mulf %360, %354 : vector<8x16xf32>
    %362 = arith.addf %359, %361 : vector<8x16xf32>
    %363 = vector.broadcast %356 : vector<8x1xf32> to vector<8x16xf32>
    %364 = arith.mulf %363, %352 : vector<8x16xf32>
    %365 = arith.addf %350, %364 : vector<8x16xf32>
    %366 = vector.broadcast %355 : vector<8x1xf32> to vector<8x16xf32>
    %367 = arith.mulf %366, %354 : vector<8x16xf32>
    %368 = arith.subf %365, %367 : vector<8x16xf32>
    %c0_173 = arith.constant 0 : index
    %c10 = arith.constant 10 : index
    %c0_174 = arith.constant 0 : index
    %c0_175 = arith.constant 0 : index
    %369 = vector.load %arg2[%c0_173, %c10, %c0_174, %c0_175] : memref<1x16x8x16xf32, #tpu.memory_space<vmem>>, vector<1x1x8x16xf32>
    %370 = vector.shape_cast %369 : vector<1x1x8x16xf32> to vector<8x16xf32>
    %c0_176 = arith.constant 0 : index
    %c10_177 = arith.constant 10 : index
    %c0_178 = arith.constant 0 : index
    %c0_179 = arith.constant 0 : index
    %371 = vector.load %arg3[%c0_176, %c10_177, %c0_178, %c0_179] : memref<1x16x8x16xf32, #tpu.memory_space<vmem>>, vector<1x1x8x16xf32>
    %372 = vector.shape_cast %371 : vector<1x1x8x16xf32> to vector<8x16xf32>
    %373 = vector.extract_strided_slice %331 {offsets = [0, 2], sizes = [8, 1], strides = [1, 1]} : vector<8x8xf32> to vector<8x1xf32>
    %374 = vector.extract_strided_slice %332 {offsets = [0, 2], sizes = [8, 1], strides = [1, 1]} : vector<8x8xf32> to vector<8x1xf32>
    %375 = vector.broadcast %373 : vector<8x1xf32> to vector<8x16xf32>
    %376 = arith.mulf %375, %370 : vector<8x16xf32>
    %377 = arith.addf %362, %376 : vector<8x16xf32>
    %378 = vector.broadcast %374 : vector<8x1xf32> to vector<8x16xf32>
    %379 = arith.mulf %378, %372 : vector<8x16xf32>
    %380 = arith.addf %377, %379 : vector<8x16xf32>
    %381 = vector.broadcast %374 : vector<8x1xf32> to vector<8x16xf32>
    %382 = arith.mulf %381, %370 : vector<8x16xf32>
    %383 = arith.addf %368, %382 : vector<8x16xf32>
    %384 = vector.broadcast %373 : vector<8x1xf32> to vector<8x16xf32>
    %385 = arith.mulf %384, %372 : vector<8x16xf32>
    %386 = arith.subf %383, %385 : vector<8x16xf32>
    %c0_180 = arith.constant 0 : index
    %c11 = arith.constant 11 : index
    %c0_181 = arith.constant 0 : index
    %c0_182 = arith.constant 0 : index
    %387 = vector.load %arg2[%c0_180, %c11, %c0_181, %c0_182] : memref<1x16x8x16xf32, #tpu.memory_space<vmem>>, vector<1x1x8x16xf32>
    %388 = vector.shape_cast %387 : vector<1x1x8x16xf32> to vector<8x16xf32>
    %c0_183 = arith.constant 0 : index
    %c11_184 = arith.constant 11 : index
    %c0_185 = arith.constant 0 : index
    %c0_186 = arith.constant 0 : index
    %389 = vector.load %arg3[%c0_183, %c11_184, %c0_185, %c0_186] : memref<1x16x8x16xf32, #tpu.memory_space<vmem>>, vector<1x1x8x16xf32>
    %390 = vector.shape_cast %389 : vector<1x1x8x16xf32> to vector<8x16xf32>
    %391 = vector.extract_strided_slice %331 {offsets = [0, 3], sizes = [8, 1], strides = [1, 1]} : vector<8x8xf32> to vector<8x1xf32>
    %392 = vector.extract_strided_slice %332 {offsets = [0, 3], sizes = [8, 1], strides = [1, 1]} : vector<8x8xf32> to vector<8x1xf32>
    %393 = vector.broadcast %391 : vector<8x1xf32> to vector<8x16xf32>
    %394 = arith.mulf %393, %388 : vector<8x16xf32>
    %395 = arith.addf %380, %394 : vector<8x16xf32>
    %396 = vector.broadcast %392 : vector<8x1xf32> to vector<8x16xf32>
    %397 = arith.mulf %396, %390 : vector<8x16xf32>
    %398 = arith.addf %395, %397 : vector<8x16xf32>
    %399 = vector.broadcast %392 : vector<8x1xf32> to vector<8x16xf32>
    %400 = arith.mulf %399, %388 : vector<8x16xf32>
    %401 = arith.addf %386, %400 : vector<8x16xf32>
    %402 = vector.broadcast %391 : vector<8x1xf32> to vector<8x16xf32>
    %403 = arith.mulf %402, %390 : vector<8x16xf32>
    %404 = arith.subf %401, %403 : vector<8x16xf32>
    %c0_187 = arith.constant 0 : index
    %c12 = arith.constant 12 : index
    %c0_188 = arith.constant 0 : index
    %c0_189 = arith.constant 0 : index
    %405 = vector.load %arg2[%c0_187, %c12, %c0_188, %c0_189] : memref<1x16x8x16xf32, #tpu.memory_space<vmem>>, vector<1x1x8x16xf32>
    %406 = vector.shape_cast %405 : vector<1x1x8x16xf32> to vector<8x16xf32>
    %c0_190 = arith.constant 0 : index
    %c12_191 = arith.constant 12 : index
    %c0_192 = arith.constant 0 : index
    %c0_193 = arith.constant 0 : index
    %407 = vector.load %arg3[%c0_190, %c12_191, %c0_192, %c0_193] : memref<1x16x8x16xf32, #tpu.memory_space<vmem>>, vector<1x1x8x16xf32>
    %408 = vector.shape_cast %407 : vector<1x1x8x16xf32> to vector<8x16xf32>
    %409 = vector.extract_strided_slice %331 {offsets = [0, 4], sizes = [8, 1], strides = [1, 1]} : vector<8x8xf32> to vector<8x1xf32>
    %410 = vector.extract_strided_slice %332 {offsets = [0, 4], sizes = [8, 1], strides = [1, 1]} : vector<8x8xf32> to vector<8x1xf32>
    %411 = vector.broadcast %409 : vector<8x1xf32> to vector<8x16xf32>
    %412 = arith.mulf %411, %406 : vector<8x16xf32>
    %413 = arith.addf %398, %412 : vector<8x16xf32>
    %414 = vector.broadcast %410 : vector<8x1xf32> to vector<8x16xf32>
    %415 = arith.mulf %414, %408 : vector<8x16xf32>
    %416 = arith.addf %413, %415 : vector<8x16xf32>
    %417 = vector.broadcast %410 : vector<8x1xf32> to vector<8x16xf32>
    %418 = arith.mulf %417, %406 : vector<8x16xf32>
    %419 = arith.addf %404, %418 : vector<8x16xf32>
    %420 = vector.broadcast %409 : vector<8x1xf32> to vector<8x16xf32>
    %421 = arith.mulf %420, %408 : vector<8x16xf32>
    %422 = arith.subf %419, %421 : vector<8x16xf32>
    %c0_194 = arith.constant 0 : index
    %c13 = arith.constant 13 : index
    %c0_195 = arith.constant 0 : index
    %c0_196 = arith.constant 0 : index
    %423 = vector.load %arg2[%c0_194, %c13, %c0_195, %c0_196] : memref<1x16x8x16xf32, #tpu.memory_space<vmem>>, vector<1x1x8x16xf32>
    %424 = vector.shape_cast %423 : vector<1x1x8x16xf32> to vector<8x16xf32>
    %c0_197 = arith.constant 0 : index
    %c13_198 = arith.constant 13 : index
    %c0_199 = arith.constant 0 : index
    %c0_200 = arith.constant 0 : index
    %425 = vector.load %arg3[%c0_197, %c13_198, %c0_199, %c0_200] : memref<1x16x8x16xf32, #tpu.memory_space<vmem>>, vector<1x1x8x16xf32>
    %426 = vector.shape_cast %425 : vector<1x1x8x16xf32> to vector<8x16xf32>
    %427 = vector.extract_strided_slice %331 {offsets = [0, 5], sizes = [8, 1], strides = [1, 1]} : vector<8x8xf32> to vector<8x1xf32>
    %428 = vector.extract_strided_slice %332 {offsets = [0, 5], sizes = [8, 1], strides = [1, 1]} : vector<8x8xf32> to vector<8x1xf32>
    %429 = vector.broadcast %427 : vector<8x1xf32> to vector<8x16xf32>
    %430 = arith.mulf %429, %424 : vector<8x16xf32>
    %431 = arith.addf %416, %430 : vector<8x16xf32>
    %432 = vector.broadcast %428 : vector<8x1xf32> to vector<8x16xf32>
    %433 = arith.mulf %432, %426 : vector<8x16xf32>
    %434 = arith.addf %431, %433 : vector<8x16xf32>
    %435 = vector.broadcast %428 : vector<8x1xf32> to vector<8x16xf32>
    %436 = arith.mulf %435, %424 : vector<8x16xf32>
    %437 = arith.addf %422, %436 : vector<8x16xf32>
    %438 = vector.broadcast %427 : vector<8x1xf32> to vector<8x16xf32>
    %439 = arith.mulf %438, %426 : vector<8x16xf32>
    %440 = arith.subf %437, %439 : vector<8x16xf32>
    %c0_201 = arith.constant 0 : index
    %c14 = arith.constant 14 : index
    %c0_202 = arith.constant 0 : index
    %c0_203 = arith.constant 0 : index
    %441 = vector.load %arg2[%c0_201, %c14, %c0_202, %c0_203] : memref<1x16x8x16xf32, #tpu.memory_space<vmem>>, vector<1x1x8x16xf32>
    %442 = vector.shape_cast %441 : vector<1x1x8x16xf32> to vector<8x16xf32>
    %c0_204 = arith.constant 0 : index
    %c14_205 = arith.constant 14 : index
    %c0_206 = arith.constant 0 : index
    %c0_207 = arith.constant 0 : index
    %443 = vector.load %arg3[%c0_204, %c14_205, %c0_206, %c0_207] : memref<1x16x8x16xf32, #tpu.memory_space<vmem>>, vector<1x1x8x16xf32>
    %444 = vector.shape_cast %443 : vector<1x1x8x16xf32> to vector<8x16xf32>
    %445 = vector.extract_strided_slice %331 {offsets = [0, 6], sizes = [8, 1], strides = [1, 1]} : vector<8x8xf32> to vector<8x1xf32>
    %446 = vector.extract_strided_slice %332 {offsets = [0, 6], sizes = [8, 1], strides = [1, 1]} : vector<8x8xf32> to vector<8x1xf32>
    %447 = vector.broadcast %445 : vector<8x1xf32> to vector<8x16xf32>
    %448 = arith.mulf %447, %442 : vector<8x16xf32>
    %449 = arith.addf %434, %448 : vector<8x16xf32>
    %450 = vector.broadcast %446 : vector<8x1xf32> to vector<8x16xf32>
    %451 = arith.mulf %450, %444 : vector<8x16xf32>
    %452 = arith.addf %449, %451 : vector<8x16xf32>
    %453 = vector.broadcast %446 : vector<8x1xf32> to vector<8x16xf32>
    %454 = arith.mulf %453, %442 : vector<8x16xf32>
    %455 = arith.addf %440, %454 : vector<8x16xf32>
    %456 = vector.broadcast %445 : vector<8x1xf32> to vector<8x16xf32>
    %457 = arith.mulf %456, %444 : vector<8x16xf32>
    %458 = arith.subf %455, %457 : vector<8x16xf32>
    %c0_208 = arith.constant 0 : index
    %c15 = arith.constant 15 : index
    %c0_209 = arith.constant 0 : index
    %c0_210 = arith.constant 0 : index
    %459 = vector.load %arg2[%c0_208, %c15, %c0_209, %c0_210] : memref<1x16x8x16xf32, #tpu.memory_space<vmem>>, vector<1x1x8x16xf32>
    %460 = vector.shape_cast %459 : vector<1x1x8x16xf32> to vector<8x16xf32>
    %c0_211 = arith.constant 0 : index
    %c15_212 = arith.constant 15 : index
    %c0_213 = arith.constant 0 : index
    %c0_214 = arith.constant 0 : index
    %461 = vector.load %arg3[%c0_211, %c15_212, %c0_213, %c0_214] : memref<1x16x8x16xf32, #tpu.memory_space<vmem>>, vector<1x1x8x16xf32>
    %462 = vector.shape_cast %461 : vector<1x1x8x16xf32> to vector<8x16xf32>
    %463 = vector.extract_strided_slice %331 {offsets = [0, 7], sizes = [8, 1], strides = [1, 1]} : vector<8x8xf32> to vector<8x1xf32>
    %464 = vector.extract_strided_slice %332 {offsets = [0, 7], sizes = [8, 1], strides = [1, 1]} : vector<8x8xf32> to vector<8x1xf32>
    %465 = vector.broadcast %463 : vector<8x1xf32> to vector<8x16xf32>
    %466 = arith.mulf %465, %460 : vector<8x16xf32>
    %467 = arith.addf %452, %466 : vector<8x16xf32>
    %468 = vector.broadcast %464 : vector<8x1xf32> to vector<8x16xf32>
    %469 = arith.mulf %468, %462 : vector<8x16xf32>
    %470 = arith.addf %467, %469 : vector<8x16xf32>
    %471 = vector.broadcast %464 : vector<8x1xf32> to vector<8x16xf32>
    %472 = arith.mulf %471, %460 : vector<8x16xf32>
    %473 = arith.addf %458, %472 : vector<8x16xf32>
    %474 = vector.broadcast %463 : vector<8x1xf32> to vector<8x16xf32>
    %475 = arith.mulf %474, %462 : vector<8x16xf32>
    %476 = arith.subf %473, %475 : vector<8x16xf32>
    %c0_215 = arith.constant 0 : index
    %c0_216 = arith.constant 0 : index
    %477 = vector.load %arg14[%c0_215, %c0_216] : memref<16x128xf32, #tpu.memory_space<vmem>>, vector<16x128xf32>
    %cst_217 = arith.constant dense<0.000000e+00> : vector<8x128xf32>
    %478 = tpu.matmul %470, %477, %cst_217 {dimension_numbers = #tpu.dot_dimension_numbers<[1], [0], [0], [1], [0, 0, 1, 1], [], []>} : vector<8x16xf32>, vector<16x128xf32>, vector<8x128xf32> -> vector<8x128xf32>
    %c0_218 = arith.constant 0 : index
    %c0_219 = arith.constant 0 : index
    %479 = vector.load %arg15[%c0_218, %c0_219] : memref<16x128xf32, #tpu.memory_space<vmem>>, vector<16x128xf32>
    %cst_220 = arith.constant dense<0.000000e+00> : vector<8x128xf32>
    %480 = tpu.matmul %476, %479, %cst_220 {dimension_numbers = #tpu.dot_dimension_numbers<[1], [0], [0], [1], [0, 0, 1, 1], [], []>} : vector<8x16xf32>, vector<16x128xf32>, vector<8x128xf32> -> vector<8x128xf32>
    %481 = arith.addf %478, %480 : vector<8x128xf32>
    %c0_221 = arith.constant 0 : index
    %c0_222 = arith.constant 0 : index
    %482 = vector.load %arg16[%c0_221, %c0_222] : memref<1x128xf32, #tpu.memory_space<vmem>>, vector<1x128xf32>
    %483 = vector.broadcast %482 : vector<1x128xf32> to vector<8x128xf32>
    %484 = arith.addf %481, %483 : vector<8x128xf32>
    %cst_223 = arith.constant 0.000000e+00 : f32
    %485 = vector.broadcast %cst_223 : f32 to vector<8x128xf32>
    %486 = arith.maximumf %484, %485 : vector<8x128xf32>
    %c0_224 = arith.constant 0 : index
    %c0_225 = arith.constant 0 : index
    %487 = vector.load %arg17[%c0_224, %c0_225] : memref<128x128xf32, #tpu.memory_space<vmem>>, vector<128x128xf32>
    %cst_226 = arith.constant dense<0.000000e+00> : vector<8x128xf32>
    %488 = tpu.matmul %486, %487, %cst_226 {dimension_numbers = #tpu.dot_dimension_numbers<[1], [0], [0], [1], [0, 0, 1, 1], [], []>} : vector<8x128xf32>, vector<128x128xf32>, vector<8x128xf32> -> vector<8x128xf32>
    %c0_227 = arith.constant 0 : index
    %c0_228 = arith.constant 0 : index
    %489 = vector.load %arg18[%c0_227, %c0_228] : memref<1x128xf32, #tpu.memory_space<vmem>>, vector<1x128xf32>
    %490 = vector.broadcast %489 : vector<1x128xf32> to vector<8x128xf32>
    %491 = arith.addf %488, %490 : vector<8x128xf32>
    %cst_229 = arith.constant 0.000000e+00 : f32
    %492 = vector.broadcast %cst_229 : f32 to vector<8x128xf32>
    %493 = arith.maximumf %491, %492 : vector<8x128xf32>
    %c0_230 = arith.constant 0 : index
    %c0_231 = arith.constant 0 : index
    %494 = vector.load %arg19[%c0_230, %c0_231] : memref<128x40xf32, #tpu.memory_space<vmem>>, vector<128x40xf32>
    %cst_232 = arith.constant dense<0.000000e+00> : vector<8x40xf32>
    %495 = tpu.matmul %493, %494, %cst_232 {dimension_numbers = #tpu.dot_dimension_numbers<[1], [0], [0], [1], [0, 0, 1, 1], [], []>} : vector<8x128xf32>, vector<128x40xf32>, vector<8x40xf32> -> vector<8x40xf32>
    %c0_233 = arith.constant 0 : index
    %c0_234 = arith.constant 0 : index
    %496 = vector.load %arg20[%c0_233, %c0_234] : memref<1x40xf32, #tpu.memory_space<vmem>>, vector<1x40xf32>
    %497 = vector.broadcast %496 : vector<1x40xf32> to vector<8x40xf32>
    %498 = arith.addf %495, %497 : vector<8x40xf32>
    %c0_235 = arith.constant 0 : index
    %c0_236 = arith.constant 0 : index
    %499 = vector.load %arg21[%c0_235, %c0_236] : memref<16x128xf32, #tpu.memory_space<vmem>>, vector<16x128xf32>
    %cst_237 = arith.constant dense<0.000000e+00> : vector<8x128xf32>
    %500 = tpu.matmul %470, %499, %cst_237 {dimension_numbers = #tpu.dot_dimension_numbers<[1], [0], [0], [1], [0, 0, 1, 1], [], []>} : vector<8x16xf32>, vector<16x128xf32>, vector<8x128xf32> -> vector<8x128xf32>
    %c0_238 = arith.constant 0 : index
    %c0_239 = arith.constant 0 : index
    %501 = vector.load %arg22[%c0_238, %c0_239] : memref<16x128xf32, #tpu.memory_space<vmem>>, vector<16x128xf32>
    %cst_240 = arith.constant dense<0.000000e+00> : vector<8x128xf32>
    %502 = tpu.matmul %476, %501, %cst_240 {dimension_numbers = #tpu.dot_dimension_numbers<[1], [0], [0], [1], [0, 0, 1, 1], [], []>} : vector<8x16xf32>, vector<16x128xf32>, vector<8x128xf32> -> vector<8x128xf32>
    %503 = arith.addf %500, %502 : vector<8x128xf32>
    %c0_241 = arith.constant 0 : index
    %c0_242 = arith.constant 0 : index
    %504 = vector.load %arg23[%c0_241, %c0_242] : memref<1x128xf32, #tpu.memory_space<vmem>>, vector<1x128xf32>
    %505 = vector.broadcast %504 : vector<1x128xf32> to vector<8x128xf32>
    %506 = arith.addf %503, %505 : vector<8x128xf32>
    %cst_243 = arith.constant 0.000000e+00 : f32
    %507 = vector.broadcast %cst_243 : f32 to vector<8x128xf32>
    %508 = arith.maximumf %506, %507 : vector<8x128xf32>
    %c0_244 = arith.constant 0 : index
    %c0_245 = arith.constant 0 : index
    %509 = vector.load %arg24[%c0_244, %c0_245] : memref<128x2xf32, #tpu.memory_space<vmem>>, vector<128x2xf32>
    %cst_246 = arith.constant dense<0.000000e+00> : vector<8x2xf32>
    %510 = tpu.matmul %508, %509, %cst_246 {dimension_numbers = #tpu.dot_dimension_numbers<[1], [0], [0], [1], [0, 0, 1, 1], [], []>} : vector<8x128xf32>, vector<128x2xf32>, vector<8x2xf32> -> vector<8x2xf32>
    %c0_247 = arith.constant 0 : index
    %c0_248 = arith.constant 0 : index
    %511 = vector.load %arg25[%c0_247, %c0_248] : memref<1x2xf32, #tpu.memory_space<vmem>>, vector<1x2xf32>
    %512 = vector.broadcast %511 : vector<1x2xf32> to vector<8x2xf32>
    %513 = arith.addf %510, %512 : vector<8x2xf32>
    %cst_249 = arith.constant dense<0xFF800000> : vector<8xf32>
    %514 = vector.multi_reduction <maximumf>, %513, %cst_249 [1] : vector<8x2xf32> to vector<8xf32>
    %515 = vector.shape_cast %514 : vector<8xf32> to vector<8x1xf32>
    %516 = vector.broadcast %515 : vector<8x1xf32> to vector<8x2xf32>
    %517 = arith.subf %513, %516 : vector<8x2xf32>
    %518 = math.exp %517 : vector<8x2xf32>
    %cst_250 = arith.constant dense<0.000000e+00> : vector<8xf32>
    %519 = vector.multi_reduction <add>, %518, %cst_250 [1] : vector<8x2xf32> to vector<8xf32>
    %520 = vector.shape_cast %519 : vector<8xf32> to vector<8x1xf32>
    %521 = vector.broadcast %520 : vector<8x1xf32> to vector<8x2xf32>
    %522 = arith.divf %518, %521 : vector<8x2xf32>
    %523 = arith.mulf %498, %498 : vector<8x40xf32>
    %cst_251 = arith.constant dense<0.000000e+00> : vector<8xf32>
    %524 = vector.multi_reduction <add>, %523, %cst_251 [1] : vector<8x40xf32> to vector<8xf32>
    %525 = vector.shape_cast %524 : vector<8xf32> to vector<8x1xf32>
    %cst_252 = arith.constant 1.000000e-24 : f32
    %526 = vector.broadcast %cst_252 : f32 to vector<8x1xf32>
    %527 = arith.maximumf %525, %526 : vector<8x1xf32>
    %528 = math.rsqrt %527 : vector<8x1xf32>
    %cst_253 = arith.constant 3.1622777 : f32
    %529 = vector.broadcast %cst_253 : f32 to vector<8x1xf32>
    %530 = arith.mulf %528, %529 : vector<8x1xf32>
    %531 = vector.extract_strided_slice %522 {offsets = [0, 0], sizes = [8, 1], strides = [1, 1]} : vector<8x2xf32> to vector<8x1xf32>
    %532 = math.sqrt %531 : vector<8x1xf32>
    %533 = arith.mulf %530, %532 : vector<8x1xf32>
    %534 = vector.broadcast %533 : vector<8x1xf32> to vector<8x40xf32>
    %535 = arith.mulf %498, %534 : vector<8x40xf32>
    %536 = vector.extract_strided_slice %179 {offsets = [0, 0], sizes = [8, 8], strides = [1, 1]} : vector<16x8xf32> to vector<8x8xf32>
    %537 = vector.extract_strided_slice %180 {offsets = [0, 0], sizes = [8, 8], strides = [1, 1]} : vector<16x8xf32> to vector<8x8xf32>
    %538 = vector.extract_strided_slice %179 {offsets = [8, 0], sizes = [8, 8], strides = [1, 1]} : vector<16x8xf32> to vector<8x8xf32>
    %539 = vector.extract_strided_slice %180 {offsets = [8, 0], sizes = [8, 8], strides = [1, 1]} : vector<16x8xf32> to vector<8x8xf32>
    %cst_254 = arith.constant 0.000000e+00 : f32
    %540 = vector.broadcast %cst_254 : f32 to vector<8x54xf32>
    %541 = tpu.concatenate %536, %537, %538, %539, %535, %522, %540 in 1 : vector<8x8xf32>, vector<8x8xf32>, vector<8x8xf32>, vector<8x8xf32>, vector<8x40xf32>, vector<8x2xf32>, vector<8x54xf32> -> vector<8x128xf32>
    %c0_255 = arith.constant 0 : index
    %c0_256 = arith.constant 0 : index
    %c0_257 = arith.constant 0 : index
    %542 = vector.load %arg26[%c0_255, %c0_256, %c0_257] : memref<1x8x128xf32, #tpu.memory_space<vmem>>, vector<1x8x128xf32>
    %543 = vector.shape_cast %542 : vector<1x8x128xf32> to vector<8x128xf32>
    %544 = vector.shape_cast %541 : vector<8x128xf32> to vector<1x8x128xf32>
    tpu.vector_store %arg26[%c0_255, %c0_256, %c0_257], %544 {strides = array<i32>} : memref<1x8x128xf32, #tpu.memory_space<vmem>>, vector<1x8x128xf32>,
    return
  }
  func.func @transform_0(%arg0: i32) -> (i32, i32, i32) {
    %c0_i32 = arith.constant 0 : i32
    %c0_i32_0 = arith.constant 0 : i32
    %c0_i32_1 = arith.constant 0 : i32
    return %arg0, %c0_i32, %c0_i32_0 : i32, i32, i32
  }
  func.func @transform_1(%arg0: i32) -> (i32, i32, i32, i32) {
    %c0_i32 = arith.constant 0 : i32
    %c0_i32_0 = arith.constant 0 : i32
    %c0_i32_1 = arith.constant 0 : i32
    %c0_i32_2 = arith.constant 0 : i32
    return %arg0, %c0_i32, %c0_i32_0, %c0_i32_1 : i32, i32, i32, i32
  }
  func.func @transform_2(%arg0: i32) -> (i32, i32, i32, i32) {
    %c0_i32 = arith.constant 0 : i32
    %c0_i32_0 = arith.constant 0 : i32
    %c0_i32_1 = arith.constant 0 : i32
    %c0_i32_2 = arith.constant 0 : i32
    return %arg0, %c0_i32, %c0_i32_0, %c0_i32_1 : i32, i32, i32, i32
  }
  func.func @transform_3(%arg0: i32) -> (i32, i32, i32) {
    %c0_i32 = arith.constant 0 : i32
    %c0_i32_0 = arith.constant 0 : i32
    %c0_i32_1 = arith.constant 0 : i32
    return %arg0, %c0_i32, %c0_i32_0 : i32, i32, i32
  }
  func.func @transform_4(%arg0: i32) -> (i32, i32, i32) {
    %c0_i32 = arith.constant 0 : i32
    %c0_i32_0 = arith.constant 0 : i32
    %c0_i32_1 = arith.constant 0 : i32
    return %arg0, %c0_i32, %c0_i32_0 : i32, i32, i32
  }
  func.func @transform_5(%arg0: i32) -> (i32, i32) {
    %c0_i32 = arith.constant 0 : i32
    %c0_i32_0 = arith.constant 0 : i32
    %c0_i32_1 = arith.constant 0 : i32
    return %c0_i32, %c0_i32_0 : i32, i32
  }
  func.func @transform_6(%arg0: i32) -> (i32, i32) {
    %c0_i32 = arith.constant 0 : i32
    %c0_i32_0 = arith.constant 0 : i32
    %c0_i32_1 = arith.constant 0 : i32
    return %c0_i32, %c0_i32_0 : i32, i32
  }
  func.func @transform_7(%arg0: i32) -> (i32, i32) {
    %c0_i32 = arith.constant 0 : i32
    %c0_i32_0 = arith.constant 0 : i32
    %c0_i32_1 = arith.constant 0 : i32
    return %c0_i32, %c0_i32_0 : i32, i32
  }
  func.func @transform_8(%arg0: i32) -> (i32, i32) {
    %c0_i32 = arith.constant 0 : i32
    %c0_i32_0 = arith.constant 0 : i32
    %c0_i32_1 = arith.constant 0 : i32
    return %c0_i32, %c0_i32_0 : i32, i32
  }
  func.func @transform_9(%arg0: i32) -> (i32, i32) {
    %c0_i32 = arith.constant 0 : i32
    %c0_i32_0 = arith.constant 0 : i32
    %c0_i32_1 = arith.constant 0 : i32
    return %c0_i32, %c0_i32_0 : i32, i32
  }
  func.func @transform_10(%arg0: i32) -> (i32, i32) {
    %c0_i32 = arith.constant 0 : i32
    %c0_i32_0 = arith.constant 0 : i32
    %c0_i32_1 = arith.constant 0 : i32
    return %c0_i32, %c0_i32_0 : i32, i32
  }
  func.func @transform_11(%arg0: i32) -> (i32, i32) {
    %c0_i32 = arith.constant 0 : i32
    %c0_i32_0 = arith.constant 0 : i32
    %c0_i32_1 = arith.constant 0 : i32
    return %c0_i32, %c0_i32_0 : i32, i32
  }
  func.func @transform_12(%arg0: i32) -> (i32, i32) {
    %c0_i32 = arith.constant 0 : i32
    %c0_i32_0 = arith.constant 0 : i32
    %c0_i32_1 = arith.constant 0 : i32
    return %c0_i32, %c0_i32_0 : i32, i32
  }
  func.func @transform_13(%arg0: i32) -> (i32, i32) {
    %c0_i32 = arith.constant 0 : i32
    %c0_i32_0 = arith.constant 0 : i32
    %c0_i32_1 = arith.constant 0 : i32
    return %c0_i32, %c0_i32_0 : i32, i32
  }
  func.func @transform_14(%arg0: i32) -> (i32, i32) {
    %c0_i32 = arith.constant 0 : i32
    %c0_i32_0 = arith.constant 0 : i32
    %c0_i32_1 = arith.constant 0 : i32
    return %c0_i32, %c0_i32_0 : i32, i32
  }
  func.func @transform_15(%arg0: i32) -> (i32, i32) {
    %c0_i32 = arith.constant 0 : i32
    %c0_i32_0 = arith.constant 0 : i32
    %c0_i32_1 = arith.constant 0 : i32
    return %c0_i32, %c0_i32_0 : i32, i32
  }
  func.func @transform_16(%arg0: i32) -> (i32, i32) {
    %c0_i32 = arith.constant 0 : i32
    %c0_i32_0 = arith.constant 0 : i32
    %c0_i32_1 = arith.constant 0 : i32
    return %c0_i32, %c0_i32_0 : i32, i32
  }
  func.func @transform_17(%arg0: i32) -> (i32, i32) {
    %c0_i32 = arith.constant 0 : i32
    %c0_i32_0 = arith.constant 0 : i32
    %c0_i32_1 = arith.constant 0 : i32
    return %c0_i32, %c0_i32_0 : i32, i32
  }
  func.func @transform_18(%arg0: i32) -> (i32, i32) {
    %c0_i32 = arith.constant 0 : i32
    %c0_i32_0 = arith.constant 0 : i32
    %c0_i32_1 = arith.constant 0 : i32
    return %c0_i32, %c0_i32_0 : i32, i32
  }
  func.func @transform_19(%arg0: i32) -> (i32, i32) {
    %c0_i32 = arith.constant 0 : i32
    %c0_i32_0 = arith.constant 0 : i32
    %c0_i32_1 = arith.constant 0 : i32
    return %c0_i32, %c0_i32_0 : i32, i32
  }
  func.func @transform_20(%arg0: i32) -> (i32, i32) {
    %c0_i32 = arith.constant 0 : i32
    %c0_i32_0 = arith.constant 0 : i32
    %c0_i32_1 = arith.constant 0 : i32
    return %c0_i32, %c0_i32_0 : i32, i32
  }
  func.func @transform_21(%arg0: i32) -> (i32, i32) {
    %c0_i32 = arith.constant 0 : i32
    %c0_i32_0 = arith.constant 0 : i32
    %c0_i32_1 = arith.constant 0 : i32
    return %c0_i32, %c0_i32_0 : i32, i32
  }
  func.func @transform_22(%arg0: i32) -> (i32, i32) {
    %c0_i32 = arith.constant 0 : i32
    %c0_i32_0 = arith.constant 0 : i32
    %c0_i32_1 = arith.constant 0 : i32
    return %c0_i32, %c0_i32_0 : i32, i32
  }
  func.func @transform_23(%arg0: i32) -> (i32, i32) {
    %c0_i32 = arith.constant 0 : i32
    %c0_i32_0 = arith.constant 0 : i32
    %c0_i32_1 = arith.constant 0 : i32
    return %c0_i32, %c0_i32_0 : i32, i32
  }
  func.func @transform_24(%arg0: i32) -> (i32, i32) {
    %c0_i32 = arith.constant 0 : i32
    %c0_i32_0 = arith.constant 0 : i32
    %c0_i32_1 = arith.constant 0 : i32
    return %c0_i32, %c0_i32_0 : i32, i32
  }
  func.func @transform_25(%arg0: i32) -> (i32, i32, i32) {
    %c0_i32 = arith.constant 0 : i32
    %c0_i32_0 = arith.constant 0 : i32
    %c0_i32_1 = arith.constant 0 : i32
    return %arg0, %c0_i32, %c0_i32_0 : i32, i32, i32
  }
}

</mosaic_0001>

<llo_original>
// kernel: custom-call.2
$region0: #{custom-call.2}
  %s0 = inlined_call_operand.hbm [shape: c64[16,4,4], index: 0, kind: input, shape index: {}]
  %s1 = inlined_call_operand.vmem [shape: f32[16,4,4], index: 1, kind: output, shape index: {}]
  $region1: #{custom-call.2} parent=0
    #allocation0 [shape = 's32[1]{0}', space=sflag, size = 0x4, scoped, tag = 'scoped memory for custom-call.2']
    %2 = vsyncpa [#allocation0], 0
    %s3 = sshll.u32 %s1, 4
    %s4 = int_to_ptr.vmem [resolvable:$true] %s3
    %6 = dma.hbm_to_vmem [thread:$0]  %s0, 256, %s4, [#allocation0]
    %7 = dma.done [#allocation0], 256
    %8 = vsyncpa [#allocation0], 1

// kernel: custom-call.3
$region0: #{custom-call.3}
  %s0 = inlined_call_operand.hbm [shape: c64[16,4,4], index: 0, kind: input, shape index: {}]
  %s1 = inlined_call_operand.vmem [shape: f32[16,4,4], index: 1, kind: output, shape index: {}]
  %s2 = scalar_lea.hbm %s0, 256
  $region1: #{custom-call.3} parent=0
    #allocation0 [shape = 's32[1]{0}', space=sflag, size = 0x4, scoped, tag = 'scoped memory for custom-call.3']
    %3 = vsyncpa [#allocation0], 0
    %s4 = sshll.u32 %s1, 4
    %s5 = int_to_ptr.vmem [resolvable:$true] %s4
    %7 = dma.hbm_to_vmem [thread:$0]  %s2, 256, %s5, [#allocation0]
    %8 = dma.done [#allocation0], 256
    %9 = vsyncpa [#allocation0], 1

// kernel: custom-call.1
$region0: #{custom-call.1}
  %s0 = inlined_call_operand.hbm [shape: c64[16,4,8,2,4], index: 0, kind: input, shape index: {}]
  %s1 = inlined_call_operand.vmem [shape: f32[16,4,8,2,4], index: 1, kind: output, shape index: {}]
  %s2 = scalar_lea.hbm %s0, 4096
  $region1: #{custom-call.1} parent=0
    #allocation0 [shape = 's32[1]{0}', space=sflag, size = 0x4, scoped, tag = 'scoped memory for custom-call.1']
    %3 = vsyncpa [#allocation0], 0
    %s4 = sshll.u32 %s1, 4
    %s5 = int_to_ptr.vmem [resolvable:$true] %s4
    %7 = dma.hbm_to_vmem [thread:$0]  %s2, 4096, %s5, [#allocation0]
    %8 = dma.done [#allocation0], 4096
    %9 = vsyncpa [#allocation0], 1

// kernel: custom-call
$region0: #{custom-call}
  %s0 = inlined_call_operand.hbm [shape: c64[16,4,8,2,4], index: 0, kind: input, shape index: {}]
  %s1 = inlined_call_operand.vmem [shape: f32[16,4,8,2,4], index: 1, kind: output, shape index: {}]
  $region1: #{custom-call} parent=0
    #allocation0 [shape = 's32[1]{0}', space=sflag, size = 0x4, scoped, tag = 'scoped memory for custom-call']
    %2 = vsyncpa [#allocation0], 0
    %s3 = sshll.u32 %s1, 4
    %s4 = int_to_ptr.vmem [resolvable:$true] %s3
    %6 = dma.hbm_to_vmem [thread:$0]  %s0, 4096, %s4, [#allocation0]
    %7 = dma.done [#allocation0], 4096
    %8 = vsyncpa [#allocation0], 1

// kernel: dnn_forward.1
$region0: #{dnn_forward.1}
  #allocation0 [shape = 'u32[]', space=smem, size = 0x4, offset = 0x4, fixed_abs, tag = 'smem constant byte address 0x4 - core index']
  #allocation1 [shape = 'u32[144,128]{1,0:T(1,128)}', space=vmem, size = 0x12000, scoped, tag = 'internal scratch']
  %s0 = inlined_call_operand.vmem [shape: f32[2,576,8], index: 0, kind: input, shape index: {}]
  %s1 = inlined_call_operand.vmem [shape: f32[2,16,8,16], index: 1, kind: input, shape index: {}]
  %s2 = inlined_call_operand.vmem [shape: f32[2,16,8,16], index: 2, kind: input, shape index: {}]
  %s3 = inlined_call_operand.vmem [shape: f32[2,8,16], index: 3, kind: input, shape index: {}]
  %s4 = inlined_call_operand.vmem [shape: f32[2,8,16], index: 4, kind: input, shape index: {}]
  %s5 = inlined_call_operand.vmem [shape: f32[8,64], index: 5, kind: input, shape index: {}]
  %s6 = inlined_call_operand.vmem [shape: f32[1,64], index: 6, kind: input, shape index: {}]
  %s7 = inlined_call_operand.vmem [shape: f32[64,64], index: 7, kind: input, shape index: {}]
  %s8 = inlined_call_operand.vmem [shape: f32[1,64], index: 8, kind: input, shape index: {}]
  %s9 = inlined_call_operand.vmem [shape: f32[2304,32], index: 9, kind: input, shape index: {}]
  %s10 = inlined_call_operand.vmem [shape: f32[1,32], index: 10, kind: input, shape index: {}]
  %s11 = inlined_call_operand.vmem [shape: f32[32,16], index: 11, kind: input, shape index: {}]
  %s12 = inlined_call_operand.vmem [shape: f32[1,16], index: 12, kind: input, shape index: {}]
  %s13 = inlined_call_operand.vmem [shape: f32[16,128], index: 13, kind: input, shape index: {}]
  %s14 = inlined_call_operand.vmem [shape: f32[16,128], index: 14, kind: input, shape index: {}]
  %s15 = inlined_call_operand.vmem [shape: f32[1,128], index: 15, kind: input, shape index: {}]
  %s16 = inlined_call_operand.vmem [shape: f32[128,128], index: 16, kind: input, shape index: {}]
  %s17 = inlined_call_operand.vmem [shape: f32[1,128], index: 17, kind: input, shape index: {}]
  %s18 = inlined_call_operand.vmem [shape: f32[128,40], index: 18, kind: input, shape index: {}]
  %s19 = inlined_call_operand.vmem [shape: f32[1,40], index: 19, kind: input, shape index: {}]
  %s20 = inlined_call_operand.vmem [shape: f32[16,128], index: 20, kind: input, shape index: {}]
  %s21 = inlined_call_operand.vmem [shape: f32[16,128], index: 21, kind: input, shape index: {}]
  %s22 = inlined_call_operand.vmem [shape: f32[1,128], index: 22, kind: input, shape index: {}]
  %s23 = inlined_call_operand.vmem [shape: f32[128,2], index: 23, kind: input, shape index: {}]
  %s24 = inlined_call_operand.vmem [shape: f32[1,2], index: 24, kind: input, shape index: {}]
  %s25 = inlined_call_operand.vmem [shape: f32[2,8,128], index: 25, kind: output, shape index: {}]
  %s26 = sld [smem:[#allocation0]]
  $region133: #{dnn_forward.1} parent=0
    _
  %s28 = ssub.s32 1, %s26
  %s29 = scalar_select 0, %s28, %s26
  loop: start=0, step=1, limit=4
  $region2: #{dnn_forward.1} parent=0 // loop_pre_header
    _
  $region3: #{dnn_forward.1} parent=0 // loop_header
    %s31 = sphi 0, %s35
    %p32 = scmp.ge.s32.totalorder %s31, 4
    %s41 = sphi 0, %s43
    %s44 = sphi 0, %s41
    %s45 = sphi 0, %s44
    %s61 = sphi 0, %s45
    %s67 = sphi 0, %s69
    %s70 = sphi 0, %s67
    %s71 = sphi 0, %s70
    %s87 = sphi 0, %s71
    %s93 = sphi 0, %s95
    %s96 = sphi 0, %s93
    %s97 = sphi 0, %s96
    %s113 = sphi 0, %s97
    %s119 = sphi 0, %s121
    %s122 = sphi 0, %s119
    %s123 = sphi 0, %s122
    %s139 = sphi 0, %s123
    %s145 = sphi 0, %s147
    %s148 = sphi 0, %s145
    %s149 = sphi 0, %s148
    %s165 = sphi 0, %s149
    %s169 = sphi 0, %s169
    %s171 = sphi 0, %s169
    %s172 = sphi 0, %s171
    %s186 = sphi 0, %s172
    %s190 = sphi 0, %s190
    %s192 = sphi 0, %s190
    %s193 = sphi 0, %s192
    %s207 = sphi 0, %s193
    %s211 = sphi 0, %s211
    %s213 = sphi 0, %s211
    %s214 = sphi 0, %s213
    %s228 = sphi 0, %s214
    %s232 = sphi 0, %s232
    %s234 = sphi 0, %s232
    %s235 = sphi 0, %s234
    %s249 = sphi 0, %s235
    %s253 = sphi 0, %s253
    %s255 = sphi 0, %s253
    %s256 = sphi 0, %s255
    %s270 = sphi 0, %s256
    %s274 = sphi 0, %s274
    %s276 = sphi 0, %s274
    %s277 = sphi 0, %s276
    %s291 = sphi 0, %s277
    %s295 = sphi 0, %s295
    %s297 = sphi 0, %s295
    %s298 = sphi 0, %s297
    %s312 = sphi 0, %s298
    %s316 = sphi 0, %s316
    %s318 = sphi 0, %s316
    %s319 = sphi 0, %s318
    %s333 = sphi 0, %s319
    %s337 = sphi 0, %s337
    %s339 = sphi 0, %s337
    %s340 = sphi 0, %s339
    %s354 = sphi 0, %s340
    %s358 = sphi 0, %s358
    %s360 = sphi 0, %s358
    %s361 = sphi 0, %s360
    %s375 = sphi 0, %s361
    %s379 = sphi 0, %s379
    %s381 = sphi 0, %s379
    %s382 = sphi 0, %s381
    %s396 = sphi 0, %s382
    %s400 = sphi 0, %s400
    %s402 = sphi 0, %s400
    %s403 = sphi 0, %s402
    %s417 = sphi 0, %s403
    %s421 = sphi 0, %s421
    %s423 = sphi 0, %s421
    %s424 = sphi 0, %s423
    %s438 = sphi 0, %s424
    %s442 = sphi 0, %s442
    %s444 = sphi 0, %s442
    %s445 = sphi 0, %s444
    %s459 = sphi 0, %s445
    %s463 = sphi 0, %s463
    %s465 = sphi 0, %s463
    %s466 = sphi 0, %s465
    %s480 = sphi 0, %s466
    %s484 = sphi 0, %s484
    %s486 = sphi 0, %s484
    %s487 = sphi 0, %s486
    %s501 = sphi 0, %s487
    %s505 = sphi 0, %s505
    %s507 = sphi 0, %s505
    %s508 = sphi 0, %s507
    %s522 = sphi 0, %s508
    %s526 = sphi 0, %s526
    %s528 = sphi 0, %s526
    %s529 = sphi 0, %s528
    %s543 = sphi 0, %s529
    %s547 = sphi 0, %s547
    %s549 = sphi 0, %s547
    %s550 = sphi 0, %s549
    %s564 = sphi 0, %s550
    %s568 = sphi 0, %s568
    %s570 = sphi 0, %s568
    %s571 = sphi 0, %s570
    %s585 = sphi 0, %s571
    %s591 = sphi 0, %s593
    %s594 = sphi 0, %s591
    %s595 = sphi 0, %s594
    %s611 = sphi 0, %s595
  $region4: #{dnn_forward.1} parent=0 // loop_header_branch
    %34 = sbr.rel (%p32) target = $region8
  $region5: #{dnn_forward.1} parent=0 // loop_body
    %s36 = ssub.s32 %s31, 1
    %s37 = ssub.s32 %s31, 2
    %s38 = sadd.s32 %s31, 1
    %s39 = ssub.s32 %s31, %s38
    %p40 = scmp.eq.s32.totalorder %s39, 0
    %s42 = sadd.s32 %s41, 1
    %s43 = scalar_select %p40, %s41, %s42
    %p46 = pneg %p40
    %p47 = scmp.eq.s32.totalorder %s31, 1
    %p48 = por %p46, %p47
    %p49 = scmp.ne.s32.totalorder %s41, %s44
    %p50 = scmp.eq.s32.totalorder %s31, 0
    %p51 = por %p49, %p50
    %p52 = scmp.ne.s32.totalorder %s41, %s44
    %p53 = scmp.eq.s32.totalorder %s36, 1
    %p54 = por %p52, %p53
    %p55 = scmp.ne.s32.totalorder %s44, %s45
    %p56 = scmp.eq.s32.totalorder %s36, 0
    %p57 = por %p55, %p56
    %p58 = scmp.ne.s32.totalorder %s44, %s45
    %p59 = scmp.eq.s32.totalorder %s37, 1
    %p60 = por %p58, %p59
    %p62 = scmp.ne.s32.totalorder %s45, %s61
    %p63 = scmp.eq.s32.totalorder %s37, 0
    %p64 = por %p62, %p63
    %s65 = ssub.s32 %s31, %s38
    %p66 = scmp.eq.s32.totalorder %s65, 0
    %s68 = sadd.s32 %s67, 1
    %s69 = scalar_select %p66, %s67, %s68
    %p72 = pneg %p66
    %p73 = scmp.eq.s32.totalorder %s31, 1
    %p74 = por %p72, %p73
    %p75 = scmp.ne.s32.totalorder %s67, %s70
    %p76 = scmp.eq.s32.totalorder %s31, 0
    %p77 = por %p75, %p76
    %p78 = scmp.ne.s32.totalorder %s67, %s70
    %p79 = scmp.eq.s32.totalorder %s36, 1
    %p80 = por %p78, %p79
    %p81 = scmp.ne.s32.totalorder %s70, %s71
    %p82 = scmp.eq.s32.totalorder %s36, 0
    %p83 = por %p81, %p82
    %p84 = scmp.ne.s32.totalorder %s70, %s71
    %p85 = scmp.eq.s32.totalorder %s37, 1
    %p86 = por %p84, %p85
    %p88 = scmp.ne.s32.totalorder %s71, %s87
    %p89 = scmp.eq.s32.totalorder %s37, 0
    %p90 = por %p88, %p89
    %s91 = ssub.s32 %s31, %s38
    %p92 = scmp.eq.s32.totalorder %s91, 0
    %s94 = sadd.s32 %s93, 1
    %s95 = scalar_select %p92, %s93, %s94
    %p98 = pneg %p92
    %p99 = scmp.eq.s32.totalorder %s31, 1
    %p100 = por %p98, %p99
    %p101 = scmp.ne.s32.totalorder %s93, %s96
    %p102 = scmp.eq.s32.totalorder %s31, 0
    %p103 = por %p101, %p102
    %p104 = scmp.ne.s32.totalorder %s93, %s96
    %p105 = scmp.eq.s32.totalorder %s36, 1
    %p106 = por %p104, %p105
    %p107 = scmp.ne.s32.totalorder %s96, %s97
    %p108 = scmp.eq.s32.totalorder %s36, 0
    %p109 = por %p107, %p108
    %p110 = scmp.ne.s32.totalorder %s96, %s97
    %p111 = scmp.eq.s32.totalorder %s37, 1
    %p112 = por %p110, %p111
    %p114 = scmp.ne.s32.totalorder %s97, %s113
    %p115 = scmp.eq.s32.totalorder %s37, 0
    %p116 = por %p114, %p115
    %s117 = ssub.s32 %s31, %s38
    %p118 = scmp.eq.s32.totalorder %s117, 0
    %s120 = sadd.s32 %s119, 1
    %s121 = scalar_select %p118, %s119, %s120
    %p124 = pneg %p118
    %p125 = scmp.eq.s32.totalorder %s31, 1
    %p126 = por %p124, %p125
    %p127 = scmp.ne.s32.totalorder %s119, %s122
    %p128 = scmp.eq.s32.totalorder %s31, 0
    %p129 = por %p127, %p128
    %p130 = scmp.ne.s32.totalorder %s119, %s122
    %p131 = scmp.eq.s32.totalorder %s36, 1
    %p132 = por %p130, %p131
    %p133 = scmp.ne.s32.totalorder %s122, %s123
    %p134 = scmp.eq.s32.totalorder %s36, 0
    %p135 = por %p133, %p134
    %p136 = scmp.ne.s32.totalorder %s122, %s123
    %p137 = scmp.eq.s32.totalorder %s37, 1
    %p138 = por %p136, %p137
    %p140 = scmp.ne.s32.totalorder %s123, %s139
    %p141 = scmp.eq.s32.totalorder %s37, 0
    %p142 = por %p140, %p141
    %s143 = ssub.s32 %s31, %s38
    %p144 = scmp.eq.s32.totalorder %s143, 0
    %s146 = sadd.s32 %s145, 1
    %s147 = scalar_select %p144, %s145, %s146
    %p150 = pneg %p144
    %p151 = scmp.eq.s32.totalorder %s31, 1
    %p152 = por %p150, %p151
    %p153 = scmp.ne.s32.totalorder %s145, %s148
    %p154 = scmp.eq.s32.totalorder %s31, 0
    %p155 = por %p153, %p154
    %p156 = scmp.ne.s32.totalorder %s145, %s148
    %p157 = scmp.eq.s32.totalorder %s36, 1
    %p158 = por %p156, %p157
    %p159 = scmp.ne.s32.totalorder %s148, %s149
    %p160 = scmp.eq.s32.totalorder %s36, 0
    %p161 = por %p159, %p160
    %p162 = scmp.ne.s32.totalorder %s148, %s149
    %p163 = scmp.eq.s32.totalorder %s37, 1
    %p164 = por %p162, %p163
    %p166 = scmp.ne.s32.totalorder %s149, %s165
    %p167 = scmp.eq.s32.totalorder %s37, 0
    %p168 = por %p166, %p167
    %s170 = sadd.s32 %s169, 1
    %p173 = scmp.eq.s32.totalorder %s31, 1
    %p174 = scmp.ne.s32.totalorder %s169, %s171
    %p175 = scmp.eq.s32.totalorder %s31, 0
    %p176 = por %p174, %p175
    %p177 = scmp.ne.s32.totalorder %s169, %s171
    %p178 = scmp.eq.s32.totalorder %s36, 1
    %p179 = por %p177, %p178
    %p180 = scmp.ne.s32.totalorder %s171, %s172
    %p181 = scmp.eq.s32.totalorder %s36, 0
    %p182 = por %p180, %p181
    %p183 = scmp.ne.s32.totalorder %s171, %s172
    %p184 = scmp.eq.s32.totalorder %s37, 1
    %p185 = por %p183, %p184
    %p187 = scmp.ne.s32.totalorder %s172, %s186
    %p188 = scmp.eq.s32.totalorder %s37, 0
    %p189 = por %p187, %p188
    %s191 = sadd.s32 %s190, 1
    %p194 = scmp.eq.s32.totalorder %s31, 1
    %p195 = scmp.ne.s32.totalorder %s190, %s192
    %p196 = scmp.eq.s32.totalorder %s31, 0
    %p197 = por %p195, %p196
    %p198 = scmp.ne.s32.totalorder %s190, %s192
    %p199 = scmp.eq.s32.totalorder %s36, 1
    %p200 = por %p198, %p199
    %p201 = scmp.ne.s32.totalorder %s192, %s193
    %p202 = scmp.eq.s32.totalorder %s36, 0
    %p203 = por %p201, %p202
    %p204 = scmp.ne.s32.totalorder %s192, %s193
    %p205 = scmp.eq.s32.totalorder %s37, 1
    %p206 = por %p204, %p205
    %p208 = scmp.ne.s32.totalorder %s193, %s207
    %p209 = scmp.eq.s32.totalorder %s37, 0
    %p210 = por %p208, %p209
    %s212 = sadd.s32 %s211, 1
    %p215 = scmp.eq.s32.totalorder %s31, 1
    %p216 = scmp.ne.s32.totalorder %s211, %s213
    %p217 = scmp.eq.s32.totalorder %s31, 0
    %p218 = por %p216, %p217
    %p219 = scmp.ne.s32.totalorder %s211, %s213
    %p220 = scmp.eq.s32.totalorder %s36, 1
    %p221 = por %p219, %p220
    %p222 = scmp.ne.s32.totalorder %s213, %s214
    %p223 = scmp.eq.s32.totalorder %s36, 0
    %p224 = por %p222, %p223
    %p225 = scmp.ne.s32.totalorder %s213, %s214
    %p226 = scmp.eq.s32.totalorder %s37, 1
    %p227 = por %p225, %p226
    %p229 = scmp.ne.s32.totalorder %s214, %s228
    %p230 = scmp.eq.s32.totalorder %s37, 0
    %p231 = por %p229, %p230
    %s233 = sadd.s32 %s232, 1
    %p236 = scmp.eq.s32.totalorder %s31, 1
    %p237 = scmp.ne.s32.totalorder %s232, %s234
    %p238 = scmp.eq.s32.totalorder %s31, 0
    %p239 = por %p237, %p238
    %p240 = scmp.ne.s32.totalorder %s232, %s234
    %p241 = scmp.eq.s32.totalorder %s36, 1
    %p242 = por %p240, %p241
    %p243 = scmp.ne.s32.totalorder %s234, %s235
    %p244 = scmp.eq.s32.totalorder %s36, 0
    %p245 = por %p243, %p244
    %p246 = scmp.ne.s32.totalorder %s234, %s235
    %p247 = scmp.eq.s32.totalorder %s37, 1
    %p248 = por %p246, %p247
    %p250 = scmp.ne.s32.totalorder %s235, %s249
    %p251 = scmp.eq.s32.totalorder %s37, 0
    %p252 = por %p250, %p251
    %s254 = sadd.s32 %s253, 1
    %p257 = scmp.eq.s32.totalorder %s31, 1
    %p258 = scmp.ne.s32.totalorder %s253, %s255
    %p259 = scmp.eq.s32.totalorder %s31, 0
    %p260 = por %p258, %p259
    %p261 = scmp.ne.s32.totalorder %s253, %s255
    %p262 = scmp.eq.s32.totalorder %s36, 1
    %p263 = por %p261, %p262
    %p264 = scmp.ne.s32.totalorder %s255, %s256
    %p265 = scmp.eq.s32.totalorder %s36, 0
    %p266 = por %p264, %p265
    %p267 = scmp.ne.s32.totalorder %s255, %s256
    %p268 = scmp.eq.s32.totalorder %s37, 1
    %p269 = por %p267, %p268
    %p271 = scmp.ne.s32.totalorder %s256, %s270
    %p272 = scmp.eq.s32.totalorder %s37, 0
    %p273 = por %p271, %p272
    %s275 = sadd.s32 %s274, 1
    %p278 = scmp.eq.s32.totalorder %s31, 1
    %p279 = scmp.ne.s32.totalorder %s274, %s276
    %p280 = scmp.eq.s32.totalorder %s31, 0
    %p281 = por %p279, %p280
    %p282 = scmp.ne.s32.totalorder %s274, %s276
    %p283 = scmp.eq.s32.totalorder %s36, 1
    %p284 = por %p282, %p283
    %p285 = scmp.ne.s32.totalorder %s276, %s277
    %p286 = scmp.eq.s32.totalorder %s36, 0
    %p287 = por %p285, %p286
    %p288 = scmp.ne.s32.totalorder %s276, %s277
    %p289 = scmp.eq.s32.totalorder %s37, 1
    %p290 = por %p288, %p289
    %p292 = scmp.ne.s32.totalorder %s277, %s291
    %p293 = scmp.eq.s32.totalorder %s37, 0
    %p294 = por %p292, %p293
    %s296 = sadd.s32 %s295, 1
    %p299 = scmp.eq.s32.totalorder %s31, 1
    %p300 = scmp.ne.s32.totalorder %s295, %s297
    %p301 = scmp.eq.s32.totalorder %s31, 0
    %p302 = por %p300, %p301
    %p303 = scmp.ne.s32.totalorder %s295, %s297
    %p304 = scmp.eq.s32.totalorder %s36, 1
    %p305 = por %p303, %p304
    %p306 = scmp.ne.s32.totalorder %s297, %s298
    %p307 = scmp.eq.s32.totalorder %s36, 0
    %p308 = por %p306, %p307
    %p309 = scmp.ne.s32.totalorder %s297, %s298
    %p310 = scmp.eq.s32.totalorder %s37, 1
    %p311 = por %p309, %p310
    %p313 = scmp.ne.s32.totalorder %s298, %s312
    %p314 = scmp.eq.s32.totalorder %s37, 0
    %p315 = por %p313, %p314
    %s317 = sadd.s32 %s316, 1
    %p320 = scmp.eq.s32.totalorder %s31, 1
    %p321 = scmp.ne.s32.totalorder %s316, %s318
    %p322 = scmp.eq.s32.totalorder %s31, 0
    %p323 = por %p321, %p322
    %p324 = scmp.ne.s32.totalorder %s316, %s318
    %p325 = scmp.eq.s32.totalorder %s36, 1
    %p326 = por %p324, %p325
    %p327 = scmp.ne.s32.totalorder %s318, %s319
    %p328 = scmp.eq.s32.totalorder %s36, 0
    %p329 = por %p327, %p328
    %p330 = scmp.ne.s32.totalorder %s318, %s319
    %p331 = scmp.eq.s32.totalorder %s37, 1
    %p332 = por %p330, %p331
    %p334 = scmp.ne.s32.totalorder %s319, %s333
    %p335 = scmp.eq.s32.totalorder %s37, 0
    %p336 = por %p334, %p335
    %s338 = sadd.s32 %s337, 1
    %p341 = scmp.eq.s32.totalorder %s31, 1
    %p342 = scmp.ne.s32.totalorder %s337, %s339
    %p343 = scmp.eq.s32.totalorder %s31, 0
    %p344 = por %p342, %p343
    %p345 = scmp.ne.s32.totalorder %s337, %s339
    %p346 = scmp.eq.s32.totalorder %s36, 1
    %p347 = por %p345, %p346
    %p348 = scmp.ne.s32.totalorder %s339, %s340
    %p349 = scmp.eq.s32.totalorder %s36, 0
    %p350 = por %p348, %p349
    %p351 = scmp.ne.s32.totalorder %s339, %s340
    %p352 = scmp.eq.s32.totalorder %s37, 1
    %p353 = por %p351, %p352
    %p355 = scmp.ne.s32.totalorder %s340, %s354
    %p356 = scmp.eq.s32.totalorder %s37, 0
    %p357 = por %p355, %p356
    %s359 = sadd.s32 %s358, 1
    %p362 = scmp.eq.s32.totalorder %s31, 1
    %p363 = scmp.ne.s32.totalorder %s358, %s360
    %p364 = scmp.eq.s32.totalorder %s31, 0
    %p365 = por %p363, %p364
    %p366 = scmp.ne.s32.totalorder %s358, %s360
    %p367 = scmp.eq.s32.totalorder %s36, 1
    %p368 = por %p366, %p367
    %p369 = scmp.ne.s32.totalorder %s360, %s361
    %p370 = scmp.eq.s32.totalorder %s36, 0
    %p371 = por %p369, %p370
    %p372 = scmp.ne.s32.totalorder %s360, %s361
    %p373 = scmp.eq.s32.totalorder %s37, 1
    %p374 = por %p372, %p373
    %p376 = scmp.ne.s32.totalorder %s361, %s375
    %p377 = scmp.eq.s32.totalorder %s37, 0
    %p378 = por %p376, %p377
    %s380 = sadd.s32 %s379, 1
    %p383 = scmp.eq.s32.totalorder %s31, 1
    %p384 = scmp.ne.s32.totalorder %s379, %s381
    %p385 = scmp.eq.s32.totalorder %s31, 0
    %p386 = por %p384, %p385
    %p387 = scmp.ne.s32.totalorder %s379, %s381
    %p388 = scmp.eq.s32.totalorder %s36, 1
    %p389 = por %p387, %p388
    %p390 = scmp.ne.s32.totalorder %s381, %s382
    %p391 = scmp.eq.s32.totalorder %s36, 0
    %p392 = por %p390, %p391
    %p393 = scmp.ne.s32.totalorder %s381, %s382
    %p394 = scmp.eq.s32.totalorder %s37, 1
    %p395 = por %p393, %p394
    %p397 = scmp.ne.s32.totalorder %s382, %s396
    %p398 = scmp.eq.s32.totalorder %s37, 0
    %p399 = por %p397, %p398
    %s401 = sadd.s32 %s400, 1
    %p404 = scmp.eq.s32.totalorder %s31, 1
    %p405 = scmp.ne.s32.totalorder %s400, %s402
    %p406 = scmp.eq.s32.totalorder %s31, 0
    %p407 = por %p405, %p406
    %p408 = scmp.ne.s32.totalorder %s400, %s402
    %p409 = scmp.eq.s32.totalorder %s36, 1
    %p410 = por %p408, %p409
    %p411 = scmp.ne.s32.totalorder %s402, %s403
    %p412 = scmp.eq.s32.totalorder %s36, 0
    %p413 = por %p411, %p412
    %p414 = scmp.ne.s32.totalorder %s402, %s403
    %p415 = scmp.eq.s32.totalorder %s37, 1
    %p416 = por %p414, %p415
    %p418 = scmp.ne.s32.totalorder %s403, %s417
    %p419 = scmp.eq.s32.totalorder %s37, 0
    %p420 = por %p418, %p419
    %s422 = sadd.s32 %s421, 1
    %p425 = scmp.eq.s32.totalorder %s31, 1
    %p426 = scmp.ne.s32.totalorder %s421, %s423
    %p427 = scmp.eq.s32.totalorder %s31, 0
    %p428 = por %p426, %p427
    %p429 = scmp.ne.s32.totalorder %s421, %s423
    %p430 = scmp.eq.s32.totalorder %s36, 1
    %p431 = por %p429, %p430
    %p432 = scmp.ne.s32.totalorder %s423, %s424
    %p433 = scmp.eq.s32.totalorder %s36, 0
    %p434 = por %p432, %p433
    %p435 = scmp.ne.s32.totalorder %s423, %s424
    %p436 = scmp.eq.s32.totalorder %s37, 1
    %p437 = por %p435, %p436
    %p439 = scmp.ne.s32.totalorder %s424, %s438
    %p440 = scmp.eq.s32.totalorder %s37, 0
    %p441 = por %p439, %p440
    %s443 = sadd.s32 %s442, 1
    %p446 = scmp.eq.s32.totalorder %s31, 1
    %p447 = scmp.ne.s32.totalorder %s442, %s444
    %p448 = scmp.eq.s32.totalorder %s31, 0
    %p449 = por %p447, %p448
    %p450 = scmp.ne.s32.totalorder %s442, %s444
    %p451 = scmp.eq.s32.totalorder %s36, 1
    %p452 = por %p450, %p451
    %p453 = scmp.ne.s32.totalorder %s444, %s445
    %p454 = scmp.eq.s32.totalorder %s36, 0
    %p455 = por %p453, %p454
    %p456 = scmp.ne.s32.totalorder %s444, %s445
    %p457 = scmp.eq.s32.totalorder %s37, 1
    %p458 = por %p456, %p457
    %p460 = scmp.ne.s32.totalorder %s445, %s459
    %p461 = scmp.eq.s32.totalorder %s37, 0
    %p462 = por %p460, %p461
    %s464 = sadd.s32 %s463, 1
    %p467 = scmp.eq.s32.totalorder %s31, 1
    %p468 = scmp.ne.s32.totalorder %s463, %s465
    %p469 = scmp.eq.s32.totalorder %s31, 0
    %p470 = por %p468, %p469
    %p471 = scmp.ne.s32.totalorder %s463, %s465
    %p472 = scmp.eq.s32.totalorder %s36, 1
    %p473 = por %p471, %p472
    %p474 = scmp.ne.s32.totalorder %s465, %s466
    %p475 = scmp.eq.s32.totalorder %s36, 0
    %p476 = por %p474, %p475
    %p477 = scmp.ne.s32.totalorder %s465, %s466
    %p478 = scmp.eq.s32.totalorder %s37, 1
    %p479 = por %p477, %p478
    %p481 = scmp.ne.s32.totalorder %s466, %s480
    %p482 = scmp.eq.s32.totalorder %s37, 0
    %p483 = por %p481, %p482
    %s485 = sadd.s32 %s484, 1
    %p488 = scmp.eq.s32.totalorder %s31, 1
    %p489 = scmp.ne.s32.totalorder %s484, %s486
    %p490 = scmp.eq.s32.totalorder %s31, 0
    %p491 = por %p489, %p490
    %p492 = scmp.ne.s32.totalorder %s484, %s486
    %p493 = scmp.eq.s32.totalorder %s36, 1
    %p494 = por %p492, %p493
    %p495 = scmp.ne.s32.totalorder %s486, %s487
    %p496 = scmp.eq.s32.totalorder %s36, 0
    %p497 = por %p495, %p496
    %p498 = scmp.ne.s32.totalorder %s486, %s487
    %p499 = scmp.eq.s32.totalorder %s37, 1
    %p500 = por %p498, %p499
    %p502 = scmp.ne.s32.totalorder %s487, %s501
    %p503 = scmp.eq.s32.totalorder %s37, 0
    %p504 = por %p502, %p503
    %s506 = sadd.s32 %s505, 1
    %p509 = scmp.eq.s32.totalorder %s31, 1
    %p510 = scmp.ne.s32.totalorder %s505, %s507
    %p511 = scmp.eq.s32.totalorder %s31, 0
    %p512 = por %p510, %p511
    %p513 = scmp.ne.s32.totalorder %s505, %s507
    %p514 = scmp.eq.s32.totalorder %s36, 1
    %p515 = por %p513, %p514
    %p516 = scmp.ne.s32.totalorder %s507, %s508
    %p517 = scmp.eq.s32.totalorder %s36, 0
    %p518 = por %p516, %p517
    %p519 = scmp.ne.s32.totalorder %s507, %s508
    %p520 = scmp.eq.s32.totalorder %s37, 1
    %p521 = por %p519, %p520
    %p523 = scmp.ne.s32.totalorder %s508, %s522
    %p524 = scmp.eq.s32.totalorder %s37, 0
    %p525 = por %p523, %p524
    %s527 = sadd.s32 %s526, 1
    %p530 = scmp.eq.s32.totalorder %s31, 1
    %p531 = scmp.ne.s32.totalorder %s526, %s528
    %p532 = scmp.eq.s32.totalorder %s31, 0
    %p533 = por %p531, %p532
    %p534 = scmp.ne.s32.totalorder %s526, %s528
    %p535 = scmp.eq.s32.totalorder %s36, 1
    %p536 = por %p534, %p535
    %p537 = scmp.ne.s32.totalorder %s528, %s529
    %p538 = scmp.eq.s32.totalorder %s36, 0
    %p539 = por %p537, %p538
    %p540 = scmp.ne.s32.totalorder %s528, %s529
    %p541 = scmp.eq.s32.totalorder %s37, 1
    %p542 = por %p540, %p541
    %p544 = scmp.ne.s32.totalorder %s529, %s543
    %p545 = scmp.eq.s32.totalorder %s37, 0
    %p546 = por %p544, %p545
    %s548 = sadd.s32 %s547, 1
    %p551 = scmp.eq.s32.totalorder %s31, 1
    %p552 = scmp.ne.s32.totalorder %s547, %s549
    %p553 = scmp.eq.s32.totalorder %s31, 0
    %p554 = por %p552, %p553
    %p555 = scmp.ne.s32.totalorder %s547, %s549
    %p556 = scmp.eq.s32.totalorder %s36, 1
    %p557 = por %p555, %p556
    %p558 = scmp.ne.s32.totalorder %s549, %s550
    %p559 = scmp.eq.s32.totalorder %s36, 0
    %p560 = por %p558, %p559
    %p561 = scmp.ne.s32.totalorder %s549, %s550
    %p562 = scmp.eq.s32.totalorder %s37, 1
    %p563 = por %p561, %p562
    %p565 = scmp.ne.s32.totalorder %s550, %s564
    %p566 = scmp.eq.s32.totalorder %s37, 0
    %p567 = por %p565, %p566
    %s569 = sadd.s32 %s568, 1
    %p572 = scmp.eq.s32.totalorder %s31, 1
    %p573 = scmp.ne.s32.totalorder %s568, %s570
    %p574 = scmp.eq.s32.totalorder %s31, 0
    %p575 = por %p573, %p574
    %p576 = scmp.ne.s32.totalorder %s568, %s570
    %p577 = scmp.eq.s32.totalorder %s36, 1
    %p578 = por %p576, %p577
    %p579 = scmp.ne.s32.totalorder %s570, %s571
    %p580 = scmp.eq.s32.totalorder %s36, 0
    %p581 = por %p579, %p580
    %p582 = scmp.ne.s32.totalorder %s570, %s571
    %p583 = scmp.eq.s32.totalorder %s37, 1
    %p584 = por %p582, %p583
    %p586 = scmp.ne.s32.totalorder %s571, %s585
    %p587 = scmp.eq.s32.totalorder %s37, 0
    %p588 = por %p586, %p587
    %s589 = ssub.s32 %s31, %s38
    %p590 = scmp.eq.s32.totalorder %s589, 0
    %s592 = sadd.s32 %s591, 1
    %s593 = scalar_select %p590, %s591, %s592
    %p596 = pneg %p590
    %p597 = scmp.eq.s32.totalorder %s31, 1
    %p598 = por %p596, %p597
    %p599 = scmp.ne.s32.totalorder %s591, %s594
    %p600 = scmp.eq.s32.totalorder %s31, 0
    %p601 = por %p599, %p600
    %p602 = scmp.ne.s32.totalorder %s591, %s594
    %p603 = scmp.eq.s32.totalorder %s36, 1
    %p604 = por %p602, %p603
    %p605 = scmp.ne.s32.totalorder %s594, %s595
    %p606 = scmp.eq.s32.totalorder %s36, 0
    %p607 = por %p605, %p606
    %p608 = scmp.ne.s32.totalorder %s594, %s595
    %p609 = scmp.eq.s32.totalorder %s37, 1
    %p610 = por %p608, %p609
    %p612 = scmp.ne.s32.totalorder %s595, %s611
    %p613 = scmp.eq.s32.totalorder %s37, 0
    %p614 = por %p612, %p613
    %p615 = scmp.le.s32.totalorder 1, %s31
    %p616 = scmp.lt.s32.totalorder %s31, 3
    %p617 = pnand %p615, %p616
    %p618 = pneg %p617
    // Predicated region
    $region9: #{dnn_forward.1} parent=5 // pred_check
      _
    $region10: #{dnn_forward.1} parent=5 // pred_check_branch
      %620 = sbr.rel (%p617) target = $region12
    $region11: #{dnn_forward.1} parent=5 // pred_region
      %s621 = ssub.s32 %s31, 1
      // Predicated region
      $region13: #{dnn_forward.1} parent=11 // pred_check
        %p622 = pneg %p182
      $region14: #{dnn_forward.1} parent=11 // pred_check_branch
        %624 = sbr.rel (%p622) target = $region16
      $region15: #{dnn_forward.1} parent=11 // pred_region
        _
      $region16: #{dnn_forward.1} parent=11 // pred_fallthru
        _
      // Predicated region
      $region17: #{dnn_forward.1} parent=11 // pred_check
        %p625 = pneg %p203
      $region18: #{dnn_forward.1} parent=11 // pred_check_branch
        %627 = sbr.rel (%p625) target = $region20
      $region19: #{dnn_forward.1} parent=11 // pred_region
        _
      $region20: #{dnn_forward.1} parent=11 // pred_fallthru
        _
      // Predicated region
      $region21: #{dnn_forward.1} parent=11 // pred_check
        %p628 = pneg %p224
      $region22: #{dnn_forward.1} parent=11 // pred_check_branch
        %630 = sbr.rel (%p628) target = $region24
      $region23: #{dnn_forward.1} parent=11 // pred_region
        _
      $region24: #{dnn_forward.1} parent=11 // pred_fallthru
        _
      // Predicated region
      $region25: #{dnn_forward.1} parent=11 // pred_check
        %p631 = pneg %p245
      $region26: #{dnn_forward.1} parent=11 // pred_check_branch
        %633 = sbr.rel (%p631) target = $region28
      $region27: #{dnn_forward.1} parent=11 // pred_region
        _
      $region28: #{dnn_forward.1} parent=11 // pred_fallthru
        _
      // Predicated region
      $region29: #{dnn_forward.1} parent=11 // pred_check
        %p634 = pneg %p266
      $region30: #{dnn_forward.1} parent=11 // pred_check_branch
        %636 = sbr.rel (%p634) target = $region32
      $region31: #{dnn_forward.1} parent=11 // pred_region
        _
      $region32: #{dnn_forward.1} parent=11 // pred_fallthru
        _
      // Predicated region
      $region33: #{dnn_forward.1} parent=11 // pred_check
        %p637 = pneg %p287
      $region34: #{dnn_forward.1} parent=11 // pred_check_branch
        %639 = sbr.rel (%p637) target = $region36
      $region35: #{dnn_forward.1} parent=11 // pred_region
        _
      $region36: #{dnn_forward.1} parent=11 // pred_fallthru
        _
      // Predicated region
      $region37: #{dnn_forward.1} parent=11 // pred_check
        %p640 = pneg %p308
      $region38: #{dnn_forward.1} parent=11 // pred_check_branch
        %642 = sbr.rel (%p640) target = $region40
      $region39: #{dnn_forward.1} parent=11 // pred_region
        _
      $region40: #{dnn_forward.1} parent=11 // pred_fallthru
        _
      // Predicated region
      $region41: #{dnn_forward.1} parent=11 // pred_check
        %p643 = pneg %p329
      $region42: #{dnn_forward.1} parent=11 // pred_check_branch
        %645 = sbr.rel (%p643) target = $region44
      $region43: #{dnn_forward.1} parent=11 // pred_region
        _
      $region44: #{dnn_forward.1} parent=11 // pred_fallthru
        _
      // Predicated region
      $region45: #{dnn_forward.1} parent=11 // pred_check
        %p646 = pneg %p350
      $region46: #{dnn_forward.1} parent=11 // pred_check_branch
        %648 = sbr.rel (%p646) target = $region48
      $region47: #{dnn_forward.1} parent=11 // pred_region
        _
      $region48: #{dnn_forward.1} parent=11 // pred_fallthru
        _
      // Predicated region
      $region49: #{dnn_forward.1} parent=11 // pred_check
        %p649 = pneg %p371
      $region50: #{dnn_forward.1} parent=11 // pred_check_branch
        %651 = sbr.rel (%p649) target = $region52
      $region51: #{dnn_forward.1} parent=11 // pred_region
        _
      $region52: #{dnn_forward.1} parent=11 // pred_fallthru
        _
      // Predicated region
      $region53: #{dnn_forward.1} parent=11 // pred_check
        %p652 = pneg %p392
      $region54: #{dnn_forward.1} parent=11 // pred_check_branch
        %654 = sbr.rel (%p652) target = $region56
      $region55: #{dnn_forward.1} parent=11 // pred_region
        _
      $region56: #{dnn_forward.1} parent=11 // pred_fallthru
        _
      // Predicated region
      $region57: #{dnn_forward.1} parent=11 // pred_check
        %p655 = pneg %p413
      $region58: #{dnn_forward.1} parent=11 // pred_check_branch
        %657 = sbr.rel (%p655) target = $region60
      $region59: #{dnn_forward.1} parent=11 // pred_region
        _
      $region60: #{dnn_forward.1} parent=11 // pred_fallthru
        _
      // Predicated region
      $region61: #{dnn_forward.1} parent=11 // pred_check
        %p658 = pneg %p434
      $region62: #{dnn_forward.1} parent=11 // pred_check_branch
        %660 = sbr.rel (%p658) target = $region64
      $region63: #{dnn_forward.1} parent=11 // pred_region
        _
      $region64: #{dnn_forward.1} parent=11 // pred_fallthru
        _
      // Predicated region
      $region65: #{dnn_forward.1} parent=11 // pred_check
        %p661 = pneg %p455
      $region66: #{dnn_forward.1} parent=11 // pred_check_branch
        %663 = sbr.rel (%p661) target = $region68
      $region67: #{dnn_forward.1} parent=11 // pred_region
        _
      $region68: #{dnn_forward.1} parent=11 // pred_fallthru
        _
      // Predicated region
      $region69: #{dnn_forward.1} parent=11 // pred_check
        %p664 = pneg %p476
      $region70: #{dnn_forward.1} parent=11 // pred_check_branch
        %666 = sbr.rel (%p664) target = $region72
      $region71: #{dnn_forward.1} parent=11 // pred_region
        _
      $region72: #{dnn_forward.1} parent=11 // pred_fallthru
        _
      // Predicated region
      $region73: #{dnn_forward.1} parent=11 // pred_check
        %p667 = pneg %p497
      $region74: #{dnn_forward.1} parent=11 // pred_check_branch
        %669 = sbr.rel (%p667) target = $region76
      $region75: #{dnn_forward.1} parent=11 // pred_region
        _
      $region76: #{dnn_forward.1} parent=11 // pred_fallthru
        _
      // Predicated region
      $region77: #{dnn_forward.1} parent=11 // pred_check
        %p670 = pneg %p518
      $region78: #{dnn_forward.1} parent=11 // pred_check_branch
        %672 = sbr.rel (%p670) target = $region80
      $region79: #{dnn_forward.1} parent=11 // pred_region
        _
      $region80: #{dnn_forward.1} parent=11 // pred_fallthru
        _
      // Predicated region
      $region81: #{dnn_forward.1} parent=11 // pred_check
        %p673 = pneg %p539
      $region82: #{dnn_forward.1} parent=11 // pred_check_branch
        %675 = sbr.rel (%p673) target = $region84
      $region83: #{dnn_forward.1} parent=11 // pred_region
        _
      $region84: #{dnn_forward.1} parent=11 // pred_fallthru
        _
      // Predicated region
      $region85: #{dnn_forward.1} parent=11 // pred_check
        %p676 = pneg %p560
      $region86: #{dnn_forward.1} parent=11 // pred_check_branch
        %678 = sbr.rel (%p676) target = $region88
      $region87: #{dnn_forward.1} parent=11 // pred_region
        _
      $region88: #{dnn_forward.1} parent=11 // pred_fallthru
        _
      // Predicated region
      $region89: #{dnn_forward.1} parent=11 // pred_check
        %p679 = pneg %p581
      $region90: #{dnn_forward.1} parent=11 // pred_check_branch
        %681 = sbr.rel (%p679) target = $region92
      $region91: #{dnn_forward.1} parent=11 // pred_region
        _
      $region92: #{dnn_forward.1} parent=11 // pred_fallthru
        _
    $region12: #{dnn_forward.1} parent=5 // pred_fallthru
      _
    %p682 = scmp.lt.s32.totalorder %s31, 2
    // Predicated region
    $region93: #{dnn_forward.1} parent=5 // pred_check
      %p683 = pneg %p682
    $region94: #{dnn_forward.1} parent=5 // pred_check_branch
      %685 = sbr.rel (%p683) target = $region96
    $region95: #{dnn_forward.1} parent=5 // pred_region
      // Predicated region
      $region97: #{dnn_forward.1} parent=95 // pred_check
        %p686 = pneg %p51
      $region98: #{dnn_forward.1} parent=95 // pred_check_branch
        %688 = sbr.rel (%p686) target = $region100
      $region99: #{dnn_forward.1} parent=95 // pred_region
        %p689 = scmp.lt.s32.totalorder %s31, 1
        %s690 = scalar_select %p689, %s31, 1
        %s691 = smul.addr %s690, 72
        %s692 = smul.addr %s691, 8
        %s693 = scalar_lea.vmem %s0, %s692
      $region100: #{dnn_forward.1} parent=95 // pred_fallthru
        _
      // Predicated region
      $region101: #{dnn_forward.1} parent=95 // pred_check
        %p694 = pneg %p77
      $region102: #{dnn_forward.1} parent=95 // pred_check_branch
        %696 = sbr.rel (%p694) target = $region104
      $region103: #{dnn_forward.1} parent=95 // pred_region
        %p697 = scmp.lt.s32.totalorder %s31, 1
        %s698 = scalar_select %p697, %s31, 1
        %s699 = smul.addr %s698, 16
        %s700 = smul.addr %s699, 8
        %s701 = scalar_lea.vmem %s1, %s700
      $region104: #{dnn_forward.1} parent=95 // pred_fallthru
        _
      // Predicated region
      $region105: #{dnn_forward.1} parent=95 // pred_check
        %p702 = pneg %p103
      $region106: #{dnn_forward.1} parent=95 // pred_check_branch
        %704 = sbr.rel (%p702) target = $region108
      $region107: #{dnn_forward.1} parent=95 // pred_region
        %p705 = scmp.lt.s32.totalorder %s31, 1
        %s706 = scalar_select %p705, %s31, 1
        %s707 = smul.addr %s706, 16
        %s708 = smul.addr %s707, 8
        %s709 = scalar_lea.vmem %s2, %s708
      $region108: #{dnn_forward.1} parent=95 // pred_fallthru
        _
      // Predicated region
      $region109: #{dnn_forward.1} parent=95 // pred_check
        %p710 = pneg %p129
      $region110: #{dnn_forward.1} parent=95 // pred_check_branch
        %712 = sbr.rel (%p710) target = $region112
      $region111: #{dnn_forward.1} parent=95 // pred_region
        %p713 = scmp.lt.s32.totalorder %s31, 1
        %s714 = scalar_select %p713, %s31, 1
        %s715 = smul.addr %s714, 8
        %s716 = scalar_lea.vmem %s3, %s715
      $region112: #{dnn_forward.1} parent=95 // pred_fallthru
        _
      // Predicated region
      $region113: #{dnn_forward.1} parent=95 // pred_check
        %p717 = pneg %p155
      $region114: #{dnn_forward.1} parent=95 // pred_check_branch
        %719 = sbr.rel (%p717) target = $region116
      $region115: #{dnn_forward.1} parent=95 // pred_region
        %p720 = scmp.lt.s32.totalorder %s31, 1
        %s721 = scalar_select %p720, %s31, 1
        %s722 = smul.addr %s721, 8
        %s723 = scalar_lea.vmem %s4, %s722
      $region116: #{dnn_forward.1} parent=95 // pred_fallthru
        _
    $region96: #{dnn_forward.1} parent=5 // pred_fallthru
      _
    %p724 = scmp.le.s32.totalorder 1, %s31
    %p725 = scmp.lt.s32.totalorder %s31, 3
    %p726 = pnand %p724, %p725
    %p727 = pneg %p726
    // Predicated region
    $region117: #{dnn_forward.1} parent=5 // pred_check
      _
    $region118: #{dnn_forward.1} parent=5 // pred_check_branch
      %729 = sbr.rel (%p726) target = $region120
    $region119: #{dnn_forward.1} parent=5 // pred_region
      %s730 = ssub.s32 %s31, 1
      %p731 = scmp.lt.s32.totalorder %s36, 1
      %s732 = scalar_select %p731, %s36, 1
      %s733 = smul.addr %s732, 72
      %s734 = smul.addr %s733, 8
      %s735 = scalar_lea.vmem %s0, %s734
      %p736 = pneg %p57
      %p737 = pneg %p54
      %p738 = scmp.lt.s32.totalorder %s36, 1
      %s739 = scalar_select %p738, %s36, 1
      %s740 = smul.addr %s739, 16
      %s741 = smul.addr %s740, 8
      %s742 = scalar_lea.vmem %s1, %s741
      %p743 = pneg %p83
      %p744 = pneg %p80
      %p745 = scmp.lt.s32.totalorder %s36, 1
      %s746 = scalar_select %p745, %s36, 1
      %s747 = smul.addr %s746, 16
      %s748 = smul.addr %s747, 8
      %s749 = scalar_lea.vmem %s2, %s748
      %p750 = pneg %p109
      %p751 = pneg %p106
      %p752 = scmp.lt.s32.totalorder %s36, 1
      %s753 = scalar_select %p752, %s36, 1
      %s754 = smul.addr %s753, 8
      %s755 = scalar_lea.vmem %s3, %s754
      %p756 = pneg %p135
      %p757 = pneg %p132
      %p758 = scmp.lt.s32.totalorder %s36, 1
      %s759 = scalar_select %p758, %s36, 1
      %s760 = smul.addr %s759, 8
      %s761 = scalar_lea.vmem %s4, %s760
      %p762 = pneg %p161
      %p763 = pneg %p158
      %p764 = pneg %p182
      %p765 = pneg %p179
      %p766 = pneg %p203
      %p767 = pneg %p200
      %p768 = pneg %p224
      %p769 = pneg %p221
      %p770 = pneg %p245
      %p771 = pneg %p242
      %p772 = pneg %p266
      %p773 = pneg %p263
      %p774 = pneg %p287
      %p775 = pneg %p284
      %p776 = pneg %p308
      %p777 = pneg %p305
      %p778 = pneg %p329
      %p779 = pneg %p326
      %p780 = pneg %p350
      %p781 = pneg %p347
      %p782 = pneg %p371
      %p783 = pneg %p368
      %p784 = pneg %p392
      %p785 = pneg %p389
      %p786 = pneg %p413
      %p787 = pneg %p410
      %p788 = pneg %p434
      %p789 = pneg %p431
      %p790 = pneg %p455
      %p791 = pneg %p452
      %p792 = pneg %p476
      %p793 = pneg %p473
      %p794 = pneg %p497
      %p795 = pneg %p494
      %p796 = pneg %p518
      %p797 = pneg %p515
      %p798 = pneg %p539
      %p799 = pneg %p536
      %p800 = pneg %p560
      %p801 = pneg %p557
      %p802 = pneg %p581
      %p803 = pneg %p578
      %p804 = pneg %p607
      %p805 = pneg %p604
      %p806 = scmp.lt.s32.totalorder %s36, 1
      %s807 = scalar_select %p806, %s36, 1
      %s808 = smul.addr %s807, 8
      %s809 = scalar_lea.vmem %s25, %s808
      %p810 = scmp.lt.s32.totalorder %s36, 1
      %s811 = scalar_select %p810, %s36, 1
      %s812 = smul.addr %s811, 72
      %s813 = smul.addr %s812, 8
      %s814 = scalar_lea.vmem %s0, %s813
      %p815 = scmp.lt.s32.totalorder %s36, 1
      %s816 = scalar_select %p815, %s36, 1
      %s817 = smul.addr %s816, 16
      %s818 = smul.addr %s817, 8
      %s819 = scalar_lea.vmem %s1, %s818
      %p820 = scmp.lt.s32.totalorder %s36, 1
      %s821 = scalar_select %p820, %s36, 1
      %s822 = smul.addr %s821, 16
      %s823 = smul.addr %s822, 8
      %s824 = scalar_lea.vmem %s2, %s823
      %p825 = scmp.lt.s32.totalorder %s36, 1
      %s826 = scalar_select %p825, %s36, 1
      %s827 = smul.addr %s826, 8
      %s828 = scalar_lea.vmem %s3, %s827
      %p829 = scmp.lt.s32.totalorder %s36, 1
      %s830 = scalar_select %p829, %s36, 1
      %s831 = smul.addr %s830, 8
      %s832 = scalar_lea.vmem %s4, %s831
      %p833 = scmp.lt.s32.totalorder %s36, 1
      %s834 = scalar_select %p833, %s36, 1
      %s835 = smul.addr %s834, 8
      %s836 = scalar_lea.vmem %s25, %s835
      %v837 = vld [vmem:[%s814] sm:$0xff]
      %v838 = vld [vmem:[%s814 + $0x8] sm:$0xff]
      %v839 = vld [vmem:[%s814 + $0x10] sm:$0xff]
      %v840 = vld [vmem:[%s814 + $0x18] sm:$0xff]
      %v841 = vld [vmem:[%s814 + $0x20] sm:$0xff]
      %v842 = vld [vmem:[%s814 + $0x28] sm:$0xff]
      %v843 = vld [vmem:[%s814 + $0x30] sm:$0xff]
      %v844 = vld [vmem:[%s814 + $0x38] sm:$0xff]
      %v845 = vld [vmem:[%s814 + $0x40] sm:$0xff]
      %v846 = vld [vmem:[%s814 + $0x48] sm:$0xff]
      %v847 = vld [vmem:[%s814 + $0x50] sm:$0xff]
      %v848 = vld [vmem:[%s814 + $0x58] sm:$0xff]
      %v849 = vld [vmem:[%s814 + $0x60] sm:$0xff]
      %v850 = vld [vmem:[%s814 + $0x68] sm:$0xff]
      %v851 = vld [vmem:[%s814 + $0x70] sm:$0xff]
      %v852 = vld [vmem:[%s814 + $0x78] sm:$0xff]
      %v853 = vld [vmem:[%s814 + $0x80] sm:$0xff]
      %v854 = vld [vmem:[%s814 + $0x88] sm:$0xff]
      %v855 = vld [vmem:[%s814 + $0x90] sm:$0xff]
      %v856 = vld [vmem:[%s814 + $0x98] sm:$0xff]
      %v857 = vld [vmem:[%s814 + $0xa0] sm:$0xff]
      %v858 = vld [vmem:[%s814 + $0xa8] sm:$0xff]
      %v859 = vld [vmem:[%s814 + $0xb0] sm:$0xff]
      %v860 = vld [vmem:[%s814 + $0xb8] sm:$0xff]
      %v861 = vld [vmem:[%s814 + $0xc0] sm:$0xff]
      %v862 = vld [vmem:[%s814 + $0xc8] sm:$0xff]
      %v863 = vld [vmem:[%s814 + $0xd0] sm:$0xff]
      %v864 = vld [vmem:[%s814 + $0xd8] sm:$0xff]
      %v865 = vld [vmem:[%s814 + $0xe0] sm:$0xff]
      %v866 = vld [vmem:[%s814 + $0xe8] sm:$0xff]
      %v867 = vld [vmem:[%s814 + $0xf0] sm:$0xff]
      %v868 = vld [vmem:[%s814 + $0xf8] sm:$0xff]
      %v869 = vld [vmem:[%s814 + $0x100] sm:$0xff]
      %v870 = vld [vmem:[%s814 + $0x108] sm:$0xff]
      %v871 = vld [vmem:[%s814 + $0x110] sm:$0xff]
      %v872 = vld [vmem:[%s814 + $0x118] sm:$0xff]
      %v873 = vld [vmem:[%s814 + $0x120] sm:$0xff]
      %v874 = vld [vmem:[%s814 + $0x128] sm:$0xff]
      %v875 = vld [vmem:[%s814 + $0x130] sm:$0xff]
      %v876 = vld [vmem:[%s814 + $0x138] sm:$0xff]
      %v877 = vld [vmem:[%s814 + $0x140] sm:$0xff]
      %v878 = vld [vmem:[%s814 + $0x148] sm:$0xff]
      %v879 = vld [vmem:[%s814 + $0x150] sm:$0xff]
      %v880 = vld [vmem:[%s814 + $0x158] sm:$0xff]
      %v881 = vld [vmem:[%s814 + $0x160] sm:$0xff]
      %v882 = vld [vmem:[%s814 + $0x168] sm:$0xff]
      %v883 = vld [vmem:[%s814 + $0x170] sm:$0xff]
      %v884 = vld [vmem:[%s814 + $0x178] sm:$0xff]
      %v885 = vld [vmem:[%s814 + $0x180] sm:$0xff]
      %v886 = vld [vmem:[%s814 + $0x188] sm:$0xff]
      %v887 = vld [vmem:[%s814 + $0x190] sm:$0xff]
      %v888 = vld [vmem:[%s814 + $0x198] sm:$0xff]
      %v889 = vld [vmem:[%s814 + $0x1a0] sm:$0xff]
      %v890 = vld [vmem:[%s814 + $0x1a8] sm:$0xff]
      %v891 = vld [vmem:[%s814 + $0x1b0] sm:$0xff]
      %v892 = vld [vmem:[%s814 + $0x1b8] sm:$0xff]
      %v893 = vld [vmem:[%s814 + $0x1c0] sm:$0xff]
      %v894 = vld [vmem:[%s814 + $0x1c8] sm:$0xff]
      %v895 = vld [vmem:[%s814 + $0x1d0] sm:$0xff]
      %v896 = vld [vmem:[%s814 + $0x1d8] sm:$0xff]
      %v897 = vld [vmem:[%s814 + $0x1e0] sm:$0xff]
      %v898 = vld [vmem:[%s814 + $0x1e8] sm:$0xff]
      %v899 = vld [vmem:[%s814 + $0x1f0] sm:$0xff]
      %v900 = vld [vmem:[%s814 + $0x1f8] sm:$0xff]
      %v901 = vld [vmem:[%s814 + $0x200] sm:$0xff]
      %v902 = vld [vmem:[%s814 + $0x208] sm:$0xff]
      %v903 = vld [vmem:[%s814 + $0x210] sm:$0xff]
      %v904 = vld [vmem:[%s814 + $0x218] sm:$0xff]
      %v905 = vld [vmem:[%s814 + $0x220] sm:$0xff]
      %v906 = vld [vmem:[%s814 + $0x228] sm:$0xff]
      %v907 = vld [vmem:[%s814 + $0x230] sm:$0xff]
      %v908 = vld [vmem:[%s814 + $0x238] sm:$0xff]
      %v909 = vld [vmem:[%s5] sm:$0xff]
      %v910 = vld [vmem:[%s6] sm:$0x1]
      %v912 = vlaneseq
      %v913 = vshrl.u32 %v912, 7
      %v914 = vsub.s32 0, %v913
      %v915 = vrot.slane %v910, %v914
      %vm917 = vcmask 64512
      %v919 = vsel %vm917, %v837, 0
      %v922 = vsel %vm917, %v838, 0
      %v925 = vsel %vm917, %v839, 0
      %v928 = vsel %vm917, %v840, 0
      %v931 = vsel %vm917, %v841, 0
      %v934 = vsel %vm917, %v842, 0
      %v937 = vsel %vm917, %v843, 0
      %v940 = vsel %vm917, %v844, 0
      %v943 = vsel %vm917, %v845, 0
      %v946 = vsel %vm917, %v846, 0
      %v949 = vsel %vm917, %v847, 0
      %v952 = vsel %vm917, %v848, 0
      %v955 = vsel %vm917, %v849, 0
      %v958 = vsel %vm917, %v850, 0
      %v961 = vsel %vm917, %v851, 0
      %v964 = vsel %vm917, %v852, 0
      %v967 = vsel %vm917, %v853, 0
      %v970 = vsel %vm917, %v854, 0
      %v973 = vsel %vm917, %v855, 0
      %v976 = vsel %vm917, %v856, 0
      %v979 = vsel %vm917, %v857, 0
      %v982 = vsel %vm917, %v858, 0
      %v985 = vsel %vm917, %v859, 0
      %v988 = vsel %vm917, %v860, 0
      %v991 = vsel %vm917, %v861, 0
      %v994 = vsel %vm917, %v862, 0
      %v997 = vsel %vm917, %v863, 0
      %v1000 = vsel %vm917, %v864, 0
      %v1003 = vsel %vm917, %v865, 0
      %v1006 = vsel %vm917, %v866, 0
      %v1009 = vsel %vm917, %v867, 0
      %v1012 = vsel %vm917, %v868, 0
      %v1015 = vsel %vm917, %v869, 0
      %v1018 = vsel %vm917, %v870, 0
      %v1021 = vsel %vm917, %v871, 0
      %v1024 = vsel %vm917, %v872, 0
      %v1027 = vsel %vm917, %v873, 0
      %v1030 = vsel %vm917, %v874, 0
      %v1033 = vsel %vm917, %v875, 0
      %v1036 = vsel %vm917, %v876, 0
      %v1039 = vsel %vm917, %v877, 0
      %v1042 = vsel %vm917, %v878, 0
      %v1045 = vsel %vm917, %v879, 0
      %v1048 = vsel %vm917, %v880, 0
      %v1051 = vsel %vm917, %v881, 0
      %v1054 = vsel %vm917, %v882, 0
      %v1057 = vsel %vm917, %v883, 0
      %v1060 = vsel %vm917, %v884, 0
      %v1063 = vsel %vm917, %v885, 0
      %v1066 = vsel %vm917, %v886, 0
      %v1069 = vsel %vm917, %v887, 0
      %v1072 = vsel %vm917, %v888, 0
      %v1075 = vsel %vm917, %v889, 0
      %v1078 = vsel %vm917, %v890, 0
      %v1081 = vsel %vm917, %v891, 0
      %v1084 = vsel %vm917, %v892, 0
      %v1087 = vsel %vm917, %v893, 0
      %v1090 = vsel %vm917, %v894, 0
      %v1093 = vsel %vm917, %v895, 0
      %v1096 = vsel %vm917, %v896, 0
      %v1099 = vsel %vm917, %v897, 0
      %v1102 = vsel %vm917, %v898, 0
      %v1105 = vsel %vm917, %v899, 0
      %v1108 = vsel %vm917, %v900, 0
      %v1111 = vsel %vm917, %v901, 0
      %v1114 = vsel %vm917, %v902, 0
      %v1117 = vsel %vm917, %v903, 0
      %v1120 = vsel %vm917, %v904, 0
      %v1123 = vsel %vm917, %v905, 0
      %v1126 = vsel %vm917, %v906, 0
      %v1129 = vsel %vm917, %v907, 0
      %v1132 = vsel %vm917, %v908, 0
      %1134 = vmatprep.subr.mxu0 0.0
      %1135 = vmatpush1.msra.mxu0 %v909
      %1136 = vmatprep.subr.mxu0 0.0
      %1137 = vmatpush1.msra.mxu0 0.0
      %1138 = vmatprep.subr.mxu0 0.0
      %1139 = vmatpush1.msra.mxu0 0.0
      %1140 = vmatprep.subr.mxu0 0.0
      %1141 = vmatpush1.msra.mxu0 0.0
      %1142 = vmatprep.subr.mxu0 0.0
      %1143 = vmatpush1.msra.mxu0 0.0
      %1144 = vmatprep.subr.mxu0 0.0
      %1145 = vmatpush1.msra.mxu0 0.0
      %1146 = vmatprep.subr.mxu0 0.0
      %1147 = vmatpush1.msra.mxu0 0.0
      %1148 = vmatprep.subr.mxu0 0.0
      %1149 = vmatpush1.msra.mxu0 0.0
      %1150 = vmatprep.subr.mxu0 0.0
      %1151 = vmatpush1.msra.mxu0 0.0
      %1152 = vmatprep.subr.mxu0 0.0
      %1153 = vmatpush1.msra.mxu0 0.0
      %1154 = vmatprep.subr.mxu0 0.0
      %1155 = vmatpush1.msra.mxu0 0.0
      %1156 = vmatprep.subr.mxu0 0.0
      %1157 = vmatpush1.msra.mxu0 0.0
      %1158 = vmatprep.subr.mxu0 0.0
      %1159 = vmatpush1.msra.mxu0 0.0
      %1160 = vmatprep.subr.mxu0 0.0
      %1161 = vmatpush1.msra.mxu0 0.0
      %1162 = vmatprep.subr.mxu0 0.0
      %1163 = vmatpush1.msra.mxu0 0.0
      %1164 = vmatprep.subr.mxu0 0.0
      %1165 = vmatpush1.msra.mxu0 0.0
      %1166 = vmatprep.subr.mxu0 0.0
      %1167 = vmatpush1.msra.mxu0 0.0
      %1168 = vmatprep.subr.mxu0 0.0
      %1169 = vmatpush1.msra.mxu0 0.0
      %1170 = vmatprep.subr.mxu0 0.0
      %1171 = vmatpush1.msra.mxu0 0.0
      %1172 = vmatprep.subr.mxu0 0.0
      %1173 = vmatpush1.msra.mxu0 0.0
      %1174 = vmatprep.subr.mxu0 0.0
      %1175 = vmatpush1.msra.mxu0 0.0
      %1176 = vmatprep.subr.mxu0 0.0
      %1177 = vmatpush1.msra.mxu0 0.0
      %1178 = vmatprep.subr.mxu0 0.0
      %1179 = vmatpush1.msra.mxu0 0.0
      %1180 = vmatprep.subr.mxu0 0.0
      %1181 = vmatpush1.msra.mxu0 0.0
      %1182 = vmatprep.subr.mxu0 0.0
      %1183 = vmatpush1.msra.mxu0 0.0
      %1184 = vmatprep.subr.mxu0 0.0
      %1185 = vmatpush1.msra.mxu0 0.0
      %1186 = vmatprep.subr.mxu0 0.0
      %1187 = vmatpush1.msra.mxu0 0.0
      %1188 = vmatprep.subr.mxu0 0.0
      %1189 = vmatpush1.msra.mxu0 0.0
      %1190 = vmatprep.subr.mxu0 0.0
      %1191 = vmatpush1.msra.mxu0 0.0
      %1192 = vmatprep.subr.mxu0 0.0
      %1193 = vmatpush1.msra.mxu0 0.0
      %1194 = vmatprep.subr.mxu0 0.0
      %1195 = vmatpush1.msra.mxu0 0.0
      %1196 = vmatprep.subr.mxu0 0.0
      %1197 = vmatpush1.msra.mxu0 0.0
      %1198 = vmatprep.mubr.f32.mxu0 0.0
      %1199 = vmatmul.mubr.f32.gmra.mrb[0].mxu0 %v919
      %v1200 = vpop.f32.mrb[0].mxu0
      %v1201 = vadd.f32 %v915, %v1200
      %v1202 = vpop.f32.mrb[0].mxu0
      %1203 = vmatprep.mubr.f32.mxu0 0.0
      %1204 = vmatmul.mubr.f32.gmra.mrb[0].mxu0 %v922
      %v1205 = vpop.f32.mrb[0].mxu0
      %v1206 = vadd.f32 %v915, %v1205
      %v1207 = vpop.f32.mrb[0].mxu0
      %1208 = vmatprep.mubr.f32.mxu0 0.0
      %1209 = vmatmul.mubr.f32.gmra.mrb[0].mxu0 %v925
      %v1210 = vpop.f32.mrb[0].mxu0
      %v1211 = vadd.f32 %v915, %v1210
      %v1212 = vpop.f32.mrb[0].mxu0
      %1213 = vmatprep.mubr.f32.mxu0 0.0
      %1214 = vmatmul.mubr.f32.gmra.mrb[0].mxu0 %v928
      %v1215 = vpop.f32.mrb[0].mxu0
      %v1216 = vadd.f32 %v915, %v1215
      %v1217 = vpop.f32.mrb[0].mxu0
      %1218 = vmatprep.mubr.f32.mxu0 0.0
      %1219 = vmatmul.mubr.f32.gmra.mrb[0].mxu0 %v931
      %v1220 = vpop.f32.mrb[0].mxu0
      %v1221 = vadd.f32 %v915, %v1220
      %v1222 = vpop.f32.mrb[0].mxu0
      %1223 = vmatprep.mubr.f32.mxu0 0.0
      %1224 = vmatmul.mubr.f32.gmra.mrb[0].mxu0 %v934
      %v1225 = vpop.f32.mrb[0].mxu0
      %v1226 = vadd.f32 %v915, %v1225
      %v1227 = vpop.f32.mrb[0].mxu0
      %1228 = vmatprep.mubr.f32.mxu0 0.0
      %1229 = vmatmul.mubr.f32.gmra.mrb[0].mxu0 %v937
      %v1230 = vpop.f32.mrb[0].mxu0
      %v1231 = vadd.f32 %v915, %v1230
      %v1232 = vpop.f32.mrb[0].mxu0
      %1233 = vmatprep.mubr.f32.mxu0 0.0
      %1234 = vmatmul.mubr.f32.gmra.mrb[0].mxu0 %v940
      %v1235 = vpop.f32.mrb[0].mxu0
      %v1236 = vadd.f32 %v915, %v1235
      %v1237 = vpop.f32.mrb[0].mxu0
      %1238 = vmatprep.mubr.f32.mxu0 0.0
      %1239 = vmatmul.mubr.f32.gmra.mrb[0].mxu0 %v943
      %v1240 = vpop.f32.mrb[0].mxu0
      %v1241 = vadd.f32 %v915, %v1240
      %v1242 = vpop.f32.mrb[0].mxu0
      %1243 = vmatprep.mubr.f32.mxu0 0.0
      %1244 = vmatmul.mubr.f32.gmra.mrb[0].mxu0 %v946
      %v1245 = vpop.f32.mrb[0].mxu0
      %v1246 = vadd.f32 %v915, %v1245
      %v1247 = vpop.f32.mrb[0].mxu0
      %1248 = vmatprep.mubr.f32.mxu0 0.0
      %1249 = vmatmul.mubr.f32.gmra.mrb[0].mxu0 %v949
      %v1250 = vpop.f32.mrb[0].mxu0
      %v1251 = vadd.f32 %v915, %v1250
      %v1252 = vpop.f32.mrb[0].mxu0
      %1253 = vmatprep.mubr.f32.mxu0 0.0
      %1254 = vmatmul.mubr.f32.gmra.mrb[0].mxu0 %v952
      %v1255 = vpop.f32.mrb[0].mxu0
      %v1256 = vadd.f32 %v915, %v1255
      %v1257 = vpop.f32.mrb[0].mxu0
      %1258 = vmatprep.mubr.f32.mxu0 0.0
      %1259 = vmatmul.mubr.f32.gmra.mrb[0].mxu0 %v955
      %v1260 = vpop.f32.mrb[0].mxu0
      %v1261 = vadd.f32 %v915, %v1260
      %v1262 = vpop.f32.mrb[0].mxu0
      %1263 = vmatprep.mubr.f32.mxu0 0.0
      %1264 = vmatmul.mubr.f32.gmra.mrb[0].mxu0 %v958
      %v1265 = vpop.f32.mrb[0].mxu0
      %v1266 = vadd.f32 %v915, %v1265
      %v1267 = vpop.f32.mrb[0].mxu0
      %1268 = vmatprep.mubr.f32.mxu0 0.0
      %1269 = vmatmul.mubr.f32.gmra.mrb[0].mxu0 %v961
      %v1270 = vpop.f32.mrb[0].mxu0
      %v1271 = vadd.f32 %v915, %v1270
      %v1272 = vpop.f32.mrb[0].mxu0
      %1273 = vmatprep.mubr.f32.mxu0 0.0
      %1274 = vmatmul.mubr.f32.gmra.mrb[0].mxu0 %v964
      %v1275 = vpop.f32.mrb[0].mxu0
      %v1276 = vadd.f32 %v915, %v1275
      %v1277 = vpop.f32.mrb[0].mxu0
      %1278 = vmatprep.mubr.f32.mxu0 0.0
      %1279 = vmatmul.mubr.f32.gmra.mrb[0].mxu0 %v967
      %v1280 = vpop.f32.mrb[0].mxu0
      %v1281 = vadd.f32 %v915, %v1280
      %v1282 = vpop.f32.mrb[0].mxu0
      %1283 = vmatprep.mubr.f32.mxu0 0.0
      %1284 = vmatmul.mubr.f32.gmra.mrb[0].mxu0 %v970
      %v1285 = vpop.f32.mrb[0].mxu0
      %v1286 = vadd.f32 %v915, %v1285
      %v1287 = vpop.f32.mrb[0].mxu0
      %1288 = vmatprep.mubr.f32.mxu0 0.0
      %1289 = vmatmul.mubr.f32.gmra.mrb[0].mxu0 %v973
      %v1290 = vpop.f32.mrb[0].mxu0
      %v1291 = vadd.f32 %v915, %v1290
      %v1292 = vpop.f32.mrb[0].mxu0
      %1293 = vmatprep.mubr.f32.mxu0 0.0
      %1294 = vmatmul.mubr.f32.gmra.mrb[0].mxu0 %v976
      %v1295 = vpop.f32.mrb[0].mxu0
      %v1296 = vadd.f32 %v915, %v1295
      %v1297 = vpop.f32.mrb[0].mxu0
      %1298 = vmatprep.mubr.f32.mxu0 0.0
      %1299 = vmatmul.mubr.f32.gmra.mrb[0].mxu0 %v979
      %v1300 = vpop.f32.mrb[0].mxu0
      %v1301 = vadd.f32 %v915, %v1300
      %v1302 = vpop.f32.mrb[0].mxu0
      %1303 = vmatprep.mubr.f32.mxu0 0.0
      %1304 = vmatmul.mubr.f32.gmra.mrb[0].mxu0 %v982
      %v1305 = vpop.f32.mrb[0].mxu0
      %v1306 = vadd.f32 %v915, %v1305
      %v1307 = vpop.f32.mrb[0].mxu0
      %1308 = vmatprep.mubr.f32.mxu0 0.0
      %1309 = vmatmul.mubr.f32.gmra.mrb[0].mxu0 %v985
      %v1310 = vpop.f32.mrb[0].mxu0
      %v1311 = vadd.f32 %v915, %v1310
      %v1312 = vpop.f32.mrb[0].mxu0
      %1313 = vmatprep.mubr.f32.mxu0 0.0
      %1314 = vmatmul.mubr.f32.gmra.mrb[0].mxu0 %v988
      %v1315 = vpop.f32.mrb[0].mxu0
      %v1316 = vadd.f32 %v915, %v1315
      %v1317 = vpop.f32.mrb[0].mxu0
      %1318 = vmatprep.mubr.f32.mxu0 0.0
      %1319 = vmatmul.mubr.f32.gmra.mrb[0].mxu0 %v991
      %v1320 = vpop.f32.mrb[0].mxu0
      %v1321 = vadd.f32 %v915, %v1320
      %v1322 = vpop.f32.mrb[0].mxu0
      %1323 = vmatprep.mubr.f32.mxu0 0.0
      %1324 = vmatmul.mubr.f32.gmra.mrb[0].mxu0 %v994
      %v1325 = vpop.f32.mrb[0].mxu0
      %v1326 = vadd.f32 %v915, %v1325
      %v1327 = vpop.f32.mrb[0].mxu0
      %1328 = vmatprep.mubr.f32.mxu0 0.0
      %1329 = vmatmul.mubr.f32.gmra.mrb[0].mxu0 %v997
      %v1330 = vpop.f32.mrb[0].mxu0
      %v1331 = vadd.f32 %v915, %v1330
      %v1332 = vpop.f32.mrb[0].mxu0
      %1333 = vmatprep.mubr.f32.mxu0 0.0
      %1334 = vmatmul.mubr.f32.gmra.mrb[0].mxu0 %v1000
      %v1335 = vpop.f32.mrb[0].mxu0
      %v1336 = vadd.f32 %v915, %v1335
      %v1337 = vpop.f32.mrb[0].mxu0
      %1338 = vmatprep.mubr.f32.mxu0 0.0
      %1339 = vmatmul.mubr.f32.gmra.mrb[0].mxu0 %v1003
      %v1340 = vpop.f32.mrb[0].mxu0
      %v1341 = vadd.f32 %v915, %v1340
      %v1342 = vpop.f32.mrb[0].mxu0
      %1343 = vmatprep.mubr.f32.mxu0 0.0
      %1344 = vmatmul.mubr.f32.gmra.mrb[0].mxu0 %v1006
      %v1345 = vpop.f32.mrb[0].mxu0
      %v1346 = vadd.f32 %v915, %v1345
      %v1347 = vpop.f32.mrb[0].mxu0
      %1348 = vmatprep.mubr.f32.mxu0 0.0
      %1349 = vmatmul.mubr.f32.gmra.mrb[0].mxu0 %v1009
      %v1350 = vpop.f32.mrb[0].mxu0
      %v1351 = vadd.f32 %v915, %v1350
      %v1352 = vpop.f32.mrb[0].mxu0
      %1353 = vmatprep.mubr.f32.mxu0 0.0
      %1354 = vmatmul.mubr.f32.gmra.mrb[0].mxu0 %v1012
      %v1355 = vpop.f32.mrb[0].mxu0
      %v1356 = vadd.f32 %v915, %v1355
      %v1357 = vpop.f32.mrb[0].mxu0
      %1358 = vmatprep.mubr.f32.mxu0 0.0
      %1359 = vmatmul.mubr.f32.gmra.mrb[0].mxu0 %v1015
      %v1360 = vpop.f32.mrb[0].mxu0
      %v1361 = vadd.f32 %v915, %v1360
      %v1362 = vpop.f32.mrb[0].mxu0
      %1363 = vmatprep.mubr.f32.mxu0 0.0
      %1364 = vmatmul.mubr.f32.gmra.mrb[0].mxu0 %v1018
      %v1365 = vpop.f32.mrb[0].mxu0
      %v1366 = vadd.f32 %v915, %v1365
      %v1367 = vpop.f32.mrb[0].mxu0
      %1368 = vmatprep.mubr.f32.mxu0 0.0
      %1369 = vmatmul.mubr.f32.gmra.mrb[0].mxu0 %v1021
      %v1370 = vpop.f32.mrb[0].mxu0
      %v1371 = vadd.f32 %v915, %v1370
      %v1372 = vpop.f32.mrb[0].mxu0
      %1373 = vmatprep.mubr.f32.mxu0 0.0
      %1374 = vmatmul.mubr.f32.gmra.mrb[0].mxu0 %v1024
      %v1375 = vpop.f32.mrb[0].mxu0
      %v1376 = vadd.f32 %v915, %v1375
      %v1377 = vpop.f32.mrb[0].mxu0
      %1378 = vmatprep.mubr.f32.mxu0 0.0
      %1379 = vmatmul.mubr.f32.gmra.mrb[0].mxu0 %v1027
      %v1380 = vpop.f32.mrb[0].mxu0
      %v1381 = vadd.f32 %v915, %v1380
      %v1382 = vpop.f32.mrb[0].mxu0
      %1383 = vmatprep.mubr.f32.mxu0 0.0
      %1384 = vmatmul.mubr.f32.gmra.mrb[0].mxu0 %v1030
      %v1385 = vpop.f32.mrb[0].mxu0
      %v1386 = vadd.f32 %v915, %v1385
      %v1387 = vpop.f32.mrb[0].mxu0
      %1388 = vmatprep.mubr.f32.mxu0 0.0
      %1389 = vmatmul.mubr.f32.gmra.mrb[0].mxu0 %v1033
      %v1390 = vpop.f32.mrb[0].mxu0
      %v1391 = vadd.f32 %v915, %v1390
      %v1392 = vpop.f32.mrb[0].mxu0
      %1393 = vmatprep.mubr.f32.mxu0 0.0
      %1394 = vmatmul.mubr.f32.gmra.mrb[0].mxu0 %v1036
      %v1395 = vpop.f32.mrb[0].mxu0
      %v1396 = vadd.f32 %v915, %v1395
      %v1397 = vpop.f32.mrb[0].mxu0
      %1398 = vmatprep.mubr.f32.mxu0 0.0
      %1399 = vmatmul.mubr.f32.gmra.mrb[0].mxu0 %v1039
      %v1400 = vpop.f32.mrb[0].mxu0
      %v1401 = vadd.f32 %v915, %v1400
      %v1402 = vpop.f32.mrb[0].mxu0
      %1403 = vmatprep.mubr.f32.mxu0 0.0
      %1404 = vmatmul.mubr.f32.gmra.mrb[0].mxu0 %v1042
      %v1405 = vpop.f32.mrb[0].mxu0
      %v1406 = vadd.f32 %v915, %v1405
      %v1407 = vpop.f32.mrb[0].mxu0
      %1408 = vmatprep.mubr.f32.mxu0 0.0
      %1409 = vmatmul.mubr.f32.gmra.mrb[0].mxu0 %v1045
      %v1410 = vpop.f32.mrb[0].mxu0
      %v1411 = vadd.f32 %v915, %v1410
      %v1412 = vpop.f32.mrb[0].mxu0
      %1413 = vmatprep.mubr.f32.mxu0 0.0
      %1414 = vmatmul.mubr.f32.gmra.mrb[0].mxu0 %v1048
      %v1415 = vpop.f32.mrb[0].mxu0
      %v1416 = vadd.f32 %v915, %v1415
      %v1417 = vpop.f32.mrb[0].mxu0
      %1418 = vmatprep.mubr.f32.mxu0 0.0
      %1419 = vmatmul.mubr.f32.gmra.mrb[0].mxu0 %v1051
      %v1420 = vpop.f32.mrb[0].mxu0
      %v1421 = vadd.f32 %v915, %v1420
      %v1422 = vpop.f32.mrb[0].mxu0
      %1423 = vmatprep.mubr.f32.mxu0 0.0
      %1424 = vmatmul.mubr.f32.gmra.mrb[0].mxu0 %v1054
      %v1425 = vpop.f32.mrb[0].mxu0
      %v1426 = vadd.f32 %v915, %v1425
      %v1427 = vpop.f32.mrb[0].mxu0
      %1428 = vmatprep.mubr.f32.mxu0 0.0
      %1429 = vmatmul.mubr.f32.gmra.mrb[0].mxu0 %v1057
      %v1430 = vpop.f32.mrb[0].mxu0
      %v1431 = vadd.f32 %v915, %v1430
      %v1432 = vpop.f32.mrb[0].mxu0
      %1433 = vmatprep.mubr.f32.mxu0 0.0
      %1434 = vmatmul.mubr.f32.gmra.mrb[0].mxu0 %v1060
      %v1435 = vpop.f32.mrb[0].mxu0
      %v1436 = vadd.f32 %v915, %v1435
      %v1437 = vpop.f32.mrb[0].mxu0
      %1438 = vmatprep.mubr.f32.mxu0 0.0
      %1439 = vmatmul.mubr.f32.gmra.mrb[0].mxu0 %v1063
      %v1440 = vpop.f32.mrb[0].mxu0
      %v1441 = vadd.f32 %v915, %v1440
      %v1442 = vpop.f32.mrb[0].mxu0
      %1443 = vmatprep.mubr.f32.mxu0 0.0
      %1444 = vmatmul.mubr.f32.gmra.mrb[0].mxu0 %v1066
      %v1445 = vpop.f32.mrb[0].mxu0
      %v1446 = vadd.f32 %v915, %v1445
      %v1447 = vpop.f32.mrb[0].mxu0
      %1448 = vmatprep.mubr.f32.mxu0 0.0
      %1449 = vmatmul.mubr.f32.gmra.mrb[0].mxu0 %v1069
      %v1450 = vpop.f32.mrb[0].mxu0
      %v1451 = vadd.f32 %v915, %v1450
      %v1452 = vpop.f32.mrb[0].mxu0
      %1453 = vmatprep.mubr.f32.mxu0 0.0
      %1454 = vmatmul.mubr.f32.gmra.mrb[0].mxu0 %v1072
      %v1455 = vpop.f32.mrb[0].mxu0
      %v1456 = vadd.f32 %v915, %v1455
      %v1457 = vpop.f32.mrb[0].mxu0
      %1458 = vmatprep.mubr.f32.mxu0 0.0
      %1459 = vmatmul.mubr.f32.gmra.mrb[0].mxu0 %v1075
      %v1460 = vpop.f32.mrb[0].mxu0
      %v1461 = vadd.f32 %v915, %v1460
      %v1462 = vpop.f32.mrb[0].mxu0
      %1463 = vmatprep.mubr.f32.mxu0 0.0
      %1464 = vmatmul.mubr.f32.gmra.mrb[0].mxu0 %v1078
      %v1465 = vpop.f32.mrb[0].mxu0
      %v1466 = vadd.f32 %v915, %v1465
      %v1467 = vpop.f32.mrb[0].mxu0
      %1468 = vmatprep.mubr.f32.mxu0 0.0
      %1469 = vmatmul.mubr.f32.gmra.mrb[0].mxu0 %v1081
      %v1470 = vpop.f32.mrb[0].mxu0
      %v1471 = vadd.f32 %v915, %v1470
      %v1472 = vpop.f32.mrb[0].mxu0
      %1473 = vmatprep.mubr.f32.mxu0 0.0
      %1474 = vmatmul.mubr.f32.gmra.mrb[0].mxu0 %v1084
      %v1475 = vpop.f32.mrb[0].mxu0
      %v1476 = vadd.f32 %v915, %v1475
      %v1477 = vpop.f32.mrb[0].mxu0
      %1478 = vmatprep.mubr.f32.mxu0 0.0
      %1479 = vmatmul.mubr.f32.gmra.mrb[0].mxu0 %v1087
      %v1480 = vpop.f32.mrb[0].mxu0
      %v1481 = vadd.f32 %v915, %v1480
      %v1482 = vpop.f32.mrb[0].mxu0
      %1483 = vmatprep.mubr.f32.mxu0 0.0
      %1484 = vmatmul.mubr.f32.gmra.mrb[0].mxu0 %v1090
      %v1485 = vpop.f32.mrb[0].mxu0
      %v1486 = vadd.f32 %v915, %v1485
      %v1487 = vpop.f32.mrb[0].mxu0
      %1488 = vmatprep.mubr.f32.mxu0 0.0
      %1489 = vmatmul.mubr.f32.gmra.mrb[0].mxu0 %v1093
      %v1490 = vpop.f32.mrb[0].mxu0
      %v1491 = vadd.f32 %v915, %v1490
      %v1492 = vpop.f32.mrb[0].mxu0
      %1493 = vmatprep.mubr.f32.mxu0 0.0
      %1494 = vmatmul.mubr.f32.gmra.mrb[0].mxu0 %v1096
      %v1495 = vpop.f32.mrb[0].mxu0
      %v1496 = vadd.f32 %v915, %v1495
      %v1497 = vpop.f32.mrb[0].mxu0
      %1498 = vmatprep.mubr.f32.mxu0 0.0
      %1499 = vmatmul.mubr.f32.gmra.mrb[0].mxu0 %v1099
      %v1500 = vpop.f32.mrb[0].mxu0
      %v1501 = vadd.f32 %v915, %v1500
      %v1502 = vpop.f32.mrb[0].mxu0
      %1503 = vmatprep.mubr.f32.mxu0 0.0
      %1504 = vmatmul.mubr.f32.gmra.mrb[0].mxu0 %v1102
      %v1505 = vpop.f32.mrb[0].mxu0
      %v1506 = vadd.f32 %v915, %v1505
      %v1507 = vpop.f32.mrb[0].mxu0
      %1508 = vmatprep.mubr.f32.mxu0 0.0
      %1509 = vmatmul.mubr.f32.gmra.mrb[0].mxu0 %v1105
      %v1510 = vpop.f32.mrb[0].mxu0
      %v1511 = vadd.f32 %v915, %v1510
      %v1512 = vpop.f32.mrb[0].mxu0
      %1513 = vmatprep.mubr.f32.mxu0 0.0
      %1514 = vmatmul.mubr.f32.gmra.mrb[0].mxu0 %v1108
      %v1515 = vpop.f32.mrb[0].mxu0
      %v1516 = vadd.f32 %v915, %v1515
      %v1517 = vpop.f32.mrb[0].mxu0
      %1518 = vmatprep.mubr.f32.mxu0 0.0
      %1519 = vmatmul.mubr.f32.gmra.mrb[0].mxu0 %v1111
      %v1520 = vpop.f32.mrb[0].mxu0
      %v1521 = vadd.f32 %v915, %v1520
      %v1522 = vpop.f32.mrb[0].mxu0
      %1523 = vmatprep.mubr.f32.mxu0 0.0
      %1524 = vmatmul.mubr.f32.gmra.mrb[0].mxu0 %v1114
      %v1525 = vpop.f32.mrb[0].mxu0
      %v1526 = vadd.f32 %v915, %v1525
      %v1527 = vpop.f32.mrb[0].mxu0
      %1528 = vmatprep.mubr.f32.mxu0 0.0
      %1529 = vmatmul.mubr.f32.gmra.mrb[0].mxu0 %v1117
      %v1530 = vpop.f32.mrb[0].mxu0
      %v1531 = vadd.f32 %v915, %v1530
      %v1532 = vpop.f32.mrb[0].mxu0
      %1533 = vmatprep.mubr.f32.mxu0 0.0
      %1534 = vmatmul.mubr.f32.gmra.mrb[0].mxu0 %v1120
      %v1535 = vpop.f32.mrb[0].mxu0
      %v1536 = vadd.f32 %v915, %v1535
      %v1537 = vpop.f32.mrb[0].mxu0
      %1538 = vmatprep.mubr.f32.mxu0 0.0
      %1539 = vmatmul.mubr.f32.gmra.mrb[0].mxu0 %v1123
      %v1540 = vpop.f32.mrb[0].mxu0
      %v1541 = vadd.f32 %v915, %v1540
      %v1542 = vpop.f32.mrb[0].mxu0
      %1543 = vmatprep.mubr.f32.mxu0 0.0
      %1544 = vmatmul.mubr.f32.gmra.mrb[0].mxu0 %v1126
      %v1545 = vpop.f32.mrb[0].mxu0
      %v1546 = vadd.f32 %v915, %v1545
      %v1547 = vpop.f32.mrb[0].mxu0
      %1548 = vmatprep.mubr.f32.mxu0 0.0
      %1549 = vmatmul.mubr.f32.gmra.mrb[0].mxu0 %v1129
      %v1550 = vpop.f32.mrb[0].mxu0
      %v1551 = vadd.f32 %v915, %v1550
      %v1552 = vpop.f32.mrb[0].mxu0
      %1553 = vmatprep.mubr.f32.mxu0 0.0
      %1554 = vmatmul.mubr.f32.gmra.mrb[0].mxu0 %v1132
      %v1555 = vpop.f32.mrb[0].mxu0
      %v1556 = vadd.f32 %v915, %v1555
      %v1557 = vpop.f32.mrb[0].mxu0
      %1558 = vdwg.mxu0
      %v1559 = vmax.f32 %v1201, 0.0
      %v1560 = vmax.f32 %v1206, 0.0
      %v1561 = vmax.f32 %v1211, 0.0
      %v1562 = vmax.f32 %v1216, 0.0
      %v1563 = vmax.f32 %v1221, 0.0
      %v1564 = vmax.f32 %v1226, 0.0
      %v1565 = vmax.f32 %v1231, 0.0
      %v1566 = vmax.f32 %v1236, 0.0
      %v1567 = vmax.f32 %v1241, 0.0
      %v1568 = vmax.f32 %v1246, 0.0
      %v1569 = vmax.f32 %v1251, 0.0
      %v1570 = vmax.f32 %v1256, 0.0
      %v1571 = vmax.f32 %v1261, 0.0
      %v1572 = vmax.f32 %v1266, 0.0
      %v1573 = vmax.f32 %v1271, 0.0
      %v1574 = vmax.f32 %v1276, 0.0
      %v1575 = vmax.f32 %v1281, 0.0
      %v1576 = vmax.f32 %v1286, 0.0
      %v1577 = vmax.f32 %v1291, 0.0
      %v1578 = vmax.f32 %v1296, 0.0
      %v1579 = vmax.f32 %v1301, 0.0
      %v1580 = vmax.f32 %v1306, 0.0
      %v1581 = vmax.f32 %v1311, 0.0
      %v1582 = vmax.f32 %v1316, 0.0
      %v1583 = vmax.f32 %v1321, 0.0
      %v1584 = vmax.f32 %v1326, 0.0
      %v1585 = vmax.f32 %v1331, 0.0
      %v1586 = vmax.f32 %v1336, 0.0
      %v1587 = vmax.f32 %v1341, 0.0
      %v1588 = vmax.f32 %v1346, 0.0
      %v1589 = vmax.f32 %v1351, 0.0
      %v1590 = vmax.f32 %v1356, 0.0
      %v1591 = vmax.f32 %v1361, 0.0
      %v1592 = vmax.f32 %v1366, 0.0
      %v1593 = vmax.f32 %v1371, 0.0
      %v1594 = vmax.f32 %v1376, 0.0
      %v1595 = vmax.f32 %v1381, 0.0
      %v1596 = vmax.f32 %v1386, 0.0
      %v1597 = vmax.f32 %v1391, 0.0
      %v1598 = vmax.f32 %v1396, 0.0
      %v1599 = vmax.f32 %v1401, 0.0
      %v1600 = vmax.f32 %v1406, 0.0
      %v1601 = vmax.f32 %v1411, 0.0
      %v1602 = vmax.f32 %v1416, 0.0
      %v1603 = vmax.f32 %v1421, 0.0
      %v1604 = vmax.f32 %v1426, 0.0
      %v1605 = vmax.f32 %v1431, 0.0
      %v1606 = vmax.f32 %v1436, 0.0
      %v1607 = vmax.f32 %v1441, 0.0
      %v1608 = vmax.f32 %v1446, 0.0
      %v1609 = vmax.f32 %v1451, 0.0
      %v1610 = vmax.f32 %v1456, 0.0
      %v1611 = vmax.f32 %v1461, 0.0
      %v1612 = vmax.f32 %v1466, 0.0
      %v1613 = vmax.f32 %v1471, 0.0
      %v1614 = vmax.f32 %v1476, 0.0
      %v1615 = vmax.f32 %v1481, 0.0
      %v1616 = vmax.f32 %v1486, 0.0
      %v1617 = vmax.f32 %v1491, 0.0
      %v1618 = vmax.f32 %v1496, 0.0
      %v1619 = vmax.f32 %v1501, 0.0
      %v1620 = vmax.f32 %v1506, 0.0
      %v1621 = vmax.f32 %v1511, 0.0
      %v1622 = vmax.f32 %v1516, 0.0
      %v1623 = vmax.f32 %v1521, 0.0
      %v1624 = vmax.f32 %v1526, 0.0
      %v1625 = vmax.f32 %v1531, 0.0
      %v1626 = vmax.f32 %v1536, 0.0
      %v1627 = vmax.f32 %v1541, 0.0
      %v1628 = vmax.f32 %v1546, 0.0
      %v1629 = vmax.f32 %v1551, 0.0
      %v1630 = vmax.f32 %v1556, 0.0
      %v1631 = vld [vmem:[%s7] sm:$0xff]
      %v1632 = vld [vmem:[%s7 + $0x8] sm:$0xff]
      %v1633 = vld [vmem:[%s7 + $0x10] sm:$0xff]
      %v1634 = vld [vmem:[%s7 + $0x18] sm:$0xff]
      %v1635 = vld [vmem:[%s7 + $0x20] sm:$0xff]
      %v1636 = vld [vmem:[%s7 + $0x28] sm:$0xff]
      %v1637 = vld [vmem:[%s7 + $0x30] sm:$0xff]
      %v1638 = vld [vmem:[%s7 + $0x38] sm:$0xff]
      %v1639 = vld [vmem:[%s8] sm:$0x1]
      %v1641 = vlaneseq
      %v1642 = vshrl.u32 %v1641, 7
      %v1643 = vsub.s32 0, %v1642
      %v1644 = vrot.slane %v1639, %v1643
      %vm1646 = vcmask 523264
      %v1648 = vsel %vm1646, %v1559, 0
      %v1651 = vsel %vm1646, %v1560, 0
      %v1654 = vsel %vm1646, %v1561, 0
      %v1657 = vsel %vm1646, %v1562, 0
      %v1660 = vsel %vm1646, %v1563, 0
      %v1663 = vsel %vm1646, %v1564, 0
      %v1666 = vsel %vm1646, %v1565, 0
      %v1669 = vsel %vm1646, %v1566, 0
      %v1672 = vsel %vm1646, %v1567, 0
      %v1675 = vsel %vm1646, %v1568, 0
      %v1678 = vsel %vm1646, %v1569, 0
      %v1681 = vsel %vm1646, %v1570, 0
      %v1684 = vsel %vm1646, %v1571, 0
      %v1687 = vsel %vm1646, %v1572, 0
      %v1690 = vsel %vm1646, %v1573, 0
      %v1693 = vsel %vm1646, %v1574, 0
      %v1696 = vsel %vm1646, %v1575, 0
      %v1699 = vsel %vm1646, %v1576, 0
      %v1702 = vsel %vm1646, %v1577, 0
      %v1705 = vsel %vm1646, %v1578, 0
      %v1708 = vsel %vm1646, %v1579, 0
      %v1711 = vsel %vm1646, %v1580, 0
      %v1714 = vsel %vm1646, %v1581, 0
      %v1717 = vsel %vm1646, %v1582, 0
      %v1720 = vsel %vm1646, %v1583, 0
      %v1723 = vsel %vm1646, %v1584, 0
      %v1726 = vsel %vm1646, %v1585, 0
      %v1729 = vsel %vm1646, %v1586, 0
      %v1732 = vsel %vm1646, %v1587, 0
      %v1735 = vsel %vm1646, %v1588, 0
      %v1738 = vsel %vm1646, %v1589, 0
      %v1741 = vsel %vm1646, %v1590, 0
      %v1744 = vsel %vm1646, %v1591, 0
      %v1747 = vsel %vm1646, %v1592, 0
      %v1750 = vsel %vm1646, %v1593, 0
      %v1753 = vsel %vm1646, %v1594, 0
      %v1756 = vsel %vm1646, %v1595, 0
      %v1759 = vsel %vm1646, %v1596, 0
      %v1762 = vsel %vm1646, %v1597, 0
      %v1765 = vsel %vm1646, %v1598, 0
      %v1768 = vsel %vm1646, %v1599, 0
      %v1771 = vsel %vm1646, %v1600, 0
      %v1774 = vsel %vm1646, %v1601, 0
      %v1777 = vsel %vm1646, %v1602, 0
      %v1780 = vsel %vm1646, %v1603, 0
      %v1783 = vsel %vm1646, %v1604, 0
      %v1786 = vsel %vm1646, %v1605, 0
      %v1789 = vsel %vm1646, %v1606, 0
      %v1792 = vsel %vm1646, %v1607, 0
      %v1795 = vsel %vm1646, %v1608, 0
      %v1798 = vsel %vm1646, %v1609, 0
      %v1801 = vsel %vm1646, %v1610, 0
      %v1804 = vsel %vm1646, %v1611, 0
      %v1807 = vsel %vm1646, %v1612, 0
      %v1810 = vsel %vm1646, %v1613, 0
      %v1813 = vsel %vm1646, %v1614, 0
      %v1816 = vsel %vm1646, %v1615, 0
      %v1819 = vsel %vm1646, %v1616, 0
      %v1822 = vsel %vm1646, %v1617, 0
      %v1825 = vsel %vm1646, %v1618, 0
      %v1828 = vsel %vm1646, %v1619, 0
      %v1831 = vsel %vm1646, %v1620, 0
      %v1834 = vsel %vm1646, %v1621, 0
      %v1837 = vsel %vm1646, %v1622, 0
      %v1840 = vsel %vm1646, %v1623, 0
      %v1843 = vsel %vm1646, %v1624, 0
      %v1846 = vsel %vm1646, %v1625, 0
      %v1849 = vsel %vm1646, %v1626, 0
      %v1852 = vsel %vm1646, %v1627, 0
      %v1855 = vsel %vm1646, %v1628, 0
      %v1858 = vsel %vm1646, %v1629, 0
      %v1861 = vsel %vm1646, %v1630, 0
      %1863 = vmatprep.subr.mxu0 0.0
      %1864 = vmatpush1.msra.mxu0 %v1631
      %1865 = vmatprep.subr.mxu0 0.0
      %1866 = vmatpush1.msra.mxu0 %v1632
      %1867 = vmatprep.subr.mxu0 0.0
      %1868 = vmatpush1.msra.mxu0 %v1633
      %1869 = vmatprep.subr.mxu0 0.0
      %1870 = vmatpush1.msra.mxu0 %v1634
      %1871 = vmatprep.subr.mxu0 0.0
      %1872 = vmatpush1.msra.mxu0 %v1635
      %1873 = vmatprep.subr.mxu0 0.0
      %1874 = vmatpush1.msra.mxu0 %v1636
      %1875 = vmatprep.subr.mxu0 0.0
      %1876 = vmatpush1.msra.mxu0 %v1637
      %1877 = vmatprep.subr.mxu0 0.0
      %1878 = vmatpush1.msra.mxu0 %v1638
      %1879 = vmatprep.subr.mxu0 0.0
      %1880 = vmatpush1.msra.mxu0 0.0
      %1881 = vmatprep.subr.mxu0 0.0
      %1882 = vmatpush1.msra.mxu0 0.0
      %1883 = vmatprep.subr.mxu0 0.0
      %1884 = vmatpush1.msra.mxu0 0.0
      %1885 = vmatprep.subr.mxu0 0.0
      %1886 = vmatpush1.msra.mxu0 0.0
      %1887 = vmatprep.subr.mxu0 0.0
      %1888 = vmatpush1.msra.mxu0 0.0
      %1889 = vmatprep.subr.mxu0 0.0
      %1890 = vmatpush1.msra.mxu0 0.0
      %1891 = vmatprep.subr.mxu0 0.0
      %1892 = vmatpush1.msra.mxu0 0.0
      %1893 = vmatprep.subr.mxu0 0.0
      %1894 = vmatpush1.msra.mxu0 0.0
      %1895 = vmatprep.subr.mxu0 0.0
      %1896 = vmatpush1.msra.mxu0 0.0
      %1897 = vmatprep.subr.mxu0 0.0
      %1898 = vmatpush1.msra.mxu0 0.0
      %1899 = vmatprep.subr.mxu0 0.0
      %1900 = vmatpush1.msra.mxu0 0.0
      %1901 = vmatprep.subr.mxu0 0.0
      %1902 = vmatpush1.msra.mxu0 0.0
      %1903 = vmatprep.subr.mxu0 0.0
      %1904 = vmatpush1.msra.mxu0 0.0
      %1905 = vmatprep.subr.mxu0 0.0
      %1906 = vmatpush1.msra.mxu0 0.0
      %1907 = vmatprep.subr.mxu0 0.0
      %1908 = vmatpush1.msra.mxu0 0.0
      %1909 = vmatprep.subr.mxu0 0.0
      %1910 = vmatpush1.msra.mxu0 0.0
      %1911 = vmatprep.subr.mxu0 0.0
      %1912 = vmatpush1.msra.mxu0 0.0
      %1913 = vmatprep.subr.mxu0 0.0
      %1914 = vmatpush1.msra.mxu0 0.0
      %1915 = vmatprep.subr.mxu0 0.0
      %1916 = vmatpush1.msra.mxu0 0.0
      %1917 = vmatprep.subr.mxu0 0.0
      %1918 = vmatpush1.msra.mxu0 0.0
      %1919 = vmatprep.subr.mxu0 0.0
      %1920 = vmatpush1.msra.mxu0 0.0
      %1921 = vmatprep.subr.mxu0 0.0
      %1922 = vmatpush1.msra.mxu0 0.0
      %1923 = vmatprep.subr.mxu0 0.0
      %1924 = vmatpush1.msra.mxu0 0.0
      %1925 = vmatprep.subr.mxu0 0.0
      %1926 = vmatpush1.msra.mxu0 0.0
      %1927 = vmatprep.mubr.f32.mxu0 0.0
      %1928 = vmatmul.mubr.f32.gmra.mrb[0].mxu0 %v1648
      %v1929 = vpop.f32.mrb[0].mxu0
      %v1930 = vadd.f32 %v1644, %v1929
      %v1931 = vpop.f32.mrb[0].mxu0
      %1932 = vmatprep.mubr.f32.mxu0 0.0
      %1933 = vmatmul.mubr.f32.gmra.mrb[0].mxu0 %v1651
      %v1934 = vpop.f32.mrb[0].mxu0
      %v1935 = vadd.f32 %v1644, %v1934
      %v1936 = vpop.f32.mrb[0].mxu0
      %1937 = vmatprep.mubr.f32.mxu0 0.0
      %1938 = vmatmul.mubr.f32.gmra.mrb[0].mxu0 %v1654
      %v1939 = vpop.f32.mrb[0].mxu0
      %v1940 = vadd.f32 %v1644, %v1939
      %v1941 = vpop.f32.mrb[0].mxu0
      %1942 = vmatprep.mubr.f32.mxu0 0.0
      %1943 = vmatmul.mubr.f32.gmra.mrb[0].mxu0 %v1657
      %v1944 = vpop.f32.mrb[0].mxu0
      %v1945 = vadd.f32 %v1644, %v1944
      %v1946 = vpop.f32.mrb[0].mxu0
      %1947 = vmatprep.mubr.f32.mxu0 0.0
      %1948 = vmatmul.mubr.f32.gmra.mrb[0].mxu0 %v1660
      %v1949 = vpop.f32.mrb[0].mxu0
      %v1950 = vadd.f32 %v1644, %v1949
      %v1951 = vpop.f32.mrb[0].mxu0
      %1952 = vmatprep.mubr.f32.mxu0 0.0
      %1953 = vmatmul.mubr.f32.gmra.mrb[0].mxu0 %v1663
      %v1954 = vpop.f32.mrb[0].mxu0
      %v1955 = vadd.f32 %v1644, %v1954
      %v1956 = vpop.f32.mrb[0].mxu0
      %1957 = vmatprep.mubr.f32.mxu0 0.0
      %1958 = vmatmul.mubr.f32.gmra.mrb[0].mxu0 %v1666
      %v1959 = vpop.f32.mrb[0].mxu0
      %v1960 = vadd.f32 %v1644, %v1959
      %v1961 = vpop.f32.mrb[0].mxu0
      %1962 = vmatprep.mubr.f32.mxu0 0.0
      %1963 = vmatmul.mubr.f32.gmra.mrb[0].mxu0 %v1669
      %v1964 = vpop.f32.mrb[0].mxu0
      %v1965 = vadd.f32 %v1644, %v1964
      %v1966 = vpop.f32.mrb[0].mxu0
      %1967 = vmatprep.mubr.f32.mxu0 0.0
      %1968 = vmatmul.mubr.f32.gmra.mrb[0].mxu0 %v1672
      %v1969 = vpop.f32.mrb[0].mxu0
      %v1970 = vadd.f32 %v1644, %v1969
      %v1971 = vpop.f32.mrb[0].mxu0
      %1972 = vmatprep.mubr.f32.mxu0 0.0
      %1973 = vmatmul.mubr.f32.gmra.mrb[0].mxu0 %v1675
      %v1974 = vpop.f32.mrb[0].mxu0
      %v1975 = vadd.f32 %v1644, %v1974
      %v1976 = vpop.f32.mrb[0].mxu0
      %1977 = vmatprep.mubr.f32.mxu0 0.0
      %1978 = vmatmul.mubr.f32.gmra.mrb[0].mxu0 %v1678
      %v1979 = vpop.f32.mrb[0].mxu0
      %v1980 = vadd.f32 %v1644, %v1979
      %v1981 = vpop.f32.mrb[0].mxu0
      %1982 = vmatprep.mubr.f32.mxu0 0.0
      %1983 = vmatmul.mubr.f32.gmra.mrb[0].mxu0 %v1681
      %v1984 = vpop.f32.mrb[0].mxu0
      %v1985 = vadd.f32 %v1644, %v1984
      %v1986 = vpop.f32.mrb[0].mxu0
      %1987 = vmatprep.mubr.f32.mxu0 0.0
      %1988 = vmatmul.mubr.f32.gmra.mrb[0].mxu0 %v1684
      %v1989 = vpop.f32.mrb[0].mxu0
      %v1990 = vadd.f32 %v1644, %v1989
      %v1991 = vpop.f32.mrb[0].mxu0
      %1992 = vmatprep.mubr.f32.mxu0 0.0
      %1993 = vmatmul.mubr.f32.gmra.mrb[0].mxu0 %v1687
      %v1994 = vpop.f32.mrb[0].mxu0
      %v1995 = vadd.f32 %v1644, %v1994
      %v1996 = vpop.f32.mrb[0].mxu0
      %1997 = vmatprep.mubr.f32.mxu0 0.0
      %1998 = vmatmul.mubr.f32.gmra.mrb[0].mxu0 %v1690
      %v1999 = vpop.f32.mrb[0].mxu0
      %v2000 = vadd.f32 %v1644, %v1999
      %v2001 = vpop.f32.mrb[0].mxu0
      %2002 = vmatprep.mubr.f32.mxu0 0.0
      %2003 = vmatmul.mubr.f32.gmra.mrb[0].mxu0 %v1693
      %v2004 = vpop.f32.mrb[0].mxu0
      %v2005 = vadd.f32 %v1644, %v2004
      %v2006 = vpop.f32.mrb[0].mxu0
      %2007 = vmatprep.mubr.f32.mxu0 0.0
      %2008 = vmatmul.mubr.f32.gmra.mrb[0].mxu0 %v1696
      %v2009 = vpop.f32.mrb[0].mxu0
      %v2010 = vadd.f32 %v1644, %v2009
      %v2011 = vpop.f32.mrb[0].mxu0
      %2012 = vmatprep.mubr.f32.mxu0 0.0
      %2013 = vmatmul.mubr.f32.gmra.mrb[0].mxu0 %v1699
      %v2014 = vpop.f32.mrb[0].mxu0
      %v2015 = vadd.f32 %v1644, %v2014
      %v2016 = vpop.f32.mrb[0].mxu0
      %2017 = vmatprep.mubr.f32.mxu0 0.0
      %2018 = vmatmul.mubr.f32.gmra.mrb[0].mxu0 %v1702
      %v2019 = vpop.f32.mrb[0].mxu0
      %v2020 = vadd.f32 %v1644, %v2019
      %v2021 = vpop.f32.mrb[0].mxu0
      %2022 = vmatprep.mubr.f32.mxu0 0.0
      %2023 = vmatmul.mubr.f32.gmra.mrb[0].mxu0 %v1705
      %v2024 = vpop.f32.mrb[0].mxu0
      %v2025 = vadd.f32 %v1644, %v2024
      %v2026 = vpop.f32.mrb[0].mxu0
      %2027 = vmatprep.mubr.f32.mxu0 0.0
      %2028 = vmatmul.mubr.f32.gmra.mrb[0].mxu0 %v1708
      %v2029 = vpop.f32.mrb[0].mxu0
      %v2030 = vadd.f32 %v1644, %v2029
      %v2031 = vpop.f32.mrb[0].mxu0
      %2032 = vmatprep.mubr.f32.mxu0 0.0
      %2033 = vmatmul.mubr.f32.gmra.mrb[0].mxu0 %v1711
      %v2034 = vpop.f32.mrb[0].mxu0
      %v2035 = vadd.f32 %v1644, %v2034
      %v2036 = vpop.f32.mrb[0].mxu0
      %2037 = vmatprep.mubr.f32.mxu0 0.0
      %2038 = vmatmul.mubr.f32.gmra.mrb[0].mxu0 %v1714
      %v2039 = vpop.f32.mrb[0].mxu0
      %v2040 = vadd.f32 %v1644, %v2039
      %v2041 = vpop.f32.mrb[0].mxu0
      %2042 = vmatprep.mubr.f32.mxu0 0.0
      %2043 = vmatmul.mubr.f32.gmra.mrb[0].mxu0 %v1717
      %v2044 = vpop.f32.mrb[0].mxu0
      %v2045 = vadd.f32 %v1644, %v2044
      %v2046 = vpop.f32.mrb[0].mxu0
      %2047 = vmatprep.mubr.f32.mxu0 0.0
      %2048 = vmatmul.mubr.f32.gmra.mrb[0].mxu0 %v1720
      %v2049 = vpop.f32.mrb[0].mxu0
      %v2050 = vadd.f32 %v1644, %v2049
      %v2051 = vpop.f32.mrb[0].mxu0
      %2052 = vmatprep.mubr.f32.mxu0 0.0
      %2053 = vmatmul.mubr.f32.gmra.mrb[0].mxu0 %v1723
      %v2054 = vpop.f32.mrb[0].mxu0
      %v2055 = vadd.f32 %v1644, %v2054
      %v2056 = vpop.f32.mrb[0].mxu0
      %2057 = vmatprep.mubr.f32.mxu0 0.0
      %2058 = vmatmul.mubr.f32.gmra.mrb[0].mxu0 %v1726
      %v2059 = vpop.f32.mrb[0].mxu0
      %v2060 = vadd.f32 %v1644, %v2059
      %v2061 = vpop.f32.mrb[0].mxu0
      %2062 = vmatprep.mubr.f32.mxu0 0.0
      %2063 = vmatmul.mubr.f32.gmra.mrb[0].mxu0 %v1729
      %v2064 = vpop.f32.mrb[0].mxu0
      %v2065 = vadd.f32 %v1644, %v2064
      %v2066 = vpop.f32.mrb[0].mxu0
      %2067 = vmatprep.mubr.f32.mxu0 0.0
      %2068 = vmatmul.mubr.f32.gmra.mrb[0].mxu0 %v1732
      %v2069 = vpop.f32.mrb[0].mxu0
      %v2070 = vadd.f32 %v1644, %v2069
      %v2071 = vpop.f32.mrb[0].mxu0
      %2072 = vmatprep.mubr.f32.mxu0 0.0
      %2073 = vmatmul.mubr.f32.gmra.mrb[0].mxu0 %v1735
      %v2074 = vpop.f32.mrb[0].mxu0
      %v2075 = vadd.f32 %v1644, %v2074
      %v2076 = vpop.f32.mrb[0].mxu0
      %2077 = vmatprep.mubr.f32.mxu0 0.0
      %2078 = vmatmul.mubr.f32.gmra.mrb[0].mxu0 %v1738
      %v2079 = vpop.f32.mrb[0].mxu0
      %v2080 = vadd.f32 %v1644, %v2079
      %v2081 = vpop.f32.mrb[0].mxu0
      %2082 = vmatprep.mubr.f32.mxu0 0.0
      %2083 = vmatmul.mubr.f32.gmra.mrb[0].mxu0 %v1741
      %v2084 = vpop.f32.mrb[0].mxu0
      %v2085 = vadd.f32 %v1644, %v2084
      %v2086 = vpop.f32.mrb[0].mxu0
      %2087 = vmatprep.mubr.f32.mxu0 0.0
      %2088 = vmatmul.mubr.f32.gmra.mrb[0].mxu0 %v1744
      %v2089 = vpop.f32.mrb[0].mxu0
      %v2090 = vadd.f32 %v1644, %v2089
      %v2091 = vpop.f32.mrb[0].mxu0
      %2092 = vmatprep.mubr.f32.mxu0 0.0
      %2093 = vmatmul.mubr.f32.gmra.mrb[0].mxu0 %v1747
      %v2094 = vpop.f32.mrb[0].mxu0
      %v2095 = vadd.f32 %v1644, %v2094
      %v2096 = vpop.f32.mrb[0].mxu0
      %2097 = vmatprep.mubr.f32.mxu0 0.0
      %2098 = vmatmul.mubr.f32.gmra.mrb[0].mxu0 %v1750
      %v2099 = vpop.f32.mrb[0].mxu0
      %v2100 = vadd.f32 %v1644, %v2099
      %v2101 = vpop.f32.mrb[0].mxu0
      %2102 = vmatprep.mubr.f32.mxu0 0.0
      %2103 = vmatmul.mubr.f32.gmra.mrb[0].mxu0 %v1753
      %v2104 = vpop.f32.mrb[0].mxu0
      %v2105 = vadd.f32 %v1644, %v2104
      %v2106 = vpop.f32.mrb[0].mxu0
      %2107 = vmatprep.mubr.f32.mxu0 0.0
      %2108 = vmatmul.mubr.f32.gmra.mrb[0].mxu0 %v1756
      %v2109 = vpop.f32.mrb[0].mxu0
      %v2110 = vadd.f32 %v1644, %v2109
      %v2111 = vpop.f32.mrb[0].mxu0
      %2112 = vmatprep.mubr.f32.mxu0 0.0
      %2113 = vmatmul.mubr.f32.gmra.mrb[0].mxu0 %v1759
      %v2114 = vpop.f32.mrb[0].mxu0
      %v2115 = vadd.f32 %v1644, %v2114
      %v2116 = vpop.f32.mrb[0].mxu0
      %2117 = vmatprep.mubr.f32.mxu0 0.0
      %2118 = vmatmul.mubr.f32.gmra.mrb[0].mxu0 %v1762
      %v2119 = vpop.f32.mrb[0].mxu0
      %v2120 = vadd.f32 %v1644, %v2119
      %v2121 = vpop.f32.mrb[0].mxu0
      %2122 = vmatprep.mubr.f32.mxu0 0.0
      %2123 = vmatmul.mubr.f32.gmra.mrb[0].mxu0 %v1765
      %v2124 = vpop.f32.mrb[0].mxu0
      %v2125 = vadd.f32 %v1644, %v2124
      %v2126 = vpop.f32.mrb[0].mxu0
      %2127 = vmatprep.mubr.f32.mxu0 0.0
      %2128 = vmatmul.mubr.f32.gmra.mrb[0].mxu0 %v1768
      %v2129 = vpop.f32.mrb[0].mxu0
      %v2130 = vadd.f32 %v1644, %v2129
      %v2131 = vpop.f32.mrb[0].mxu0
      %2132 = vmatprep.mubr.f32.mxu0 0.0
      %2133 = vmatmul.mubr.f32.gmra.mrb[0].mxu0 %v1771
      %v2134 = vpop.f32.mrb[0].mxu0
      %v2135 = vadd.f32 %v1644, %v2134
      %v2136 = vpop.f32.mrb[0].mxu0
      %2137 = vmatprep.mubr.f32.mxu0 0.0
      %2138 = vmatmul.mubr.f32.gmra.mrb[0].mxu0 %v1774
      %v2139 = vpop.f32.mrb[0].mxu0
      %v2140 = vadd.f32 %v1644, %v2139
      %v2141 = vpop.f32.mrb[0].mxu0
      %2142 = vmatprep.mubr.f32.mxu0 0.0
      %2143 = vmatmul.mubr.f32.gmra.mrb[0].mxu0 %v1777
      %v2144 = vpop.f32.mrb[0].mxu0
      %v2145 = vadd.f32 %v1644, %v2144
      %v2146 = vpop.f32.mrb[0].mxu0
      %2147 = vmatprep.mubr.f32.mxu0 0.0
      %2148 = vmatmul.mubr.f32.gmra.mrb[0].mxu0 %v1780
      %v2149 = vpop.f32.mrb[0].mxu0
      %v2150 = vadd.f32 %v1644, %v2149
      %v2151 = vpop.f32.mrb[0].mxu0
      %2152 = vmatprep.mubr.f32.mxu0 0.0
      %2153 = vmatmul.mubr.f32.gmra.mrb[0].mxu0 %v1783
      %v2154 = vpop.f32.mrb[0].mxu0
      %v2155 = vadd.f32 %v1644, %v2154
      %v2156 = vpop.f32.mrb[0].mxu0
      %2157 = vmatprep.mubr.f32.mxu0 0.0
      %2158 = vmatmul.mubr.f32.gmra.mrb[0].mxu0 %v1786
      %v2159 = vpop.f32.mrb[0].mxu0
      %v2160 = vadd.f32 %v1644, %v2159
      %v2161 = vpop.f32.mrb[0].mxu0
      %2162 = vmatprep.mubr.f32.mxu0 0.0
      %2163 = vmatmul.mubr.f32.gmra.mrb[0].mxu0 %v1789
      %v2164 = vpop.f32.mrb[0].mxu0
      %v2165 = vadd.f32 %v1644, %v2164
      %v2166 = vpop.f32.mrb[0].mxu0
      %2167 = vmatprep.mubr.f32.mxu0 0.0
      %2168 = vmatmul.mubr.f32.gmra.mrb[0].mxu0 %v1792
      %v2169 = vpop.f32.mrb[0].mxu0
      %v2170 = vadd.f32 %v1644, %v2169
      %v2171 = vpop.f32.mrb[0].mxu0
      %2172 = vmatprep.mubr.f32.mxu0 0.0
      %2173 = vmatmul.mubr.f32.gmra.mrb[0].mxu0 %v1795
      %v2174 = vpop.f32.mrb[0].mxu0
      %v2175 = vadd.f32 %v1644, %v2174
      %v2176 = vpop.f32.mrb[0].mxu0
      %2177 = vmatprep.mubr.f32.mxu0 0.0
      %2178 = vmatmul.mubr.f32.gmra.mrb[0].mxu0 %v1798
      %v2179 = vpop.f32.mrb[0].mxu0
      %v2180 = vadd.f32 %v1644, %v2179
      %v2181 = vpop.f32.mrb[0].mxu0
      %2182 = vmatprep.mubr.f32.mxu0 0.0
      %2183 = vmatmul.mubr.f32.gmra.mrb[0].mxu0 %v1801
      %v2184 = vpop.f32.mrb[0].mxu0
      %v2185 = vadd.f32 %v1644, %v2184
      %v2186 = vpop.f32.mrb[0].mxu0
      %2187 = vmatprep.mubr.f32.mxu0 0.0
      %2188 = vmatmul.mubr.f32.gmra.mrb[0].mxu0 %v1804
      %v2189 = vpop.f32.mrb[0].mxu0
      %v2190 = vadd.f32 %v1644, %v2189
      %v2191 = vpop.f32.mrb[0].mxu0
      %2192 = vmatprep.mubr.f32.mxu0 0.0
      %2193 = vmatmul.mubr.f32.gmra.mrb[0].mxu0 %v1807
      %v2194 = vpop.f32.mrb[0].mxu0
      %v2195 = vadd.f32 %v1644, %v2194
      %v2196 = vpop.f32.mrb[0].mxu0
      %2197 = vmatprep.mubr.f32.mxu0 0.0
      %2198 = vmatmul.mubr.f32.gmra.mrb[0].mxu0 %v1810
      %v2199 = vpop.f32.mrb[0].mxu0
      %v2200 = vadd.f32 %v1644, %v2199
      %v2201 = vpop.f32.mrb[0].mxu0
      %2202 = vmatprep.mubr.f32.mxu0 0.0
      %2203 = vmatmul.mubr.f32.gmra.mrb[0].mxu0 %v1813
      %v2204 = vpop.f32.mrb[0].mxu0
      %v2205 = vadd.f32 %v1644, %v2204
      %v2206 = vpop.f32.mrb[0].mxu0
      %2207 = vmatprep.mubr.f32.mxu0 0.0
      %2208 = vmatmul.mubr.f32.gmra.mrb[0].mxu0 %v1816
      %v2209 = vpop.f32.mrb[0].mxu0
      %v2210 = vadd.f32 %v1644, %v2209
      %v2211 = vpop.f32.mrb[0].mxu0
      %2212 = vmatprep.mubr.f32.mxu0 0.0
      %2213 = vmatmul.mubr.f32.gmra.mrb[0].mxu0 %v1819
      %v2214 = vpop.f32.mrb[0].mxu0
      %v2215 = vadd.f32 %v1644, %v2214
      %v2216 = vpop.f32.mrb[0].mxu0
      %2217 = vmatprep.mubr.f32.mxu0 0.0
      %2218 = vmatmul.mubr.f32.gmra.mrb[0].mxu0 %v1822
      %v2219 = vpop.f32.mrb[0].mxu0
      %v2220 = vadd.f32 %v1644, %v2219
      %v2221 = vpop.f32.mrb[0].mxu0
      %2222 = vmatprep.mubr.f32.mxu0 0.0
      %2223 = vmatmul.mubr.f32.gmra.mrb[0].mxu0 %v1825
      %v2224 = vpop.f32.mrb[0].mxu0
      %v2225 = vadd.f32 %v1644, %v2224
      %v2226 = vpop.f32.mrb[0].mxu0
      %2227 = vmatprep.mubr.f32.mxu0 0.0
      %2228 = vmatmul.mubr.f32.gmra.mrb[0].mxu0 %v1828
      %v2229 = vpop.f32.mrb[0].mxu0
      %v2230 = vadd.f32 %v1644, %v2229
      %v2231 = vpop.f32.mrb[0].mxu0
      %2232 = vmatprep.mubr.f32.mxu0 0.0
      %2233 = vmatmul.mubr.f32.gmra.mrb[0].mxu0 %v1831
      %v2234 = vpop.f32.mrb[0].mxu0
      %v2235 = vadd.f32 %v1644, %v2234
      %v2236 = vpop.f32.mrb[0].mxu0
      %2237 = vmatprep.mubr.f32.mxu0 0.0
      %2238 = vmatmul.mubr.f32.gmra.mrb[0].mxu0 %v1834
      %v2239 = vpop.f32.mrb[0].mxu0
      %v2240 = vadd.f32 %v1644, %v2239
      %v2241 = vpop.f32.mrb[0].mxu0
      %2242 = vmatprep.mubr.f32.mxu0 0.0
      %2243 = vmatmul.mubr.f32.gmra.mrb[0].mxu0 %v1837
      %v2244 = vpop.f32.mrb[0].mxu0
      %v2245 = vadd.f32 %v1644, %v2244
      %v2246 = vpop.f32.mrb[0].mxu0
      %2247 = vmatprep.mubr.f32.mxu0 0.0
      %2248 = vmatmul.mubr.f32.gmra.mrb[0].mxu0 %v1840
      %v2249 = vpop.f32.mrb[0].mxu0
      %v2250 = vadd.f32 %v1644, %v2249
      %v2251 = vpop.f32.mrb[0].mxu0
      %2252 = vmatprep.mubr.f32.mxu0 0.0
      %2253 = vmatmul.mubr.f32.gmra.mrb[0].mxu0 %v1843
      %v2254 = vpop.f32.mrb[0].mxu0
      %v2255 = vadd.f32 %v1644, %v2254
      %v2256 = vpop.f32.mrb[0].mxu0
      %2257 = vmatprep.mubr.f32.mxu0 0.0
      %2258 = vmatmul.mubr.f32.gmra.mrb[0].mxu0 %v1846
      %v2259 = vpop.f32.mrb[0].mxu0
      %v2260 = vadd.f32 %v1644, %v2259
      %v2261 = vpop.f32.mrb[0].mxu0
      %2262 = vmatprep.mubr.f32.mxu0 0.0
      %2263 = vmatmul.mubr.f32.gmra.mrb[0].mxu0 %v1849
      %v2264 = vpop.f32.mrb[0].mxu0
      %v2265 = vadd.f32 %v1644, %v2264
      %v2266 = vpop.f32.mrb[0].mxu0
      %2267 = vmatprep.mubr.f32.mxu0 0.0
      %2268 = vmatmul.mubr.f32.gmra.mrb[0].mxu0 %v1852
      %v2269 = vpop.f32.mrb[0].mxu0
      %v2270 = vadd.f32 %v1644, %v2269
      %v2271 = vpop.f32.mrb[0].mxu0
      %2272 = vmatprep.mubr.f32.mxu0 0.0
      %2273 = vmatmul.mubr.f32.gmra.mrb[0].mxu0 %v1855
      %v2274 = vpop.f32.mrb[0].mxu0
      %v2275 = vadd.f32 %v1644, %v2274
      %v2276 = vpop.f32.mrb[0].mxu0
      %2277 = vmatprep.mubr.f32.mxu0 0.0
      %2278 = vmatmul.mubr.f32.gmra.mrb[0].mxu0 %v1858
      %v2279 = vpop.f32.mrb[0].mxu0
      %v2280 = vadd.f32 %v1644, %v2279
      %v2281 = vpop.f32.mrb[0].mxu0
      %2282 = vmatprep.mubr.f32.mxu0 0.0
      %2283 = vmatmul.mubr.f32.gmra.mrb[0].mxu0 %v1861
      %v2284 = vpop.f32.mrb[0].mxu0
      %v2285 = vadd.f32 %v1644, %v2284
      %v2286 = vpop.f32.mrb[0].mxu0
      %2287 = vdwg.mxu0
      %v2288 = vmax.f32 %v1930, 0.0
      %v2289 = vmax.f32 %v1935, 0.0
      %v2290 = vmax.f32 %v1940, 0.0
      %v2291 = vmax.f32 %v1945, 0.0
      %v2292 = vmax.f32 %v1950, 0.0
      %v2293 = vmax.f32 %v1955, 0.0
      %v2294 = vmax.f32 %v1960, 0.0
      %v2295 = vmax.f32 %v1965, 0.0
      %v2296 = vmax.f32 %v1970, 0.0
      %v2297 = vmax.f32 %v1975, 0.0
      %v2298 = vmax.f32 %v1980, 0.0
      %v2299 = vmax.f32 %v1985, 0.0
      %v2300 = vmax.f32 %v1990, 0.0
      %v2301 = vmax.f32 %v1995, 0.0
      %v2302 = vmax.f32 %v2000, 0.0
      %v2303 = vmax.f32 %v2005, 0.0
      %v2304 = vmax.f32 %v2010, 0.0
      %v2305 = vmax.f32 %v2015, 0.0
      %v2306 = vmax.f32 %v2020, 0.0
      %v2307 = vmax.f32 %v2025, 0.0
      %v2308 = vmax.f32 %v2030, 0.0
      %v2309 = vmax.f32 %v2035, 0.0
      %v2310 = vmax.f32 %v2040, 0.0
      %v2311 = vmax.f32 %v2045, 0.0
      %v2312 = vmax.f32 %v2050, 0.0
      %v2313 = vmax.f32 %v2055, 0.0
      %v2314 = vmax.f32 %v2060, 0.0
      %v2315 = vmax.f32 %v2065, 0.0
      %v2316 = vmax.f32 %v2070, 0.0
      %v2317 = vmax.f32 %v2075, 0.0
      %v2318 = vmax.f32 %v2080, 0.0
      %v2319 = vmax.f32 %v2085, 0.0
      %v2320 = vmax.f32 %v2090, 0.0
      %v2321 = vmax.f32 %v2095, 0.0
      %v2322 = vmax.f32 %v2100, 0.0
      %v2323 = vmax.f32 %v2105, 0.0
      %v2324 = vmax.f32 %v2110, 0.0
      %v2325 = vmax.f32 %v2115, 0.0
      %v2326 = vmax.f32 %v2120, 0.0
      %v2327 = vmax.f32 %v2125, 0.0
      %v2328 = vmax.f32 %v2130, 0.0
      %v2329 = vmax.f32 %v2135, 0.0
      %v2330 = vmax.f32 %v2140, 0.0
      %v2331 = vmax.f32 %v2145, 0.0
      %v2332 = vmax.f32 %v2150, 0.0
      %v2333 = vmax.f32 %v2155, 0.0
      %v2334 = vmax.f32 %v2160, 0.0
      %v2335 = vmax.f32 %v2165, 0.0
      %v2336 = vmax.f32 %v2170, 0.0
      %v2337 = vmax.f32 %v2175, 0.0
      %v2338 = vmax.f32 %v2180, 0.0
      %v2339 = vmax.f32 %v2185, 0.0
      %v2340 = vmax.f32 %v2190, 0.0
      %v2341 = vmax.f32 %v2195, 0.0
      %v2342 = vmax.f32 %v2200, 0.0
      %v2343 = vmax.f32 %v2205, 0.0
      %v2344 = vmax.f32 %v2210, 0.0
      %v2345 = vmax.f32 %v2215, 0.0
      %v2346 = vmax.f32 %v2220, 0.0
      %v2347 = vmax.f32 %v2225, 0.0
      %v2348 = vmax.f32 %v2230, 0.0
      %v2349 = vmax.f32 %v2235, 0.0
      %v2350 = vmax.f32 %v2240, 0.0
      %v2351 = vmax.f32 %v2245, 0.0
      %v2352 = vmax.f32 %v2250, 0.0
      %v2353 = vmax.f32 %v2255, 0.0
      %v2354 = vmax.f32 %v2260, 0.0
      %v2355 = vmax.f32 %v2265, 0.0
      %v2356 = vmax.f32 %v2270, 0.0
      %v2357 = vmax.f32 %v2275, 0.0
      %v2358 = vmax.f32 %v2280, 0.0
      %v2359 = vmax.f32 %v2285, 0.0
      %v2360 = vld [vmem:[%s9] sm:$0xff]
      %v2361 = vld [vmem:[%s9 + $0x8] sm:$0xff]
      %v2362 = vld [vmem:[%s9 + $0x10] sm:$0xff]
      %v2363 = vld [vmem:[%s9 + $0x18] sm:$0xff]
      %v2364 = vld [vmem:[%s9 + $0x20] sm:$0xff]
      %v2365 = vld [vmem:[%s9 + $0x28] sm:$0xff]
      %v2366 = vld [vmem:[%s9 + $0x30] sm:$0xff]
      %v2367 = vld [vmem:[%s9 + $0x38] sm:$0xff]
      %v2368 = vld [vmem:[%s9 + $0x40] sm:$0xff]
      %v2369 = vld [vmem:[%s9 + $0x48] sm:$0xff]
      %v2370 = vld [vmem:[%s9 + $0x50] sm:$0xff]
      %v2371 = vld [vmem:[%s9 + $0x58] sm:$0xff]
      %v2372 = vld [vmem:[%s9 + $0x60] sm:$0xff]
      %v2373 = vld [vmem:[%s9 + $0x68] sm:$0xff]
      %v2374 = vld [vmem:[%s9 + $0x70] sm:$0xff]
      %v2375 = vld [vmem:[%s9 + $0x78] sm:$0xff]
      %v2377 = vsel %vm1646, %v2290, 0
      %v2380 = vsel %vm1646, %v2291, 0
      %2382 = vmatprep.subr.mxu0 0.0
      %2383 = vmatpush1.msra.mxu0 %v2368
      %2384 = vmatprep.subr.mxu0 0.0
      %2385 = vmatpush1.msra.mxu0 %v2369
      %2386 = vmatprep.subr.mxu0 0.0
      %2387 = vmatpush1.msra.mxu0 %v2370
      %2388 = vmatprep.subr.mxu0 0.0
      %2389 = vmatpush1.msra.mxu0 %v2371
      %2390 = vmatprep.subr.mxu0 0.0
      %2391 = vmatpush1.msra.mxu0 %v2372
      %2392 = vmatprep.subr.mxu0 0.0
      %2393 = vmatpush1.msra.mxu0 %v2373
      %2394 = vmatprep.subr.mxu0 0.0
      %2395 = vmatpush1.msra.mxu0 %v2374
      %2396 = vmatprep.subr.mxu0 0.0
      %2397 = vmatpush1.msra.mxu0 %v2375
      %2398 = vmatprep.subr.mxu0 0.0
      %2399 = vmatpush1.msra.mxu0 0.0
      %2400 = vmatprep.subr.mxu0 0.0
      %2401 = vmatpush1.msra.mxu0 0.0
      %2402 = vmatprep.subr.mxu0 0.0
      %2403 = vmatpush1.msra.mxu0 0.0
      %2404 = vmatprep.subr.mxu0 0.0
      %2405 = vmatpush1.msra.mxu0 0.0
      %2406 = vmatprep.subr.mxu0 0.0
      %2407 = vmatpush1.msra.mxu0 0.0
      %2408 = vmatprep.subr.mxu0 0.0
      %2409 = vmatpush1.msra.mxu0 0.0
      %2410 = vmatprep.subr.mxu0 0.0
      %2411 = vmatpush1.msra.mxu0 0.0
      %2412 = vmatprep.subr.mxu0 0.0
      %2413 = vmatpush1.msra.mxu0 0.0
      %2414 = vmatprep.subr.mxu0 0.0
      %2415 = vmatpush1.msra.mxu0 0.0
      %2416 = vmatprep.subr.mxu0 0.0
      %2417 = vmatpush1.msra.mxu0 0.0
      %2418 = vmatprep.subr.mxu0 0.0
      %2419 = vmatpush1.msra.mxu0 0.0
      %2420 = vmatprep.subr.mxu0 0.0
      %2421 = vmatpush1.msra.mxu0 0.0
      %2422 = vmatprep.subr.mxu0 0.0
      %2423 = vmatpush1.msra.mxu0 0.0
      %2424 = vmatprep.subr.mxu0 0.0
      %2425 = vmatpush1.msra.mxu0 0.0
      %2426 = vmatprep.subr.mxu0 0.0
      %2427 = vmatpush1.msra.mxu0 0.0
      %2428 = vmatprep.subr.mxu0 0.0
      %2429 = vmatpush1.msra.mxu0 0.0
      %2430 = vmatprep.subr.mxu0 0.0
      %2431 = vmatpush1.msra.mxu0 0.0
      %2432 = vmatprep.subr.mxu0 0.0
      %2433 = vmatpush1.msra.mxu0 0.0
      %2434 = vmatprep.subr.mxu0 0.0
      %2435 = vmatpush1.msra.mxu0 0.0
      %2436 = vmatprep.subr.mxu0 0.0
      %2437 = vmatpush1.msra.mxu0 0.0
      %2438 = vmatprep.subr.mxu0 0.0
      %2439 = vmatpush1.msra.mxu0 0.0
      %2440 = vmatprep.subr.mxu0 0.0
      %2441 = vmatpush1.msra.mxu0 0.0
      %2442 = vmatprep.subr.mxu0 0.0
      %2443 = vmatpush1.msra.mxu0 0.0
      %2444 = vmatprep.subr.mxu0 0.0
      %2445 = vmatpush1.msra.mxu0 0.0
      %2446 = vmatprep.mubr.f32.mxu0 0.0
      %2447 = vmatmul.mubr.f32.gmra.mrb[0].mxu0 %v2377
      %v2448 = vpop.f32.mrb[0].mxu0
      %v2449 = vadd.f32 0.0, %v2448
      %v2450 = vpop.f32.mrb[0].mxu0
      %2451 = vmatprep.mubr.f32.mxu0 0.0
      %2452 = vmatmul.mubr.f32.gmra.mrb[0].mxu0 %v2380
      %v2453 = vpop.f32.mrb[0].mxu0
      %v2454 = vadd.f32 0.0, %v2453
      %v2455 = vpop.f32.mrb[0].mxu0
      %2456 = vdwg.mxu0
      %v2458 = vsel %vm1646, %v2288, 0
      %v2461 = vsel %vm1646, %v2289, 0
      %2463 = vmatprep.subr.mxu0 0.0
      %2464 = vmatpush1.msra.mxu0 %v2360
      %2465 = vmatprep.subr.mxu0 0.0
      %2466 = vmatpush1.msra.mxu0 %v2361
      %2467 = vmatprep.subr.mxu0 0.0
      %2468 = vmatpush1.msra.mxu0 %v2362
      %2469 = vmatprep.subr.mxu0 0.0
      %2470 = vmatpush1.msra.mxu0 %v2363
      %2471 = vmatprep.subr.mxu0 0.0
      %2472 = vmatpush1.msra.mxu0 %v2364
      %2473 = vmatprep.subr.mxu0 0.0
      %2474 = vmatpush1.msra.mxu0 %v2365
      %2475 = vmatprep.subr.mxu0 0.0
      %2476 = vmatpush1.msra.mxu0 %v2366
      %2477 = vmatprep.subr.mxu0 0.0
      %2478 = vmatpush1.msra.mxu0 %v2367
      %2479 = vmatprep.subr.mxu0 0.0
      %2480 = vmatpush1.msra.mxu0 0.0
      %2481 = vmatprep.subr.mxu0 0.0
      %2482 = vmatpush1.msra.mxu0 0.0
      %2483 = vmatprep.subr.mxu0 0.0
      %2484 = vmatpush1.msra.mxu0 0.0
      %2485 = vmatprep.subr.mxu0 0.0
      %2486 = vmatpush1.msra.mxu0 0.0
      %2487 = vmatprep.subr.mxu0 0.0
      %2488 = vmatpush1.msra.mxu0 0.0
      %2489 = vmatprep.subr.mxu0 0.0
      %2490 = vmatpush1.msra.mxu0 0.0
      %2491 = vmatprep.subr.mxu0 0.0
      %2492 = vmatpush1.msra.mxu0 0.0
      %2493 = vmatprep.subr.mxu0 0.0
      %2494 = vmatpush1.msra.mxu0 0.0
      %2495 = vmatprep.subr.mxu0 0.0
      %2496 = vmatpush1.msra.mxu0 0.0
      %2497 = vmatprep.subr.mxu0 0.0
      %2498 = vmatpush1.msra.mxu0 0.0
      %2499 = vmatprep.subr.mxu0 0.0
      %2500 = vmatpush1.msra.mxu0 0.0
      %2501 = vmatprep.subr.mxu0 0.0
      %2502 = vmatpush1.msra.mxu0 0.0
      %2503 = vmatprep.subr.mxu0 0.0
      %2504 = vmatpush1.msra.mxu0 0.0
      %2505 = vmatprep.subr.mxu0 0.0
      %2506 = vmatpush1.msra.mxu0 0.0
      %2507 = vmatprep.subr.mxu0 0.0
      %2508 = vmatpush1.msra.mxu0 0.0
      %2509 = vmatprep.subr.mxu0 0.0
      %2510 = vmatpush1.msra.mxu0 0.0
      %2511 = vmatprep.subr.mxu0 0.0
      %2512 = vmatpush1.msra.mxu0 0.0
      %2513 = vmatprep.subr.mxu0 0.0
      %2514 = vmatpush1.msra.mxu0 0.0
      %2515 = vmatprep.subr.mxu0 0.0
      %2516 = vmatpush1.msra.mxu0 0.0
      %2517 = vmatprep.subr.mxu0 0.0
      %2518 = vmatpush1.msra.mxu0 0.0
      %2519 = vmatprep.subr.mxu0 0.0
      %2520 = vmatpush1.msra.mxu0 0.0
      %2521 = vmatprep.subr.mxu0 0.0
      %2522 = vmatpush1.msra.mxu0 0.0
      %2523 = vmatprep.subr.mxu0 0.0
      %2524 = vmatpush1.msra.mxu0 0.0
      %2525 = vmatprep.subr.mxu0 0.0
      %2526 = vmatpush1.msra.mxu0 0.0
      %2527 = vmatprep.mubr.f32.mxu0 0.0
      %2528 = vmatmul.mubr.f32.gmra.mrb[0].mxu0 %v2458
      %v2529 = vpop.f32.mrb[0].mxu0
      %v2530 = vadd.f32 %v2449, %v2529
      %v2531 = vpop.f32.mrb[0].mxu0
      %2532 = vmatprep.mubr.f32.mxu0 0.0
      %2533 = vmatmul.mubr.f32.gmra.mrb[0].mxu0 %v2461
      %v2534 = vpop.f32.mrb[0].mxu0
      %v2535 = vadd.f32 %v2454, %v2534
      %v2536 = vpop.f32.mrb[0].mxu0
      %2537 = vdwg.mxu0
      %v2538 = vld [vmem:[%s9 + $0x80] sm:$0xff]
      %v2539 = vld [vmem:[%s9 + $0x88] sm:$0xff]
      %v2540 = vld [vmem:[%s9 + $0x90] sm:$0xff]
      %v2541 = vld [vmem:[%s9 + $0x98] sm:$0xff]
      %v2542 = vld [vmem:[%s9 + $0xa0] sm:$0xff]
      %v2543 = vld [vmem:[%s9 + $0xa8] sm:$0xff]
      %v2544 = vld [vmem:[%s9 + $0xb0] sm:$0xff]
      %v2545 = vld [vmem:[%s9 + $0xb8] sm:$0xff]
      %v2547 = vsel %vm1646, %v2292, 0
      %v2550 = vsel %vm1646, %v2293, 0
      %2552 = vmatprep.subr.mxu0 0.0
      %2553 = vmatpush1.msra.mxu0 %v2538
      %2554 = vmatprep.subr.mxu0 0.0
      %2555 = vmatpush1.msra.mxu0 %v2539
      %2556 = vmatprep.subr.mxu0 0.0
      %2557 = vmatpush1.msra.mxu0 %v2540
      %2558 = vmatprep.subr.mxu0 0.0
      %2559 = vmatpush1.msra.mxu0 %v2541
      %2560 = vmatprep.subr.mxu0 0.0
      %2561 = vmatpush1.msra.mxu0 %v2542
      %2562 = vmatprep.subr.mxu0 0.0
      %2563 = vmatpush1.msra.mxu0 %v2543
      %2564 = vmatprep.subr.mxu0 0.0
      %2565 = vmatpush1.msra.mxu0 %v2544
      %2566 = vmatprep.subr.mxu0 0.0
      %2567 = vmatpush1.msra.mxu0 %v2545
      %2568 = vmatprep.subr.mxu0 0.0
      %2569 = vmatpush1.msra.mxu0 0.0
      %2570 = vmatprep.subr.mxu0 0.0
      %2571 = vmatpush1.msra.mxu0 0.0
      %2572 = vmatprep.subr.mxu0 0.0
      %2573 = vmatpush1.msra.mxu0 0.0
      %2574 = vmatprep.subr.mxu0 0.0
      %2575 = vmatpush1.msra.mxu0 0.0
      %2576 = vmatprep.subr.mxu0 0.0
      %2577 = vmatpush1.msra.mxu0 0.0
      %2578 = vmatprep.subr.mxu0 0.0
      %2579 = vmatpush1.msra.mxu0 0.0
      %2580 = vmatprep.subr.mxu0 0.0
      %2581 = vmatpush1.msra.mxu0 0.0
      %2582 = vmatprep.subr.mxu0 0.0
      %2583 = vmatpush1.msra.mxu0 0.0
      %2584 = vmatprep.subr.mxu0 0.0
      %2585 = vmatpush1.msra.mxu0 0.0
      %2586 = vmatprep.subr.mxu0 0.0
      %2587 = vmatpush1.msra.mxu0 0.0
      %2588 = vmatprep.subr.mxu0 0.0
      %2589 = vmatpush1.msra.mxu0 0.0
      %2590 = vmatprep.subr.mxu0 0.0
      %2591 = vmatpush1.msra.mxu0 0.0
      %2592 = vmatprep.subr.mxu0 0.0
      %2593 = vmatpush1.msra.mxu0 0.0
      %2594 = vmatprep.subr.mxu0 0.0
      %2595 = vmatpush1.msra.mxu0 0.0
      %2596 = vmatprep.subr.mxu0 0.0
      %2597 = vmatpush1.msra.mxu0 0.0
      %2598 = vmatprep.subr.mxu0 0.0
      %2599 = vmatpush1.msra.mxu0 0.0
      %2600 = vmatprep.subr.mxu0 0.0
      %2601 = vmatpush1.msra.mxu0 0.0
      %2602 = vmatprep.subr.mxu0 0.0
      %2603 = vmatpush1.msra.mxu0 0.0
      %2604 = vmatprep.subr.mxu0 0.0
      %2605 = vmatpush1.msra.mxu0 0.0
      %2606 = vmatprep.subr.mxu0 0.0
      %2607 = vmatpush1.msra.mxu0 0.0
      %2608 = vmatprep.subr.mxu0 0.0
      %2609 = vmatpush1.msra.mxu0 0.0
      %2610 = vmatprep.subr.mxu0 0.0
      %2611 = vmatpush1.msra.mxu0 0.0
      %2612 = vmatprep.subr.mxu0 0.0
      %2613 = vmatpush1.msra.mxu0 0.0
      %2614 = vmatprep.subr.mxu0 0.0
      %2615 = vmatpush1.msra.mxu0 0.0
      %2616 = vmatprep.mubr.f32.mxu0 0.0
      %2617 = vmatmul.mubr.f32.gmra.mrb[0].mxu0 %v2547
      %v2618 = vpop.f32.mrb[0].mxu0
      %v2619 = vadd.f32 0.0, %v2618
      %v2620 = vpop.f32.mrb[0].mxu0
      %2621 = vmatprep.mubr.f32.mxu0 0.0
      %2622 = vmatmul.mubr.f32.gmra.mrb[0].mxu0 %v2550
      %v2623 = vpop.f32.mrb[0].mxu0
      %v2624 = vadd.f32 0.0, %v2623
      %v2625 = vpop.f32.mrb[0].mxu0
      %2626 = vdwg.mxu0
      %v2627 = vadd.f32 %v2530, %v2619
      %v2628 = vadd.f32 %v2535, %v2624
      %v2629 = vld [vmem:[%s9 + $0xc0] sm:$0xff]
      %v2630 = vld [vmem:[%s9 + $0xc8] sm:$0xff]
      %v2631 = vld [vmem:[%s9 + $0xd0] sm:$0xff]
      %v2632 = vld [vmem:[%s9 + $0xd8] sm:$0xff]
      %v2633 = vld [vmem:[%s9 + $0xe0] sm:$0xff]
      %v2634 = vld [vmem:[%s9 + $0xe8] sm:$0xff]
      %v2635 = vld [vmem:[%s9 + $0xf0] sm:$0xff]
      %v2636 = vld [vmem:[%s9 + $0xf8] sm:$0xff]
      %v2638 = vsel %vm1646, %v2294, 0
      %v2641 = vsel %vm1646, %v2295, 0
      %2643 = vmatprep.subr.mxu0 0.0
      %2644 = vmatpush1.msra.mxu0 %v2629
      %2645 = vmatprep.subr.mxu0 0.0
      %2646 = vmatpush1.msra.mxu0 %v2630
      %2647 = vmatprep.subr.mxu0 0.0
      %2648 = vmatpush1.msra.mxu0 %v2631
      %2649 = vmatprep.subr.mxu0 0.0
      %2650 = vmatpush1.msra.mxu0 %v2632
      %2651 = vmatprep.subr.mxu0 0.0
      %2652 = vmatpush1.msra.mxu0 %v2633
      %2653 = vmatprep.subr.mxu0 0.0
      %2654 = vmatpush1.msra.mxu0 %v2634
      %2655 = vmatprep.subr.mxu0 0.0
      %2656 = vmatpush1.msra.mxu0 %v2635
      %2657 = vmatprep.subr.mxu0 0.0
      %2658 = vmatpush1.msra.mxu0 %v2636
      %2659 = vmatprep.subr.mxu0 0.0
      %2660 = vmatpush1.msra.mxu0 0.0
      %2661 = vmatprep.subr.mxu0 0.0
      %2662 = vmatpush1.msra.mxu0 0.0
      %2663 = vmatprep.subr.mxu0 0.0
      %2664 = vmatpush1.msra.mxu0 0.0
      %2665 = vmatprep.subr.mxu0 0.0
      %2666 = vmatpush1.msra.mxu0 0.0
      %2667 = vmatprep.subr.mxu0 0.0
      %2668 = vmatpush1.msra.mxu0 0.0
      %2669 = vmatprep.subr.mxu0 0.0
      %2670 = vmatpush1.msra.mxu0 0.0
      %2671 = vmatprep.subr.mxu0 0.0
      %2672 = vmatpush1.msra.mxu0 0.0
      %2673 = vmatprep.subr.mxu0 0.0
      %2674 = vmatpush1.msra.mxu0 0.0
      %2675 = vmatprep.subr.mxu0 0.0
      %2676 = vmatpush1.msra.mxu0 0.0
      %2677 = vmatprep.subr.mxu0 0.0
      %2678 = vmatpush1.msra.mxu0 0.0
      %2679 = vmatprep.subr.mxu0 0.0
      %2680 = vmatpush1.msra.mxu0 0.0
      %2681 = vmatprep.subr.mxu0 0.0
      %2682 = vmatpush1.msra.mxu0 0.0
      %2683 = vmatprep.subr.mxu0 0.0
      %2684 = vmatpush1.msra.mxu0 0.0
      %2685 = vmatprep.subr.mxu0 0.0
      %2686 = vmatpush1.msra.mxu0 0.0
      %2687 = vmatprep.subr.mxu0 0.0
      %2688 = vmatpush1.msra.mxu0 0.0
      %2689 = vmatprep.subr.mxu0 0.0
      %2690 = vmatpush1.msra.mxu0 0.0
      %2691 = vmatprep.subr.mxu0 0.0
      %2692 = vmatpush1.msra.mxu0 0.0
      %2693 = vmatprep.subr.mxu0 0.0
      %2694 = vmatpush1.msra.mxu0 0.0
      %2695 = vmatprep.subr.mxu0 0.0
      %2696 = vmatpush1.msra.mxu0 0.0
      %2697 = vmatprep.subr.mxu0 0.0
      %2698 = vmatpush1.msra.mxu0 0.0
      %2699 = vmatprep.subr.mxu0 0.0
      %2700 = vmatpush1.msra.mxu0 0.0
      %2701 = vmatprep.subr.mxu0 0.0
      %2702 = vmatpush1.msra.mxu0 0.0
      %2703 = vmatprep.subr.mxu0 0.0
      %2704 = vmatpush1.msra.mxu0 0.0
      %2705 = vmatprep.subr.mxu0 0.0
      %2706 = vmatpush1.msra.mxu0 0.0
      %2707 = vmatprep.mubr.f32.mxu0 0.0
      %2708 = vmatmul.mubr.f32.gmra.mrb[0].mxu0 %v2638
      %v2709 = vpop.f32.mrb[0].mxu0
      %v2710 = vadd.f32 0.0, %v2709
      %v2711 = vpop.f32.mrb[0].mxu0
      %2712 = vmatprep.mubr.f32.mxu0 0.0
      %2713 = vmatmul.mubr.f32.gmra.mrb[0].mxu0 %v2641
      %v2714 = vpop.f32.mrb[0].mxu0
      %v2715 = vadd.f32 0.0, %v2714
      %v2716 = vpop.f32.mrb[0].mxu0
      %2717 = vdwg.mxu0
      %v2718 = vadd.f32 %v2627, %v2710
      %v2719 = vadd.f32 %v2628, %v2715
      %v2720 = vld [vmem:[%s9 + $0x100] sm:$0xff]
      %v2721 = vld [vmem:[%s9 + $0x108] sm:$0xff]
      %v2722 = vld [vmem:[%s9 + $0x110] sm:$0xff]
      %v2723 = vld [vmem:[%s9 + $0x118] sm:$0xff]
      %v2724 = vld [vmem:[%s9 + $0x120] sm:$0xff]
      %v2725 = vld [vmem:[%s9 + $0x128] sm:$0xff]
      %v2726 = vld [vmem:[%s9 + $0x130] sm:$0xff]
      %v2727 = vld [vmem:[%s9 + $0x138] sm:$0xff]
      %v2729 = vsel %vm1646, %v2296, 0
      %v2732 = vsel %vm1646, %v2297, 0
      %2734 = vmatprep.subr.mxu0 0.0
      %2735 = vmatpush1.msra.mxu0 %v2720
      %2736 = vmatprep.subr.mxu0 0.0
      %2737 = vmatpush1.msra.mxu0 %v2721
      %2738 = vmatprep.subr.mxu0 0.0
      %2739 = vmatpush1.msra.mxu0 %v2722
      %2740 = vmatprep.subr.mxu0 0.0
      %2741 = vmatpush1.msra.mxu0 %v2723
      %2742 = vmatprep.subr.mxu0 0.0
      %2743 = vmatpush1.msra.mxu0 %v2724
      %2744 = vmatprep.subr.mxu0 0.0
      %2745 = vmatpush1.msra.mxu0 %v2725
      %2746 = vmatprep.subr.mxu0 0.0
      %2747 = vmatpush1.msra.mxu0 %v2726
      %2748 = vmatprep.subr.mxu0 0.0
      %2749 = vmatpush1.msra.mxu0 %v2727
      %2750 = vmatprep.subr.mxu0 0.0
      %2751 = vmatpush1.msra.mxu0 0.0
      %2752 = vmatprep.subr.mxu0 0.0
      %2753 = vmatpush1.msra.mxu0 0.0
      %2754 = vmatprep.subr.mxu0 0.0
      %2755 = vmatpush1.msra.mxu0 0.0
      %2756 = vmatprep.subr.mxu0 0.0
      %2757 = vmatpush1.msra.mxu0 0.0
      %2758 = vmatprep.subr.mxu0 0.0
      %2759 = vmatpush1.msra.mxu0 0.0
      %2760 = vmatprep.subr.mxu0 0.0
      %2761 = vmatpush1.msra.mxu0 0.0
      %2762 = vmatprep.subr.mxu0 0.0
      %2763 = vmatpush1.msra.mxu0 0.0
      %2764 = vmatprep.subr.mxu0 0.0
      %2765 = vmatpush1.msra.mxu0 0.0
      %2766 = vmatprep.subr.mxu0 0.0
      %2767 = vmatpush1.msra.mxu0 0.0
      %2768 = vmatprep.subr.mxu0 0.0
      %2769 = vmatpush1.msra.mxu0 0.0
      %2770 = vmatprep.subr.mxu0 0.0
      %2771 = vmatpush1.msra.mxu0 0.0
      %2772 = vmatprep.subr.mxu0 0.0
      %2773 = vmatpush1.msra.mxu0 0.0
      %2774 = vmatprep.subr.mxu0 0.0
      %2775 = vmatpush1.msra.mxu0 0.0
      %2776 = vmatprep.subr.mxu0 0.0
      %2777 = vmatpush1.msra.mxu0 0.0
      %2778 = vmatprep.subr.mxu0 0.0
      %2779 = vmatpush1.msra.mxu0 0.0
      %2780 = vmatprep.subr.mxu0 0.0
      %2781 = vmatpush1.msra.mxu0 0.0
      %2782 = vmatprep.subr.mxu0 0.0
      %2783 = vmatpush1.msra.mxu0 0.0
      %2784 = vmatprep.subr.mxu0 0.0
      %2785 = vmatpush1.msra.mxu0 0.0
      %2786 = vmatprep.subr.mxu0 0.0
      %2787 = vmatpush1.msra.mxu0 0.0
      %2788 = vmatprep.subr.mxu0 0.0
      %2789 = vmatpush1.msra.mxu0 0.0
      %2790 = vmatprep.subr.mxu0 0.0
      %2791 = vmatpush1.msra.mxu0 0.0
      %2792 = vmatprep.subr.mxu0 0.0
      %2793 = vmatpush1.msra.mxu0 0.0
      %2794 = vmatprep.subr.mxu0 0.0
      %2795 = vmatpush1.msra.mxu0 0.0
      %2796 = vmatprep.subr.mxu0 0.0
      %2797 = vmatpush1.msra.mxu0 0.0
      %2798 = vmatprep.mubr.f32.mxu0 0.0
      %2799 = vmatmul.mubr.f32.gmra.mrb[0].mxu0 %v2729
      %v2800 = vpop.f32.mrb[0].mxu0
      %v2801 = vadd.f32 0.0, %v2800
      %v2802 = vpop.f32.mrb[0].mxu0
      %2803 = vmatprep.mubr.f32.mxu0 0.0
      %2804 = vmatmul.mubr.f32.gmra.mrb[0].mxu0 %v2732
      %v2805 = vpop.f32.mrb[0].mxu0
      %v2806 = vadd.f32 0.0, %v2805
      %v2807 = vpop.f32.mrb[0].mxu0
      %2808 = vdwg.mxu0
      %v2809 = vadd.f32 %v2718, %v2801
      %v2810 = vadd.f32 %v2719, %v2806
      %v2811 = vld [vmem:[%s9 + $0x140] sm:$0xff]
      %v2812 = vld [vmem:[%s9 + $0x148] sm:$0xff]
      %v2813 = vld [vmem:[%s9 + $0x150] sm:$0xff]
      %v2814 = vld [vmem:[%s9 + $0x158] sm:$0xff]
      %v2815 = vld [vmem:[%s9 + $0x160] sm:$0xff]
      %v2816 = vld [vmem:[%s9 + $0x168] sm:$0xff]
      %v2817 = vld [vmem:[%s9 + $0x170] sm:$0xff]
      %v2818 = vld [vmem:[%s9 + $0x178] sm:$0xff]
      %v2820 = vsel %vm1646, %v2298, 0
      %v2823 = vsel %vm1646, %v2299, 0
      %2825 = vmatprep.subr.mxu0 0.0
      %2826 = vmatpush1.msra.mxu0 %v2811
      %2827 = vmatprep.subr.mxu0 0.0
      %2828 = vmatpush1.msra.mxu0 %v2812
      %2829 = vmatprep.subr.mxu0 0.0
      %2830 = vmatpush1.msra.mxu0 %v2813
      %2831 = vmatprep.subr.mxu0 0.0
      %2832 = vmatpush1.msra.mxu0 %v2814
      %2833 = vmatprep.subr.mxu0 0.0
      %2834 = vmatpush1.msra.mxu0 %v2815
      %2835 = vmatprep.subr.mxu0 0.0
      %2836 = vmatpush1.msra.mxu0 %v2816
      %2837 = vmatprep.subr.mxu0 0.0
      %2838 = vmatpush1.msra.mxu0 %v2817
      %2839 = vmatprep.subr.mxu0 0.0
      %2840 = vmatpush1.msra.mxu0 %v2818
      %2841 = vmatprep.subr.mxu0 0.0
      %2842 = vmatpush1.msra.mxu0 0.0
      %2843 = vmatprep.subr.mxu0 0.0
      %2844 = vmatpush1.msra.mxu0 0.0
      %2845 = vmatprep.subr.mxu0 0.0
      %2846 = vmatpush1.msra.mxu0 0.0
      %2847 = vmatprep.subr.mxu0 0.0
      %2848 = vmatpush1.msra.mxu0 0.0
      %2849 = vmatprep.subr.mxu0 0.0
      %2850 = vmatpush1.msra.mxu0 0.0
      %2851 = vmatprep.subr.mxu0 0.0
      %2852 = vmatpush1.msra.mxu0 0.0
      %2853 = vmatprep.subr.mxu0 0.0
      %2854 = vmatpush1.msra.mxu0 0.0
      %2855 = vmatprep.subr.mxu0 0.0
      %2856 = vmatpush1.msra.mxu0 0.0
      %2857 = vmatprep.subr.mxu0 0.0
      %2858 = vmatpush1.msra.mxu0 0.0
      %2859 = vmatprep.subr.mxu0 0.0
      %2860 = vmatpush1.msra.mxu0 0.0
      %2861 = vmatprep.subr.mxu0 0.0
      %2862 = vmatpush1.msra.mxu0 0.0
      %2863 = vmatprep.subr.mxu0 0.0
      %2864 = vmatpush1.msra.mxu0 0.0
      %2865 = vmatprep.subr.mxu0 0.0
      %2866 = vmatpush1.msra.mxu0 0.0
      %2867 = vmatprep.subr.mxu0 0.0
      %2868 = vmatpush1.msra.mxu0 0.0
      %2869 = vmatprep.subr.mxu0 0.0
      %2870 = vmatpush1.msra.mxu0 0.0
      %2871 = vmatprep.subr.mxu0 0.0
      %2872 = vmatpush1.msra.mxu0 0.0
      %2873 = vmatprep.subr.mxu0 0.0
      %2874 = vmatpush1.msra.mxu0 0.0
      %2875 = vmatprep.subr.mxu0 0.0
      %2876 = vmatpush1.msra.mxu0 0.0
      %2877 = vmatprep.subr.mxu0 0.0
      %2878 = vmatpush1.msra.mxu0 0.0
      %2879 = vmatprep.subr.mxu0 0.0
      %2880 = vmatpush1.msra.mxu0 0.0
      %2881 = vmatprep.subr.mxu0 0.0
      %2882 = vmatpush1.msra.mxu0 0.0
      %2883 = vmatprep.subr.mxu0 0.0
      %2884 = vmatpush1.msra.mxu0 0.0
      %2885 = vmatprep.subr.mxu0 0.0
      %2886 = vmatpush1.msra.mxu0 0.0
      %2887 = vmatprep.subr.mxu0 0.0
      %2888 = vmatpush1.msra.mxu0 0.0
      %2889 = vmatprep.mubr.f32.mxu0 0.0
      %2890 = vmatmul.mubr.f32.gmra.mrb[0].mxu0 %v2820
      %v2891 = vpop.f32.mrb[0].mxu0
      %v2892 = vadd.f32 0.0, %v2891
      %v2893 = vpop.f32.mrb[0].mxu0
      %2894 = vmatprep.mubr.f32.mxu0 0.0
      %2895 = vmatmul.mubr.f32.gmra.mrb[0].mxu0 %v2823
      %v2896 = vpop.f32.mrb[0].mxu0
      %v2897 = vadd.f32 0.0, %v2896
      %v2898 = vpop.f32.mrb[0].mxu0
      %2899 = vdwg.mxu0
      %v2900 = vadd.f32 %v2809, %v2892
      %v2901 = vadd.f32 %v2810, %v2897
      %v2902 = vld [vmem:[%s9 + $0x180] sm:$0xff]
      %v2903 = vld [vmem:[%s9 + $0x188] sm:$0xff]
      %v2904 = vld [vmem:[%s9 + $0x190] sm:$0xff]
      %v2905 = vld [vmem:[%s9 + $0x198] sm:$0xff]
      %v2906 = vld [vmem:[%s9 + $0x1a0] sm:$0xff]
      %v2907 = vld [vmem:[%s9 + $0x1a8] sm:$0xff]
      %v2908 = vld [vmem:[%s9 + $0x1b0] sm:$0xff]
      %v2909 = vld [vmem:[%s9 + $0x1b8] sm:$0xff]
      %v2911 = vsel %vm1646, %v2300, 0
      %v2914 = vsel %vm1646, %v2301, 0
      %2916 = vmatprep.subr.mxu0 0.0
      %2917 = vmatpush1.msra.mxu0 %v2902
      %2918 = vmatprep.subr.mxu0 0.0
      %2919 = vmatpush1.msra.mxu0 %v2903
      %2920 = vmatprep.subr.mxu0 0.0
      %2921 = vmatpush1.msra.mxu0 %v2904
      %2922 = vmatprep.subr.mxu0 0.0
      %2923 = vmatpush1.msra.mxu0 %v2905
      %2924 = vmatprep.subr.mxu0 0.0
      %2925 = vmatpush1.msra.mxu0 %v2906
      %2926 = vmatprep.subr.mxu0 0.0
      %2927 = vmatpush1.msra.mxu0 %v2907
      %2928 = vmatprep.subr.mxu0 0.0
      %2929 = vmatpush1.msra.mxu0 %v2908
      %2930 = vmatprep.subr.mxu0 0.0
      %2931 = vmatpush1.msra.mxu0 %v2909
      %2932 = vmatprep.subr.mxu0 0.0
      %2933 = vmatpush1.msra.mxu0 0.0
      %2934 = vmatprep.subr.mxu0 0.0
      %2935 = vmatpush1.msra.mxu0 0.0
      %2936 = vmatprep.subr.mxu0 0.0
      %2937 = vmatpush1.msra.mxu0 0.0
      %2938 = vmatprep.subr.mxu0 0.0
      %2939 = vmatpush1.msra.mxu0 0.0
      %2940 = vmatprep.subr.mxu0 0.0
      %2941 = vmatpush1.msra.mxu0 0.0
      %2942 = vmatprep.subr.mxu0 0.0
      %2943 = vmatpush1.msra.mxu0 0.0
      %2944 = vmatprep.subr.mxu0 0.0
      %2945 = vmatpush1.msra.mxu0 0.0
      %2946 = vmatprep.subr.mxu0 0.0
      %2947 = vmatpush1.msra.mxu0 0.0
      %2948 = vmatprep.subr.mxu0 0.0
      %2949 = vmatpush1.msra.mxu0 0.0
      %2950 = vmatprep.subr.mxu0 0.0
      %2951 = vmatpush1.msra.mxu0 0.0
      %2952 = vmatprep.subr.mxu0 0.0
      %2953 = vmatpush1.msra.mxu0 0.0
      %2954 = vmatprep.subr.mxu0 0.0
      %2955 = vmatpush1.msra.mxu0 0.0
      %2956 = vmatprep.subr.mxu0 0.0
      %2957 = vmatpush1.msra.mxu0 0.0
      %2958 = vmatprep.subr.mxu0 0.0
      %2959 = vmatpush1.msra.mxu0 0.0
      %2960 = vmatprep.subr.mxu0 0.0
      %2961 = vmatpush1.msra.mxu0 0.0
      %2962 = vmatprep.subr.mxu0 0.0
      %2963 = vmatpush1.msra.mxu0 0.0
      %2964 = vmatprep.subr.mxu0 0.0
      %2965 = vmatpush1.msra.mxu0 0.0
      %2966 = vmatprep.subr.mxu0 0.0
      %2967 = vmatpush1.msra.mxu0 0.0
      %2968 = vmatprep.subr.mxu0 0.0
      %2969 = vmatpush1.msra.mxu0 0.0
      %2970 = vmatprep.subr.mxu0 0.0
      %2971 = vmatpush1.msra.mxu0 0.0
      %2972 = vmatprep.subr.mxu0 0.0
      %2973 = vmatpush1.msra.mxu0 0.0
      %2974 = vmatprep.subr.mxu0 0.0
      %2975 = vmatpush1.msra.mxu0 0.0
      %2976 = vmatprep.subr.mxu0 0.0
      %2977 = vmatpush1.msra.mxu0 0.0
      %2978 = vmatprep.subr.mxu0 0.0
      %2979 = vmatpush1.msra.mxu0 0.0
      %2980 = vmatprep.mubr.f32.mxu0 0.0
      %2981 = vmatmul.mubr.f32.gmra.mrb[0].mxu0 %v2911
      %v2982 = vpop.f32.mrb[0].mxu0
      %v2983 = vadd.f32 0.0, %v2982
      %v2984 = vpop.f32.mrb[0].mxu0
      %2985 = vmatprep.mubr.f32.mxu0 0.0
      %2986 = vmatmul.mubr.f32.gmra.mrb[0].mxu0 %v2914
      %v2987 = vpop.f32.mrb[0].mxu0
      %v2988 = vadd.f32 0.0, %v2987
      %v2989 = vpop.f32.mrb[0].mxu0
      %2990 = vdwg.mxu0
      %v2991 = vadd.f32 %v2900, %v2983
      %v2992 = vadd.f32 %v2901, %v2988
      %v2993 = vld [vmem:[%s9 + $0x1c0] sm:$0xff]
      %v2994 = vld [vmem:[%s9 + $0x1c8] sm:$0xff]
      %v2995 = vld [vmem:[%s9 + $0x1d0] sm:$0xff]
      %v2996 = vld [vmem:[%s9 + $0x1d8] sm:$0xff]
      %v2997 = vld [vmem:[%s9 + $0x1e0] sm:$0xff]
      %v2998 = vld [vmem:[%s9 + $0x1e8] sm:$0xff]
      %v2999 = vld [vmem:[%s9 + $0x1f0] sm:$0xff]
      %v3000 = vld [vmem:[%s9 + $0x1f8] sm:$0xff]
      %v3002 = vsel %vm1646, %v2302, 0
      %v3005 = vsel %vm1646, %v2303, 0
      %3007 = vmatprep.subr.mxu0 0.0
      %3008 = vmatpush1.msra.mxu0 %v2993
      %3009 = vmatprep.subr.mxu0 0.0
      %3010 = vmatpush1.msra.mxu0 %v2994
      %3011 = vmatprep.subr.mxu0 0.0
      %3012 = vmatpush1.msra.mxu0 %v2995
      %3013 = vmatprep.subr.mxu0 0.0
      %3014 = vmatpush1.msra.mxu0 %v2996
      %3015 = vmatprep.subr.mxu0 0.0
      %3016 = vmatpush1.msra.mxu0 %v2997
      %3017 = vmatprep.subr.mxu0 0.0
      %3018 = vmatpush1.msra.mxu0 %v2998
      %3019 = vmatprep.subr.mxu0 0.0
      %3020 = vmatpush1.msra.mxu0 %v2999
      %3021 = vmatprep.subr.mxu0 0.0
      %3022 = vmatpush1.msra.mxu0 %v3000
      %3023 = vmatprep.subr.mxu0 0.0
      %3024 = vmatpush1.msra.mxu0 0.0
      %3025 = vmatprep.subr.mxu0 0.0
      %3026 = vmatpush1.msra.mxu0 0.0
      %3027 = vmatprep.subr.mxu0 0.0
      %3028 = vmatpush1.msra.mxu0 0.0
      %3029 = vmatprep.subr.mxu0 0.0
      %3030 = vmatpush1.msra.mxu0 0.0
      %3031 = vmatprep.subr.mxu0 0.0
      %3032 = vmatpush1.msra.mxu0 0.0
      %3033 = vmatprep.subr.mxu0 0.0
      %3034 = vmatpush1.msra.mxu0 0.0
      %3035 = vmatprep.subr.mxu0 0.0
      %3036 = vmatpush1.msra.mxu0 0.0
      %3037 = vmatprep.subr.mxu0 0.0
      %3038 = vmatpush1.msra.mxu0 0.0
      %3039 = vmatprep.subr.mxu0 0.0
      %3040 = vmatpush1.msra.mxu0 0.0
      %3041 = vmatprep.subr.mxu0 0.0
      %3042 = vmatpush1.msra.mxu0 0.0
      %3043 = vmatprep.subr.mxu0 0.0
      %3044 = vmatpush1.msra.mxu0 0.0
      %3045 = vmatprep.subr.mxu0 0.0
      %3046 = vmatpush1.msra.mxu0 0.0
      %3047 = vmatprep.subr.mxu0 0.0
      %3048 = vmatpush1.msra.mxu0 0.0
      %3049 = vmatprep.subr.mxu0 0.0
      %3050 = vmatpush1.msra.mxu0 0.0
      %3051 = vmatprep.subr.mxu0 0.0
      %3052 = vmatpush1.msra.mxu0 0.0
      %3053 = vmatprep.subr.mxu0 0.0
      %3054 = vmatpush1.msra.mxu0 0.0
      %3055 = vmatprep.subr.mxu0 0.0
      %3056 = vmatpush1.msra.mxu0 0.0
      %3057 = vmatprep.subr.mxu0 0.0
      %3058 = vmatpush1.msra.mxu0 0.0
      %3059 = vmatprep.subr.mxu0 0.0
      %3060 = vmatpush1.msra.mxu0 0.0
      %3061 = vmatprep.subr.mxu0 0.0
      %3062 = vmatpush1.msra.mxu0 0.0
      %3063 = vmatprep.subr.mxu0 0.0
      %3064 = vmatpush1.msra.mxu0 0.0
      %3065 = vmatprep.subr.mxu0 0.0
      %3066 = vmatpush1.msra.mxu0 0.0
      %3067 = vmatprep.subr.mxu0 0.0
      %3068 = vmatpush1.msra.mxu0 0.0
      %3069 = vmatprep.subr.mxu0 0.0
      %3070 = vmatpush1.msra.mxu0 0.0
      %3071 = vmatprep.mubr.f32.mxu0 0.0
      %3072 = vmatmul.mubr.f32.gmra.mrb[0].mxu0 %v3002
      %v3073 = vpop.f32.mrb[0].mxu0
      %v3074 = vadd.f32 0.0, %v3073
      %v3075 = vpop.f32.mrb[0].mxu0
      %3076 = vmatprep.mubr.f32.mxu0 0.0
      %3077 = vmatmul.mubr.f32.gmra.mrb[0].mxu0 %v3005
      %v3078 = vpop.f32.mrb[0].mxu0
      %v3079 = vadd.f32 0.0, %v3078
      %v3080 = vpop.f32.mrb[0].mxu0
      %3081 = vdwg.mxu0
      %v3082 = vadd.f32 %v2991, %v3074
      %v3083 = vadd.f32 %v2992, %v3079
      %v3084 = vld [vmem:[%s9 + $0x200] sm:$0xff]
      %v3085 = vld [vmem:[%s9 + $0x208] sm:$0xff]
      %v3086 = vld [vmem:[%s9 + $0x210] sm:$0xff]
      %v3087 = vld [vmem:[%s9 + $0x218] sm:$0xff]
      %v3088 = vld [vmem:[%s9 + $0x220] sm:$0xff]
      %v3089 = vld [vmem:[%s9 + $0x228] sm:$0xff]
      %v3090 = vld [vmem:[%s9 + $0x230] sm:$0xff]
      %v3091 = vld [vmem:[%s9 + $0x238] sm:$0xff]
      %v3093 = vsel %vm1646, %v2304, 0
      %v3096 = vsel %vm1646, %v2305, 0
      %3098 = vmatprep.subr.mxu0 0.0
      %3099 = vmatpush1.msra.mxu0 %v3084
      %3100 = vmatprep.subr.mxu0 0.0
      %3101 = vmatpush1.msra.mxu0 %v3085
      %3102 = vmatprep.subr.mxu0 0.0
      %3103 = vmatpush1.msra.mxu0 %v3086
      %3104 = vmatprep.subr.mxu0 0.0
      %3105 = vmatpush1.msra.mxu0 %v3087
      %3106 = vmatprep.subr.mxu0 0.0
      %3107 = vmatpush1.msra.mxu0 %v3088
      %3108 = vmatprep.subr.mxu0 0.0
      %3109 = vmatpush1.msra.mxu0 %v3089
      %3110 = vmatprep.subr.mxu0 0.0
      %3111 = vmatpush1.msra.mxu0 %v3090
      %3112 = vmatprep.subr.mxu0 0.0
      %3113 = vmatpush1.msra.mxu0 %v3091
      %3114 = vmatprep.subr.mxu0 0.0
      %3115 = vmatpush1.msra.mxu0 0.0
      %3116 = vmatprep.subr.mxu0 0.0
      %3117 = vmatpush1.msra.mxu0 0.0
      %3118 = vmatprep.subr.mxu0 0.0
      %3119 = vmatpush1.msra.mxu0 0.0
      %3120 = vmatprep.subr.mxu0 0.0
      %3121 = vmatpush1.msra.mxu0 0.0
      %3122 = vmatprep.subr.mxu0 0.0
      %3123 = vmatpush1.msra.mxu0 0.0
      %3124 = vmatprep.subr.mxu0 0.0
      %3125 = vmatpush1.msra.mxu0 0.0
      %3126 = vmatprep.subr.mxu0 0.0
      %3127 = vmatpush1.msra.mxu0 0.0
      %3128 = vmatprep.subr.mxu0 0.0
      %3129 = vmatpush1.msra.mxu0 0.0
      %3130 = vmatprep.subr.mxu0 0.0
      %3131 = vmatpush1.msra.mxu0 0.0
      %3132 = vmatprep.subr.mxu0 0.0
      %3133 = vmatpush1.msra.mxu0 0.0
      %3134 = vmatprep.subr.mxu0 0.0
      %3135 = vmatpush1.msra.mxu0 0.0
      %3136 = vmatprep.subr.mxu0 0.0
      %3137 = vmatpush1.msra.mxu0 0.0
      %3138 = vmatprep.subr.mxu0 0.0
      %3139 = vmatpush1.msra.mxu0 0.0
      %3140 = vmatprep.subr.mxu0 0.0
      %3141 = vmatpush1.msra.mxu0 0.0
      %3142 = vmatprep.subr.mxu0 0.0
      %3143 = vmatpush1.msra.mxu0 0.0
      %3144 = vmatprep.subr.mxu0 0.0
      %3145 = vmatpush1.msra.mxu0 0.0
      %3146 = vmatprep.subr.mxu0 0.0
      %3147 = vmatpush1.msra.mxu0 0.0
      %3148 = vmatprep.subr.mxu0 0.0
      %3149 = vmatpush1.msra.mxu0 0.0
      %3150 = vmatprep.subr.mxu0 0.0
      %3151 = vmatpush1.msra.mxu0 0.0
      %3152 = vmatprep.subr.mxu0 0.0
      %3153 = vmatpush1.msra.mxu0 0.0
      %3154 = vmatprep.subr.mxu0 0.0
      %3155 = vmatpush1.msra.mxu0 0.0
      %3156 = vmatprep.subr.mxu0 0.0
      %3157 = vmatpush1.msra.mxu0 0.0
      %3158 = vmatprep.subr.mxu0 0.0
      %3159 = vmatpush1.msra.mxu0 0.0
      %3160 = vmatprep.subr.mxu0 0.0
      %3161 = vmatpush1.msra.mxu0 0.0
      %3162 = vmatprep.mubr.f32.mxu0 0.0
      %3163 = vmatmul.mubr.f32.gmra.mrb[0].mxu0 %v3093
      %v3164 = vpop.f32.mrb[0].mxu0
      %v3165 = vadd.f32 0.0, %v3164
      %v3166 = vpop.f32.mrb[0].mxu0
      %3167 = vmatprep.mubr.f32.mxu0 0.0
      %3168 = vmatmul.mubr.f32.gmra.mrb[0].mxu0 %v3096
      %v3169 = vpop.f32.mrb[0].mxu0
      %v3170 = vadd.f32 0.0, %v3169
      %v3171 = vpop.f32.mrb[0].mxu0
      %3172 = vdwg.mxu0
      %v3173 = vadd.f32 %v3082, %v3165
      %v3174 = vadd.f32 %v3083, %v3170
      %v3175 = vld [vmem:[%s9 + $0x240] sm:$0xff]
      %v3176 = vld [vmem:[%s9 + $0x248] sm:$0xff]
      %v3177 = vld [vmem:[%s9 + $0x250] sm:$0xff]
      %v3178 = vld [vmem:[%s9 + $0x258] sm:$0xff]
      %v3179 = vld [vmem:[%s9 + $0x260] sm:$0xff]
      %v3180 = vld [vmem:[%s9 + $0x268] sm:$0xff]
      %v3181 = vld [vmem:[%s9 + $0x270] sm:$0xff]
      %v3182 = vld [vmem:[%s9 + $0x278] sm:$0xff]
      %v3184 = vsel %vm1646, %v2306, 0
      %v3187 = vsel %vm1646, %v2307, 0
      %3189 = vmatprep.subr.mxu0 0.0
      %3190 = vmatpush1.msra.mxu0 %v3175
      %3191 = vmatprep.subr.mxu0 0.0
      %3192 = vmatpush1.msra.mxu0 %v3176
      %3193 = vmatprep.subr.mxu0 0.0
      %3194 = vmatpush1.msra.mxu0 %v3177
      %3195 = vmatprep.subr.mxu0 0.0
      %3196 = vmatpush1.msra.mxu0 %v3178
      %3197 = vmatprep.subr.mxu0 0.0
      %3198 = vmatpush1.msra.mxu0 %v3179
      %3199 = vmatprep.subr.mxu0 0.0
      %3200 = vmatpush1.msra.mxu0 %v3180
      %3201 = vmatprep.subr.mxu0 0.0
      %3202 = vmatpush1.msra.mxu0 %v3181
      %3203 = vmatprep.subr.mxu0 0.0
      %3204 = vmatpush1.msra.mxu0 %v3182
      %3205 = vmatprep.subr.mxu0 0.0
      %3206 = vmatpush1.msra.mxu0 0.0
      %3207 = vmatprep.subr.mxu0 0.0
      %3208 = vmatpush1.msra.mxu0 0.0
      %3209 = vmatprep.subr.mxu0 0.0
      %3210 = vmatpush1.msra.mxu0 0.0
      %3211 = vmatprep.subr.mxu0 0.0
      %3212 = vmatpush1.msra.mxu0 0.0
      %3213 = vmatprep.subr.mxu0 0.0
      %3214 = vmatpush1.msra.mxu0 0.0
      %3215 = vmatprep.subr.mxu0 0.0
      %3216 = vmatpush1.msra.mxu0 0.0
      %3217 = vmatprep.subr.mxu0 0.0
      %3218 = vmatpush1.msra.mxu0 0.0
      %3219 = vmatprep.subr.mxu0 0.0
      %3220 = vmatpush1.msra.mxu0 0.0
      %3221 = vmatprep.subr.mxu0 0.0
      %3222 = vmatpush1.msra.mxu0 0.0
      %3223 = vmatprep.subr.mxu0 0.0
      %3224 = vmatpush1.msra.mxu0 0.0
      %3225 = vmatprep.subr.mxu0 0.0
      %3226 = vmatpush1.msra.mxu0 0.0
      %3227 = vmatprep.subr.mxu0 0.0
      %3228 = vmatpush1.msra.mxu0 0.0
      %3229 = vmatprep.subr.mxu0 0.0
      %3230 = vmatpush1.msra.mxu0 0.0
      %3231 = vmatprep.subr.mxu0 0.0
      %3232 = vmatpush1.msra.mxu0 0.0
      %3233 = vmatprep.subr.mxu0 0.0
      %3234 = vmatpush1.msra.mxu0 0.0
      %3235 = vmatprep.subr.mxu0 0.0
      %3236 = vmatpush1.msra.mxu0 0.0
      %3237 = vmatprep.subr.mxu0 0.0
      %3238 = vmatpush1.msra.mxu0 0.0
      %3239 = vmatprep.subr.mxu0 0.0
      %3240 = vmatpush1.msra.mxu0 0.0
      %3241 = vmatprep.subr.mxu0 0.0
      %3242 = vmatpush1.msra.mxu0 0.0
      %3243 = vmatprep.subr.mxu0 0.0
      %3244 = vmatpush1.msra.mxu0 0.0
      %3245 = vmatprep.subr.mxu0 0.0
      %3246 = vmatpush1.msra.mxu0 0.0
      %3247 = vmatprep.subr.mxu0 0.0
      %3248 = vmatpush1.msra.mxu0 0.0
      %3249 = vmatprep.subr.mxu0 0.0
      %3250 = vmatpush1.msra.mxu0 0.0
      %3251 = vmatprep.subr.mxu0 0.0
      %3252 = vmatpush1.msra.mxu0 0.0
      %3253 = vmatprep.mubr.f32.mxu0 0.0
      %3254 = vmatmul.mubr.f32.gmra.mrb[0].mxu0 %v3184
      %v3255 = vpop.f32.mrb[0].mxu0
      %v3256 = vadd.f32 0.0, %v3255
      %v3257 = vpop.f32.mrb[0].mxu0
      %3258 = vmatprep.mubr.f32.mxu0 0.0
      %3259 = vmatmul.mubr.f32.gmra.mrb[0].mxu0 %v3187
      %v3260 = vpop.f32.mrb[0].mxu0
      %v3261 = vadd.f32 0.0, %v3260
      %v3262 = vpop.f32.mrb[0].mxu0
      %3263 = vdwg.mxu0
      %v3264 = vadd.f32 %v3173, %v3256
      %v3265 = vadd.f32 %v3174, %v3261
      %v3266 = vld [vmem:[%s9 + $0x280] sm:$0xff]
      %v3267 = vld [vmem:[%s9 + $0x288] sm:$0xff]
      %v3268 = vld [vmem:[%s9 + $0x290] sm:$0xff]
      %v3269 = vld [vmem:[%s9 + $0x298] sm:$0xff]
      %v3270 = vld [vmem:[%s9 + $0x2a0] sm:$0xff]
      %v3271 = vld [vmem:[%s9 + $0x2a8] sm:$0xff]
      %v3272 = vld [vmem:[%s9 + $0x2b0] sm:$0xff]
      %v3273 = vld [vmem:[%s9 + $0x2b8] sm:$0xff]
      %v3275 = vsel %vm1646, %v2308, 0
      %v3278 = vsel %vm1646, %v2309, 0
      %3280 = vmatprep.subr.mxu0 0.0
      %3281 = vmatpush1.msra.mxu0 %v3266
      %3282 = vmatprep.subr.mxu0 0.0
      %3283 = vmatpush1.msra.mxu0 %v3267
      %3284 = vmatprep.subr.mxu0 0.0
      %3285 = vmatpush1.msra.mxu0 %v3268
      %3286 = vmatprep.subr.mxu0 0.0
      %3287 = vmatpush1.msra.mxu0 %v3269
      %3288 = vmatprep.subr.mxu0 0.0
      %3289 = vmatpush1.msra.mxu0 %v3270
      %3290 = vmatprep.subr.mxu0 0.0
      %3291 = vmatpush1.msra.mxu0 %v3271
      %3292 = vmatprep.subr.mxu0 0.0
      %3293 = vmatpush1.msra.mxu0 %v3272
      %3294 = vmatprep.subr.mxu0 0.0
      %3295 = vmatpush1.msra.mxu0 %v3273
      %3296 = vmatprep.subr.mxu0 0.0
      %3297 = vmatpush1.msra.mxu0 0.0
      %3298 = vmatprep.subr.mxu0 0.0
      %3299 = vmatpush1.msra.mxu0 0.0
      %3300 = vmatprep.subr.mxu0 0.0
      %3301 = vmatpush1.msra.mxu0 0.0
      %3302 = vmatprep.subr.mxu0 0.0
      %3303 = vmatpush1.msra.mxu0 0.0
      %3304 = vmatprep.subr.mxu0 0.0
      %3305 = vmatpush1.msra.mxu0 0.0
      %3306 = vmatprep.subr.mxu0 0.0
      %3307 = vmatpush1.msra.mxu0 0.0
      %3308 = vmatprep.subr.mxu0 0.0
      %3309 = vmatpush1.msra.mxu0 0.0
      %3310 = vmatprep.subr.mxu0 0.0
      %3311 = vmatpush1.msra.mxu0 0.0
      %3312 = vmatprep.subr.mxu0 0.0
      %3313 = vmatpush1.msra.mxu0 0.0
      %3314 = vmatprep.subr.mxu0 0.0
      %3315 = vmatpush1.msra.mxu0 0.0
      %3316 = vmatprep.subr.mxu0 0.0
      %3317 = vmatpush1.msra.mxu0 0.0
      %3318 = vmatprep.subr.mxu0 0.0
      %3319 = vmatpush1.msra.mxu0 0.0
      %3320 = vmatprep.subr.mxu0 0.0
      %3321 = vmatpush1.msra.mxu0 0.0
      %3322 = vmatprep.subr.mxu0 0.0
      %3323 = vmatpush1.msra.mxu0 0.0
      %3324 = vmatprep.subr.mxu0 0.0
      %3325 = vmatpush1.msra.mxu0 0.0
      %3326 = vmatprep.subr.mxu0 0.0
      %3327 = vmatpush1.msra.mxu0 0.0
      %3328 = vmatprep.subr.mxu0 0.0
      %3329 = vmatpush1.msra.mxu0 0.0
      %3330 = vmatprep.subr.mxu0 0.0
      %3331 = vmatpush1.msra.mxu0 0.0
      %3332 = vmatprep.subr.mxu0 0.0
      %3333 = vmatpush1.msra.mxu0 0.0
      %3334 = vmatprep.subr.mxu0 0.0
      %3335 = vmatpush1.msra.mxu0 0.0
      %3336 = vmatprep.subr.mxu0 0.0
      %3337 = vmatpush1.msra.mxu0 0.0
      %3338 = vmatprep.subr.mxu0 0.0
      %3339 = vmatpush1.msra.mxu0 0.0
      %3340 = vmatprep.subr.mxu0 0.0
      %3341 = vmatpush1.msra.mxu0 0.0
      %3342 = vmatprep.subr.mxu0 0.0
      %3343 = vmatpush1.msra.mxu0 0.0
      %3344 = vmatprep.mubr.f32.mxu0 0.0
      %3345 = vmatmul.mubr.f32.gmra.mrb[0].mxu0 %v3275
      %v3346 = vpop.f32.mrb[0].mxu0
      %v3347 = vadd.f32 0.0, %v3346
      %v3348 = vpop.f32.mrb[0].mxu0
      %3349 = vmatprep.mubr.f32.mxu0 0.0
      %3350 = vmatmul.mubr.f32.gmra.mrb[0].mxu0 %v3278
      %v3351 = vpop.f32.mrb[0].mxu0
      %v3352 = vadd.f32 0.0, %v3351
      %v3353 = vpop.f32.mrb[0].mxu0
      %3354 = vdwg.mxu0
      %v3355 = vadd.f32 %v3264, %v3347
      %v3356 = vadd.f32 %v3265, %v3352
      %v3357 = vld [vmem:[%s9 + $0x2c0] sm:$0xff]
      %v3358 = vld [vmem:[%s9 + $0x2c8] sm:$0xff]
      %v3359 = vld [vmem:[%s9 + $0x2d0] sm:$0xff]
      %v3360 = vld [vmem:[%s9 + $0x2d8] sm:$0xff]
      %v3361 = vld [vmem:[%s9 + $0x2e0] sm:$0xff]
      %v3362 = vld [vmem:[%s9 + $0x2e8] sm:$0xff]
      %v3363 = vld [vmem:[%s9 + $0x2f0] sm:$0xff]
      %v3364 = vld [vmem:[%s9 + $0x2f8] sm:$0xff]
      %v3366 = vsel %vm1646, %v2310, 0
      %v3369 = vsel %vm1646, %v2311, 0
      %3371 = vmatprep.subr.mxu0 0.0
      %3372 = vmatpush1.msra.mxu0 %v3357
      %3373 = vmatprep.subr.mxu0 0.0
      %3374 = vmatpush1.msra.mxu0 %v3358
      %3375 = vmatprep.subr.mxu0 0.0
      %3376 = vmatpush1.msra.mxu0 %v3359
      %3377 = vmatprep.subr.mxu0 0.0
      %3378 = vmatpush1.msra.mxu0 %v3360
      %3379 = vmatprep.subr.mxu0 0.0
      %3380 = vmatpush1.msra.mxu0 %v3361
      %3381 = vmatprep.subr.mxu0 0.0
      %3382 = vmatpush1.msra.mxu0 %v3362
      %3383 = vmatprep.subr.mxu0 0.0
      %3384 = vmatpush1.msra.mxu0 %v3363
      %3385 = vmatprep.subr.mxu0 0.0
      %3386 = vmatpush1.msra.mxu0 %v3364
      %3387 = vmatprep.subr.mxu0 0.0
      %3388 = vmatpush1.msra.mxu0 0.0
      %3389 = vmatprep.subr.mxu0 0.0
      %3390 = vmatpush1.msra.mxu0 0.0
      %3391 = vmatprep.subr.mxu0 0.0
      %3392 = vmatpush1.msra.mxu0 0.0
      %3393 = vmatprep.subr.mxu0 0.0
      %3394 = vmatpush1.msra.mxu0 0.0
      %3395 = vmatprep.subr.mxu0 0.0
      %3396 = vmatpush1.msra.mxu0 0.0
      %3397 = vmatprep.subr.mxu0 0.0
      %3398 = vmatpush1.msra.mxu0 0.0
      %3399 = vmatprep.subr.mxu0 0.0
      %3400 = vmatpush1.msra.mxu0 0.0
      %3401 = vmatprep.subr.mxu0 0.0
      %3402 = vmatpush1.msra.mxu0 0.0
      %3403 = vmatprep.subr.mxu0 0.0
      %3404 = vmatpush1.msra.mxu0 0.0
      %3405 = vmatprep.subr.mxu0 0.0
      %3406 = vmatpush1.msra.mxu0 0.0
      %3407 = vmatprep.subr.mxu0 0.0
      %3408 = vmatpush1.msra.mxu0 0.0
      %3409 = vmatprep.subr.mxu0 0.0
      %3410 = vmatpush1.msra.mxu0 0.0
      %3411 = vmatprep.subr.mxu0 0.0
      %3412 = vmatpush1.msra.mxu0 0.0
      %3413 = vmatprep.subr.mxu0 0.0
      %3414 = vmatpush1.msra.mxu0 0.0
      %3415 = vmatprep.subr.mxu0 0.0
      %3416 = vmatpush1.msra.mxu0 0.0
      %3417 = vmatprep.subr.mxu0 0.0
      %3418 = vmatpush1.msra.mxu0 0.0
      %3419 = vmatprep.subr.mxu0 0.0
      %3420 = vmatpush1.msra.mxu0 0.0
      %3421 = vmatprep.subr.mxu0 0.0
      %3422 = vmatpush1.msra.mxu0 0.0
      %3423 = vmatprep.subr.mxu0 0.0
      %3424 = vmatpush1.msra.mxu0 0.0
      %3425 = vmatprep.subr.mxu0 0.0
      %3426 = vmatpush1.msra.mxu0 0.0
      %3427 = vmatprep.subr.mxu0 0.0
      %3428 = vmatpush1.msra.mxu0 0.0
      %3429 = vmatprep.subr.mxu0 0.0
      %3430 = vmatpush1.msra.mxu0 0.0
      %3431 = vmatprep.subr.mxu0 0.0
      %3432 = vmatpush1.msra.mxu0 0.0
      %3433 = vmatprep.subr.mxu0 0.0
      %3434 = vmatpush1.msra.mxu0 0.0
      %3435 = vmatprep.mubr.f32.mxu0 0.0
      %3436 = vmatmul.mubr.f32.gmra.mrb[0].mxu0 %v3366
      %v3437 = vpop.f32.mrb[0].mxu0
      %v3438 = vadd.f32 0.0, %v3437
      %v3439 = vpop.f32.mrb[0].mxu0
      %3440 = vmatprep.mubr.f32.mxu0 0.0
      %3441 = vmatmul.mubr.f32.gmra.mrb[0].mxu0 %v3369
      %v3442 = vpop.f32.mrb[0].mxu0
      %v3443 = vadd.f32 0.0, %v3442
      %v3444 = vpop.f32.mrb[0].mxu0
      %3445 = vdwg.mxu0
      %v3446 = vadd.f32 %v3355, %v3438
      %v3447 = vadd.f32 %v3356, %v3443
      %v3448 = vld [vmem:[%s9 + $0x300] sm:$0xff]
      %v3449 = vld [vmem:[%s9 + $0x308] sm:$0xff]
      %v3450 = vld [vmem:[%s9 + $0x310] sm:$0xff]
      %v3451 = vld [vmem:[%s9 + $0x318] sm:$0xff]
      %v3452 = vld [vmem:[%s9 + $0x320] sm:$0xff]
      %v3453 = vld [vmem:[%s9 + $0x328] sm:$0xff]
      %v3454 = vld [vmem:[%s9 + $0x330] sm:$0xff]
      %v3455 = vld [vmem:[%s9 + $0x338] sm:$0xff]
      %v3457 = vsel %vm1646, %v2312, 0
      %v3460 = vsel %vm1646, %v2313, 0
      %3462 = vmatprep.subr.mxu0 0.0
      %3463 = vmatpush1.msra.mxu0 %v3448
      %3464 = vmatprep.subr.mxu0 0.0
      %3465 = vmatpush1.msra.mxu0 %v3449
      %3466 = vmatprep.subr.mxu0 0.0
      %3467 = vmatpush1.msra.mxu0 %v3450
      %3468 = vmatprep.subr.mxu0 0.0
      %3469 = vmatpush1.msra.mxu0 %v3451
      %3470 = vmatprep.subr.mxu0 0.0
      %3471 = vmatpush1.msra.mxu0 %v3452
      %3472 = vmatprep.subr.mxu0 0.0
      %3473 = vmatpush1.msra.mxu0 %v3453
      %3474 = vmatprep.subr.mxu0 0.0
      %3475 = vmatpush1.msra.mxu0 %v3454
      %3476 = vmatprep.subr.mxu0 0.0
      %3477 = vmatpush1.msra.mxu0 %v3455
      %3478 = vmatprep.subr.mxu0 0.0
      %3479 = vmatpush1.msra.mxu0 0.0
      %3480 = vmatprep.subr.mxu0 0.0
      %3481 = vmatpush1.msra.mxu0 0.0
      %3482 = vmatprep.subr.mxu0 0.0
      %3483 = vmatpush1.msra.mxu0 0.0
      %3484 = vmatprep.subr.mxu0 0.0
      %3485 = vmatpush1.msra.mxu0 0.0
      %3486 = vmatprep.subr.mxu0 0.0
      %3487 = vmatpush1.msra.mxu0 0.0
      %3488 = vmatprep.subr.mxu0 0.0
      %3489 = vmatpush1.msra.mxu0 0.0
      %3490 = vmatprep.subr.mxu0 0.0
      %3491 = vmatpush1.msra.mxu0 0.0
      %3492 = vmatprep.subr.mxu0 0.0
      %3493 = vmatpush1.msra.mxu0 0.0
      %3494 = vmatprep.subr.mxu0 0.0
      %3495 = vmatpush1.msra.mxu0 0.0
      %3496 = vmatprep.subr.mxu0 0.0
      %3497 = vmatpush1.msra.mxu0 0.0
      %3498 = vmatprep.subr.mxu0 0.0
      %3499 = vmatpush1.msra.mxu0 0.0
      %3500 = vmatprep.subr.mxu0 0.0
      %3501 = vmatpush1.msra.mxu0 0.0
      %3502 = vmatprep.subr.mxu0 0.0
      %3503 = vmatpush1.msra.mxu0 0.0
      %3504 = vmatprep.subr.mxu0 0.0
      %3505 = vmatpush1.msra.mxu0 0.0
      %3506 = vmatprep.subr.mxu0 0.0
      %3507 = vmatpush1.msra.mxu0 0.0
      %3508 = vmatprep.subr.mxu0 0.0
      %3509 = vmatpush1.msra.mxu0 0.0
      %3510 = vmatprep.subr.mxu0 0.0
      %3511 = vmatpush1.msra.mxu0 0.0
      %3512 = vmatprep.subr.mxu0 0.0
      %3513 = vmatpush1.msra.mxu0 0.0
      %3514 = vmatprep.subr.mxu0 0.0
      %3515 = vmatpush1.msra.mxu0 0.0
      %3516 = vmatprep.subr.mxu0 0.0
      %3517 = vmatpush1.msra.mxu0 0.0
      %3518 = vmatprep.subr.mxu0 0.0
      %3519 = vmatpush1.msra.mxu0 0.0
      %3520 = vmatprep.subr.mxu0 0.0
      %3521 = vmatpush1.msra.mxu0 0.0
      %3522 = vmatprep.subr.mxu0 0.0
      %3523 = vmatpush1.msra.mxu0 0.0
      %3524 = vmatprep.subr.mxu0 0.0
      %3525 = vmatpush1.msra.mxu0 0.0
      %3526 = vmatprep.mubr.f32.mxu0 0.0
      %3527 = vmatmul.mubr.f32.gmra.mrb[0].mxu0 %v3457
      %v3528 = vpop.f32.mrb[0].mxu0
      %v3529 = vadd.f32 0.0, %v3528
      %v3530 = vpop.f32.mrb[0].mxu0
      %3531 = vmatprep.mubr.f32.mxu0 0.0
      %3532 = vmatmul.mubr.f32.gmra.mrb[0].mxu0 %v3460
      %v3533 = vpop.f32.mrb[0].mxu0
      %v3534 = vadd.f32 0.0, %v3533
      %v3535 = vpop.f32.mrb[0].mxu0
      %3536 = vdwg.mxu0
      %v3537 = vadd.f32 %v3446, %v3529
      %v3538 = vadd.f32 %v3447, %v3534
      %v3539 = vld [vmem:[%s9 + $0x340] sm:$0xff]
      %v3540 = vld [vmem:[%s9 + $0x348] sm:$0xff]
      %v3541 = vld [vmem:[%s9 + $0x350] sm:$0xff]
      %v3542 = vld [vmem:[%s9 + $0x358] sm:$0xff]
      %v3543 = vld [vmem:[%s9 + $0x360] sm:$0xff]
      %v3544 = vld [vmem:[%s9 + $0x368] sm:$0xff]
      %v3545 = vld [vmem:[%s9 + $0x370] sm:$0xff]
      %v3546 = vld [vmem:[%s9 + $0x378] sm:$0xff]
      %v3548 = vsel %vm1646, %v2314, 0
      %v3551 = vsel %vm1646, %v2315, 0
      %3553 = vmatprep.subr.mxu0 0.0
      %3554 = vmatpush1.msra.mxu0 %v3539
      %3555 = vmatprep.subr.mxu0 0.0
      %3556 = vmatpush1.msra.mxu0 %v3540
      %3557 = vmatprep.subr.mxu0 0.0
      %3558 = vmatpush1.msra.mxu0 %v3541
      %3559 = vmatprep.subr.mxu0 0.0
      %3560 = vmatpush1.msra.mxu0 %v3542
      %3561 = vmatprep.subr.mxu0 0.0
      %3562 = vmatpush1.msra.mxu0 %v3543
      %3563 = vmatprep.subr.mxu0 0.0
      %3564 = vmatpush1.msra.mxu0 %v3544
      %3565 = vmatprep.subr.mxu0 0.0
      %3566 = vmatpush1.msra.mxu0 %v3545
      %3567 = vmatprep.subr.mxu0 0.0
      %3568 = vmatpush1.msra.mxu0 %v3546
      %3569 = vmatprep.subr.mxu0 0.0
      %3570 = vmatpush1.msra.mxu0 0.0
      %3571 = vmatprep.subr.mxu0 0.0
      %3572 = vmatpush1.msra.mxu0 0.0
      %3573 = vmatprep.subr.mxu0 0.0
      %3574 = vmatpush1.msra.mxu0 0.0
      %3575 = vmatprep.subr.mxu0 0.0
      %3576 = vmatpush1.msra.mxu0 0.0
      %3577 = vmatprep.subr.mxu0 0.0
      %3578 = vmatpush1.msra.mxu0 0.0
      %3579 = vmatprep.subr.mxu0 0.0
      %3580 = vmatpush1.msra.mxu0 0.0
      %3581 = vmatprep.subr.mxu0 0.0
      %3582 = vmatpush1.msra.mxu0 0.0
      %3583 = vmatprep.subr.mxu0 0.0
      %3584 = vmatpush1.msra.mxu0 0.0
      %3585 = vmatprep.subr.mxu0 0.0
      %3586 = vmatpush1.msra.mxu0 0.0
      %3587 = vmatprep.subr.mxu0 0.0
      %3588 = vmatpush1.msra.mxu0 0.0
      %3589 = vmatprep.subr.mxu0 0.0
      %3590 = vmatpush1.msra.mxu0 0.0
      %3591 = vmatprep.subr.mxu0 0.0
      %3592 = vmatpush1.msra.mxu0 0.0
      %3593 = vmatprep.subr.mxu0 0.0
      %3594 = vmatpush1.msra.mxu0 0.0
      %3595 = vmatprep.subr.mxu0 0.0
      %3596 = vmatpush1.msra.mxu0 0.0
      %3597 = vmatprep.subr.mxu0 0.0
      %3598 = vmatpush1.msra.mxu0 0.0
      %3599 = vmatprep.subr.mxu0 0.0
      %3600 = vmatpush1.msra.mxu0 0.0
      %3601 = vmatprep.subr.mxu0 0.0
      %3602 = vmatpush1.msra.mxu0 0.0
      %3603 = vmatprep.subr.mxu0 0.0
      %3604 = vmatpush1.msra.mxu0 0.0
      %3605 = vmatprep.subr.mxu0 0.0
      %3606 = vmatpush1.msra.mxu0 0.0
      %3607 = vmatprep.subr.mxu0 0.0
      %3608 = vmatpush1.msra.mxu0 0.0
      %3609 = vmatprep.subr.mxu0 0.0
      %3610 = vmatpush1.msra.mxu0 0.0
      %3611 = vmatprep.subr.mxu0 0.0
      %3612 = vmatpush1.msra.mxu0 0.0
      %3613 = vmatprep.subr.mxu0 0.0
      %3614 = vmatpush1.msra.mxu0 0.0
      %3615 = vmatprep.subr.mxu0 0.0
      %3616 = vmatpush1.msra.mxu0 0.0
      %3617 = vmatprep.mubr.f32.mxu0 0.0
      %3618 = vmatmul.mubr.f32.gmra.mrb[0].mxu0 %v3548
      %v3619 = vpop.f32.mrb[0].mxu0
      %v3620 = vadd.f32 0.0, %v3619
      %v3621 = vpop.f32.mrb[0].mxu0
      %3622 = vmatprep.mubr.f32.mxu0 0.0
      %3623 = vmatmul.mubr.f32.gmra.mrb[0].mxu0 %v3551
      %v3624 = vpop.f32.mrb[0].mxu0
      %v3625 = vadd.f32 0.0, %v3624
      %v3626 = vpop.f32.mrb[0].mxu0
      %3627 = vdwg.mxu0
      %v3628 = vadd.f32 %v3537, %v3620
      %v3629 = vadd.f32 %v3538, %v3625
      %v3630 = vld [vmem:[%s9 + $0x380] sm:$0xff]
      %v3631 = vld [vmem:[%s9 + $0x388] sm:$0xff]
      %v3632 = vld [vmem:[%s9 + $0x390] sm:$0xff]
      %v3633 = vld [vmem:[%s9 + $0x398] sm:$0xff]
      %v3634 = vld [vmem:[%s9 + $0x3a0] sm:$0xff]
      %v3635 = vld [vmem:[%s9 + $0x3a8] sm:$0xff]
      %v3636 = vld [vmem:[%s9 + $0x3b0] sm:$0xff]
      %v3637 = vld [vmem:[%s9 + $0x3b8] sm:$0xff]
      %v3639 = vsel %vm1646, %v2316, 0
      %v3642 = vsel %vm1646, %v2317, 0
      %3644 = vmatprep.subr.mxu0 0.0
      %3645 = vmatpush1.msra.mxu0 %v3630
      %3646 = vmatprep.subr.mxu0 0.0
      %3647 = vmatpush1.msra.mxu0 %v3631
      %3648 = vmatprep.subr.mxu0 0.0
      %3649 = vmatpush1.msra.mxu0 %v3632
      %3650 = vmatprep.subr.mxu0 0.0
      %3651 = vmatpush1.msra.mxu0 %v3633
      %3652 = vmatprep.subr.mxu0 0.0
      %3653 = vmatpush1.msra.mxu0 %v3634
      %3654 = vmatprep.subr.mxu0 0.0
      %3655 = vmatpush1.msra.mxu0 %v3635
      %3656 = vmatprep.subr.mxu0 0.0
      %3657 = vmatpush1.msra.mxu0 %v3636
      %3658 = vmatprep.subr.mxu0 0.0
      %3659 = vmatpush1.msra.mxu0 %v3637
      %3660 = vmatprep.subr.mxu0 0.0
      %3661 = vmatpush1.msra.mxu0 0.0
      %3662 = vmatprep.subr.mxu0 0.0
      %3663 = vmatpush1.msra.mxu0 0.0
      %3664 = vmatprep.subr.mxu0 0.0
      %3665 = vmatpush1.msra.mxu0 0.0
      %3666 = vmatprep.subr.mxu0 0.0
      %3667 = vmatpush1.msra.mxu0 0.0
      %3668 = vmatprep.subr.mxu0 0.0
      %3669 = vmatpush1.msra.mxu0 0.0
      %3670 = vmatprep.subr.mxu0 0.0
      %3671 = vmatpush1.msra.mxu0 0.0
      %3672 = vmatprep.subr.mxu0 0.0
      %3673 = vmatpush1.msra.mxu0 0.0
      %3674 = vmatprep.subr.mxu0 0.0
      %3675 = vmatpush1.msra.mxu0 0.0
      %3676 = vmatprep.subr.mxu0 0.0
      %3677 = vmatpush1.msra.mxu0 0.0
      %3678 = vmatprep.subr.mxu0 0.0
      %3679 = vmatpush1.msra.mxu0 0.0
      %3680 = vmatprep.subr.mxu0 0.0
      %3681 = vmatpush1.msra.mxu0 0.0
      %3682 = vmatprep.subr.mxu0 0.0
      %3683 = vmatpush1.msra.mxu0 0.0
      %3684 = vmatprep.subr.mxu0 0.0
      %3685 = vmatpush1.msra.mxu0 0.0
      %3686 = vmatprep.subr.mxu0 0.0
      %3687 = vmatpush1.msra.mxu0 0.0
      %3688 = vmatprep.subr.mxu0 0.0
      %3689 = vmatpush1.msra.mxu0 0.0
      %3690 = vmatprep.subr.mxu0 0.0
      %3691 = vmatpush1.msra.mxu0 0.0
      %3692 = vmatprep.subr.mxu0 0.0
      %3693 = vmatpush1.msra.mxu0 0.0
      %3694 = vmatprep.subr.mxu0 0.0
      %3695 = vmatpush1.msra.mxu0 0.0
      %3696 = vmatprep.subr.mxu0 0.0
      %3697 = vmatpush1.msra.mxu0 0.0
      %3698 = vmatprep.subr.mxu0 0.0
      %3699 = vmatpush1.msra.mxu0 0.0
      %3700 = vmatprep.subr.mxu0 0.0
      %3701 = vmatpush1.msra.mxu0 0.0
      %3702 = vmatprep.subr.mxu0 0.0
      %3703 = vmatpush1.msra.mxu0 0.0
      %3704 = vmatprep.subr.mxu0 0.0
      %3705 = vmatpush1.msra.mxu0 0.0
      %3706 = vmatprep.subr.mxu0 0.0
      %3707 = vmatpush1.msra.mxu0 0.0
      %3708 = vmatprep.mubr.f32.mxu0 0.0
      %3709 = vmatmul.mubr.f32.gmra.mrb[0].mxu0 %v3639
      %v3710 = vpop.f32.mrb[0].mxu0
      %v3711 = vadd.f32 0.0, %v3710
      %v3712 = vpop.f32.mrb[0].mxu0
      %3713 = vmatprep.mubr.f32.mxu0 0.0
      %3714 = vmatmul.mubr.f32.gmra.mrb[0].mxu0 %v3642
      %v3715 = vpop.f32.mrb[0].mxu0
      %v3716 = vadd.f32 0.0, %v3715
      %v3717 = vpop.f32.mrb[0].mxu0
      %3718 = vdwg.mxu0
      %v3719 = vadd.f32 %v3628, %v3711
      %v3720 = vadd.f32 %v3629, %v3716
      %v3721 = vld [vmem:[%s9 + $0x3c0] sm:$0xff]
      %v3722 = vld [vmem:[%s9 + $0x3c8] sm:$0xff]
      %v3723 = vld [vmem:[%s9 + $0x3d0] sm:$0xff]
      %v3724 = vld [vmem:[%s9 + $0x3d8] sm:$0xff]
      %v3725 = vld [vmem:[%s9 + $0x3e0] sm:$0xff]
      %v3726 = vld [vmem:[%s9 + $0x3e8] sm:$0xff]
      %v3727 = vld [vmem:[%s9 + $0x3f0] sm:$0xff]
      %v3728 = vld [vmem:[%s9 + $0x3f8] sm:$0xff]
      %v3730 = vsel %vm1646, %v2318, 0
      %v3733 = vsel %vm1646, %v2319, 0
      %3735 = vmatprep.subr.mxu0 0.0
      %3736 = vmatpush1.msra.mxu0 %v3721
      %3737 = vmatprep.subr.mxu0 0.0
      %3738 = vmatpush1.msra.mxu0 %v3722
      %3739 = vmatprep.subr.mxu0 0.0
      %3740 = vmatpush1.msra.mxu0 %v3723
      %3741 = vmatprep.subr.mxu0 0.0
      %3742 = vmatpush1.msra.mxu0 %v3724
      %3743 = vmatprep.subr.mxu0 0.0
      %3744 = vmatpush1.msra.mxu0 %v3725
      %3745 = vmatprep.subr.mxu0 0.0
      %3746 = vmatpush1.msra.mxu0 %v3726
      %3747 = vmatprep.subr.mxu0 0.0
      %3748 = vmatpush1.msra.mxu0 %v3727
      %3749 = vmatprep.subr.mxu0 0.0
      %3750 = vmatpush1.msra.mxu0 %v3728
      %3751 = vmatprep.subr.mxu0 0.0
      %3752 = vmatpush1.msra.mxu0 0.0
      %3753 = vmatprep.subr.mxu0 0.0
      %3754 = vmatpush1.msra.mxu0 0.0
      %3755 = vmatprep.subr.mxu0 0.0
      %3756 = vmatpush1.msra.mxu0 0.0
      %3757 = vmatprep.subr.mxu0 0.0
      %3758 = vmatpush1.msra.mxu0 0.0
      %3759 = vmatprep.subr.mxu0 0.0
      %3760 = vmatpush1.msra.mxu0 0.0
      %3761 = vmatprep.subr.mxu0 0.0
      %3762 = vmatpush1.msra.mxu0 0.0
      %3763 = vmatprep.subr.mxu0 0.0
      %3764 = vmatpush1.msra.mxu0 0.0
      %3765 = vmatprep.subr.mxu0 0.0
      %3766 = vmatpush1.msra.mxu0 0.0
      %3767 = vmatprep.subr.mxu0 0.0
      %3768 = vmatpush1.msra.mxu0 0.0
      %3769 = vmatprep.subr.mxu0 0.0
      %3770 = vmatpush1.msra.mxu0 0.0
      %3771 = vmatprep.subr.mxu0 0.0
      %3772 = vmatpush1.msra.mxu0 0.0
      %3773 = vmatprep.subr.mxu0 0.0
      %3774 = vmatpush1.msra.mxu0 0.0
      %3775 = vmatprep.subr.mxu0 0.0
      %3776 = vmatpush1.msra.mxu0 0.0
      %3777 = vmatprep.subr.mxu0 0.0
      %3778 = vmatpush1.msra.mxu0 0.0
      %3779 = vmatprep.subr.mxu0 0.0
      %3780 = vmatpush1.msra.mxu0 0.0
      %3781 = vmatprep.subr.mxu0 0.0
      %3782 = vmatpush1.msra.mxu0 0.0
      %3783 = vmatprep.subr.mxu0 0.0
      %3784 = vmatpush1.msra.mxu0 0.0
      %3785 = vmatprep.subr.mxu0 0.0
      %3786 = vmatpush1.msra.mxu0 0.0
      %3787 = vmatprep.subr.mxu0 0.0
      %3788 = vmatpush1.msra.mxu0 0.0
      %3789 = vmatprep.subr.mxu0 0.0
      %3790 = vmatpush1.msra.mxu0 0.0
      %3791 = vmatprep.subr.mxu0 0.0
      %3792 = vmatpush1.msra.mxu0 0.0
      %3793 = vmatprep.subr.mxu0 0.0
      %3794 = vmatpush1.msra.mxu0 0.0
      %3795 = vmatprep.subr.mxu0 0.0
      %3796 = vmatpush1.msra.mxu0 0.0
      %3797 = vmatprep.subr.mxu0 0.0
      %3798 = vmatpush1.msra.mxu0 0.0
      %3799 = vmatprep.mubr.f32.mxu0 0.0
      %3800 = vmatmul.mubr.f32.gmra.mrb[0].mxu0 %v3730
      %v3801 = vpop.f32.mrb[0].mxu0
      %v3802 = vadd.f32 0.0, %v3801
      %v3803 = vpop.f32.mrb[0].mxu0
      %3804 = vmatprep.mubr.f32.mxu0 0.0
      %3805 = vmatmul.mubr.f32.gmra.mrb[0].mxu0 %v3733
      %v3806 = vpop.f32.mrb[0].mxu0
      %v3807 = vadd.f32 0.0, %v3806
      %v3808 = vpop.f32.mrb[0].mxu0
      %3809 = vdwg.mxu0
      %v3810 = vadd.f32 %v3719, %v3802
      %v3811 = vadd.f32 %v3720, %v3807
      %v3812 = vld [vmem:[%s9 + $0x400] sm:$0xff]
      %v3813 = vld [vmem:[%s9 + $0x408] sm:$0xff]
      %v3814 = vld [vmem:[%s9 + $0x410] sm:$0xff]
      %v3815 = vld [vmem:[%s9 + $0x418] sm:$0xff]
      %v3816 = vld [vmem:[%s9 + $0x420] sm:$0xff]
      %v3817 = vld [vmem:[%s9 + $0x428] sm:$0xff]
      %v3818 = vld [vmem:[%s9 + $0x430] sm:$0xff]
      %v3819 = vld [vmem:[%s9 + $0x438] sm:$0xff]
      %v3821 = vsel %vm1646, %v2320, 0
      %v3824 = vsel %vm1646, %v2321, 0
      %3826 = vmatprep.subr.mxu0 0.0
      %3827 = vmatpush1.msra.mxu0 %v3812
      %3828 = vmatprep.subr.mxu0 0.0
      %3829 = vmatpush1.msra.mxu0 %v3813
      %3830 = vmatprep.subr.mxu0 0.0
      %3831 = vmatpush1.msra.mxu0 %v3814
      %3832 = vmatprep.subr.mxu0 0.0
      %3833 = vmatpush1.msra.mxu0 %v3815
      %3834 = vmatprep.subr.mxu0 0.0
      %3835 = vmatpush1.msra.mxu0 %v3816
      %3836 = vmatprep.subr.mxu0 0.0
      %3837 = vmatpush1.msra.mxu0 %v3817
      %3838 = vmatprep.subr.mxu0 0.0
      %3839 = vmatpush1.msra.mxu0 %v3818
      %3840 = vmatprep.subr.mxu0 0.0
      %3841 = vmatpush1.msra.mxu0 %v3819
      %3842 = vmatprep.subr.mxu0 0.0
      %3843 = vmatpush1.msra.mxu0 0.0
      %3844 = vmatprep.subr.mxu0 0.0
      %3845 = vmatpush1.msra.mxu0 0.0
      %3846 = vmatprep.subr.mxu0 0.0
      %3847 = vmatpush1.msra.mxu0 0.0
      %3848 = vmatprep.subr.mxu0 0.0
      %3849 = vmatpush1.msra.mxu0 0.0
      %3850 = vmatprep.subr.mxu0 0.0
      %3851 = vmatpush1.msra.mxu0 0.0
      %3852 = vmatprep.subr.mxu0 0.0
      %3853 = vmatpush1.msra.mxu0 0.0
      %3854 = vmatprep.subr.mxu0 0.0
      %3855 = vmatpush1.msra.mxu0 0.0
      %3856 = vmatprep.subr.mxu0 0.0
      %3857 = vmatpush1.msra.mxu0 0.0
      %3858 = vmatprep.subr.mxu0 0.0
      %3859 = vmatpush1.msra.mxu0 0.0
      %3860 = vmatprep.subr.mxu0 0.0
      %3861 = vmatpush1.msra.mxu0 0.0
      %3862 = vmatprep.subr.mxu0 0.0
      %3863 = vmatpush1.msra.mxu0 0.0
      %3864 = vmatprep.subr.mxu0 0.0
      %3865 = vmatpush1.msra.mxu0 0.0
      %3866 = vmatprep.subr.mxu0 0.0
      %3867 = vmatpush1.msra.mxu0 0.0
      %3868 = vmatprep.subr.mxu0 0.0
      %3869 = vmatpush1.msra.mxu0 0.0
      %3870 = vmatprep.subr.mxu0 0.0
      %3871 = vmatpush1.msra.mxu0 0.0
      %3872 = vmatprep.subr.mxu0 0.0
      %3873 = vmatpush1.msra.mxu0 0.0
      %3874 = vmatprep.subr.mxu0 0.0
      %3875 = vmatpush1.msra.mxu0 0.0
      %3876 = vmatprep.subr.mxu0 0.0
      %3877 = vmatpush1.msra.mxu0 0.0
      %3878 = vmatprep.subr.mxu0 0.0
      %3879 = vmatpush1.msra.mxu0 0.0
      %3880 = vmatprep.subr.mxu0 0.0
      %3881 = vmatpush1.msra.mxu0 0.0
      %3882 = vmatprep.subr.mxu0 0.0
      %3883 = vmatpush1.msra.mxu0 0.0
      %3884 = vmatprep.subr.mxu0 0.0
      %3885 = vmatpush1.msra.mxu0 0.0
      %3886 = vmatprep.subr.mxu0 0.0
      %3887 = vmatpush1.msra.mxu0 0.0
      %3888 = vmatprep.subr.mxu0 0.0
      %3889 = vmatpush1.msra.mxu0 0.0
      %3890 = vmatprep.mubr.f32.mxu0 0.0
      %3891 = vmatmul.mubr.f32.gmra.mrb[0].mxu0 %v3821
      %v3892 = vpop.f32.mrb[0].mxu0
      %v3893 = vadd.f32 0.0, %v3892
      %v3894 = vpop.f32.mrb[0].mxu0
      %3895 = vmatprep.mubr.f32.mxu0 0.0
      %3896 = vmatmul.mubr.f32.gmra.mrb[0].mxu0 %v3824
      %v3897 = vpop.f32.mrb[0].mxu0
      %v3898 = vadd.f32 0.0, %v3897
      %v3899 = vpop.f32.mrb[0].mxu0
      %3900 = vdwg.mxu0
      %v3901 = vadd.f32 %v3810, %v3893
      %v3902 = vadd.f32 %v3811, %v3898
      %v3903 = vld [vmem:[%s9 + $0x440] sm:$0xff]
      %v3904 = vld [vmem:[%s9 + $0x448] sm:$0xff]
      %v3905 = vld [vmem:[%s9 + $0x450] sm:$0xff]
      %v3906 = vld [vmem:[%s9 + $0x458] sm:$0xff]
      %v3907 = vld [vmem:[%s9 + $0x460] sm:$0xff]
      %v3908 = vld [vmem:[%s9 + $0x468] sm:$0xff]
      %v3909 = vld [vmem:[%s9 + $0x470] sm:$0xff]
      %v3910 = vld [vmem:[%s9 + $0x478] sm:$0xff]
      %v3912 = vsel %vm1646, %v2322, 0
      %v3915 = vsel %vm1646, %v2323, 0
      %3917 = vmatprep.subr.mxu0 0.0
      %3918 = vmatpush1.msra.mxu0 %v3903
      %3919 = vmatprep.subr.mxu0 0.0
      %3920 = vmatpush1.msra.mxu0 %v3904
      %3921 = vmatprep.subr.mxu0 0.0
      %3922 = vmatpush1.msra.mxu0 %v3905
      %3923 = vmatprep.subr.mxu0 0.0
      %3924 = vmatpush1.msra.mxu0 %v3906
      %3925 = vmatprep.subr.mxu0 0.0
      %3926 = vmatpush1.msra.mxu0 %v3907
      %3927 = vmatprep.subr.mxu0 0.0
      %3928 = vmatpush1.msra.mxu0 %v3908
      %3929 = vmatprep.subr.mxu0 0.0
      %3930 = vmatpush1.msra.mxu0 %v3909
      %3931 = vmatprep.subr.mxu0 0.0
      %3932 = vmatpush1.msra.mxu0 %v3910
      %3933 = vmatprep.subr.mxu0 0.0
      %3934 = vmatpush1.msra.mxu0 0.0
      %3935 = vmatprep.subr.mxu0 0.0
      %3936 = vmatpush1.msra.mxu0 0.0
      %3937 = vmatprep.subr.mxu0 0.0
      %3938 = vmatpush1.msra.mxu0 0.0
      %3939 = vmatprep.subr.mxu0 0.0
      %3940 = vmatpush1.msra.mxu0 0.0
      %3941 = vmatprep.subr.mxu0 0.0
      %3942 = vmatpush1.msra.mxu0 0.0
      %3943 = vmatprep.subr.mxu0 0.0
      %3944 = vmatpush1.msra.mxu0 0.0
      %3945 = vmatprep.subr.mxu0 0.0
      %3946 = vmatpush1.msra.mxu0 0.0
      %3947 = vmatprep.subr.mxu0 0.0
      %3948 = vmatpush1.msra.mxu0 0.0
      %3949 = vmatprep.subr.mxu0 0.0
      %3950 = vmatpush1.msra.mxu0 0.0
      %3951 = vmatprep.subr.mxu0 0.0
      %3952 = vmatpush1.msra.mxu0 0.0
      %3953 = vmatprep.subr.mxu0 0.0
      %3954 = vmatpush1.msra.mxu0 0.0
      %3955 = vmatprep.subr.mxu0 0.0
      %3956 = vmatpush1.msra.mxu0 0.0
      %3957 = vmatprep.subr.mxu0 0.0
      %3958 = vmatpush1.msra.mxu0 0.0
      %3959 = vmatprep.subr.mxu0 0.0
      %3960 = vmatpush1.msra.mxu0 0.0
      %3961 = vmatprep.subr.mxu0 0.0
      %3962 = vmatpush1.msra.mxu0 0.0
      %3963 = vmatprep.subr.mxu0 0.0
      %3964 = vmatpush1.msra.mxu0 0.0
      %3965 = vmatprep.subr.mxu0 0.0
      %3966 = vmatpush1.msra.mxu0 0.0
      %3967 = vmatprep.subr.mxu0 0.0
      %3968 = vmatpush1.msra.mxu0 0.0
      %3969 = vmatprep.subr.mxu0 0.0
      %3970 = vmatpush1.msra.mxu0 0.0
      %3971 = vmatprep.subr.mxu0 0.0
      %3972 = vmatpush1.msra.mxu0 0.0
      %3973 = vmatprep.subr.mxu0 0.0
      %3974 = vmatpush1.msra.mxu0 0.0
      %3975 = vmatprep.subr.mxu0 0.0
      %3976 = vmatpush1.msra.mxu0 0.0
      %3977 = vmatprep.subr.mxu0 0.0
      %3978 = vmatpush1.msra.mxu0 0.0
      %3979 = vmatprep.subr.mxu0 0.0
      %3980 = vmatpush1.msra.mxu0 0.0
      %3981 = vmatprep.mubr.f32.mxu0 0.0
      %3982 = vmatmul.mubr.f32.gmra.mrb[0].mxu0 %v3912
      %v3983 = vpop.f32.mrb[0].mxu0
      %v3984 = vadd.f32 0.0, %v3983
      %v3985 = vpop.f32.mrb[0].mxu0
      %3986 = vmatprep.mubr.f32.mxu0 0.0
      %3987 = vmatmul.mubr.f32.gmra.mrb[0].mxu0 %v3915
      %v3988 = vpop.f32.mrb[0].mxu0
      %v3989 = vadd.f32 0.0, %v3988
      %v3990 = vpop.f32.mrb[0].mxu0
      %3991 = vdwg.mxu0
      %v3992 = vadd.f32 %v3901, %v3984
      %v3993 = vadd.f32 %v3902, %v3989
      %v3994 = vld [vmem:[%s9 + $0x480] sm:$0xff]
      %v3995 = vld [vmem:[%s9 + $0x488] sm:$0xff]
      %v3996 = vld [vmem:[%s9 + $0x490] sm:$0xff]
      %v3997 = vld [vmem:[%s9 + $0x498] sm:$0xff]
      %v3998 = vld [vmem:[%s9 + $0x4a0] sm:$0xff]
      %v3999 = vld [vmem:[%s9 + $0x4a8] sm:$0xff]
      %v4000 = vld [vmem:[%s9 + $0x4b0] sm:$0xff]
      %v4001 = vld [vmem:[%s9 + $0x4b8] sm:$0xff]
      %v4003 = vsel %vm1646, %v2324, 0
      %v4006 = vsel %vm1646, %v2325, 0
      %4008 = vmatprep.subr.mxu0 0.0
      %4009 = vmatpush1.msra.mxu0 %v3994
      %4010 = vmatprep.subr.mxu0 0.0
      %4011 = vmatpush1.msra.mxu0 %v3995
      %4012 = vmatprep.subr.mxu0 0.0
      %4013 = vmatpush1.msra.mxu0 %v3996
      %4014 = vmatprep.subr.mxu0 0.0
      %4015 = vmatpush1.msra.mxu0 %v3997
      %4016 = vmatprep.subr.mxu0 0.0
      %4017 = vmatpush1.msra.mxu0 %v3998
      %4018 = vmatprep.subr.mxu0 0.0
      %4019 = vmatpush1.msra.mxu0 %v3999
      %4020 = vmatprep.subr.mxu0 0.0
      %4021 = vmatpush1.msra.mxu0 %v4000
      %4022 = vmatprep.subr.mxu0 0.0
      %4023 = vmatpush1.msra.mxu0 %v4001
      %4024 = vmatprep.subr.mxu0 0.0
      %4025 = vmatpush1.msra.mxu0 0.0
      %4026 = vmatprep.subr.mxu0 0.0
      %4027 = vmatpush1.msra.mxu0 0.0
      %4028 = vmatprep.subr.mxu0 0.0
      %4029 = vmatpush1.msra.mxu0 0.0
      %4030 = vmatprep.subr.mxu0 0.0
      %4031 = vmatpush1.msra.mxu0 0.0
      %4032 = vmatprep.subr.mxu0 0.0
      %4033 = vmatpush1.msra.mxu0 0.0
      %4034 = vmatprep.subr.mxu0 0.0
      %4035 = vmatpush1.msra.mxu0 0.0
      %4036 = vmatprep.subr.mxu0 0.0
      %4037 = vmatpush1.msra.mxu0 0.0
      %4038 = vmatprep.subr.mxu0 0.0
      %4039 = vmatpush1.msra.mxu0 0.0
      %4040 = vmatprep.subr.mxu0 0.0
      %4041 = vmatpush1.msra.mxu0 0.0
      %4042 = vmatprep.subr.mxu0 0.0
      %4043 = vmatpush1.msra.mxu0 0.0
      %4044 = vmatprep.subr.mxu0 0.0
      %4045 = vmatpush1.msra.mxu0 0.0
      %4046 = vmatprep.subr.mxu0 0.0
      %4047 = vmatpush1.msra.mxu0 0.0
      %4048 = vmatprep.subr.mxu0 0.0
      %4049 = vmatpush1.msra.mxu0 0.0
      %4050 = vmatprep.subr.mxu0 0.0
      %4051 = vmatpush1.msra.mxu0 0.0
      %4052 = vmatprep.subr.mxu0 0.0
      %4053 = vmatpush1.msra.mxu0 0.0
      %4054 = vmatprep.subr.mxu0 0.0
      %4055 = vmatpush1.msra.mxu0 0.0
      %4056 = vmatprep.subr.mxu0 0.0
      %4057 = vmatpush1.msra.mxu0 0.0
      %4058 = vmatprep.subr.mxu0 0.0
      %4059 = vmatpush1.msra.mxu0 0.0
      %4060 = vmatprep.subr.mxu0 0.0
      %4061 = vmatpush1.msra.mxu0 0.0
      %4062 = vmatprep.subr.mxu0 0.0
      %4063 = vmatpush1.msra.mxu0 0.0
      %4064 = vmatprep.subr.mxu0 0.0
      %4065 = vmatpush1.msra.mxu0 0.0
      %4066 = vmatprep.subr.mxu0 0.0
      %4067 = vmatpush1.msra.mxu0 0.0
      %4068 = vmatprep.subr.mxu0 0.0
      %4069 = vmatpush1.msra.mxu0 0.0
      %4070 = vmatprep.subr.mxu0 0.0
      %4071 = vmatpush1.msra.mxu0 0.0
      %4072 = vmatprep.mubr.f32.mxu0 0.0
      %4073 = vmatmul.mubr.f32.gmra.mrb[0].mxu0 %v4003
      %v4074 = vpop.f32.mrb[0].mxu0
      %v4075 = vadd.f32 0.0, %v4074
      %v4076 = vpop.f32.mrb[0].mxu0
      %4077 = vmatprep.mubr.f32.mxu0 0.0
      %4078 = vmatmul.mubr.f32.gmra.mrb[0].mxu0 %v4006
      %v4079 = vpop.f32.mrb[0].mxu0
      %v4080 = vadd.f32 0.0, %v4079
      %v4081 = vpop.f32.mrb[0].mxu0
      %4082 = vdwg.mxu0
      %v4083 = vadd.f32 %v3992, %v4075
      %v4084 = vadd.f32 %v3993, %v4080
      %v4085 = vld [vmem:[%s9 + $0x4c0] sm:$0xff]
      %v4086 = vld [vmem:[%s9 + $0x4c8] sm:$0xff]
      %v4087 = vld [vmem:[%s9 + $0x4d0] sm:$0xff]
      %v4088 = vld [vmem:[%s9 + $0x4d8] sm:$0xff]
      %v4089 = vld [vmem:[%s9 + $0x4e0] sm:$0xff]
      %v4090 = vld [vmem:[%s9 + $0x4e8] sm:$0xff]
      %v4091 = vld [vmem:[%s9 + $0x4f0] sm:$0xff]
      %v4092 = vld [vmem:[%s9 + $0x4f8] sm:$0xff]
      %v4094 = vsel %vm1646, %v2326, 0
      %v4097 = vsel %vm1646, %v2327, 0
      %4099 = vmatprep.subr.mxu0 0.0
      %4100 = vmatpush1.msra.mxu0 %v4085
      %4101 = vmatprep.subr.mxu0 0.0
      %4102 = vmatpush1.msra.mxu0 %v4086
      %4103 = vmatprep.subr.mxu0 0.0
      %4104 = vmatpush1.msra.mxu0 %v4087
      %4105 = vmatprep.subr.mxu0 0.0
      %4106 = vmatpush1.msra.mxu0 %v4088
      %4107 = vmatprep.subr.mxu0 0.0
      %4108 = vmatpush1.msra.mxu0 %v4089
      %4109 = vmatprep.subr.mxu0 0.0
      %4110 = vmatpush1.msra.mxu0 %v4090
      %4111 = vmatprep.subr.mxu0 0.0
      %4112 = vmatpush1.msra.mxu0 %v4091
      %4113 = vmatprep.subr.mxu0 0.0
      %4114 = vmatpush1.msra.mxu0 %v4092
      %4115 = vmatprep.subr.mxu0 0.0
      %4116 = vmatpush1.msra.mxu0 0.0
      %4117 = vmatprep.subr.mxu0 0.0
      %4118 = vmatpush1.msra.mxu0 0.0
      %4119 = vmatprep.subr.mxu0 0.0
      %4120 = vmatpush1.msra.mxu0 0.0
      %4121 = vmatprep.subr.mxu0 0.0
      %4122 = vmatpush1.msra.mxu0 0.0
      %4123 = vmatprep.subr.mxu0 0.0
      %4124 = vmatpush1.msra.mxu0 0.0
      %4125 = vmatprep.subr.mxu0 0.0
      %4126 = vmatpush1.msra.mxu0 0.0
      %4127 = vmatprep.subr.mxu0 0.0
      %4128 = vmatpush1.msra.mxu0 0.0
      %4129 = vmatprep.subr.mxu0 0.0
      %4130 = vmatpush1.msra.mxu0 0.0
      %4131 = vmatprep.subr.mxu0 0.0
      %4132 = vmatpush1.msra.mxu0 0.0
      %4133 = vmatprep.subr.mxu0 0.0
      %4134 = vmatpush1.msra.mxu0 0.0
      %4135 = vmatprep.subr.mxu0 0.0
      %4136 = vmatpush1.msra.mxu0 0.0
      %4137 = vmatprep.subr.mxu0 0.0
      %4138 = vmatpush1.msra.mxu0 0.0
      %4139 = vmatprep.subr.mxu0 0.0
      %4140 = vmatpush1.msra.mxu0 0.0
      %4141 = vmatprep.subr.mxu0 0.0
      %4142 = vmatpush1.msra.mxu0 0.0
      %4143 = vmatprep.subr.mxu0 0.0
      %4144 = vmatpush1.msra.mxu0 0.0
      %4145 = vmatprep.subr.mxu0 0.0
      %4146 = vmatpush1.msra.mxu0 0.0
      %4147 = vmatprep.subr.mxu0 0.0
      %4148 = vmatpush1.msra.mxu0 0.0
      %4149 = vmatprep.subr.mxu0 0.0
      %4150 = vmatpush1.msra.mxu0 0.0
      %4151 = vmatprep.subr.mxu0 0.0
      %4152 = vmatpush1.msra.mxu0 0.0
      %4153 = vmatprep.subr.mxu0 0.0
      %4154 = vmatpush1.msra.mxu0 0.0
      %4155 = vmatprep.subr.mxu0 0.0
      %4156 = vmatpush1.msra.mxu0 0.0
      %4157 = vmatprep.subr.mxu0 0.0
      %4158 = vmatpush1.msra.mxu0 0.0
      %4159 = vmatprep.subr.mxu0 0.0
      %4160 = vmatpush1.msra.mxu0 0.0
      %4161 = vmatprep.subr.mxu0 0.0
      %4162 = vmatpush1.msra.mxu0 0.0
      %4163 = vmatprep.mubr.f32.mxu0 0.0
      %4164 = vmatmul.mubr.f32.gmra.mrb[0].mxu0 %v4094
      %v4165 = vpop.f32.mrb[0].mxu0
      %v4166 = vadd.f32 0.0, %v4165
      %v4167 = vpop.f32.mrb[0].mxu0
      %4168 = vmatprep.mubr.f32.mxu0 0.0
      %4169 = vmatmul.mubr.f32.gmra.mrb[0].mxu0 %v4097
      %v4170 = vpop.f32.mrb[0].mxu0
      %v4171 = vadd.f32 0.0, %v4170
      %v4172 = vpop.f32.mrb[0].mxu0
      %4173 = vdwg.mxu0
      %v4174 = vadd.f32 %v4083, %v4166
      %v4175 = vadd.f32 %v4084, %v4171
      %v4176 = vld [vmem:[%s9 + $0x500] sm:$0xff]
      %v4177 = vld [vmem:[%s9 + $0x508] sm:$0xff]
      %v4178 = vld [vmem:[%s9 + $0x510] sm:$0xff]
      %v4179 = vld [vmem:[%s9 + $0x518] sm:$0xff]
      %v4180 = vld [vmem:[%s9 + $0x520] sm:$0xff]
      %v4181 = vld [vmem:[%s9 + $0x528] sm:$0xff]
      %v4182 = vld [vmem:[%s9 + $0x530] sm:$0xff]
      %v4183 = vld [vmem:[%s9 + $0x538] sm:$0xff]
      %v4185 = vsel %vm1646, %v2328, 0
      %v4188 = vsel %vm1646, %v2329, 0
      %4190 = vmatprep.subr.mxu0 0.0
      %4191 = vmatpush1.msra.mxu0 %v4176
      %4192 = vmatprep.subr.mxu0 0.0
      %4193 = vmatpush1.msra.mxu0 %v4177
      %4194 = vmatprep.subr.mxu0 0.0
      %4195 = vmatpush1.msra.mxu0 %v4178
      %4196 = vmatprep.subr.mxu0 0.0
      %4197 = vmatpush1.msra.mxu0 %v4179
      %4198 = vmatprep.subr.mxu0 0.0
      %4199 = vmatpush1.msra.mxu0 %v4180
      %4200 = vmatprep.subr.mxu0 0.0
      %4201 = vmatpush1.msra.mxu0 %v4181
      %4202 = vmatprep.subr.mxu0 0.0
      %4203 = vmatpush1.msra.mxu0 %v4182
      %4204 = vmatprep.subr.mxu0 0.0
      %4205 = vmatpush1.msra.mxu0 %v4183
      %4206 = vmatprep.subr.mxu0 0.0
      %4207 = vmatpush1.msra.mxu0 0.0
      %4208 = vmatprep.subr.mxu0 0.0
      %4209 = vmatpush1.msra.mxu0 0.0
      %4210 = vmatprep.subr.mxu0 0.0
      %4211 = vmatpush1.msra.mxu0 0.0
      %4212 = vmatprep.subr.mxu0 0.0
      %4213 = vmatpush1.msra.mxu0 0.0
      %4214 = vmatprep.subr.mxu0 0.0
      %4215 = vmatpush1.msra.mxu0 0.0
      %4216 = vmatprep.subr.mxu0 0.0
      %4217 = vmatpush1.msra.mxu0 0.0
      %4218 = vmatprep.subr.mxu0 0.0
      %4219 = vmatpush1.msra.mxu0 0.0
      %4220 = vmatprep.subr.mxu0 0.0
      %4221 = vmatpush1.msra.mxu0 0.0
      %4222 = vmatprep.subr.mxu0 0.0
      %4223 = vmatpush1.msra.mxu0 0.0
      %4224 = vmatprep.subr.mxu0 0.0
      %4225 = vmatpush1.msra.mxu0 0.0
      %4226 = vmatprep.subr.mxu0 0.0
      %4227 = vmatpush1.msra.mxu0 0.0
      %4228 = vmatprep.subr.mxu0 0.0
      %4229 = vmatpush1.msra.mxu0 0.0
      %4230 = vmatprep.subr.mxu0 0.0
      %4231 = vmatpush1.msra.mxu0 0.0
      %4232 = vmatprep.subr.mxu0 0.0
      %4233 = vmatpush1.msra.mxu0 0.0
      %4234 = vmatprep.subr.mxu0 0.0
      %4235 = vmatpush1.msra.mxu0 0.0
      %4236 = vmatprep.subr.mxu0 0.0
      %4237 = vmatpush1.msra.mxu0 0.0
      %4238 = vmatprep.subr.mxu0 0.0
      %4239 = vmatpush1.msra.mxu0 0.0
      %4240 = vmatprep.subr.mxu0 0.0
      %4241 = vmatpush1.msra.mxu0 0.0
      %4242 = vmatprep.subr.mxu0 0.0
      %4243 = vmatpush1.msra.mxu0 0.0
      %4244 = vmatprep.subr.mxu0 0.0
      %4245 = vmatpush1.msra.mxu0 0.0
      %4246 = vmatprep.subr.mxu0 0.0
      %4247 = vmatpush1.msra.mxu0 0.0
      %4248 = vmatprep.subr.mxu0 0.0
      %4249 = vmatpush1.msra.mxu0 0.0
      %4250 = vmatprep.subr.mxu0 0.0
      %4251 = vmatpush1.msra.mxu0 0.0
      %4252 = vmatprep.subr.mxu0 0.0
      %4253 = vmatpush1.msra.mxu0 0.0
      %4254 = vmatprep.mubr.f32.mxu0 0.0
      %4255 = vmatmul.mubr.f32.gmra.mrb[0].mxu0 %v4185
      %v4256 = vpop.f32.mrb[0].mxu0
      %v4257 = vadd.f32 0.0, %v4256
      %v4258 = vpop.f32.mrb[0].mxu0
      %4259 = vmatprep.mubr.f32.mxu0 0.0
      %4260 = vmatmul.mubr.f32.gmra.mrb[0].mxu0 %v4188
      %v4261 = vpop.f32.mrb[0].mxu0
      %v4262 = vadd.f32 0.0, %v4261
      %v4263 = vpop.f32.mrb[0].mxu0
      %4264 = vdwg.mxu0
      %v4265 = vadd.f32 %v4174, %v4257
      %v4266 = vadd.f32 %v4175, %v4262
      %v4267 = vld [vmem:[%s9 + $0x540] sm:$0xff]
      %v4268 = vld [vmem:[%s9 + $0x548] sm:$0xff]
      %v4269 = vld [vmem:[%s9 + $0x550] sm:$0xff]
      %v4270 = vld [vmem:[%s9 + $0x558] sm:$0xff]
      %v4271 = vld [vmem:[%s9 + $0x560] sm:$0xff]
      %v4272 = vld [vmem:[%s9 + $0x568] sm:$0xff]
      %v4273 = vld [vmem:[%s9 + $0x570] sm:$0xff]
      %v4274 = vld [vmem:[%s9 + $0x578] sm:$0xff]
      %v4276 = vsel %vm1646, %v2330, 0
      %v4279 = vsel %vm1646, %v2331, 0
      %4281 = vmatprep.subr.mxu0 0.0
      %4282 = vmatpush1.msra.mxu0 %v4267
      %4283 = vmatprep.subr.mxu0 0.0
      %4284 = vmatpush1.msra.mxu0 %v4268
      %4285 = vmatprep.subr.mxu0 0.0
      %4286 = vmatpush1.msra.mxu0 %v4269
      %4287 = vmatprep.subr.mxu0 0.0
      %4288 = vmatpush1.msra.mxu0 %v4270
      %4289 = vmatprep.subr.mxu0 0.0
      %4290 = vmatpush1.msra.mxu0 %v4271
      %4291 = vmatprep.subr.mxu0 0.0
      %4292 = vmatpush1.msra.mxu0 %v4272
      %4293 = vmatprep.subr.mxu0 0.0
      %4294 = vmatpush1.msra.mxu0 %v4273
      %4295 = vmatprep.subr.mxu0 0.0
      %4296 = vmatpush1.msra.mxu0 %v4274
      %4297 = vmatprep.subr.mxu0 0.0
      %4298 = vmatpush1.msra.mxu0 0.0
      %4299 = vmatprep.subr.mxu0 0.0
      %4300 = vmatpush1.msra.mxu0 0.0
      %4301 = vmatprep.subr.mxu0 0.0
      %4302 = vmatpush1.msra.mxu0 0.0
      %4303 = vmatprep.subr.mxu0 0.0
      %4304 = vmatpush1.msra.mxu0 0.0
      %4305 = vmatprep.subr.mxu0 0.0
      %4306 = vmatpush1.msra.mxu0 0.0
      %4307 = vmatprep.subr.mxu0 0.0
      %4308 = vmatpush1.msra.mxu0 0.0
      %4309 = vmatprep.subr.mxu0 0.0
      %4310 = vmatpush1.msra.mxu0 0.0
      %4311 = vmatprep.subr.mxu0 0.0
      %4312 = vmatpush1.msra.mxu0 0.0
      %4313 = vmatprep.subr.mxu0 0.0
      %4314 = vmatpush1.msra.mxu0 0.0
      %4315 = vmatprep.subr.mxu0 0.0
      %4316 = vmatpush1.msra.mxu0 0.0
      %4317 = vmatprep.subr.mxu0 0.0
      %4318 = vmatpush1.msra.mxu0 0.0
      %4319 = vmatprep.subr.mxu0 0.0
      %4320 = vmatpush1.msra.mxu0 0.0
      %4321 = vmatprep.subr.mxu0 0.0
      %4322 = vmatpush1.msra.mxu0 0.0
      %4323 = vmatprep.subr.mxu0 0.0
      %4324 = vmatpush1.msra.mxu0 0.0
      %4325 = vmatprep.subr.mxu0 0.0
      %4326 = vmatpush1.msra.mxu0 0.0
      %4327 = vmatprep.subr.mxu0 0.0
      %4328 = vmatpush1.msra.mxu0 0.0
      %4329 = vmatprep.subr.mxu0 0.0
      %4330 = vmatpush1.msra.mxu0 0.0
      %4331 = vmatprep.subr.mxu0 0.0
      %4332 = vmatpush1.msra.mxu0 0.0
      %4333 = vmatprep.subr.mxu0 0.0
      %4334 = vmatpush1.msra.mxu0 0.0
      %4335 = vmatprep.subr.mxu0 0.0
      %4336 = vmatpush1.msra.mxu0 0.0
      %4337 = vmatprep.subr.mxu0 0.0
      %4338 = vmatpush1.msra.mxu0 0.0
      %4339 = vmatprep.subr.mxu0 0.0
      %4340 = vmatpush1.msra.mxu0 0.0
      %4341 = vmatprep.subr.mxu0 0.0
      %4342 = vmatpush1.msra.mxu0 0.0
      %4343 = vmatprep.subr.mxu0 0.0
      %4344 = vmatpush1.msra.mxu0 0.0
      %4345 = vmatprep.mubr.f32.mxu0 0.0
      %4346 = vmatmul.mubr.f32.gmra.mrb[0].mxu0 %v4276
      %v4347 = vpop.f32.mrb[0].mxu0
      %v4348 = vadd.f32 0.0, %v4347
      %v4349 = vpop.f32.mrb[0].mxu0
      %4350 = vmatprep.mubr.f32.mxu0 0.0
      %4351 = vmatmul.mubr.f32.gmra.mrb[0].mxu0 %v4279
      %v4352 = vpop.f32.mrb[0].mxu0
      %v4353 = vadd.f32 0.0, %v4352
      %v4354 = vpop.f32.mrb[0].mxu0
      %4355 = vdwg.mxu0
      %v4356 = vadd.f32 %v4265, %v4348
      %v4357 = vadd.f32 %v4266, %v4353
      %v4358 = vld [vmem:[%s9 + $0x580] sm:$0xff]
      %v4359 = vld [vmem:[%s9 + $0x588] sm:$0xff]
      %v4360 = vld [vmem:[%s9 + $0x590] sm:$0xff]
      %v4361 = vld [vmem:[%s9 + $0x598] sm:$0xff]
      %v4362 = vld [vmem:[%s9 + $0x5a0] sm:$0xff]
      %v4363 = vld [vmem:[%s9 + $0x5a8] sm:$0xff]
      %v4364 = vld [vmem:[%s9 + $0x5b0] sm:$0xff]
      %v4365 = vld [vmem:[%s9 + $0x5b8] sm:$0xff]
      %v4367 = vsel %vm1646, %v2332, 0
      %v4370 = vsel %vm1646, %v2333, 0
      %4372 = vmatprep.subr.mxu0 0.0
      %4373 = vmatpush1.msra.mxu0 %v4358
      %4374 = vmatprep.subr.mxu0 0.0
      %4375 = vmatpush1.msra.mxu0 %v4359
      %4376 = vmatprep.subr.mxu0 0.0
      %4377 = vmatpush1.msra.mxu0 %v4360
      %4378 = vmatprep.subr.mxu0 0.0
      %4379 = vmatpush1.msra.mxu0 %v4361
      %4380 = vmatprep.subr.mxu0 0.0
      %4381 = vmatpush1.msra.mxu0 %v4362
      %4382 = vmatprep.subr.mxu0 0.0
      %4383 = vmatpush1.msra.mxu0 %v4363
      %4384 = vmatprep.subr.mxu0 0.0
      %4385 = vmatpush1.msra.mxu0 %v4364
      %4386 = vmatprep.subr.mxu0 0.0
      %4387 = vmatpush1.msra.mxu0 %v4365
      %4388 = vmatprep.subr.mxu0 0.0
      %4389 = vmatpush1.msra.mxu0 0.0
      %4390 = vmatprep.subr.mxu0 0.0
      %4391 = vmatpush1.msra.mxu0 0.0
      %4392 = vmatprep.subr.mxu0 0.0
      %4393 = vmatpush1.msra.mxu0 0.0
      %4394 = vmatprep.subr.mxu0 0.0
      %4395 = vmatpush1.msra.mxu0 0.0
      %4396 = vmatprep.subr.mxu0 0.0
      %4397 = vmatpush1.msra.mxu0 0.0
      %4398 = vmatprep.subr.mxu0 0.0
      %4399 = vmatpush1.msra.mxu0 0.0
      %4400 = vmatprep.subr.mxu0 0.0
      %4401 = vmatpush1.msra.mxu0 0.0
      %4402 = vmatprep.subr.mxu0 0.0
      %4403 = vmatpush1.msra.mxu0 0.0
      %4404 = vmatprep.subr.mxu0 0.0
      %4405 = vmatpush1.msra.mxu0 0.0
      %4406 = vmatprep.subr.mxu0 0.0
      %4407 = vmatpush1.msra.mxu0 0.0
      %4408 = vmatprep.subr.mxu0 0.0
      %4409 = vmatpush1.msra.mxu0 0.0
      %4410 = vmatprep.subr.mxu0 0.0
      %4411 = vmatpush1.msra.mxu0 0.0
      %4412 = vmatprep.subr.mxu0 0.0
      %4413 = vmatpush1.msra.mxu0 0.0
      %4414 = vmatprep.subr.mxu0 0.0
      %4415 = vmatpush1.msra.mxu0 0.0
      %4416 = vmatprep.subr.mxu0 0.0
      %4417 = vmatpush1.msra.mxu0 0.0
      %4418 = vmatprep.subr.mxu0 0.0
      %4419 = vmatpush1.msra.mxu0 0.0
      %4420 = vmatprep.subr.mxu0 0.0
      %4421 = vmatpush1.msra.mxu0 0.0
      %4422 = vmatprep.subr.mxu0 0.0
      %4423 = vmatpush1.msra.mxu0 0.0
      %4424 = vmatprep.subr.mxu0 0.0
      %4425 = vmatpush1.msra.mxu0 0.0
      %4426 = vmatprep.subr.mxu0 0.0
      %4427 = vmatpush1.msra.mxu0 0.0
      %4428 = vmatprep.subr.mxu0 0.0
      %4429 = vmatpush1.msra.mxu0 0.0
      %4430 = vmatprep.subr.mxu0 0.0
      %4431 = vmatpush1.msra.mxu0 0.0
      %4432 = vmatprep.subr.mxu0 0.0
      %4433 = vmatpush1.msra.mxu0 0.0
      %4434 = vmatprep.subr.mxu0 0.0
      %4435 = vmatpush1.msra.mxu0 0.0
      %4436 = vmatprep.mubr.f32.mxu0 0.0
      %4437 = vmatmul.mubr.f32.gmra.mrb[0].mxu0 %v4367
      %v4438 = vpop.f32.mrb[0].mxu0
      %v4439 = vadd.f32 0.0, %v4438
      %v4440 = vpop.f32.mrb[0].mxu0
      %4441 = vmatprep.mubr.f32.mxu0 0.0
      %4442 = vmatmul.mubr.f32.gmra.mrb[0].mxu0 %v4370
      %v4443 = vpop.f32.mrb[0].mxu0
      %v4444 = vadd.f32 0.0, %v4443
      %v4445 = vpop.f32.mrb[0].mxu0
      %4446 = vdwg.mxu0
      %v4447 = vadd.f32 %v4356, %v4439
      %v4448 = vadd.f32 %v4357, %v4444
      %v4449 = vld [vmem:[%s9 + $0x5c0] sm:$0xff]
      %v4450 = vld [vmem:[%s9 + $0x5c8] sm:$0xff]
      %v4451 = vld [vmem:[%s9 + $0x5d0] sm:$0xff]
      %v4452 = vld [vmem:[%s9 + $0x5d8] sm:$0xff]
      %v4453 = vld [vmem:[%s9 + $0x5e0] sm:$0xff]
      %v4454 = vld [vmem:[%s9 + $0x5e8] sm:$0xff]
      %v4455 = vld [vmem:[%s9 + $0x5f0] sm:$0xff]
      %v4456 = vld [vmem:[%s9 + $0x5f8] sm:$0xff]
      %v4458 = vsel %vm1646, %v2334, 0
      %v4461 = vsel %vm1646, %v2335, 0
      %4463 = vmatprep.subr.mxu0 0.0
      %4464 = vmatpush1.msra.mxu0 %v4449
      %4465 = vmatprep.subr.mxu0 0.0
      %4466 = vmatpush1.msra.mxu0 %v4450
      %4467 = vmatprep.subr.mxu0 0.0
      %4468 = vmatpush1.msra.mxu0 %v4451
      %4469 = vmatprep.subr.mxu0 0.0
      %4470 = vmatpush1.msra.mxu0 %v4452
      %4471 = vmatprep.subr.mxu0 0.0
      %4472 = vmatpush1.msra.mxu0 %v4453
      %4473 = vmatprep.subr.mxu0 0.0
      %4474 = vmatpush1.msra.mxu0 %v4454
      %4475 = vmatprep.subr.mxu0 0.0
      %4476 = vmatpush1.msra.mxu0 %v4455
      %4477 = vmatprep.subr.mxu0 0.0
      %4478 = vmatpush1.msra.mxu0 %v4456
      %4479 = vmatprep.subr.mxu0 0.0
      %4480 = vmatpush1.msra.mxu0 0.0
      %4481 = vmatprep.subr.mxu0 0.0
      %4482 = vmatpush1.msra.mxu0 0.0
      %4483 = vmatprep.subr.mxu0 0.0
      %4484 = vmatpush1.msra.mxu0 0.0
      %4485 = vmatprep.subr.mxu0 0.0
      %4486 = vmatpush1.msra.mxu0 0.0
      %4487 = vmatprep.subr.mxu0 0.0
      %4488 = vmatpush1.msra.mxu0 0.0
      %4489 = vmatprep.subr.mxu0 0.0
      %4490 = vmatpush1.msra.mxu0 0.0
      %4491 = vmatprep.subr.mxu0 0.0
      %4492 = vmatpush1.msra.mxu0 0.0
      %4493 = vmatprep.subr.mxu0 0.0
      %4494 = vmatpush1.msra.mxu0 0.0
      %4495 = vmatprep.subr.mxu0 0.0
      %4496 = vmatpush1.msra.mxu0 0.0
      %4497 = vmatprep.subr.mxu0 0.0
      %4498 = vmatpush1.msra.mxu0 0.0
      %4499 = vmatprep.subr.mxu0 0.0
      %4500 = vmatpush1.msra.mxu0 0.0
      %4501 = vmatprep.subr.mxu0 0.0
      %4502 = vmatpush1.msra.mxu0 0.0
      %4503 = vmatprep.subr.mxu0 0.0
      %4504 = vmatpush1.msra.mxu0 0.0
      %4505 = vmatprep.subr.mxu0 0.0
      %4506 = vmatpush1.msra.mxu0 0.0
      %4507 = vmatprep.subr.mxu0 0.0
      %4508 = vmatpush1.msra.mxu0 0.0
      %4509 = vmatprep.subr.mxu0 0.0
      %4510 = vmatpush1.msra.mxu0 0.0
      %4511 = vmatprep.subr.mxu0 0.0
      %4512 = vmatpush1.msra.mxu0 0.0
      %4513 = vmatprep.subr.mxu0 0.0
      %4514 = vmatpush1.msra.mxu0 0.0
      %4515 = vmatprep.subr.mxu0 0.0
      %4516 = vmatpush1.msra.mxu0 0.0
      %4517 = vmatprep.subr.mxu0 0.0
      %4518 = vmatpush1.msra.mxu0 0.0
      %4519 = vmatprep.subr.mxu0 0.0
      %4520 = vmatpush1.msra.mxu0 0.0
      %4521 = vmatprep.subr.mxu0 0.0
      %4522 = vmatpush1.msra.mxu0 0.0
      %4523 = vmatprep.subr.mxu0 0.0
      %4524 = vmatpush1.msra.mxu0 0.0
      %4525 = vmatprep.subr.mxu0 0.0
      %4526 = vmatpush1.msra.mxu0 0.0
      %4527 = vmatprep.mubr.f32.mxu0 0.0
      %4528 = vmatmul.mubr.f32.gmra.mrb[0].mxu0 %v4458
      %v4529 = vpop.f32.mrb[0].mxu0
      %v4530 = vadd.f32 0.0, %v4529
      %v4531 = vpop.f32.mrb[0].mxu0
      %4532 = vmatprep.mubr.f32.mxu0 0.0
      %4533 = vmatmul.mubr.f32.gmra.mrb[0].mxu0 %v4461
      %v4534 = vpop.f32.mrb[0].mxu0
      %v4535 = vadd.f32 0.0, %v4534
      %v4536 = vpop.f32.mrb[0].mxu0
      %4537 = vdwg.mxu0
      %v4538 = vadd.f32 %v4447, %v4530
      %v4539 = vadd.f32 %v4448, %v4535
      %v4540 = vld [vmem:[%s9 + $0x600] sm:$0xff]
      %v4541 = vld [vmem:[%s9 + $0x608] sm:$0xff]
      %v4542 = vld [vmem:[%s9 + $0x610] sm:$0xff]
      %v4543 = vld [vmem:[%s9 + $0x618] sm:$0xff]
      %v4544 = vld [vmem:[%s9 + $0x620] sm:$0xff]
      %v4545 = vld [vmem:[%s9 + $0x628] sm:$0xff]
      %v4546 = vld [vmem:[%s9 + $0x630] sm:$0xff]
      %v4547 = vld [vmem:[%s9 + $0x638] sm:$0xff]
      %v4549 = vsel %vm1646, %v2336, 0
      %v4552 = vsel %vm1646, %v2337, 0
      %4554 = vmatprep.subr.mxu0 0.0
      %4555 = vmatpush1.msra.mxu0 %v4540
      %4556 = vmatprep.subr.mxu0 0.0
      %4557 = vmatpush1.msra.mxu0 %v4541
      %4558 = vmatprep.subr.mxu0 0.0
      %4559 = vmatpush1.msra.mxu0 %v4542
      %4560 = vmatprep.subr.mxu0 0.0
      %4561 = vmatpush1.msra.mxu0 %v4543
      %4562 = vmatprep.subr.mxu0 0.0
      %4563 = vmatpush1.msra.mxu0 %v4544
      %4564 = vmatprep.subr.mxu0 0.0
      %4565 = vmatpush1.msra.mxu0 %v4545
      %4566 = vmatprep.subr.mxu0 0.0
      %4567 = vmatpush1.msra.mxu0 %v4546
      %4568 = vmatprep.subr.mxu0 0.0
      %4569 = vmatpush1.msra.mxu0 %v4547
      %4570 = vmatprep.subr.mxu0 0.0
      %4571 = vmatpush1.msra.mxu0 0.0
      %4572 = vmatprep.subr.mxu0 0.0
      %4573 = vmatpush1.msra.mxu0 0.0
      %4574 = vmatprep.subr.mxu0 0.0
      %4575 = vmatpush1.msra.mxu0 0.0
      %4576 = vmatprep.subr.mxu0 0.0
      %4577 = vmatpush1.msra.mxu0 0.0
      %4578 = vmatprep.subr.mxu0 0.0
      %4579 = vmatpush1.msra.mxu0 0.0
      %4580 = vmatprep.subr.mxu0 0.0
      %4581 = vmatpush1.msra.mxu0 0.0
      %4582 = vmatprep.subr.mxu0 0.0
      %4583 = vmatpush1.msra.mxu0 0.0
      %4584 = vmatprep.subr.mxu0 0.0
      %4585 = vmatpush1.msra.mxu0 0.0
      %4586 = vmatprep.subr.mxu0 0.0
      %4587 = vmatpush1.msra.mxu0 0.0
      %4588 = vmatprep.subr.mxu0 0.0
      %4589 = vmatpush1.msra.mxu0 0.0
      %4590 = vmatprep.subr.mxu0 0.0
      %4591 = vmatpush1.msra.mxu0 0.0
      %4592 = vmatprep.subr.mxu0 0.0
      %4593 = vmatpush1.msra.mxu0 0.0
      %4594 = vmatprep.subr.mxu0 0.0
      %4595 = vmatpush1.msra.mxu0 0.0
      %4596 = vmatprep.subr.mxu0 0.0
      %4597 = vmatpush1.msra.mxu0 0.0
      %4598 = vmatprep.subr.mxu0 0.0
      %4599 = vmatpush1.msra.mxu0 0.0
      %4600 = vmatprep.subr.mxu0 0.0
      %4601 = vmatpush1.msra.mxu0 0.0
      %4602 = vmatprep.subr.mxu0 0.0
      %4603 = vmatpush1.msra.mxu0 0.0
      %4604 = vmatprep.subr.mxu0 0.0
      %4605 = vmatpush1.msra.mxu0 0.0
      %4606 = vmatprep.subr.mxu0 0.0
      %4607 = vmatpush1.msra.mxu0 0.0
      %4608 = vmatprep.subr.mxu0 0.0
      %4609 = vmatpush1.msra.mxu0 0.0
      %4610 = vmatprep.subr.mxu0 0.0
      %4611 = vmatpush1.msra.mxu0 0.0
      %4612 = vmatprep.subr.mxu0 0.0
      %4613 = vmatpush1.msra.mxu0 0.0
      %4614 = vmatprep.subr.mxu0 0.0
      %4615 = vmatpush1.msra.mxu0 0.0
      %4616 = vmatprep.subr.mxu0 0.0
      %4617 = vmatpush1.msra.mxu0 0.0
      %4618 = vmatprep.mubr.f32.mxu0 0.0
      %4619 = vmatmul.mubr.f32.gmra.mrb[0].mxu0 %v4549
      %v4620 = vpop.f32.mrb[0].mxu0
      %v4621 = vadd.f32 0.0, %v4620
      %v4622 = vpop.f32.mrb[0].mxu0
      %4623 = vmatprep.mubr.f32.mxu0 0.0
      %4624 = vmatmul.mubr.f32.gmra.mrb[0].mxu0 %v4552
      %v4625 = vpop.f32.mrb[0].mxu0
      %v4626 = vadd.f32 0.0, %v4625
      %v4627 = vpop.f32.mrb[0].mxu0
      %4628 = vdwg.mxu0
      %v4629 = vadd.f32 %v4538, %v4621
      %v4630 = vadd.f32 %v4539, %v4626
      %v4631 = vld [vmem:[%s9 + $0x640] sm:$0xff]
      %v4632 = vld [vmem:[%s9 + $0x648] sm:$0xff]
      %v4633 = vld [vmem:[%s9 + $0x650] sm:$0xff]
      %v4634 = vld [vmem:[%s9 + $0x658] sm:$0xff]
      %v4635 = vld [vmem:[%s9 + $0x660] sm:$0xff]
      %v4636 = vld [vmem:[%s9 + $0x668] sm:$0xff]
      %v4637 = vld [vmem:[%s9 + $0x670] sm:$0xff]
      %v4638 = vld [vmem:[%s9 + $0x678] sm:$0xff]
      %v4640 = vsel %vm1646, %v2338, 0
      %v4643 = vsel %vm1646, %v2339, 0
      %4645 = vmatprep.subr.mxu0 0.0
      %4646 = vmatpush1.msra.mxu0 %v4631
      %4647 = vmatprep.subr.mxu0 0.0
      %4648 = vmatpush1.msra.mxu0 %v4632
      %4649 = vmatprep.subr.mxu0 0.0
      %4650 = vmatpush1.msra.mxu0 %v4633
      %4651 = vmatprep.subr.mxu0 0.0
      %4652 = vmatpush1.msra.mxu0 %v4634
      %4653 = vmatprep.subr.mxu0 0.0
      %4654 = vmatpush1.msra.mxu0 %v4635
      %4655 = vmatprep.subr.mxu0 0.0
      %4656 = vmatpush1.msra.mxu0 %v4636
      %4657 = vmatprep.subr.mxu0 0.0
      %4658 = vmatpush1.msra.mxu0 %v4637
      %4659 = vmatprep.subr.mxu0 0.0
      %4660 = vmatpush1.msra.mxu0 %v4638
      %4661 = vmatprep.subr.mxu0 0.0
      %4662 = vmatpush1.msra.mxu0 0.0
      %4663 = vmatprep.subr.mxu0 0.0
      %4664 = vmatpush1.msra.mxu0 0.0
      %4665 = vmatprep.subr.mxu0 0.0
      %4666 = vmatpush1.msra.mxu0 0.0
      %4667 = vmatprep.subr.mxu0 0.0
      %4668 = vmatpush1.msra.mxu0 0.0
      %4669 = vmatprep.subr.mxu0 0.0
      %4670 = vmatpush1.msra.mxu0 0.0
      %4671 = vmatprep.subr.mxu0 0.0
      %4672 = vmatpush1.msra.mxu0 0.0
      %4673 = vmatprep.subr.mxu0 0.0
      %4674 = vmatpush1.msra.mxu0 0.0
      %4675 = vmatprep.subr.mxu0 0.0
      %4676 = vmatpush1.msra.mxu0 0.0
      %4677 = vmatprep.subr.mxu0 0.0
      %4678 = vmatpush1.msra.mxu0 0.0
      %4679 = vmatprep.subr.mxu0 0.0
      %4680 = vmatpush1.msra.mxu0 0.0
      %4681 = vmatprep.subr.mxu0 0.0
      %4682 = vmatpush1.msra.mxu0 0.0
      %4683 = vmatprep.subr.mxu0 0.0
      %4684 = vmatpush1.msra.mxu0 0.0
      %4685 = vmatprep.subr.mxu0 0.0
      %4686 = vmatpush1.msra.mxu0 0.0
      %4687 = vmatprep.subr.mxu0 0.0
      %4688 = vmatpush1.msra.mxu0 0.0
      %4689 = vmatprep.subr.mxu0 0.0
      %4690 = vmatpush1.msra.mxu0 0.0
      %4691 = vmatprep.subr.mxu0 0.0
      %4692 = vmatpush1.msra.mxu0 0.0
      %4693 = vmatprep.subr.mxu0 0.0
      %4694 = vmatpush1.msra.mxu0 0.0
      %4695 = vmatprep.subr.mxu0 0.0
      %4696 = vmatpush1.msra.mxu0 0.0
      %4697 = vmatprep.subr.mxu0 0.0
      %4698 = vmatpush1.msra.mxu0 0.0
      %4699 = vmatprep.subr.mxu0 0.0
      %4700 = vmatpush1.msra.mxu0 0.0
      %4701 = vmatprep.subr.mxu0 0.0
      %4702 = vmatpush1.msra.mxu0 0.0
      %4703 = vmatprep.subr.mxu0 0.0
      %4704 = vmatpush1.msra.mxu0 0.0
      %4705 = vmatprep.subr.mxu0 0.0
      %4706 = vmatpush1.msra.mxu0 0.0
      %4707 = vmatprep.subr.mxu0 0.0
      %4708 = vmatpush1.msra.mxu0 0.0
      %4709 = vmatprep.mubr.f32.mxu0 0.0
      %4710 = vmatmul.mubr.f32.gmra.mrb[0].mxu0 %v4640
      %v4711 = vpop.f32.mrb[0].mxu0
      %v4712 = vadd.f32 0.0, %v4711
      %v4713 = vpop.f32.mrb[0].mxu0
      %4714 = vmatprep.mubr.f32.mxu0 0.0
      %4715 = vmatmul.mubr.f32.gmra.mrb[0].mxu0 %v4643
      %v4716 = vpop.f32.mrb[0].mxu0
      %v4717 = vadd.f32 0.0, %v4716
      %v4718 = vpop.f32.mrb[0].mxu0
      %4719 = vdwg.mxu0
      %v4720 = vadd.f32 %v4629, %v4712
      %v4721 = vadd.f32 %v4630, %v4717
      %v4722 = vld [vmem:[%s9 + $0x680] sm:$0xff]
      %v4723 = vld [vmem:[%s9 + $0x688] sm:$0xff]
      %v4724 = vld [vmem:[%s9 + $0x690] sm:$0xff]
      %v4725 = vld [vmem:[%s9 + $0x698] sm:$0xff]
      %v4726 = vld [vmem:[%s9 + $0x6a0] sm:$0xff]
      %v4727 = vld [vmem:[%s9 + $0x6a8] sm:$0xff]
      %v4728 = vld [vmem:[%s9 + $0x6b0] sm:$0xff]
      %v4729 = vld [vmem:[%s9 + $0x6b8] sm:$0xff]
      %v4731 = vsel %vm1646, %v2340, 0
      %v4734 = vsel %vm1646, %v2341, 0
      %4736 = vmatprep.subr.mxu0 0.0
      %4737 = vmatpush1.msra.mxu0 %v4722
      %4738 = vmatprep.subr.mxu0 0.0
      %4739 = vmatpush1.msra.mxu0 %v4723
      %4740 = vmatprep.subr.mxu0 0.0
      %4741 = vmatpush1.msra.mxu0 %v4724
      %4742 = vmatprep.subr.mxu0 0.0
      %4743 = vmatpush1.msra.mxu0 %v4725
      %4744 = vmatprep.subr.mxu0 0.0
      %4745 = vmatpush1.msra.mxu0 %v4726
      %4746 = vmatprep.subr.mxu0 0.0
      %4747 = vmatpush1.msra.mxu0 %v4727
      %4748 = vmatprep.subr.mxu0 0.0
      %4749 = vmatpush1.msra.mxu0 %v4728
      %4750 = vmatprep.subr.mxu0 0.0
      %4751 = vmatpush1.msra.mxu0 %v4729
      %4752 = vmatprep.subr.mxu0 0.0
      %4753 = vmatpush1.msra.mxu0 0.0
      %4754 = vmatprep.subr.mxu0 0.0
      %4755 = vmatpush1.msra.mxu0 0.0
      %4756 = vmatprep.subr.mxu0 0.0
      %4757 = vmatpush1.msra.mxu0 0.0
      %4758 = vmatprep.subr.mxu0 0.0
      %4759 = vmatpush1.msra.mxu0 0.0
      %4760 = vmatprep.subr.mxu0 0.0
      %4761 = vmatpush1.msra.mxu0 0.0
      %4762 = vmatprep.subr.mxu0 0.0
      %4763 = vmatpush1.msra.mxu0 0.0
      %4764 = vmatprep.subr.mxu0 0.0
      %4765 = vmatpush1.msra.mxu0 0.0
      %4766 = vmatprep.subr.mxu0 0.0
      %4767 = vmatpush1.msra.mxu0 0.0
      %4768 = vmatprep.subr.mxu0 0.0
      %4769 = vmatpush1.msra.mxu0 0.0
      %4770 = vmatprep.subr.mxu0 0.0
      %4771 = vmatpush1.msra.mxu0 0.0
      %4772 = vmatprep.subr.mxu0 0.0
      %4773 = vmatpush1.msra.mxu0 0.0
      %4774 = vmatprep.subr.mxu0 0.0
      %4775 = vmatpush1.msra.mxu0 0.0
      %4776 = vmatprep.subr.mxu0 0.0
      %4777 = vmatpush1.msra.mxu0 0.0
      %4778 = vmatprep.subr.mxu0 0.0
      %4779 = vmatpush1.msra.mxu0 0.0
      %4780 = vmatprep.subr.mxu0 0.0
      %4781 = vmatpush1.msra.mxu0 0.0
      %4782 = vmatprep.subr.mxu0 0.0
      %4783 = vmatpush1.msra.mxu0 0.0
      %4784 = vmatprep.subr.mxu0 0.0
      %4785 = vmatpush1.msra.mxu0 0.0
      %4786 = vmatprep.subr.mxu0 0.0
      %4787 = vmatpush1.msra.mxu0 0.0
      %4788 = vmatprep.subr.mxu0 0.0
      %4789 = vmatpush1.msra.mxu0 0.0
      %4790 = vmatprep.subr.mxu0 0.0
      %4791 = vmatpush1.msra.mxu0 0.0
      %4792 = vmatprep.subr.mxu0 0.0
      %4793 = vmatpush1.msra.mxu0 0.0
      %4794 = vmatprep.subr.mxu0 0.0
      %4795 = vmatpush1.msra.mxu0 0.0
      %4796 = vmatprep.subr.mxu0 0.0
      %4797 = vmatpush1.msra.mxu0 0.0
      %4798 = vmatprep.subr.mxu0 0.0
      %4799 = vmatpush1.msra.mxu0 0.0
      %4800 = vmatprep.mubr.f32.mxu0 0.0
      %4801 = vmatmul.mubr.f32.gmra.mrb[0].mxu0 %v4731
      %v4802 = vpop.f32.mrb[0].mxu0
      %v4803 = vadd.f32 0.0, %v4802
      %v4804 = vpop.f32.mrb[0].mxu0
      %4805 = vmatprep.mubr.f32.mxu0 0.0
      %4806 = vmatmul.mubr.f32.gmra.mrb[0].mxu0 %v4734
      %v4807 = vpop.f32.mrb[0].mxu0
      %v4808 = vadd.f32 0.0, %v4807
      %v4809 = vpop.f32.mrb[0].mxu0
      %4810 = vdwg.mxu0
      %v4811 = vadd.f32 %v4720, %v4803
      %v4812 = vadd.f32 %v4721, %v4808
      %v4813 = vld [vmem:[%s9 + $0x6c0] sm:$0xff]
      %v4814 = vld [vmem:[%s9 + $0x6c8] sm:$0xff]
      %v4815 = vld [vmem:[%s9 + $0x6d0] sm:$0xff]
      %v4816 = vld [vmem:[%s9 + $0x6d8] sm:$0xff]
      %v4817 = vld [vmem:[%s9 + $0x6e0] sm:$0xff]
      %v4818 = vld [vmem:[%s9 + $0x6e8] sm:$0xff]
      %v4819 = vld [vmem:[%s9 + $0x6f0] sm:$0xff]
      %v4820 = vld [vmem:[%s9 + $0x6f8] sm:$0xff]
      %v4822 = vsel %vm1646, %v2342, 0
      %v4825 = vsel %vm1646, %v2343, 0
      %4827 = vmatprep.subr.mxu0 0.0
      %4828 = vmatpush1.msra.mxu0 %v4813
      %4829 = vmatprep.subr.mxu0 0.0
      %4830 = vmatpush1.msra.mxu0 %v4814
      %4831 = vmatprep.subr.mxu0 0.0
      %4832 = vmatpush1.msra.mxu0 %v4815
      %4833 = vmatprep.subr.mxu0 0.0
      %4834 = vmatpush1.msra.mxu0 %v4816
      %4835 = vmatprep.subr.mxu0 0.0
      %4836 = vmatpush1.msra.mxu0 %v4817
      %4837 = vmatprep.subr.mxu0 0.0
      %4838 = vmatpush1.msra.mxu0 %v4818
      %4839 = vmatprep.subr.mxu0 0.0
      %4840 = vmatpush1.msra.mxu0 %v4819
      %4841 = vmatprep.subr.mxu0 0.0
      %4842 = vmatpush1.msra.mxu0 %v4820
      %4843 = vmatprep.subr.mxu0 0.0
      %4844 = vmatpush1.msra.mxu0 0.0
      %4845 = vmatprep.subr.mxu0 0.0
      %4846 = vmatpush1.msra.mxu0 0.0
      %4847 = vmatprep.subr.mxu0 0.0
      %4848 = vmatpush1.msra.mxu0 0.0
      %4849 = vmatprep.subr.mxu0 0.0
      %4850 = vmatpush1.msra.mxu0 0.0
      %4851 = vmatprep.subr.mxu0 0.0
      %4852 = vmatpush1.msra.mxu0 0.0
      %4853 = vmatprep.subr.mxu0 0.0
      %4854 = vmatpush1.msra.mxu0 0.0
      %4855 = vmatprep.subr.mxu0 0.0
      %4856 = vmatpush1.msra.mxu0 0.0
      %4857 = vmatprep.subr.mxu0 0.0
      %4858 = vmatpush1.msra.mxu0 0.0
      %4859 = vmatprep.subr.mxu0 0.0
      %4860 = vmatpush1.msra.mxu0 0.0
      %4861 = vmatprep.subr.mxu0 0.0
      %4862 = vmatpush1.msra.mxu0 0.0
      %4863 = vmatprep.subr.mxu0 0.0
      %4864 = vmatpush1.msra.mxu0 0.0
      %4865 = vmatprep.subr.mxu0 0.0
      %4866 = vmatpush1.msra.mxu0 0.0
      %4867 = vmatprep.subr.mxu0 0.0
      %4868 = vmatpush1.msra.mxu0 0.0
      %4869 = vmatprep.subr.mxu0 0.0
      %4870 = vmatpush1.msra.mxu0 0.0
      %4871 = vmatprep.subr.mxu0 0.0
      %4872 = vmatpush1.msra.mxu0 0.0
      %4873 = vmatprep.subr.mxu0 0.0
      %4874 = vmatpush1.msra.mxu0 0.0
      %4875 = vmatprep.subr.mxu0 0.0
      %4876 = vmatpush1.msra.mxu0 0.0
      %4877 = vmatprep.subr.mxu0 0.0
      %4878 = vmatpush1.msra.mxu0 0.0
      %4879 = vmatprep.subr.mxu0 0.0
      %4880 = vmatpush1.msra.mxu0 0.0
      %4881 = vmatprep.subr.mxu0 0.0
      %4882 = vmatpush1.msra.mxu0 0.0
      %4883 = vmatprep.subr.mxu0 0.0
      %4884 = vmatpush1.msra.mxu0 0.0
      %4885 = vmatprep.subr.mxu0 0.0
      %4886 = vmatpush1.msra.mxu0 0.0
      %4887 = vmatprep.subr.mxu0 0.0
      %4888 = vmatpush1.msra.mxu0 0.0
      %4889 = vmatprep.subr.mxu0 0.0
      %4890 = vmatpush1.msra.mxu0 0.0
      %4891 = vmatprep.mubr.f32.mxu0 0.0
      %4892 = vmatmul.mubr.f32.gmra.mrb[0].mxu0 %v4822
      %v4893 = vpop.f32.mrb[0].mxu0
      %v4894 = vadd.f32 0.0, %v4893
      %v4895 = vpop.f32.mrb[0].mxu0
      %4896 = vmatprep.mubr.f32.mxu0 0.0
      %4897 = vmatmul.mubr.f32.gmra.mrb[0].mxu0 %v4825
      %v4898 = vpop.f32.mrb[0].mxu0
      %v4899 = vadd.f32 0.0, %v4898
      %v4900 = vpop.f32.mrb[0].mxu0
      %4901 = vdwg.mxu0
      %v4902 = vadd.f32 %v4811, %v4894
      %v4903 = vadd.f32 %v4812, %v4899
      %v4904 = vld [vmem:[%s9 + $0x700] sm:$0xff]
      %v4905 = vld [vmem:[%s9 + $0x708] sm:$0xff]
      %v4906 = vld [vmem:[%s9 + $0x710] sm:$0xff]
      %v4907 = vld [vmem:[%s9 + $0x718] sm:$0xff]
      %v4908 = vld [vmem:[%s9 + $0x720] sm:$0xff]
      %v4909 = vld [vmem:[%s9 + $0x728] sm:$0xff]
      %v4910 = vld [vmem:[%s9 + $0x730] sm:$0xff]
      %v4911 = vld [vmem:[%s9 + $0x738] sm:$0xff]
      %v4913 = vsel %vm1646, %v2344, 0
      %v4916 = vsel %vm1646, %v2345, 0
      %4918 = vmatprep.subr.mxu0 0.0
      %4919 = vmatpush1.msra.mxu0 %v4904
      %4920 = vmatprep.subr.mxu0 0.0
      %4921 = vmatpush1.msra.mxu0 %v4905
      %4922 = vmatprep.subr.mxu0 0.0
      %4923 = vmatpush1.msra.mxu0 %v4906
      %4924 = vmatprep.subr.mxu0 0.0
      %4925 = vmatpush1.msra.mxu0 %v4907
      %4926 = vmatprep.subr.mxu0 0.0
      %4927 = vmatpush1.msra.mxu0 %v4908
      %4928 = vmatprep.subr.mxu0 0.0
      %4929 = vmatpush1.msra.mxu0 %v4909
      %4930 = vmatprep.subr.mxu0 0.0
      %4931 = vmatpush1.msra.mxu0 %v4910
      %4932 = vmatprep.subr.mxu0 0.0
      %4933 = vmatpush1.msra.mxu0 %v4911
      %4934 = vmatprep.subr.mxu0 0.0
      %4935 = vmatpush1.msra.mxu0 0.0
      %4936 = vmatprep.subr.mxu0 0.0
      %4937 = vmatpush1.msra.mxu0 0.0
      %4938 = vmatprep.subr.mxu0 0.0
      %4939 = vmatpush1.msra.mxu0 0.0
      %4940 = vmatprep.subr.mxu0 0.0
      %4941 = vmatpush1.msra.mxu0 0.0
      %4942 = vmatprep.subr.mxu0 0.0
      %4943 = vmatpush1.msra.mxu0 0.0
      %4944 = vmatprep.subr.mxu0 0.0
      %4945 = vmatpush1.msra.mxu0 0.0
      %4946 = vmatprep.subr.mxu0 0.0
      %4947 = vmatpush1.msra.mxu0 0.0
      %4948 = vmatprep.subr.mxu0 0.0
      %4949 = vmatpush1.msra.mxu0 0.0
      %4950 = vmatprep.subr.mxu0 0.0
      %4951 = vmatpush1.msra.mxu0 0.0
      %4952 = vmatprep.subr.mxu0 0.0
      %4953 = vmatpush1.msra.mxu0 0.0
      %4954 = vmatprep.subr.mxu0 0.0
      %4955 = vmatpush1.msra.mxu0 0.0
      %4956 = vmatprep.subr.mxu0 0.0
      %4957 = vmatpush1.msra.mxu0 0.0
      %4958 = vmatprep.subr.mxu0 0.0
      %4959 = vmatpush1.msra.mxu0 0.0
      %4960 = vmatprep.subr.mxu0 0.0
      %4961 = vmatpush1.msra.mxu0 0.0
      %4962 = vmatprep.subr.mxu0 0.0
      %4963 = vmatpush1.msra.mxu0 0.0
      %4964 = vmatprep.subr.mxu0 0.0
      %4965 = vmatpush1.msra.mxu0 0.0
      %4966 = vmatprep.subr.mxu0 0.0
      %4967 = vmatpush1.msra.mxu0 0.0
      %4968 = vmatprep.subr.mxu0 0.0
      %4969 = vmatpush1.msra.mxu0 0.0
      %4970 = vmatprep.subr.mxu0 0.0
      %4971 = vmatpush1.msra.mxu0 0.0
      %4972 = vmatprep.subr.mxu0 0.0
      %4973 = vmatpush1.msra.mxu0 0.0
      %4974 = vmatprep.subr.mxu0 0.0
      %4975 = vmatpush1.msra.mxu0 0.0
      %4976 = vmatprep.subr.mxu0 0.0
      %4977 = vmatpush1.msra.mxu0 0.0
      %4978 = vmatprep.subr.mxu0 0.0
      %4979 = vmatpush1.msra.mxu0 0.0
      %4980 = vmatprep.subr.mxu0 0.0
      %4981 = vmatpush1.msra.mxu0 0.0
      %4982 = vmatprep.mubr.f32.mxu0 0.0
      %4983 = vmatmul.mubr.f32.gmra.mrb[0].mxu0 %v4913
      %v4984 = vpop.f32.mrb[0].mxu0
      %v4985 = vadd.f32 0.0, %v4984
      %v4986 = vpop.f32.mrb[0].mxu0
      %4987 = vmatprep.mubr.f32.mxu0 0.0
      %4988 = vmatmul.mubr.f32.gmra.mrb[0].mxu0 %v4916
      %v4989 = vpop.f32.mrb[0].mxu0
      %v4990 = vadd.f32 0.0, %v4989
      %v4991 = vpop.f32.mrb[0].mxu0
      %4992 = vdwg.mxu0
      %v4993 = vadd.f32 %v4902, %v4985
      %v4994 = vadd.f32 %v4903, %v4990
      %v4995 = vld [vmem:[%s9 + $0x740] sm:$0xff]
      %v4996 = vld [vmem:[%s9 + $0x748] sm:$0xff]
      %v4997 = vld [vmem:[%s9 + $0x750] sm:$0xff]
      %v4998 = vld [vmem:[%s9 + $0x758] sm:$0xff]
      %v4999 = vld [vmem:[%s9 + $0x760] sm:$0xff]
      %v5000 = vld [vmem:[%s9 + $0x768] sm:$0xff]
      %v5001 = vld [vmem:[%s9 + $0x770] sm:$0xff]
      %v5002 = vld [vmem:[%s9 + $0x778] sm:$0xff]
      %v5004 = vsel %vm1646, %v2346, 0
      %v5007 = vsel %vm1646, %v2347, 0
      %5009 = vmatprep.subr.mxu0 0.0
      %5010 = vmatpush1.msra.mxu0 %v4995
      %5011 = vmatprep.subr.mxu0 0.0
      %5012 = vmatpush1.msra.mxu0 %v4996
      %5013 = vmatprep.subr.mxu0 0.0
      %5014 = vmatpush1.msra.mxu0 %v4997
      %5015 = vmatprep.subr.mxu0 0.0
      %5016 = vmatpush1.msra.mxu0 %v4998
      %5017 = vmatprep.subr.mxu0 0.0
      %5018 = vmatpush1.msra.mxu0 %v4999
      %5019 = vmatprep.subr.mxu0 0.0
      %5020 = vmatpush1.msra.mxu0 %v5000
      %5021 = vmatprep.subr.mxu0 0.0
      %5022 = vmatpush1.msra.mxu0 %v5001
      %5023 = vmatprep.subr.mxu0 0.0
      %5024 = vmatpush1.msra.mxu0 %v5002
      %5025 = vmatprep.subr.mxu0 0.0
      %5026 = vmatpush1.msra.mxu0 0.0
      %5027 = vmatprep.subr.mxu0 0.0
      %5028 = vmatpush1.msra.mxu0 0.0
      %5029 = vmatprep.subr.mxu0 0.0
      %5030 = vmatpush1.msra.mxu0 0.0
      %5031 = vmatprep.subr.mxu0 0.0
      %5032 = vmatpush1.msra.mxu0 0.0
      %5033 = vmatprep.subr.mxu0 0.0
      %5034 = vmatpush1.msra.mxu0 0.0
      %5035 = vmatprep.subr.mxu0 0.0
      %5036 = vmatpush1.msra.mxu0 0.0
      %5037 = vmatprep.subr.mxu0 0.0
      %5038 = vmatpush1.msra.mxu0 0.0
      %5039 = vmatprep.subr.mxu0 0.0
      %5040 = vmatpush1.msra.mxu0 0.0
      %5041 = vmatprep.subr.mxu0 0.0
      %5042 = vmatpush1.msra.mxu0 0.0
      %5043 = vmatprep.subr.mxu0 0.0
      %5044 = vmatpush1.msra.mxu0 0.0
      %5045 = vmatprep.subr.mxu0 0.0
      %5046 = vmatpush1.msra.mxu0 0.0
      %5047 = vmatprep.subr.mxu0 0.0
      %5048 = vmatpush1.msra.mxu0 0.0
      %5049 = vmatprep.subr.mxu0 0.0
      %5050 = vmatpush1.msra.mxu0 0.0
      %5051 = vmatprep.subr.mxu0 0.0
      %5052 = vmatpush1.msra.mxu0 0.0
      %5053 = vmatprep.subr.mxu0 0.0
      %5054 = vmatpush1.msra.mxu0 0.0
      %5055 = vmatprep.subr.mxu0 0.0
      %5056 = vmatpush1.msra.mxu0 0.0
      %5057 = vmatprep.subr.mxu0 0.0
      %5058 = vmatpush1.msra.mxu0 0.0
      %5059 = vmatprep.subr.mxu0 0.0
      %5060 = vmatpush1.msra.mxu0 0.0
      %5061 = vmatprep.subr.mxu0 0.0
      %5062 = vmatpush1.msra.mxu0 0.0
      %5063 = vmatprep.subr.mxu0 0.0
      %5064 = vmatpush1.msra.mxu0 0.0
      %5065 = vmatprep.subr.mxu0 0.0
      %5066 = vmatpush1.msra.mxu0 0.0
      %5067 = vmatprep.subr.mxu0 0.0
      %5068 = vmatpush1.msra.mxu0 0.0
      %5069 = vmatprep.subr.mxu0 0.0
      %5070 = vmatpush1.msra.mxu0 0.0
      %5071 = vmatprep.subr.mxu0 0.0
      %5072 = vmatpush1.msra.mxu0 0.0
      %5073 = vmatprep.mubr.f32.mxu0 0.0
      %5074 = vmatmul.mubr.f32.gmra.mrb[0].mxu0 %v5004
      %v5075 = vpop.f32.mrb[0].mxu0
      %v5076 = vadd.f32 0.0, %v5075
      %v5077 = vpop.f32.mrb[0].mxu0
      %5078 = vmatprep.mubr.f32.mxu0 0.0
      %5079 = vmatmul.mubr.f32.gmra.mrb[0].mxu0 %v5007
      %v5080 = vpop.f32.mrb[0].mxu0
      %v5081 = vadd.f32 0.0, %v5080
      %v5082 = vpop.f32.mrb[0].mxu0
      %5083 = vdwg.mxu0
      %v5084 = vadd.f32 %v4993, %v5076
      %v5085 = vadd.f32 %v4994, %v5081
      %v5086 = vld [vmem:[%s9 + $0x780] sm:$0xff]
      %v5087 = vld [vmem:[%s9 + $0x788] sm:$0xff]
      %v5088 = vld [vmem:[%s9 + $0x790] sm:$0xff]
      %v5089 = vld [vmem:[%s9 + $0x798] sm:$0xff]
      %v5090 = vld [vmem:[%s9 + $0x7a0] sm:$0xff]
      %v5091 = vld [vmem:[%s9 + $0x7a8] sm:$0xff]
      %v5092 = vld [vmem:[%s9 + $0x7b0] sm:$0xff]
      %v5093 = vld [vmem:[%s9 + $0x7b8] sm:$0xff]
      %v5095 = vsel %vm1646, %v2348, 0
      %v5098 = vsel %vm1646, %v2349, 0
      %5100 = vmatprep.subr.mxu0 0.0
      %5101 = vmatpush1.msra.mxu0 %v5086
      %5102 = vmatprep.subr.mxu0 0.0
      %5103 = vmatpush1.msra.mxu0 %v5087
      %5104 = vmatprep.subr.mxu0 0.0
      %5105 = vmatpush1.msra.mxu0 %v5088
      %5106 = vmatprep.subr.mxu0 0.0
      %5107 = vmatpush1.msra.mxu0 %v5089
      %5108 = vmatprep.subr.mxu0 0.0
      %5109 = vmatpush1.msra.mxu0 %v5090
      %5110 = vmatprep.subr.mxu0 0.0
      %5111 = vmatpush1.msra.mxu0 %v5091
      %5112 = vmatprep.subr.mxu0 0.0
      %5113 = vmatpush1.msra.mxu0 %v5092
      %5114 = vmatprep.subr.mxu0 0.0
      %5115 = vmatpush1.msra.mxu0 %v5093
      %5116 = vmatprep.subr.mxu0 0.0
      %5117 = vmatpush1.msra.mxu0 0.0
      %5118 = vmatprep.subr.mxu0 0.0
      %5119 = vmatpush1.msra.mxu0 0.0
      %5120 = vmatprep.subr.mxu0 0.0
      %5121 = vmatpush1.msra.mxu0 0.0
      %5122 = vmatprep.subr.mxu0 0.0
      %5123 = vmatpush1.msra.mxu0 0.0
      %5124 = vmatprep.subr.mxu0 0.0
      %5125 = vmatpush1.msra.mxu0 0.0
      %5126 = vmatprep.subr.mxu0 0.0
      %5127 = vmatpush1.msra.mxu0 0.0
      %5128 = vmatprep.subr.mxu0 0.0
      %5129 = vmatpush1.msra.mxu0 0.0
      %5130 = vmatprep.subr.mxu0 0.0
      %5131 = vmatpush1.msra.mxu0 0.0
      %5132 = vmatprep.subr.mxu0 0.0
      %5133 = vmatpush1.msra.mxu0 0.0
      %5134 = vmatprep.subr.mxu0 0.0
      %5135 = vmatpush1.msra.mxu0 0.0
      %5136 = vmatprep.subr.mxu0 0.0
      %5137 = vmatpush1.msra.mxu0 0.0
      %5138 = vmatprep.subr.mxu0 0.0
      %5139 = vmatpush1.msra.mxu0 0.0
      %5140 = vmatprep.subr.mxu0 0.0
      %5141 = vmatpush1.msra.mxu0 0.0
      %5142 = vmatprep.subr.mxu0 0.0
      %5143 = vmatpush1.msra.mxu0 0.0
      %5144 = vmatprep.subr.mxu0 0.0
      %5145 = vmatpush1.msra.mxu0 0.0
      %5146 = vmatprep.subr.mxu0 0.0
      %5147 = vmatpush1.msra.mxu0 0.0
      %5148 = vmatprep.subr.mxu0 0.0
      %5149 = vmatpush1.msra.mxu0 0.0
      %5150 = vmatprep.subr.mxu0 0.0
      %5151 = vmatpush1.msra.mxu0 0.0
      %5152 = vmatprep.subr.mxu0 0.0
      %5153 = vmatpush1.msra.mxu0 0.0
      %5154 = vmatprep.subr.mxu0 0.0
      %5155 = vmatpush1.msra.mxu0 0.0
      %5156 = vmatprep.subr.mxu0 0.0
      %5157 = vmatpush1.msra.mxu0 0.0
      %5158 = vmatprep.subr.mxu0 0.0
      %5159 = vmatpush1.msra.mxu0 0.0
      %5160 = vmatprep.subr.mxu0 0.0
      %5161 = vmatpush1.msra.mxu0 0.0
      %5162 = vmatprep.subr.mxu0 0.0
      %5163 = vmatpush1.msra.mxu0 0.0
      %5164 = vmatprep.mubr.f32.mxu0 0.0
      %5165 = vmatmul.mubr.f32.gmra.mrb[0].mxu0 %v5095
      %v5166 = vpop.f32.mrb[0].mxu0
      %v5167 = vadd.f32 0.0, %v5166
      %v5168 = vpop.f32.mrb[0].mxu0
      %5169 = vmatprep.mubr.f32.mxu0 0.0
      %5170 = vmatmul.mubr.f32.gmra.mrb[0].mxu0 %v5098
      %v5171 = vpop.f32.mrb[0].mxu0
      %v5172 = vadd.f32 0.0, %v5171
      %v5173 = vpop.f32.mrb[0].mxu0
      %5174 = vdwg.mxu0
      %v5175 = vadd.f32 %v5084, %v5167
      %v5176 = vadd.f32 %v5085, %v5172
      %v5177 = vld [vmem:[%s9 + $0x7c0] sm:$0xff]
      %v5178 = vld [vmem:[%s9 + $0x7c8] sm:$0xff]
      %v5179 = vld [vmem:[%s9 + $0x7d0] sm:$0xff]
      %v5180 = vld [vmem:[%s9 + $0x7d8] sm:$0xff]
      %v5181 = vld [vmem:[%s9 + $0x7e0] sm:$0xff]
      %v5182 = vld [vmem:[%s9 + $0x7e8] sm:$0xff]
      %v5183 = vld [vmem:[%s9 + $0x7f0] sm:$0xff]
      %v5184 = vld [vmem:[%s9 + $0x7f8] sm:$0xff]
      %v5186 = vsel %vm1646, %v2350, 0
      %v5189 = vsel %vm1646, %v2351, 0
      %5191 = vmatprep.subr.mxu0 0.0
      %5192 = vmatpush1.msra.mxu0 %v5177
      %5193 = vmatprep.subr.mxu0 0.0
      %5194 = vmatpush1.msra.mxu0 %v5178
      %5195 = vmatprep.subr.mxu0 0.0
      %5196 = vmatpush1.msra.mxu0 %v5179
      %5197 = vmatprep.subr.mxu0 0.0
      %5198 = vmatpush1.msra.mxu0 %v5180
      %5199 = vmatprep.subr.mxu0 0.0
      %5200 = vmatpush1.msra.mxu0 %v5181
      %5201 = vmatprep.subr.mxu0 0.0
      %5202 = vmatpush1.msra.mxu0 %v5182
      %5203 = vmatprep.subr.mxu0 0.0
      %5204 = vmatpush1.msra.mxu0 %v5183
      %5205 = vmatprep.subr.mxu0 0.0
      %5206 = vmatpush1.msra.mxu0 %v5184
      %5207 = vmatprep.subr.mxu0 0.0
      %5208 = vmatpush1.msra.mxu0 0.0
      %5209 = vmatprep.subr.mxu0 0.0
      %5210 = vmatpush1.msra.mxu0 0.0
      %5211 = vmatprep.subr.mxu0 0.0
      %5212 = vmatpush1.msra.mxu0 0.0
      %5213 = vmatprep.subr.mxu0 0.0
      %5214 = vmatpush1.msra.mxu0 0.0
      %5215 = vmatprep.subr.mxu0 0.0
      %5216 = vmatpush1.msra.mxu0 0.0
      %5217 = vmatprep.subr.mxu0 0.0
      %5218 = vmatpush1.msra.mxu0 0.0
      %5219 = vmatprep.subr.mxu0 0.0
      %5220 = vmatpush1.msra.mxu0 0.0
      %5221 = vmatprep.subr.mxu0 0.0
      %5222 = vmatpush1.msra.mxu0 0.0
      %5223 = vmatprep.subr.mxu0 0.0
      %5224 = vmatpush1.msra.mxu0 0.0
      %5225 = vmatprep.subr.mxu0 0.0
      %5226 = vmatpush1.msra.mxu0 0.0
      %5227 = vmatprep.subr.mxu0 0.0
      %5228 = vmatpush1.msra.mxu0 0.0
      %5229 = vmatprep.subr.mxu0 0.0
      %5230 = vmatpush1.msra.mxu0 0.0
      %5231 = vmatprep.subr.mxu0 0.0
      %5232 = vmatpush1.msra.mxu0 0.0
      %5233 = vmatprep.subr.mxu0 0.0
      %5234 = vmatpush1.msra.mxu0 0.0
      %5235 = vmatprep.subr.mxu0 0.0
      %5236 = vmatpush1.msra.mxu0 0.0
      %5237 = vmatprep.subr.mxu0 0.0
      %5238 = vmatpush1.msra.mxu0 0.0
      %5239 = vmatprep.subr.mxu0 0.0
      %5240 = vmatpush1.msra.mxu0 0.0
      %5241 = vmatprep.subr.mxu0 0.0
      %5242 = vmatpush1.msra.mxu0 0.0
      %5243 = vmatprep.subr.mxu0 0.0
      %5244 = vmatpush1.msra.mxu0 0.0
      %5245 = vmatprep.subr.mxu0 0.0
      %5246 = vmatpush1.msra.mxu0 0.0
      %5247 = vmatprep.subr.mxu0 0.0
      %5248 = vmatpush1.msra.mxu0 0.0
      %5249 = vmatprep.subr.mxu0 0.0
      %5250 = vmatpush1.msra.mxu0 0.0
      %5251 = vmatprep.subr.mxu0 0.0
      %5252 = vmatpush1.msra.mxu0 0.0
      %5253 = vmatprep.subr.mxu0 0.0
      %5254 = vmatpush1.msra.mxu0 0.0
      %5255 = vmatprep.mubr.f32.mxu0 0.0
      %5256 = vmatmul.mubr.f32.gmra.mrb[0].mxu0 %v5186
      %v5257 = vpop.f32.mrb[0].mxu0
      %v5258 = vadd.f32 0.0, %v5257
      %v5259 = vpop.f32.mrb[0].mxu0
      %5260 = vmatprep.mubr.f32.mxu0 0.0
      %5261 = vmatmul.mubr.f32.gmra.mrb[0].mxu0 %v5189
      %v5262 = vpop.f32.mrb[0].mxu0
      %v5263 = vadd.f32 0.0, %v5262
      %v5264 = vpop.f32.mrb[0].mxu0
      %5265 = vdwg.mxu0
      %v5266 = vadd.f32 %v5175, %v5258
      %v5267 = vadd.f32 %v5176, %v5263
      %v5268 = vld [vmem:[%s9 + $0x800] sm:$0xff]
      %v5269 = vld [vmem:[%s9 + $0x808] sm:$0xff]
      %v5270 = vld [vmem:[%s9 + $0x810] sm:$0xff]
      %v5271 = vld [vmem:[%s9 + $0x818] sm:$0xff]
      %v5272 = vld [vmem:[%s9 + $0x820] sm:$0xff]
      %v5273 = vld [vmem:[%s9 + $0x828] sm:$0xff]
      %v5274 = vld [vmem:[%s9 + $0x830] sm:$0xff]
      %v5275 = vld [vmem:[%s9 + $0x838] sm:$0xff]
      %v5277 = vsel %vm1646, %v2352, 0
      %v5280 = vsel %vm1646, %v2353, 0
      %5282 = vmatprep.subr.mxu0 0.0
      %5283 = vmatpush1.msra.mxu0 %v5268
      %5284 = vmatprep.subr.mxu0 0.0
      %5285 = vmatpush1.msra.mxu0 %v5269
      %5286 = vmatprep.subr.mxu0 0.0
      %5287 = vmatpush1.msra.mxu0 %v5270
      %5288 = vmatprep.subr.mxu0 0.0
      %5289 = vmatpush1.msra.mxu0 %v5271
      %5290 = vmatprep.subr.mxu0 0.0
      %5291 = vmatpush1.msra.mxu0 %v5272
      %5292 = vmatprep.subr.mxu0 0.0
      %5293 = vmatpush1.msra.mxu0 %v5273
      %5294 = vmatprep.subr.mxu0 0.0
      %5295 = vmatpush1.msra.mxu0 %v5274
      %5296 = vmatprep.subr.mxu0 0.0
      %5297 = vmatpush1.msra.mxu0 %v5275
      %5298 = vmatprep.subr.mxu0 0.0
      %5299 = vmatpush1.msra.mxu0 0.0
      %5300 = vmatprep.subr.mxu0 0.0
      %5301 = vmatpush1.msra.mxu0 0.0
      %5302 = vmatprep.subr.mxu0 0.0
      %5303 = vmatpush1.msra.mxu0 0.0
      %5304 = vmatprep.subr.mxu0 0.0
      %5305 = vmatpush1.msra.mxu0 0.0
      %5306 = vmatprep.subr.mxu0 0.0
      %5307 = vmatpush1.msra.mxu0 0.0
      %5308 = vmatprep.subr.mxu0 0.0
      %5309 = vmatpush1.msra.mxu0 0.0
      %5310 = vmatprep.subr.mxu0 0.0
      %5311 = vmatpush1.msra.mxu0 0.0
      %5312 = vmatprep.subr.mxu0 0.0
      %5313 = vmatpush1.msra.mxu0 0.0
      %5314 = vmatprep.subr.mxu0 0.0
      %5315 = vmatpush1.msra.mxu0 0.0
      %5316 = vmatprep.subr.mxu0 0.0
      %5317 = vmatpush1.msra.mxu0 0.0
      %5318 = vmatprep.subr.mxu0 0.0
      %5319 = vmatpush1.msra.mxu0 0.0
      %5320 = vmatprep.subr.mxu0 0.0
      %5321 = vmatpush1.msra.mxu0 0.0
      %5322 = vmatprep.subr.mxu0 0.0
      %5323 = vmatpush1.msra.mxu0 0.0
      %5324 = vmatprep.subr.mxu0 0.0
      %5325 = vmatpush1.msra.mxu0 0.0
      %5326 = vmatprep.subr.mxu0 0.0
      %5327 = vmatpush1.msra.mxu0 0.0
      %5328 = vmatprep.subr.mxu0 0.0
      %5329 = vmatpush1.msra.mxu0 0.0
      %5330 = vmatprep.subr.mxu0 0.0
      %5331 = vmatpush1.msra.mxu0 0.0
      %5332 = vmatprep.subr.mxu0 0.0
      %5333 = vmatpush1.msra.mxu0 0.0
      %5334 = vmatprep.subr.mxu0 0.0
      %5335 = vmatpush1.msra.mxu0 0.0
      %5336 = vmatprep.subr.mxu0 0.0
      %5337 = vmatpush1.msra.mxu0 0.0
      %5338 = vmatprep.subr.mxu0 0.0
      %5339 = vmatpush1.msra.mxu0 0.0
      %5340 = vmatprep.subr.mxu0 0.0
      %5341 = vmatpush1.msra.mxu0 0.0
      %5342 = vmatprep.subr.mxu0 0.0
      %5343 = vmatpush1.msra.mxu0 0.0
      %5344 = vmatprep.subr.mxu0 0.0
      %5345 = vmatpush1.msra.mxu0 0.0
      %5346 = vmatprep.mubr.f32.mxu0 0.0
      %5347 = vmatmul.mubr.f32.gmra.mrb[0].mxu0 %v5277
      %v5348 = vpop.f32.mrb[0].mxu0
      %v5349 = vadd.f32 0.0, %v5348
      %v5350 = vpop.f32.mrb[0].mxu0
      %5351 = vmatprep.mubr.f32.mxu0 0.0
      %5352 = vmatmul.mubr.f32.gmra.mrb[0].mxu0 %v5280
      %v5353 = vpop.f32.mrb[0].mxu0
      %v5354 = vadd.f32 0.0, %v5353
      %v5355 = vpop.f32.mrb[0].mxu0
      %5356 = vdwg.mxu0
      %v5357 = vadd.f32 %v5266, %v5349
      %v5358 = vadd.f32 %v5267, %v5354
      %v5359 = vld [vmem:[%s9 + $0x840] sm:$0xff]
      %v5360 = vld [vmem:[%s9 + $0x848] sm:$0xff]
      %v5361 = vld [vmem:[%s9 + $0x850] sm:$0xff]
      %v5362 = vld [vmem:[%s9 + $0x858] sm:$0xff]
      %v5363 = vld [vmem:[%s9 + $0x860] sm:$0xff]
      %v5364 = vld [vmem:[%s9 + $0x868] sm:$0xff]
      %v5365 = vld [vmem:[%s9 + $0x870] sm:$0xff]
      %v5366 = vld [vmem:[%s9 + $0x878] sm:$0xff]
      %v5368 = vsel %vm1646, %v2354, 0
      %v5371 = vsel %vm1646, %v2355, 0
      %5373 = vmatprep.subr.mxu0 0.0
      %5374 = vmatpush1.msra.mxu0 %v5359
      %5375 = vmatprep.subr.mxu0 0.0
      %5376 = vmatpush1.msra.mxu0 %v5360
      %5377 = vmatprep.subr.mxu0 0.0
      %5378 = vmatpush1.msra.mxu0 %v5361
      %5379 = vmatprep.subr.mxu0 0.0
      %5380 = vmatpush1.msra.mxu0 %v5362
      %5381 = vmatprep.subr.mxu0 0.0
      %5382 = vmatpush1.msra.mxu0 %v5363
      %5383 = vmatprep.subr.mxu0 0.0
      %5384 = vmatpush1.msra.mxu0 %v5364
      %5385 = vmatprep.subr.mxu0 0.0
      %5386 = vmatpush1.msra.mxu0 %v5365
      %5387 = vmatprep.subr.mxu0 0.0
      %5388 = vmatpush1.msra.mxu0 %v5366
      %5389 = vmatprep.subr.mxu0 0.0
      %5390 = vmatpush1.msra.mxu0 0.0
      %5391 = vmatprep.subr.mxu0 0.0
      %5392 = vmatpush1.msra.mxu0 0.0
      %5393 = vmatprep.subr.mxu0 0.0
      %5394 = vmatpush1.msra.mxu0 0.0
      %5395 = vmatprep.subr.mxu0 0.0
      %5396 = vmatpush1.msra.mxu0 0.0
      %5397 = vmatprep.subr.mxu0 0.0
      %5398 = vmatpush1.msra.mxu0 0.0
      %5399 = vmatprep.subr.mxu0 0.0
      %5400 = vmatpush1.msra.mxu0 0.0
      %5401 = vmatprep.subr.mxu0 0.0
      %5402 = vmatpush1.msra.mxu0 0.0
      %5403 = vmatprep.subr.mxu0 0.0
      %5404 = vmatpush1.msra.mxu0 0.0
      %5405 = vmatprep.subr.mxu0 0.0
      %5406 = vmatpush1.msra.mxu0 0.0
      %5407 = vmatprep.subr.mxu0 0.0
      %5408 = vmatpush1.msra.mxu0 0.0
      %5409 = vmatprep.subr.mxu0 0.0
      %5410 = vmatpush1.msra.mxu0 0.0
      %5411 = vmatprep.subr.mxu0 0.0
      %5412 = vmatpush1.msra.mxu0 0.0
      %5413 = vmatprep.subr.mxu0 0.0
      %5414 = vmatpush1.msra.mxu0 0.0
      %5415 = vmatprep.subr.mxu0 0.0
      %5416 = vmatpush1.msra.mxu0 0.0
      %5417 = vmatprep.subr.mxu0 0.0
      %5418 = vmatpush1.msra.mxu0 0.0
      %5419 = vmatprep.subr.mxu0 0.0
      %5420 = vmatpush1.msra.mxu0 0.0
      %5421 = vmatprep.subr.mxu0 0.0
      %5422 = vmatpush1.msra.mxu0 0.0
      %5423 = vmatprep.subr.mxu0 0.0
      %5424 = vmatpush1.msra.mxu0 0.0
      %5425 = vmatprep.subr.mxu0 0.0
      %5426 = vmatpush1.msra.mxu0 0.0
      %5427 = vmatprep.subr.mxu0 0.0
      %5428 = vmatpush1.msra.mxu0 0.0
      %5429 = vmatprep.subr.mxu0 0.0
      %5430 = vmatpush1.msra.mxu0 0.0
      %5431 = vmatprep.subr.mxu0 0.0
      %5432 = vmatpush1.msra.mxu0 0.0
      %5433 = vmatprep.subr.mxu0 0.0
      %5434 = vmatpush1.msra.mxu0 0.0
      %5435 = vmatprep.subr.mxu0 0.0
      %5436 = vmatpush1.msra.mxu0 0.0
      %5437 = vmatprep.mubr.f32.mxu0 0.0
      %5438 = vmatmul.mubr.f32.gmra.mrb[0].mxu0 %v5368
      %v5439 = vpop.f32.mrb[0].mxu0
      %v5440 = vadd.f32 0.0, %v5439
      %v5441 = vpop.f32.mrb[0].mxu0
      %5442 = vmatprep.mubr.f32.mxu0 0.0
      %5443 = vmatmul.mubr.f32.gmra.mrb[0].mxu0 %v5371
      %v5444 = vpop.f32.mrb[0].mxu0
      %v5445 = vadd.f32 0.0, %v5444
      %v5446 = vpop.f32.mrb[0].mxu0
      %5447 = vdwg.mxu0
      %v5448 = vadd.f32 %v5357, %v5440
      %v5449 = vadd.f32 %v5358, %v5445
      %v5450 = vld [vmem:[%s9 + $0x880] sm:$0xff]
      %v5451 = vld [vmem:[%s9 + $0x888] sm:$0xff]
      %v5452 = vld [vmem:[%s9 + $0x890] sm:$0xff]
      %v5453 = vld [vmem:[%s9 + $0x898] sm:$0xff]
      %v5454 = vld [vmem:[%s9 + $0x8a0] sm:$0xff]
      %v5455 = vld [vmem:[%s9 + $0x8a8] sm:$0xff]
      %v5456 = vld [vmem:[%s9 + $0x8b0] sm:$0xff]
      %v5457 = vld [vmem:[%s9 + $0x8b8] sm:$0xff]
      %v5459 = vsel %vm1646, %v2356, 0
      %v5462 = vsel %vm1646, %v2357, 0
      %5464 = vmatprep.subr.mxu0 0.0
      %5465 = vmatpush1.msra.mxu0 %v5450
      %5466 = vmatprep.subr.mxu0 0.0
      %5467 = vmatpush1.msra.mxu0 %v5451
      %5468 = vmatprep.subr.mxu0 0.0
      %5469 = vmatpush1.msra.mxu0 %v5452
      %5470 = vmatprep.subr.mxu0 0.0
      %5471 = vmatpush1.msra.mxu0 %v5453
      %5472 = vmatprep.subr.mxu0 0.0
      %5473 = vmatpush1.msra.mxu0 %v5454
      %5474 = vmatprep.subr.mxu0 0.0
      %5475 = vmatpush1.msra.mxu0 %v5455
      %5476 = vmatprep.subr.mxu0 0.0
      %5477 = vmatpush1.msra.mxu0 %v5456
      %5478 = vmatprep.subr.mxu0 0.0
      %5479 = vmatpush1.msra.mxu0 %v5457
      %5480 = vmatprep.subr.mxu0 0.0
      %5481 = vmatpush1.msra.mxu0 0.0
      %5482 = vmatprep.subr.mxu0 0.0
      %5483 = vmatpush1.msra.mxu0 0.0
      %5484 = vmatprep.subr.mxu0 0.0
      %5485 = vmatpush1.msra.mxu0 0.0
      %5486 = vmatprep.subr.mxu0 0.0
      %5487 = vmatpush1.msra.mxu0 0.0
      %5488 = vmatprep.subr.mxu0 0.0
      %5489 = vmatpush1.msra.mxu0 0.0
      %5490 = vmatprep.subr.mxu0 0.0
      %5491 = vmatpush1.msra.mxu0 0.0
      %5492 = vmatprep.subr.mxu0 0.0
      %5493 = vmatpush1.msra.mxu0 0.0
      %5494 = vmatprep.subr.mxu0 0.0
      %5495 = vmatpush1.msra.mxu0 0.0
      %5496 = vmatprep.subr.mxu0 0.0
      %5497 = vmatpush1.msra.mxu0 0.0
      %5498 = vmatprep.subr.mxu0 0.0
      %5499 = vmatpush1.msra.mxu0 0.0
      %5500 = vmatprep.subr.mxu0 0.0
      %5501 = vmatpush1.msra.mxu0 0.0
      %5502 = vmatprep.subr.mxu0 0.0
      %5503 = vmatpush1.msra.mxu0 0.0
      %5504 = vmatprep.subr.mxu0 0.0
      %5505 = vmatpush1.msra.mxu0 0.0
      %5506 = vmatprep.subr.mxu0 0.0
      %5507 = vmatpush1.msra.mxu0 0.0
      %5508 = vmatprep.subr.mxu0 0.0
      %5509 = vmatpush1.msra.mxu0 0.0
      %5510 = vmatprep.subr.mxu0 0.0
      %5511 = vmatpush1.msra.mxu0 0.0
      %5512 = vmatprep.subr.mxu0 0.0
      %5513 = vmatpush1.msra.mxu0 0.0
      %5514 = vmatprep.subr.mxu0 0.0
      %5515 = vmatpush1.msra.mxu0 0.0
      %5516 = vmatprep.subr.mxu0 0.0
      %5517 = vmatpush1.msra.mxu0 0.0
      %5518 = vmatprep.subr.mxu0 0.0
      %5519 = vmatpush1.msra.mxu0 0.0
      %5520 = vmatprep.subr.mxu0 0.0
      %5521 = vmatpush1.msra.mxu0 0.0
      %5522 = vmatprep.subr.mxu0 0.0
      %5523 = vmatpush1.msra.mxu0 0.0
      %5524 = vmatprep.subr.mxu0 0.0
      %5525 = vmatpush1.msra.mxu0 0.0
      %5526 = vmatprep.subr.mxu0 0.0
      %5527 = vmatpush1.msra.mxu0 0.0
      %5528 = vmatprep.mubr.f32.mxu0 0.0
      %5529 = vmatmul.mubr.f32.gmra.mrb[0].mxu0 %v5459
      %v5530 = vpop.f32.mrb[0].mxu0
      %v5531 = vadd.f32 0.0, %v5530
      %v5532 = vpop.f32.mrb[0].mxu0
      %5533 = vmatprep.mubr.f32.mxu0 0.0
      %5534 = vmatmul.mubr.f32.gmra.mrb[0].mxu0 %v5462
      %v5535 = vpop.f32.mrb[0].mxu0
      %v5536 = vadd.f32 0.0, %v5535
      %v5537 = vpop.f32.mrb[0].mxu0
      %5538 = vdwg.mxu0
      %v5539 = vadd.f32 %v5448, %v5531
      %v5540 = vadd.f32 %v5449, %v5536
      %v5541 = vld [vmem:[%s9 + $0x8c0] sm:$0xff]
      %v5542 = vld [vmem:[%s9 + $0x8c8] sm:$0xff]
      %v5543 = vld [vmem:[%s9 + $0x8d0] sm:$0xff]
      %v5544 = vld [vmem:[%s9 + $0x8d8] sm:$0xff]
      %v5545 = vld [vmem:[%s9 + $0x8e0] sm:$0xff]
      %v5546 = vld [vmem:[%s9 + $0x8e8] sm:$0xff]
      %v5547 = vld [vmem:[%s9 + $0x8f0] sm:$0xff]
      %v5548 = vld [vmem:[%s9 + $0x8f8] sm:$0xff]
      %v5550 = vsel %vm1646, %v2358, 0
      %v5553 = vsel %vm1646, %v2359, 0
      %5555 = vmatprep.subr.mxu0 0.0
      %5556 = vmatpush1.msra.mxu0 %v5541
      %5557 = vmatprep.subr.mxu0 0.0
      %5558 = vmatpush1.msra.mxu0 %v5542
      %5559 = vmatprep.subr.mxu0 0.0
      %5560 = vmatpush1.msra.mxu0 %v5543
      %5561 = vmatprep.subr.mxu0 0.0
      %5562 = vmatpush1.msra.mxu0 %v5544
      %5563 = vmatprep.subr.mxu0 0.0
      %5564 = vmatpush1.msra.mxu0 %v5545
      %5565 = vmatprep.subr.mxu0 0.0
      %5566 = vmatpush1.msra.mxu0 %v5546
      %5567 = vmatprep.subr.mxu0 0.0
      %5568 = vmatpush1.msra.mxu0 %v5547
      %5569 = vmatprep.subr.mxu0 0.0
      %5570 = vmatpush1.msra.mxu0 %v5548
      %5571 = vmatprep.subr.mxu0 0.0
      %5572 = vmatpush1.msra.mxu0 0.0
      %5573 = vmatprep.subr.mxu0 0.0
      %5574 = vmatpush1.msra.mxu0 0.0
      %5575 = vmatprep.subr.mxu0 0.0
      %5576 = vmatpush1.msra.mxu0 0.0
      %5577 = vmatprep.subr.mxu0 0.0
      %5578 = vmatpush1.msra.mxu0 0.0
      %5579 = vmatprep.subr.mxu0 0.0
      %5580 = vmatpush1.msra.mxu0 0.0
      %5581 = vmatprep.subr.mxu0 0.0
      %5582 = vmatpush1.msra.mxu0 0.0
      %5583 = vmatprep.subr.mxu0 0.0
      %5584 = vmatpush1.msra.mxu0 0.0
      %5585 = vmatprep.subr.mxu0 0.0
      %5586 = vmatpush1.msra.mxu0 0.0
      %5587 = vmatprep.subr.mxu0 0.0
      %5588 = vmatpush1.msra.mxu0 0.0
      %5589 = vmatprep.subr.mxu0 0.0
      %5590 = vmatpush1.msra.mxu0 0.0
      %5591 = vmatprep.subr.mxu0 0.0
      %5592 = vmatpush1.msra.mxu0 0.0
      %5593 = vmatprep.subr.mxu0 0.0
      %5594 = vmatpush1.msra.mxu0 0.0
      %5595 = vmatprep.subr.mxu0 0.0
      %5596 = vmatpush1.msra.mxu0 0.0
      %5597 = vmatprep.subr.mxu0 0.0
      %5598 = vmatpush1.msra.mxu0 0.0
      %5599 = vmatprep.subr.mxu0 0.0
      %5600 = vmatpush1.msra.mxu0 0.0
      %5601 = vmatprep.subr.mxu0 0.0
      %5602 = vmatpush1.msra.mxu0 0.0
      %5603 = vmatprep.subr.mxu0 0.0
      %5604 = vmatpush1.msra.mxu0 0.0
      %5605 = vmatprep.subr.mxu0 0.0
      %5606 = vmatpush1.msra.mxu0 0.0
      %5607 = vmatprep.subr.mxu0 0.0
      %5608 = vmatpush1.msra.mxu0 0.0
      %5609 = vmatprep.subr.mxu0 0.0
      %5610 = vmatpush1.msra.mxu0 0.0
      %5611 = vmatprep.subr.mxu0 0.0
      %5612 = vmatpush1.msra.mxu0 0.0
      %5613 = vmatprep.subr.mxu0 0.0
      %5614 = vmatpush1.msra.mxu0 0.0
      %5615 = vmatprep.subr.mxu0 0.0
      %5616 = vmatpush1.msra.mxu0 0.0
      %5617 = vmatprep.subr.mxu0 0.0
      %5618 = vmatpush1.msra.mxu0 0.0
      %5619 = vmatprep.mubr.f32.mxu0 0.0
      %5620 = vmatmul.mubr.f32.gmra.mrb[0].mxu0 %v5550
      %v5621 = vpop.f32.mrb[0].mxu0
      %v5622 = vadd.f32 0.0, %v5621
      %v5623 = vpop.f32.mrb[0].mxu0
      %5624 = vmatprep.mubr.f32.mxu0 0.0
      %5625 = vmatmul.mubr.f32.gmra.mrb[0].mxu0 %v5553
      %v5626 = vpop.f32.mrb[0].mxu0
      %v5627 = vadd.f32 0.0, %v5626
      %v5628 = vpop.f32.mrb[0].mxu0
      %5629 = vdwg.mxu0
      %v5630 = vadd.f32 %v5539, %v5622
      %v5631 = vadd.f32 %v5540, %v5627
      %v5632 = vld [vmem:[%s10] sm:$0x1]
      %v5634 = vlaneseq
      %v5635 = vshrl.u32 %v5634, 7
      %v5636 = vsub.s32 0, %v5635
      %v5637 = vrot.slane %v5632, %v5636
      %v5639 = vadd.f32 %v5630, %v5637
      %v5640 = vadd.f32 %v5631, %v5637
      %v5641 = vmax.f32 %v5639, 0.0
      %v5642 = vmax.f32 %v5640, 0.0
      %v5643 = vld [vmem:[%s11] sm:$0xff]
      %v5644 = vld [vmem:[%s11 + $0x8] sm:$0xff]
      %v5645 = vld [vmem:[%s11 + $0x10] sm:$0xff]
      %v5646 = vld [vmem:[%s11 + $0x18] sm:$0xff]
      %v5647 = vld [vmem:[%s12] sm:$0x1]
      %v5649 = vlaneseq
      %v5650 = vshrl.u32 %v5649, 7
      %v5651 = vsub.s32 0, %v5650
      %v5652 = vrot.slane %v5647, %v5651
      %vm5654 = vcmask 261120
      %v5656 = vsel %vm5654, %v5641, 0
      %v5659 = vsel %vm5654, %v5642, 0
      %5661 = vmatprep.subr.mxu0 0.0
      %5662 = vmatpush1.msra.mxu0 %v5643
      %5663 = vmatprep.subr.mxu0 0.0
      %5664 = vmatpush1.msra.mxu0 %v5644
      %5665 = vmatprep.subr.mxu0 0.0
      %5666 = vmatpush1.msra.mxu0 %v5645
      %5667 = vmatprep.subr.mxu0 0.0
      %5668 = vmatpush1.msra.mxu0 %v5646
      %5669 = vmatprep.subr.mxu0 0.0
      %5670 = vmatpush1.msra.mxu0 0.0
      %5671 = vmatprep.subr.mxu0 0.0
      %5672 = vmatpush1.msra.mxu0 0.0
      %5673 = vmatprep.subr.mxu0 0.0
      %5674 = vmatpush1.msra.mxu0 0.0
      %5675 = vmatprep.subr.mxu0 0.0
      %5676 = vmatpush1.msra.mxu0 0.0
      %5677 = vmatprep.subr.mxu0 0.0
      %5678 = vmatpush1.msra.mxu0 0.0
      %5679 = vmatprep.subr.mxu0 0.0
      %5680 = vmatpush1.msra.mxu0 0.0
      %5681 = vmatprep.subr.mxu0 0.0
      %5682 = vmatpush1.msra.mxu0 0.0
      %5683 = vmatprep.subr.mxu0 0.0
      %5684 = vmatpush1.msra.mxu0 0.0
      %5685 = vmatprep.subr.mxu0 0.0
      %5686 = vmatpush1.msra.mxu0 0.0
      %5687 = vmatprep.subr.mxu0 0.0
      %5688 = vmatpush1.msra.mxu0 0.0
      %5689 = vmatprep.subr.mxu0 0.0
      %5690 = vmatpush1.msra.mxu0 0.0
      %5691 = vmatprep.subr.mxu0 0.0
      %5692 = vmatpush1.msra.mxu0 0.0
      %5693 = vmatprep.subr.mxu0 0.0
      %5694 = vmatpush1.msra.mxu0 0.0
      %5695 = vmatprep.subr.mxu0 0.0
      %5696 = vmatpush1.msra.mxu0 0.0
      %5697 = vmatprep.subr.mxu0 0.0
      %5698 = vmatpush1.msra.mxu0 0.0
      %5699 = vmatprep.subr.mxu0 0.0
      %5700 = vmatpush1.msra.mxu0 0.0
      %5701 = vmatprep.subr.mxu0 0.0
      %5702 = vmatpush1.msra.mxu0 0.0
      %5703 = vmatprep.subr.mxu0 0.0
      %5704 = vmatpush1.msra.mxu0 0.0
      %5705 = vmatprep.subr.mxu0 0.0
      %5706 = vmatpush1.msra.mxu0 0.0
      %5707 = vmatprep.subr.mxu0 0.0
      %5708 = vmatpush1.msra.mxu0 0.0
      %5709 = vmatprep.subr.mxu0 0.0
      %5710 = vmatpush1.msra.mxu0 0.0
      %5711 = vmatprep.subr.mxu0 0.0
      %5712 = vmatpush1.msra.mxu0 0.0
      %5713 = vmatprep.subr.mxu0 0.0
      %5714 = vmatpush1.msra.mxu0 0.0
      %5715 = vmatprep.subr.mxu0 0.0
      %5716 = vmatpush1.msra.mxu0 0.0
      %5717 = vmatprep.subr.mxu0 0.0
      %5718 = vmatpush1.msra.mxu0 0.0
      %5719 = vmatprep.subr.mxu0 0.0
      %5720 = vmatpush1.msra.mxu0 0.0
      %5721 = vmatprep.subr.mxu0 0.0
      %5722 = vmatpush1.msra.mxu0 0.0
      %5723 = vmatprep.subr.mxu0 0.0
      %5724 = vmatpush1.msra.mxu0 0.0
      %5725 = vmatprep.mubr.f32.mxu0 0.0
      %5726 = vmatmul.mubr.f32.gmra.mrb[0].mxu0 %v5656
      %v5727 = vpop.f32.mrb[0].mxu0
      %v5728 = vadd.f32 %v5652, %v5727
      %v5729 = vpop.f32.mrb[0].mxu0
      %5730 = vmatprep.mubr.f32.mxu0 0.0
      %5731 = vmatmul.mubr.f32.gmra.mrb[0].mxu0 %v5659
      %v5732 = vpop.f32.mrb[0].mxu0
      %v5733 = vadd.f32 %v5652, %v5732
      %v5734 = vpop.f32.mrb[0].mxu0
      %5735 = vdwg.mxu0
      %v5736 = vmul.f32 %v5728, %v5728
      %v5737 = vmul.f32 %v5733, %v5733
      %5740 = vrot.lane.b32.xlu0 %v5736, 120
      %v5741 = vpop.permute.xlu0 %5740
      %5742 = vrot.lane.b32.xlu0 %v5737, 120
      %v5743 = vpop.permute.xlu0 %5742
      %v5746 = vadd.f32 %v5736, %v5741
      %v5747 = vadd.f32 %v5737, %v5743
      %v5748 = vmax.f32 %v5746, 1e-24
      %v5749 = vmax.f32 %v5747, 1e-24
      %v5750 = vrsqrt.pop %v5748
      %v5751 = vrsqrt.pop %v5749
      %v5752 = vmul.f32 %v5728, %v5750
      %v5753 = vmul.f32 %v5733, %v5751
      %5756 = vrot.lane.b32.xlu0 %v5750, 8
      %v5757 = vpop.permute.xlu0 %5756
      %5758 = vrot.lane.b32.xlu0 %v5751, 8
      %v5759 = vpop.permute.xlu0 %5758
      %v5762 = vmul.f32 %v5728, %v5757
      %v5763 = vmul.f32 %v5733, %v5759
      %v5764 = vld [vmem:[%s828] sm:$0xff]
      %v5765 = vld [vmem:[%s832] sm:$0xff]
      %v5766 = vld [vmem:[%s819] sm:$0xff]
      %v5767 = vld [vmem:[%s824] sm:$0xff]
      %5769 = vset.pattern.permute.xlu0 0
      %5770 = vperm.xlu0 %5769, %v5752
      %v5771 = vpop.permute.xlu0 %5770
      %v5773 = vmul.f32 %v5771, %v5766
      %v5774 = vadd.f32 %v5764, %v5773
      %5776 = vset.pattern.permute.xlu0 8
      %5777 = vperm.xlu0 %5776, %v5762
      %v5778 = vpop.permute.xlu0 %5777
      %v5780 = vmul.f32 %v5778, %v5767
      %v5781 = vadd.f32 %v5774, %v5780
      %v5782 = vmul.f32 %v5778, %v5766
      %v5783 = vadd.f32 %v5765, %v5782
      %v5784 = vmul.f32 %v5771, %v5767
      %v5785 = vsub.f32 %v5783, %v5784
      %s5786 = scalar_lea.vmem %s819, 8
      %v5787 = vld [vmem:[%s5786] sm:$0xff]
      %s5788 = scalar_lea.vmem %s824, 8
      %v5789 = vld [vmem:[%s5788] sm:$0xff]
      %5790 = vset.pattern.permute.xlu0 1
      %5791 = vperm.xlu0 %5790, %v5752
      %v5792 = vpop.permute.xlu0 %5791
      %v5794 = vmul.f32 %v5792, %v5787
      %v5795 = vadd.f32 %v5781, %v5794
      %5796 = vset.pattern.permute.xlu0 9
      %5797 = vperm.xlu0 %5796, %v5762
      %v5798 = vpop.permute.xlu0 %5797
      %v5800 = vmul.f32 %v5798, %v5789
      %v5801 = vadd.f32 %v5795, %v5800
      %v5802 = vmul.f32 %v5798, %v5787
      %v5803 = vadd.f32 %v5785, %v5802
      %v5804 = vmul.f32 %v5792, %v5789
      %v5805 = vsub.f32 %v5803, %v5804
      %s5806 = scalar_lea.vmem %s819, 16
      %v5807 = vld [vmem:[%s5806] sm:$0xff]
      %s5808 = scalar_lea.vmem %s824, 16
      %v5809 = vld [vmem:[%s5808] sm:$0xff]
      %5810 = vset.pattern.permute.xlu0 2
      %5811 = vperm.xlu0 %5810, %v5752
      %v5812 = vpop.permute.xlu0 %5811
      %v5814 = vmul.f32 %v5812, %v5807
      %v5815 = vadd.f32 %v5801, %v5814
      %5816 = vset.pattern.permute.xlu0 10
      %5817 = vperm.xlu0 %5816, %v5762
      %v5818 = vpop.permute.xlu0 %5817
      %v5820 = vmul.f32 %v5818, %v5809
      %v5821 = vadd.f32 %v5815, %v5820
      %v5822 = vmul.f32 %v5818, %v5807
      %v5823 = vadd.f32 %v5805, %v5822
      %v5824 = vmul.f32 %v5812, %v5809
      %v5825 = vsub.f32 %v5823, %v5824
      %s5826 = scalar_lea.vmem %s819, 24
      %v5827 = vld [vmem:[%s5826] sm:$0xff]
      %s5828 = scalar_lea.vmem %s824, 24
      %v5829 = vld [vmem:[%s5828] sm:$0xff]
      %5830 = vset.pattern.permute.xlu0 3
      %5831 = vperm.xlu0 %5830, %v5752
      %v5832 = vpop.permute.xlu0 %5831
      %v5834 = vmul.f32 %v5832, %v5827
      %v5835 = vadd.f32 %v5821, %v5834
      %5836 = vset.pattern.permute.xlu0 11
      %5837 = vperm.xlu0 %5836, %v5762
      %v5838 = vpop.permute.xlu0 %5837
      %v5840 = vmul.f32 %v5838, %v5829
      %v5841 = vadd.f32 %v5835, %v5840
      %v5842 = vmul.f32 %v5838, %v5827
      %v5843 = vadd.f32 %v5825, %v5842
      %v5844 = vmul.f32 %v5832, %v5829
      %v5845 = vsub.f32 %v5843, %v5844
      %s5846 = scalar_lea.vmem %s819, 32
      %v5847 = vld [vmem:[%s5846] sm:$0xff]
      %s5848 = scalar_lea.vmem %s824, 32
      %v5849 = vld [vmem:[%s5848] sm:$0xff]
      %5850 = vset.pattern.permute.xlu0 4
      %5851 = vperm.xlu0 %5850, %v5752
      %v5852 = vpop.permute.xlu0 %5851
      %v5854 = vmul.f32 %v5852, %v5847
      %v5855 = vadd.f32 %v5841, %v5854
      %5856 = vset.pattern.permute.xlu0 12
      %5857 = vperm.xlu0 %5856, %v5762
      %v5858 = vpop.permute.xlu0 %5857
      %v5860 = vmul.f32 %v5858, %v5849
      %v5861 = vadd.f32 %v5855, %v5860
      %v5862 = vmul.f32 %v5858, %v5847
      %v5863 = vadd.f32 %v5845, %v5862
      %v5864 = vmul.f32 %v5852, %v5849
      %v5865 = vsub.f32 %v5863, %v5864
      %s5866 = scalar_lea.vmem %s819, 40
      %v5867 = vld [vmem:[%s5866] sm:$0xff]
      %s5868 = scalar_lea.vmem %s824, 40
      %v5869 = vld [vmem:[%s5868] sm:$0xff]
      %5870 = vset.pattern.permute.xlu0 5
      %5871 = vperm.xlu0 %5870, %v5752
      %v5872 = vpop.permute.xlu0 %5871
      %v5874 = vmul.f32 %v5872, %v5867
      %v5875 = vadd.f32 %v5861, %v5874
      %5876 = vset.pattern.permute.xlu0 13
      %5877 = vperm.xlu0 %5876, %v5762
      %v5878 = vpop.permute.xlu0 %5877
      %v5880 = vmul.f32 %v5878, %v5869
      %v5881 = vadd.f32 %v5875, %v5880
      %v5882 = vmul.f32 %v5878, %v5867
      %v5883 = vadd.f32 %v5865, %v5882
      %v5884 = vmul.f32 %v5872, %v5869
      %v5885 = vsub.f32 %v5883, %v5884
      %s5886 = scalar_lea.vmem %s819, 48
      %v5887 = vld [vmem:[%s5886] sm:$0xff]
      %s5888 = scalar_lea.vmem %s824, 48
      %v5889 = vld [vmem:[%s5888] sm:$0xff]
      %5890 = vset.pattern.permute.xlu0 6
      %5891 = vperm.xlu0 %5890, %v5752
      %v5892 = vpop.permute.xlu0 %5891
      %v5894 = vmul.f32 %v5892, %v5887
      %v5895 = vadd.f32 %v5881, %v5894
      %5896 = vset.pattern.permute.xlu0 14
      %5897 = vperm.xlu0 %5896, %v5762
      %v5898 = vpop.permute.xlu0 %5897
      %v5900 = vmul.f32 %v5898, %v5889
      %v5901 = vadd.f32 %v5895, %v5900
      %v5902 = vmul.f32 %v5898, %v5887
      %v5903 = vadd.f32 %v5885, %v5902
      %v5904 = vmul.f32 %v5892, %v5889
      %v5905 = vsub.f32 %v5903, %v5904
      %s5906 = scalar_lea.vmem %s819, 56
      %v5907 = vld [vmem:[%s5906] sm:$0xff]
      %s5908 = scalar_lea.vmem %s824, 56
      %v5909 = vld [vmem:[%s5908] sm:$0xff]
      %5910 = vset.pattern.permute.xlu0 7
      %5911 = vperm.xlu0 %5910, %v5752
      %v5912 = vpop.permute.xlu0 %5911
      %v5914 = vmul.f32 %v5912, %v5907
      %v5915 = vadd.f32 %v5901, %v5914
      %5916 = vset.pattern.permute.xlu0 15
      %5917 = vperm.xlu0 %5916, %v5762
      %v5918 = vpop.permute.xlu0 %5917
      %v5920 = vmul.f32 %v5918, %v5909
      %v5921 = vadd.f32 %v5915, %v5920
      %v5922 = vmul.f32 %v5918, %v5907
      %v5923 = vadd.f32 %v5905, %v5922
      %v5924 = vmul.f32 %v5912, %v5909
      %v5925 = vsub.f32 %v5923, %v5924
      %s5926 = scalar_lea.vmem %s819, 64
      %v5927 = vld [vmem:[%s5926] sm:$0xff]
      %s5928 = scalar_lea.vmem %s824, 64
      %v5929 = vld [vmem:[%s5928] sm:$0xff]
      %5931 = vset.pattern.permute.xlu0 0
      %5932 = vperm.xlu0 %5931, %v5753
      %v5933 = vpop.permute.xlu0 %5932
      %v5935 = vmul.f32 %v5933, %v5927
      %v5936 = vadd.f32 %v5921, %v5935
      %5938 = vset.pattern.permute.xlu0 8
      %5939 = vperm.xlu0 %5938, %v5763
      %v5940 = vpop.permute.xlu0 %5939
      %v5942 = vmul.f32 %v5940, %v5929
      %v5943 = vadd.f32 %v5936, %v5942
      %v5944 = vmul.f32 %v5940, %v5927
      %v5945 = vadd.f32 %v5925, %v5944
      %v5946 = vmul.f32 %v5933, %v5929
      %v5947 = vsub.f32 %v5945, %v5946
      %s5948 = scalar_lea.vmem %s819, 72
      %v5949 = vld [vmem:[%s5948] sm:$0xff]
      %s5950 = scalar_lea.vmem %s824, 72
      %v5951 = vld [vmem:[%s5950] sm:$0xff]
      %5952 = vset.pattern.permute.xlu0 1
      %5953 = vperm.xlu0 %5952, %v5753
      %v5954 = vpop.permute.xlu0 %5953
      %v5956 = vmul.f32 %v5954, %v5949
      %v5957 = vadd.f32 %v5943, %v5956
      %5958 = vset.pattern.permute.xlu0 9
      %5959 = vperm.xlu0 %5958, %v5763
      %v5960 = vpop.permute.xlu0 %5959
      %v5962 = vmul.f32 %v5960, %v5951
      %v5963 = vadd.f32 %v5957, %v5962
      %v5964 = vmul.f32 %v5960, %v5949
      %v5965 = vadd.f32 %v5947, %v5964
      %v5966 = vmul.f32 %v5954, %v5951
      %v5967 = vsub.f32 %v5965, %v5966
      %s5968 = scalar_lea.vmem %s819, 80
      %v5969 = vld [vmem:[%s5968] sm:$0xff]
      %s5970 = scalar_lea.vmem %s824, 80
      %v5971 = vld [vmem:[%s5970] sm:$0xff]
      %5972 = vset.pattern.permute.xlu0 2
      %5973 = vperm.xlu0 %5972, %v5753
      %v5974 = vpop.permute.xlu0 %5973
      %v5976 = vmul.f32 %v5974, %v5969
      %v5977 = vadd.f32 %v5963, %v5976
      %5978 = vset.pattern.permute.xlu0 10
      %5979 = vperm.xlu0 %5978, %v5763
      %v5980 = vpop.permute.xlu0 %5979
      %v5982 = vmul.f32 %v5980, %v5971
      %v5983 = vadd.f32 %v5977, %v5982
      %v5984 = vmul.f32 %v5980, %v5969
      %v5985 = vadd.f32 %v5967, %v5984
      %v5986 = vmul.f32 %v5974, %v5971
      %v5987 = vsub.f32 %v5985, %v5986
      %s5988 = scalar_lea.vmem %s819, 88
      %v5989 = vld [vmem:[%s5988] sm:$0xff]
      %s5990 = scalar_lea.vmem %s824, 88
      %v5991 = vld [vmem:[%s5990] sm:$0xff]
      %5992 = vset.pattern.permute.xlu0 3
      %5993 = vperm.xlu0 %5992, %v5753
      %v5994 = vpop.permute.xlu0 %5993
      %v5996 = vmul.f32 %v5994, %v5989
      %v5997 = vadd.f32 %v5983, %v5996
      %5998 = vset.pattern.permute.xlu0 11
      %5999 = vperm.xlu0 %5998, %v5763
      %v6000 = vpop.permute.xlu0 %5999
      %v6002 = vmul.f32 %v6000, %v5991
      %v6003 = vadd.f32 %v5997, %v6002
      %v6004 = vmul.f32 %v6000, %v5989
      %v6005 = vadd.f32 %v5987, %v6004
      %v6006 = vmul.f32 %v5994, %v5991
      %v6007 = vsub.f32 %v6005, %v6006
      %s6008 = scalar_lea.vmem %s819, 96
      %v6009 = vld [vmem:[%s6008] sm:$0xff]
      %s6010 = scalar_lea.vmem %s824, 96
      %v6011 = vld [vmem:[%s6010] sm:$0xff]
      %6012 = vset.pattern.permute.xlu0 4
      %6013 = vperm.xlu0 %6012, %v5753
      %v6014 = vpop.permute.xlu0 %6013
      %v6016 = vmul.f32 %v6014, %v6009
      %v6017 = vadd.f32 %v6003, %v6016
      %6018 = vset.pattern.permute.xlu0 12
      %6019 = vperm.xlu0 %6018, %v5763
      %v6020 = vpop.permute.xlu0 %6019
      %v6022 = vmul.f32 %v6020, %v6011
      %v6023 = vadd.f32 %v6017, %v6022
      %v6024 = vmul.f32 %v6020, %v6009
      %v6025 = vadd.f32 %v6007, %v6024
      %v6026 = vmul.f32 %v6014, %v6011
      %v6027 = vsub.f32 %v6025, %v6026
      %s6028 = scalar_lea.vmem %s819, 104
      %v6029 = vld [vmem:[%s6028] sm:$0xff]
      %s6030 = scalar_lea.vmem %s824, 104
      %v6031 = vld [vmem:[%s6030] sm:$0xff]
      %6032 = vset.pattern.permute.xlu0 5
      %6033 = vperm.xlu0 %6032, %v5753
      %v6034 = vpop.permute.xlu0 %6033
      %v6036 = vmul.f32 %v6034, %v6029
      %v6037 = vadd.f32 %v6023, %v6036
      %6038 = vset.pattern.permute.xlu0 13
      %6039 = vperm.xlu0 %6038, %v5763
      %v6040 = vpop.permute.xlu0 %6039
      %v6042 = vmul.f32 %v6040, %v6031
      %v6043 = vadd.f32 %v6037, %v6042
      %v6044 = vmul.f32 %v6040, %v6029
      %v6045 = vadd.f32 %v6027, %v6044
      %v6046 = vmul.f32 %v6034, %v6031
      %v6047 = vsub.f32 %v6045, %v6046
      %s6048 = scalar_lea.vmem %s819, 112
      %v6049 = vld [vmem:[%s6048] sm:$0xff]
      %s6050 = scalar_lea.vmem %s824, 112
      %v6051 = vld [vmem:[%s6050] sm:$0xff]
      %6052 = vset.pattern.permute.xlu0 6
      %6053 = vperm.xlu0 %6052, %v5753
      %v6054 = vpop.permute.xlu0 %6053
      %v6056 = vmul.f32 %v6054, %v6049
      %v6057 = vadd.f32 %v6043, %v6056
      %6058 = vset.pattern.permute.xlu0 14
      %6059 = vperm.xlu0 %6058, %v5763
      %v6060 = vpop.permute.xlu0 %6059
      %v6062 = vmul.f32 %v6060, %v6051
      %v6063 = vadd.f32 %v6057, %v6062
      %v6064 = vmul.f32 %v6060, %v6049
      %v6065 = vadd.f32 %v6047, %v6064
      %v6066 = vmul.f32 %v6054, %v6051
      %v6067 = vsub.f32 %v6065, %v6066
      %s6068 = scalar_lea.vmem %s819, 120
      %v6069 = vld [vmem:[%s6068] sm:$0xff]
      %s6070 = scalar_lea.vmem %s824, 120
      %v6071 = vld [vmem:[%s6070] sm:$0xff]
      %6072 = vset.pattern.permute.xlu0 7
      %6073 = vperm.xlu0 %6072, %v5753
      %v6074 = vpop.permute.xlu0 %6073
      %v6076 = vmul.f32 %v6074, %v6069
      %v6077 = vadd.f32 %v6063, %v6076
      %6078 = vset.pattern.permute.xlu0 15
      %6079 = vperm.xlu0 %6078, %v5763
      %v6080 = vpop.permute.xlu0 %6079
      %v6082 = vmul.f32 %v6080, %v6071
      %v6083 = vadd.f32 %v6077, %v6082
      %v6084 = vmul.f32 %v6080, %v6069
      %v6085 = vadd.f32 %v6067, %v6084
      %v6086 = vmul.f32 %v6074, %v6071
      %v6087 = vsub.f32 %v6085, %v6086
      %v6088 = vld [vmem:[%s13] sm:$0xff]
      %v6089 = vld [vmem:[%s13 + $0x8] sm:$0xff]
      %v6090 = vld [vmem:[%s14] sm:$0xff]
      %v6091 = vld [vmem:[%s14 + $0x8] sm:$0xff]
      %vm6092 = vcmask 130048
      %v6094 = vsel %vm6092, %v6087, 0
      %6096 = vmatprep.subr.mxu0 0.0
      %6097 = vmatpush1.msra.mxu0 %v6090
      %6098 = vmatprep.subr.mxu0 0.0
      %6099 = vmatpush1.msra.mxu0 %v6091
      %6100 = vmatprep.subr.mxu0 0.0
      %6101 = vmatpush1.msra.mxu0 0.0
      %6102 = vmatprep.subr.mxu0 0.0
      %6103 = vmatpush1.msra.mxu0 0.0
      %6104 = vmatprep.subr.mxu0 0.0
      %6105 = vmatpush1.msra.mxu0 0.0
      %6106 = vmatprep.subr.mxu0 0.0
      %6107 = vmatpush1.msra.mxu0 0.0
      %6108 = vmatprep.subr.mxu0 0.0
      %6109 = vmatpush1.msra.mxu0 0.0
      %6110 = vmatprep.subr.mxu0 0.0
      %6111 = vmatpush1.msra.mxu0 0.0
      %6112 = vmatprep.subr.mxu0 0.0
      %6113 = vmatpush1.msra.mxu0 0.0
      %6114 = vmatprep.subr.mxu0 0.0
      %6115 = vmatpush1.msra.mxu0 0.0
      %6116 = vmatprep.subr.mxu0 0.0
      %6117 = vmatpush1.msra.mxu0 0.0
      %6118 = vmatprep.subr.mxu0 0.0
      %6119 = vmatpush1.msra.mxu0 0.0
      %6120 = vmatprep.subr.mxu0 0.0
      %6121 = vmatpush1.msra.mxu0 0.0
      %6122 = vmatprep.subr.mxu0 0.0
      %6123 = vmatpush1.msra.mxu0 0.0
      %6124 = vmatprep.subr.mxu0 0.0
      %6125 = vmatpush1.msra.mxu0 0.0
      %6126 = vmatprep.subr.mxu0 0.0
      %6127 = vmatpush1.msra.mxu0 0.0
      %6128 = vmatprep.subr.mxu0 0.0
      %6129 = vmatpush1.msra.mxu0 0.0
      %6130 = vmatprep.subr.mxu0 0.0
      %6131 = vmatpush1.msra.mxu0 0.0
      %6132 = vmatprep.subr.mxu0 0.0
      %6133 = vmatpush1.msra.mxu0 0.0
      %6134 = vmatprep.subr.mxu0 0.0
      %6135 = vmatpush1.msra.mxu0 0.0
      %6136 = vmatprep.subr.mxu0 0.0
      %6137 = vmatpush1.msra.mxu0 0.0
      %6138 = vmatprep.subr.mxu0 0.0
      %6139 = vmatpush1.msra.mxu0 0.0
      %6140 = vmatprep.subr.mxu0 0.0
      %6141 = vmatpush1.msra.mxu0 0.0
      %6142 = vmatprep.subr.mxu0 0.0
      %6143 = vmatpush1.msra.mxu0 0.0
      %6144 = vmatprep.subr.mxu0 0.0
      %6145 = vmatpush1.msra.mxu0 0.0
      %6146 = vmatprep.subr.mxu0 0.0
      %6147 = vmatpush1.msra.mxu0 0.0
      %6148 = vmatprep.subr.mxu0 0.0
      %6149 = vmatpush1.msra.mxu0 0.0
      %6150 = vmatprep.subr.mxu0 0.0
      %6151 = vmatpush1.msra.mxu0 0.0
      %6152 = vmatprep.subr.mxu0 0.0
      %6153 = vmatpush1.msra.mxu0 0.0
      %6154 = vmatprep.subr.mxu0 0.0
      %6155 = vmatpush1.msra.mxu0 0.0
      %6156 = vmatprep.subr.mxu0 0.0
      %6157 = vmatpush1.msra.mxu0 0.0
      %6158 = vmatprep.subr.mxu0 0.0
      %6159 = vmatpush1.msra.mxu0 0.0
      %6160 = vmatprep.mubr.f32.mxu0 0.0
      %6161 = vmatmul.mubr.f32.gmra.mrb[0].mxu0 %v6094
      %v6162 = vpop.f32.mrb[0].mxu0
      %v6163 = vadd.f32 0.0, %v6162
      %v6164 = vpop.f32.mrb[0].mxu0
      %6165 = vdwg.mxu0
      %v6167 = vsel %vm6092, %v6083, 0
      %6169 = vmatprep.subr.mxu0 0.0
      %6170 = vmatpush1.msra.mxu0 %v6088
      %6171 = vmatprep.subr.mxu0 0.0
      %6172 = vmatpush1.msra.mxu0 %v6089
      %6173 = vmatprep.subr.mxu0 0.0
      %6174 = vmatpush1.msra.mxu0 0.0
      %6175 = vmatprep.subr.mxu0 0.0
      %6176 = vmatpush1.msra.mxu0 0.0
      %6177 = vmatprep.subr.mxu0 0.0
      %6178 = vmatpush1.msra.mxu0 0.0
      %6179 = vmatprep.subr.mxu0 0.0
      %6180 = vmatpush1.msra.mxu0 0.0
      %6181 = vmatprep.subr.mxu0 0.0
      %6182 = vmatpush1.msra.mxu0 0.0
      %6183 = vmatprep.subr.mxu0 0.0
      %6184 = vmatpush1.msra.mxu0 0.0
      %6185 = vmatprep.subr.mxu0 0.0
      %6186 = vmatpush1.msra.mxu0 0.0
      %6187 = vmatprep.subr.mxu0 0.0
      %6188 = vmatpush1.msra.mxu0 0.0
      %6189 = vmatprep.subr.mxu0 0.0
      %6190 = vmatpush1.msra.mxu0 0.0
      %6191 = vmatprep.subr.mxu0 0.0
      %6192 = vmatpush1.msra.mxu0 0.0
      %6193 = vmatprep.subr.mxu0 0.0
      %6194 = vmatpush1.msra.mxu0 0.0
      %6195 = vmatprep.subr.mxu0 0.0
      %6196 = vmatpush1.msra.mxu0 0.0
      %6197 = vmatprep.subr.mxu0 0.0
      %6198 = vmatpush1.msra.mxu0 0.0
      %6199 = vmatprep.subr.mxu0 0.0
      %6200 = vmatpush1.msra.mxu0 0.0
      %6201 = vmatprep.subr.mxu0 0.0
      %6202 = vmatpush1.msra.mxu0 0.0
      %6203 = vmatprep.subr.mxu0 0.0
      %6204 = vmatpush1.msra.mxu0 0.0
      %6205 = vmatprep.subr.mxu0 0.0
      %6206 = vmatpush1.msra.mxu0 0.0
      %6207 = vmatprep.subr.mxu0 0.0
      %6208 = vmatpush1.msra.mxu0 0.0
      %6209 = vmatprep.subr.mxu0 0.0
      %6210 = vmatpush1.msra.mxu0 0.0
      %6211 = vmatprep.subr.mxu0 0.0
      %6212 = vmatpush1.msra.mxu0 0.0
      %6213 = vmatprep.subr.mxu0 0.0
      %6214 = vmatpush1.msra.mxu0 0.0
      %6215 = vmatprep.subr.mxu0 0.0
      %6216 = vmatpush1.msra.mxu0 0.0
      %6217 = vmatprep.subr.mxu0 0.0
      %6218 = vmatpush1.msra.mxu0 0.0
      %6219 = vmatprep.subr.mxu0 0.0
      %6220 = vmatpush1.msra.mxu0 0.0
      %6221 = vmatprep.subr.mxu0 0.0
      %6222 = vmatpush1.msra.mxu0 0.0
      %6223 = vmatprep.subr.mxu0 0.0
      %6224 = vmatpush1.msra.mxu0 0.0
      %6225 = vmatprep.subr.mxu0 0.0
      %6226 = vmatpush1.msra.mxu0 0.0
      %6227 = vmatprep.subr.mxu0 0.0
      %6228 = vmatpush1.msra.mxu0 0.0
      %6229 = vmatprep.subr.mxu0 0.0
      %6230 = vmatpush1.msra.mxu0 0.0
      %6231 = vmatprep.subr.mxu0 0.0
      %6232 = vmatpush1.msra.mxu0 0.0
      %6233 = vmatprep.mubr.f32.mxu0 0.0
      %6234 = vmatmul.mubr.f32.gmra.mrb[0].mxu0 %v6167
      %v6235 = vpop.f32.mrb[0].mxu0
      %v6236 = vadd.f32 %v6163, %v6235
      %v6237 = vpop.f32.mrb[0].mxu0
      %6238 = vdwg.mxu0
      %v6239 = vld [vmem:[%s15] sm:$0x1]
      %v6241 = vlaneseq
      %v6242 = vshrl.u32 %v6241, 7
      %v6243 = vsub.s32 0, %v6242
      %v6244 = vrot.slane %v6239, %v6243
      %v6246 = vadd.f32 %v6236, %v6244
      %v6247 = vmax.f32 %v6246, 0.0
      %v6248 = vld [vmem:[%s16] sm:$0xff]
      %v6249 = vld [vmem:[%s16 + $0x8] sm:$0xff]
      %v6250 = vld [vmem:[%s16 + $0x10] sm:$0xff]
      %v6251 = vld [vmem:[%s16 + $0x18] sm:$0xff]
      %v6252 = vld [vmem:[%s16 + $0x20] sm:$0xff]
      %v6253 = vld [vmem:[%s16 + $0x28] sm:$0xff]
      %v6254 = vld [vmem:[%s16 + $0x30] sm:$0xff]
      %v6255 = vld [vmem:[%s16 + $0x38] sm:$0xff]
      %v6256 = vld [vmem:[%s16 + $0x40] sm:$0xff]
      %v6257 = vld [vmem:[%s16 + $0x48] sm:$0xff]
      %v6258 = vld [vmem:[%s16 + $0x50] sm:$0xff]
      %v6259 = vld [vmem:[%s16 + $0x58] sm:$0xff]
      %v6260 = vld [vmem:[%s16 + $0x60] sm:$0xff]
      %v6261 = vld [vmem:[%s16 + $0x68] sm:$0xff]
      %v6262 = vld [vmem:[%s16 + $0x70] sm:$0xff]
      %v6263 = vld [vmem:[%s16 + $0x78] sm:$0xff]
      %v6264 = vld [vmem:[%s17] sm:$0x1]
      %v6266 = vlaneseq
      %v6267 = vshrl.u32 %v6266, 7
      %v6268 = vsub.s32 0, %v6267
      %v6269 = vrot.slane %v6264, %v6268
      %6271 = vmatprep.subr.mxu0 0.0
      %6272 = vmatpush1.msra.mxu0 %v6248
      %6273 = vmatprep.subr.mxu0 0.0
      %6274 = vmatpush1.msra.mxu0 %v6249
      %6275 = vmatprep.subr.mxu0 0.0
      %6276 = vmatpush1.msra.mxu0 %v6250
      %6277 = vmatprep.subr.mxu0 0.0
      %6278 = vmatpush1.msra.mxu0 %v6251
      %6279 = vmatprep.subr.mxu0 0.0
      %6280 = vmatpush1.msra.mxu0 %v6252
      %6281 = vmatprep.subr.mxu0 0.0
      %6282 = vmatpush1.msra.mxu0 %v6253
      %6283 = vmatprep.subr.mxu0 0.0
      %6284 = vmatpush1.msra.mxu0 %v6254
      %6285 = vmatprep.subr.mxu0 0.0
      %6286 = vmatpush1.msra.mxu0 %v6255
      %6287 = vmatprep.subr.mxu0 0.0
      %6288 = vmatpush1.msra.mxu0 %v6256
      %6289 = vmatprep.subr.mxu0 0.0
      %6290 = vmatpush1.msra.mxu0 %v6257
      %6291 = vmatprep.subr.mxu0 0.0
      %6292 = vmatpush1.msra.mxu0 %v6258
      %6293 = vmatprep.subr.mxu0 0.0
      %6294 = vmatpush1.msra.mxu0 %v6259
      %6295 = vmatprep.subr.mxu0 0.0
      %6296 = vmatpush1.msra.mxu0 %v6260
      %6297 = vmatprep.subr.mxu0 0.0
      %6298 = vmatpush1.msra.mxu0 %v6261
      %6299 = vmatprep.subr.mxu0 0.0
      %6300 = vmatpush1.msra.mxu0 %v6262
      %6301 = vmatprep.subr.mxu0 0.0
      %6302 = vmatpush1.msra.mxu0 %v6263
      %6303 = vmatprep.subr.mxu0 0.0
      %6304 = vmatpush1.msra.mxu0 0.0
      %6305 = vmatprep.subr.mxu0 0.0
      %6306 = vmatpush1.msra.mxu0 0.0
      %6307 = vmatprep.subr.mxu0 0.0
      %6308 = vmatpush1.msra.mxu0 0.0
      %6309 = vmatprep.subr.mxu0 0.0
      %6310 = vmatpush1.msra.mxu0 0.0
      %6311 = vmatprep.subr.mxu0 0.0
      %6312 = vmatpush1.msra.mxu0 0.0
      %6313 = vmatprep.subr.mxu0 0.0
      %6314 = vmatpush1.msra.mxu0 0.0
      %6315 = vmatprep.subr.mxu0 0.0
      %6316 = vmatpush1.msra.mxu0 0.0
      %6317 = vmatprep.subr.mxu0 0.0
      %6318 = vmatpush1.msra.mxu0 0.0
      %6319 = vmatprep.subr.mxu0 0.0
      %6320 = vmatpush1.msra.mxu0 0.0
      %6321 = vmatprep.subr.mxu0 0.0
      %6322 = vmatpush1.msra.mxu0 0.0
      %6323 = vmatprep.subr.mxu0 0.0
      %6324 = vmatpush1.msra.mxu0 0.0
      %6325 = vmatprep.subr.mxu0 0.0
      %6326 = vmatpush1.msra.mxu0 0.0
      %6327 = vmatprep.subr.mxu0 0.0
      %6328 = vmatpush1.msra.mxu0 0.0
      %6329 = vmatprep.subr.mxu0 0.0
      %6330 = vmatpush1.msra.mxu0 0.0
      %6331 = vmatprep.subr.mxu0 0.0
      %6332 = vmatpush1.msra.mxu0 0.0
      %6333 = vmatprep.subr.mxu0 0.0
      %6334 = vmatpush1.msra.mxu0 0.0
      %6335 = vmatprep.mubr.f32.mxu0 0.0
      %6336 = vmatmul.mubr.f32.gmra.mrb[0].mxu0 %v6247
      %v6337 = vpop.f32.mrb[0].mxu0
      %v6338 = vadd.f32 %v6269, %v6337
      %v6339 = vpop.f32.mrb[0].mxu0
      %6340 = vdwg.mxu0
      %v6341 = vmax.f32 %v6338, 0.0
      %v6342 = vld [vmem:[%s18] sm:$0xff]
      %v6343 = vld [vmem:[%s18 + $0x8] sm:$0xff]
      %v6344 = vld [vmem:[%s18 + $0x10] sm:$0xff]
      %v6345 = vld [vmem:[%s18 + $0x18] sm:$0xff]
      %v6346 = vld [vmem:[%s18 + $0x20] sm:$0xff]
      %v6347 = vld [vmem:[%s18 + $0x28] sm:$0xff]
      %v6348 = vld [vmem:[%s18 + $0x30] sm:$0xff]
      %v6349 = vld [vmem:[%s18 + $0x38] sm:$0xff]
      %v6350 = vld [vmem:[%s18 + $0x40] sm:$0xff]
      %v6351 = vld [vmem:[%s18 + $0x48] sm:$0xff]
      %v6352 = vld [vmem:[%s18 + $0x50] sm:$0xff]
      %v6353 = vld [vmem:[%s18 + $0x58] sm:$0xff]
      %v6354 = vld [vmem:[%s18 + $0x60] sm:$0xff]
      %v6355 = vld [vmem:[%s18 + $0x68] sm:$0xff]
      %v6356 = vld [vmem:[%s18 + $0x70] sm:$0xff]
      %v6357 = vld [vmem:[%s18 + $0x78] sm:$0xff]
      %v6358 = vld [vmem:[%s19] sm:$0x1]
      %v6360 = vlaneseq
      %v6361 = vshrl.u32 %v6360, 7
      %v6362 = vsub.s32 0, %v6361
      %v6363 = vrot.slane %v6358, %v6362
      %6365 = vmatprep.subr.mxu0 0.0
      %6366 = vmatpush1.msra.mxu0 %v6342
      %6367 = vmatprep.subr.mxu0 0.0
      %6368 = vmatpush1.msra.mxu0 %v6343
      %6369 = vmatprep.subr.mxu0 0.0
      %6370 = vmatpush1.msra.mxu0 %v6344
      %6371 = vmatprep.subr.mxu0 0.0
      %6372 = vmatpush1.msra.mxu0 %v6345
      %6373 = vmatprep.subr.mxu0 0.0
      %6374 = vmatpush1.msra.mxu0 %v6346
      %6375 = vmatprep.subr.mxu0 0.0
      %6376 = vmatpush1.msra.mxu0 %v6347
      %6377 = vmatprep.subr.mxu0 0.0
      %6378 = vmatpush1.msra.mxu0 %v6348
      %6379 = vmatprep.subr.mxu0 0.0
      %6380 = vmatpush1.msra.mxu0 %v6349
      %6381 = vmatprep.subr.mxu0 0.0
      %6382 = vmatpush1.msra.mxu0 %v6350
      %6383 = vmatprep.subr.mxu0 0.0
      %6384 = vmatpush1.msra.mxu0 %v6351
      %6385 = vmatprep.subr.mxu0 0.0
      %6386 = vmatpush1.msra.mxu0 %v6352
      %6387 = vmatprep.subr.mxu0 0.0
      %6388 = vmatpush1.msra.mxu0 %v6353
      %6389 = vmatprep.subr.mxu0 0.0
      %6390 = vmatpush1.msra.mxu0 %v6354
      %6391 = vmatprep.subr.mxu0 0.0
      %6392 = vmatpush1.msra.mxu0 %v6355
      %6393 = vmatprep.subr.mxu0 0.0
      %6394 = vmatpush1.msra.mxu0 %v6356
      %6395 = vmatprep.subr.mxu0 0.0
      %6396 = vmatpush1.msra.mxu0 %v6357
      %6397 = vmatprep.subr.mxu0 0.0
      %6398 = vmatpush1.msra.mxu0 0.0
      %6399 = vmatprep.subr.mxu0 0.0
      %6400 = vmatpush1.msra.mxu0 0.0
      %6401 = vmatprep.subr.mxu0 0.0
      %6402 = vmatpush1.msra.mxu0 0.0
      %6403 = vmatprep.subr.mxu0 0.0
      %6404 = vmatpush1.msra.mxu0 0.0
      %6405 = vmatprep.subr.mxu0 0.0
      %6406 = vmatpush1.msra.mxu0 0.0
      %6407 = vmatprep.subr.mxu0 0.0
      %6408 = vmatpush1.msra.mxu0 0.0
      %6409 = vmatprep.subr.mxu0 0.0
      %6410 = vmatpush1.msra.mxu0 0.0
      %6411 = vmatprep.subr.mxu0 0.0
      %6412 = vmatpush1.msra.mxu0 0.0
      %6413 = vmatprep.subr.mxu0 0.0
      %6414 = vmatpush1.msra.mxu0 0.0
      %6415 = vmatprep.subr.mxu0 0.0
      %6416 = vmatpush1.msra.mxu0 0.0
      %6417 = vmatprep.subr.mxu0 0.0
      %6418 = vmatpush1.msra.mxu0 0.0
      %6419 = vmatprep.subr.mxu0 0.0
      %6420 = vmatpush1.msra.mxu0 0.0
      %6421 = vmatprep.subr.mxu0 0.0
      %6422 = vmatpush1.msra.mxu0 0.0
      %6423 = vmatprep.subr.mxu0 0.0
      %6424 = vmatpush1.msra.mxu0 0.0
      %6425 = vmatprep.subr.mxu0 0.0
      %6426 = vmatpush1.msra.mxu0 0.0
      %6427 = vmatprep.subr.mxu0 0.0
      %6428 = vmatpush1.msra.mxu0 0.0
      %6429 = vmatprep.mubr.f32.mxu0 0.0
      %6430 = vmatmul.mubr.f32.gmra.mrb[0].mxu0 %v6341
      %v6431 = vpop.f32.mrb[0].mxu0
      %v6432 = vadd.f32 %v6363, %v6431
      %v6433 = vpop.f32.mrb[0].mxu0
      %6434 = vdwg.mxu0
      %v6435 = vld [vmem:[%s20] sm:$0xff]
      %v6436 = vld [vmem:[%s20 + $0x8] sm:$0xff]
      %v6437 = vld [vmem:[%s21] sm:$0xff]
      %v6438 = vld [vmem:[%s21 + $0x8] sm:$0xff]
      %6439 = vmatprep.subr.mxu0 0.0
      %6440 = vmatpush1.msra.mxu0 %v6437
      %6441 = vmatprep.subr.mxu0 0.0
      %6442 = vmatpush1.msra.mxu0 %v6438
      %6443 = vmatprep.subr.mxu0 0.0
      %6444 = vmatpush1.msra.mxu0 0.0
      %6445 = vmatprep.subr.mxu0 0.0
      %6446 = vmatpush1.msra.mxu0 0.0
      %6447 = vmatprep.subr.mxu0 0.0
      %6448 = vmatpush1.msra.mxu0 0.0
      %6449 = vmatprep.subr.mxu0 0.0
      %6450 = vmatpush1.msra.mxu0 0.0
      %6451 = vmatprep.subr.mxu0 0.0
      %6452 = vmatpush1.msra.mxu0 0.0
      %6453 = vmatprep.subr.mxu0 0.0
      %6454 = vmatpush1.msra.mxu0 0.0
      %6455 = vmatprep.subr.mxu0 0.0
      %6456 = vmatpush1.msra.mxu0 0.0
      %6457 = vmatprep.subr.mxu0 0.0
      %6458 = vmatpush1.msra.mxu0 0.0
      %6459 = vmatprep.subr.mxu0 0.0
      %6460 = vmatpush1.msra.mxu0 0.0
      %6461 = vmatprep.subr.mxu0 0.0
      %6462 = vmatpush1.msra.mxu0 0.0
      %6463 = vmatprep.subr.mxu0 0.0
      %6464 = vmatpush1.msra.mxu0 0.0
      %6465 = vmatprep.subr.mxu0 0.0
      %6466 = vmatpush1.msra.mxu0 0.0
      %6467 = vmatprep.subr.mxu0 0.0
      %6468 = vmatpush1.msra.mxu0 0.0
      %6469 = vmatprep.subr.mxu0 0.0
      %6470 = vmatpush1.msra.mxu0 0.0
      %6471 = vmatprep.subr.mxu0 0.0
      %6472 = vmatpush1.msra.mxu0 0.0
      %6473 = vmatprep.subr.mxu0 0.0
      %6474 = vmatpush1.msra.mxu0 0.0
      %6475 = vmatprep.subr.mxu0 0.0
      %6476 = vmatpush1.msra.mxu0 0.0
      %6477 = vmatprep.subr.mxu0 0.0
      %6478 = vmatpush1.msra.mxu0 0.0
      %6479 = vmatprep.subr.mxu0 0.0
      %6480 = vmatpush1.msra.mxu0 0.0
      %6481 = vmatprep.subr.mxu0 0.0
      %6482 = vmatpush1.msra.mxu0 0.0
      %6483 = vmatprep.subr.mxu0 0.0
      %6484 = vmatpush1.msra.mxu0 0.0
      %6485 = vmatprep.subr.mxu0 0.0
      %6486 = vmatpush1.msra.mxu0 0.0
      %6487 = vmatprep.subr.mxu0 0.0
      %6488 = vmatpush1.msra.mxu0 0.0
      %6489 = vmatprep.subr.mxu0 0.0
      %6490 = vmatpush1.msra.mxu0 0.0
      %6491 = vmatprep.subr.mxu0 0.0
      %6492 = vmatpush1.msra.mxu0 0.0
      %6493 = vmatprep.subr.mxu0 0.0
      %6494 = vmatpush1.msra.mxu0 0.0
      %6495 = vmatprep.subr.mxu0 0.0
      %6496 = vmatpush1.msra.mxu0 0.0
      %6497 = vmatprep.subr.mxu0 0.0
      %6498 = vmatpush1.msra.mxu0 0.0
      %6499 = vmatprep.subr.mxu0 0.0
      %6500 = vmatpush1.msra.mxu0 0.0
      %6501 = vmatprep.subr.mxu0 0.0
      %6502 = vmatpush1.msra.mxu0 0.0
      %6503 = vmatprep.mubr.f32.mxu0 0.0
      %6504 = vmatmul.mubr.f32.gmra.mrb[0].mxu0 %v6094
      %v6505 = vpop.f32.mrb[0].mxu0
      %v6506 = vadd.f32 0.0, %v6505
      %v6507 = vpop.f32.mrb[0].mxu0
      %6508 = vdwg.mxu0
      %6509 = vmatprep.subr.mxu0 0.0
      %6510 = vmatpush1.msra.mxu0 %v6435
      %6511 = vmatprep.subr.mxu0 0.0
      %6512 = vmatpush1.msra.mxu0 %v6436
      %6513 = vmatprep.subr.mxu0 0.0
      %6514 = vmatpush1.msra.mxu0 0.0
      %6515 = vmatprep.subr.mxu0 0.0
      %6516 = vmatpush1.msra.mxu0 0.0
      %6517 = vmatprep.subr.mxu0 0.0
      %6518 = vmatpush1.msra.mxu0 0.0
      %6519 = vmatprep.subr.mxu0 0.0
      %6520 = vmatpush1.msra.mxu0 0.0
      %6521 = vmatprep.subr.mxu0 0.0
      %6522 = vmatpush1.msra.mxu0 0.0
      %6523 = vmatprep.subr.mxu0 0.0
      %6524 = vmatpush1.msra.mxu0 0.0
      %6525 = vmatprep.subr.mxu0 0.0
      %6526 = vmatpush1.msra.mxu0 0.0
      %6527 = vmatprep.subr.mxu0 0.0
      %6528 = vmatpush1.msra.mxu0 0.0
      %6529 = vmatprep.subr.mxu0 0.0
      %6530 = vmatpush1.msra.mxu0 0.0
      %6531 = vmatprep.subr.mxu0 0.0
      %6532 = vmatpush1.msra.mxu0 0.0
      %6533 = vmatprep.subr.mxu0 0.0
      %6534 = vmatpush1.msra.mxu0 0.0
      %6535 = vmatprep.subr.mxu0 0.0
      %6536 = vmatpush1.msra.mxu0 0.0
      %6537 = vmatprep.subr.mxu0 0.0
      %6538 = vmatpush1.msra.mxu0 0.0
      %6539 = vmatprep.subr.mxu0 0.0
      %6540 = vmatpush1.msra.mxu0 0.0
      %6541 = vmatprep.subr.mxu0 0.0
      %6542 = vmatpush1.msra.mxu0 0.0
      %6543 = vmatprep.subr.mxu0 0.0
      %6544 = vmatpush1.msra.mxu0 0.0
      %6545 = vmatprep.subr.mxu0 0.0
      %6546 = vmatpush1.msra.mxu0 0.0
      %6547 = vmatprep.subr.mxu0 0.0
      %6548 = vmatpush1.msra.mxu0 0.0
      %6549 = vmatprep.subr.mxu0 0.0
      %6550 = vmatpush1.msra.mxu0 0.0
      %6551 = vmatprep.subr.mxu0 0.0
      %6552 = vmatpush1.msra.mxu0 0.0
      %6553 = vmatprep.subr.mxu0 0.0
      %6554 = vmatpush1.msra.mxu0 0.0
      %6555 = vmatprep.subr.mxu0 0.0
      %6556 = vmatpush1.msra.mxu0 0.0
      %6557 = vmatprep.subr.mxu0 0.0
      %6558 = vmatpush1.msra.mxu0 0.0
      %6559 = vmatprep.subr.mxu0 0.0
      %6560 = vmatpush1.msra.mxu0 0.0
      %6561 = vmatprep.subr.mxu0 0.0
      %6562 = vmatpush1.msra.mxu0 0.0
      %6563 = vmatprep.subr.mxu0 0.0
      %6564 = vmatpush1.msra.mxu0 0.0
      %6565 = vmatprep.subr.mxu0 0.0
      %6566 = vmatpush1.msra.mxu0 0.0
      %6567 = vmatprep.subr.mxu0 0.0
      %6568 = vmatpush1.msra.mxu0 0.0
      %6569 = vmatprep.subr.mxu0 0.0
      %6570 = vmatpush1.msra.mxu0 0.0
      %6571 = vmatprep.subr.mxu0 0.0
      %6572 = vmatpush1.msra.mxu0 0.0
      %6573 = vmatprep.mubr.f32.mxu0 0.0
      %6574 = vmatmul.mubr.f32.gmra.mrb[0].mxu0 %v6167
      %v6575 = vpop.f32.mrb[0].mxu0
      %v6576 = vadd.f32 %v6506, %v6575
      %v6577 = vpop.f32.mrb[0].mxu0
      %6578 = vdwg.mxu0
      %v6579 = vld [vmem:[%s22] sm:$0x1]
      %v6581 = vlaneseq
      %v6582 = vshrl.u32 %v6581, 7
      %v6583 = vsub.s32 0, %v6582
      %v6584 = vrot.slane %v6579, %v6583
      %v6586 = vadd.f32 %v6576, %v6584
      %v6587 = vmax.f32 %v6586, 0.0
      %v6588 = vld [vmem:[%s23] sm:$0xff]
      %v6589 = vld [vmem:[%s23 + $0x8] sm:$0xff]
      %v6590 = vld [vmem:[%s23 + $0x10] sm:$0xff]
      %v6591 = vld [vmem:[%s23 + $0x18] sm:$0xff]
      %v6592 = vld [vmem:[%s23 + $0x20] sm:$0xff]
      %v6593 = vld [vmem:[%s23 + $0x28] sm:$0xff]
      %v6594 = vld [vmem:[%s23 + $0x30] sm:$0xff]
      %v6595 = vld [vmem:[%s23 + $0x38] sm:$0xff]
      %v6596 = vld [vmem:[%s23 + $0x40] sm:$0xff]
      %v6597 = vld [vmem:[%s23 + $0x48] sm:$0xff]
      %v6598 = vld [vmem:[%s23 + $0x50] sm:$0xff]
      %v6599 = vld [vmem:[%s23 + $0x58] sm:$0xff]
      %v6600 = vld [vmem:[%s23 + $0x60] sm:$0xff]
      %v6601 = vld [vmem:[%s23 + $0x68] sm:$0xff]
      %v6602 = vld [vmem:[%s23 + $0x70] sm:$0xff]
      %v6603 = vld [vmem:[%s23 + $0x78] sm:$0xff]
      %v6604 = vld [vmem:[%s24] sm:$0x1]
      %v6606 = vlaneseq
      %v6607 = vshrl.u32 %v6606, 7
      %v6608 = vsub.s32 0, %v6607
      %v6609 = vrot.slane %v6604, %v6608
      %6611 = vmatprep.subr.mxu0 0.0
      %6612 = vmatpush1.msra.mxu0 %v6588
      %6613 = vmatprep.subr.mxu0 0.0
      %6614 = vmatpush1.msra.mxu0 %v6589
      %6615 = vmatprep.subr.mxu0 0.0
      %6616 = vmatpush1.msra.mxu0 %v6590
      %6617 = vmatprep.subr.mxu0 0.0
      %6618 = vmatpush1.msra.mxu0 %v6591
      %6619 = vmatprep.subr.mxu0 0.0
      %6620 = vmatpush1.msra.mxu0 %v6592
      %6621 = vmatprep.subr.mxu0 0.0
      %6622 = vmatpush1.msra.mxu0 %v6593
      %6623 = vmatprep.subr.mxu0 0.0
      %6624 = vmatpush1.msra.mxu0 %v6594
      %6625 = vmatprep.subr.mxu0 0.0
      %6626 = vmatpush1.msra.mxu0 %v6595
      %6627 = vmatprep.subr.mxu0 0.0
      %6628 = vmatpush1.msra.mxu0 %v6596
      %6629 = vmatprep.subr.mxu0 0.0
      %6630 = vmatpush1.msra.mxu0 %v6597
      %6631 = vmatprep.subr.mxu0 0.0
      %6632 = vmatpush1.msra.mxu0 %v6598
      %6633 = vmatprep.subr.mxu0 0.0
      %6634 = vmatpush1.msra.mxu0 %v6599
      %6635 = vmatprep.subr.mxu0 0.0
      %6636 = vmatpush1.msra.mxu0 %v6600
      %6637 = vmatprep.subr.mxu0 0.0
      %6638 = vmatpush1.msra.mxu0 %v6601
      %6639 = vmatprep.subr.mxu0 0.0
      %6640 = vmatpush1.msra.mxu0 %v6602
      %6641 = vmatprep.subr.mxu0 0.0
      %6642 = vmatpush1.msra.mxu0 %v6603
      %6643 = vmatprep.subr.mxu0 0.0
      %6644 = vmatpush1.msra.mxu0 0.0
      %6645 = vmatprep.subr.mxu0 0.0
      %6646 = vmatpush1.msra.mxu0 0.0
      %6647 = vmatprep.subr.mxu0 0.0
      %6648 = vmatpush1.msra.mxu0 0.0
      %6649 = vmatprep.subr.mxu0 0.0
      %6650 = vmatpush1.msra.mxu0 0.0
      %6651 = vmatprep.subr.mxu0 0.0
      %6652 = vmatpush1.msra.mxu0 0.0
      %6653 = vmatprep.subr.mxu0 0.0
      %6654 = vmatpush1.msra.mxu0 0.0
      %6655 = vmatprep.subr.mxu0 0.0
      %6656 = vmatpush1.msra.mxu0 0.0
      %6657 = vmatprep.subr.mxu0 0.0
      %6658 = vmatpush1.msra.mxu0 0.0
      %6659 = vmatprep.subr.mxu0 0.0
      %6660 = vmatpush1.msra.mxu0 0.0
      %6661 = vmatprep.subr.mxu0 0.0
      %6662 = vmatpush1.msra.mxu0 0.0
      %6663 = vmatprep.subr.mxu0 0.0
      %6664 = vmatpush1.msra.mxu0 0.0
      %6665 = vmatprep.subr.mxu0 0.0
      %6666 = vmatpush1.msra.mxu0 0.0
      %6667 = vmatprep.subr.mxu0 0.0
      %6668 = vmatpush1.msra.mxu0 0.0
      %6669 = vmatprep.subr.mxu0 0.0
      %6670 = vmatpush1.msra.mxu0 0.0
      %6671 = vmatprep.subr.mxu0 0.0
      %6672 = vmatpush1.msra.mxu0 0.0
      %6673 = vmatprep.subr.mxu0 0.0
      %6674 = vmatpush1.msra.mxu0 0.0
      %6675 = vmatprep.mubr.f32.mxu0 0.0
      %6676 = vmatmul.mubr.f32.gmra.mrb[0].mxu0 %v6587
      %v6677 = vpop.f32.mrb[0].mxu0
      %v6678 = vadd.f32 %v6609, %v6677
      %v6679 = vpop.f32.mrb[0].mxu0
      %6680 = vdwg.mxu0
      %vm6681 = vcmask 15360
      %v6682 = vsel %vm6681, %v6678, -inf
      %6683 = vmax.xlane.f32.xlu0 %v6682
      %v6684 = vpop.xlane.xlu0 %6683
      %v6685 = vsub.f32 %v6678, %v6684
      %v6686 = vmul.f32 %v6685, 1.442695
      %v6687 = vpow.pop %v6686
      %v6688 = vsel %vm6681, %v6687, 0.0
      %6689 = vadd.xlane.f32.xlu0 %v6688
      %v6690 = vpop.xlane.xlu0 %6689
      %v6691 = vrcp.pop %v6690
      %v6692 = vmul.f32 %v6687, %v6691
      %v6693 = vmul.f32 %v6432, %v6432
      %vm6694 = vcmask 326656
      %v6695 = vsel %vm6694, %v6693, 0.0
      %6696 = vadd.xlane.f32.xlu0 %v6695
      %v6697 = vpop.xlane.xlu0 %6696
      %v6698 = vmax.f32 %v6697, 1e-24
      %v6699 = vrsqrt.pop %v6698
      %v6700 = vmul.f32 %v6699, 3.1622777
      %v6701 = vrsqrt.pop %v6692
      %v6702 = vmul.f32 %v6692, %v6701
      %vm6703 = vcmp.eq.f32.partialorder %v6692, inf
      %v6704 = vsel %vm6703, %v6692, %v6702
      %vm6705 = vcmp.eq.f32.partialorder %v6692, 0.0
      %v6706 = vand.u32 %v6692, 2147483648
      %v6707 = vsel %vm6705, %v6706, %v6704
      %v6708 = vmul.f32 %v6700, %v6707
      %6710 = vset.pattern.permute.xlu0 0
      %6711 = vperm.xlu0 %6710, %v6708
      %v6712 = vpop.permute.xlu0 %6711
      %v6714 = vmul.f32 %v6432, %v6712
      %6715 = vrot.lane.b32.xlu0 %v5753, 16
      %v6716 = vpop.permute.xlu0 %6715
      %6718 = vrot.lane.b32.xlu0 %v5763, 16
      %v6719 = vpop.permute.xlu0 %6718
      %6722 = vrot.lane.b32.xlu0 %v6714, 32
      %v6723 = vpop.permute.xlu0 %6722
      %6726 = vrot.lane.b32.xlu0 %v6692, 72
      %v6727 = vpop.permute.xlu0 %6726
      %v6729 = vsel %vm917, %v5752, %v5762
      %v6730 = vsel %vm6092, %v6729, %v6716
      %vm6731 = vcmask 195584
      %v6732 = vsel %vm6731, %v6730, %v6719
      %v6733 = vsel %vm5654, %v6732, %v6723
      %vm6734 = vcmask 588800
      %v6735 = vsel %vm6734, %v6733, %v6727
      %vm6736 = vcmask 605184
      %v6737 = vsel %vm6736, %v6735, 0.0
      %6738 = vst [vmem:[%s836] sm:$0xff] %v6737
      %p6739 = scmp.lt.s32.totalorder %s36, 1
      %s6740 = scalar_select %p6739, %s36, 1
      %s6741 = smul.addr %s6740, 8
      %s6742 = scalar_lea.vmem %s25, %s6741
      // Predicated region
      $region121: #{dnn_forward.1} parent=119 // pred_check
        %p6743 = pneg %p604
      $region122: #{dnn_forward.1} parent=119 // pred_check_branch
        %6745 = sbr.rel (%p6743) target = $region124
      $region123: #{dnn_forward.1} parent=119 // pred_region
        _
      $region124: #{dnn_forward.1} parent=119 // pred_fallthru
        _
    $region120: #{dnn_forward.1} parent=5 // pred_fallthru
      _
    %p6746 = scmp.le.s32.totalorder 2, %s31
    // Predicated region
    $region125: #{dnn_forward.1} parent=5 // pred_check
      %p6747 = pneg %p6746
    $region126: #{dnn_forward.1} parent=5 // pred_check_branch
      %6749 = sbr.rel (%p6747) target = $region128
    $region127: #{dnn_forward.1} parent=5 // pred_region
      %s6750 = ssub.s32 %s31, 2
      // Predicated region
      $region129: #{dnn_forward.1} parent=127 // pred_check
        %p6751 = pneg %p610
      $region130: #{dnn_forward.1} parent=127 // pred_check_branch
        %6753 = sbr.rel (%p6751) target = $region132
      $region131: #{dnn_forward.1} parent=127 // pred_region
        %p6754 = scmp.lt.s32.totalorder %s37, 1
        %s6755 = scalar_select %p6754, %s37, 1
        %s6756 = smul.addr %s6755, 8
        %s6757 = scalar_lea.vmem %s25, %s6756
      $region132: #{dnn_forward.1} parent=127 // pred_fallthru
        _
    $region128: #{dnn_forward.1} parent=5 // pred_fallthru
      _
  $region6: #{dnn_forward.1} parent=0 // loop_footer
    %s35 = sadd.s32 1, %s31
  $region7: #{dnn_forward.1} parent=0 // loop_footer_branch
    %30 = sbr.rel target = $region3
  $region8: #{dnn_forward.1} parent=0 // loop_exit
    _

</llo_original>
